<compile_context>
chip_gen: v6e
topology: v6e:2x2x1
jax: 0.10.0
libtpu: 0.0.40
codegen_flags: <defaults>
</compile_context>

<pallas_src>
import jax
import jax.numpy as jnp
from jax.experimental import pallas as pl
from jax.experimental.pallas import tpu as pltpu

BAD_ANGLES = 13
ANGLES = BAD_ANGLES
HEIGHT = 64
MEASURE_WIDTH = 232
WIDTH = 192
KH = MEASURE_WIDTH - WIDTH + 1   # 41
KW = BAD_ANGLES                  # 13


def _sino_conv_kernel(sino_t_ref, w_ref, b_ref, o_ref):
    # sino_t_ref: (1, KW, MEASURE_WIDTH) -- one batch element, angle-major
    # w_ref:      (KH, HEIGHT, KW)       -- kernel-row-major so w_ref[r] is a clean slab
    # b_ref:      (HEIGHT, 1)
    # o_ref:      (1, HEIGHT, WIDTH)     -- PyTorch-native output layout
    s = sino_t_ref[0]                                    # (13, 232), stays in vregs
    acc = jnp.zeros((HEIGHT, WIDTH), jnp.float32)
    # Shift-and-matmul conv: 41 small MXU matmuls, in-register f32 accumulation.
    # Static unroll keeps every slice offset a compile-time constant.
    for r in range(KH):
        acc += jnp.dot(
            w_ref[r],                                    # (HEIGHT, KW) = (64, 13)
            s[:, r:r + WIDTH],                           # (KW, WIDTH)  = (13, 192)
            preferred_element_type=jnp.float32,
        )
    o_ref[0] = (acc + b_ref[...]).astype(o_ref.dtype)


def sino_reconstructor_forward(sino, weight, bias):
    """sino: (B, MEASURE_WIDTH, ANGLES) f32; weight: (HEIGHT, 1, KH, KW); bias: (HEIGHT,).
    Returns (B, HEIGHT, WIDTH), identical to the PyTorch module's forward."""
    B = sino.shape[0]
    # Tiny layout prep (a few hundred KB total, fuses into one trivial XLA copy):
    sino_t = sino.reshape(B, MEASURE_WIDTH, ANGLES).transpose(0, 2, 1)   # (B, 13, 232)
    w_t = weight.reshape(HEIGHT, KH, KW).transpose(1, 0, 2)              # (41, 64, 13)
    b2 = bias.reshape(HEIGHT, 1)                                         # (64, 1)

    return pl.pallas_call(
        _sino_conv_kernel,
        out_shape=jax.ShapeDtypeStruct((B, HEIGHT, WIDTH), jnp.float32),
        grid=(B,),
        in_specs=[
            pl.BlockSpec((1, ANGLES, MEASURE_WIDTH), lambda b: (b, 0, 0)),
            pl.BlockSpec((KH, HEIGHT, KW), lambda b: (0, 0, 0)),
            pl.BlockSpec((HEIGHT, 1), lambda b: (0, 0)),
        ],
        out_specs=pl.BlockSpec((1, HEIGHT, WIDTH), lambda b: (b, 0, 0)),
        compiler_params=pltpu.CompilerParams(
            dimension_semantics=("parallel",),
        ),
    )(sino_t, w_t, b2)


def _reference_forward(sino, weight, bias):
    """Pure-JAX reference (XLA conv) for correctness checking."""
    B = sino.shape[0]
    x = sino.reshape(B, 1, MEASURE_WIDTH, ANGLES)
    y = jax.lax.conv_general_dilated(
        x, weight, window_strides=(1, 1), padding="VALID",
        dimension_numbers=("NCHW", "OIHW", "NCHW"))
    y = y + bias.reshape(1, HEIGHT, 1, 1)
    return y.reshape(B, HEIGHT, WIDTH)


if __name__ == "__main__":
    key = jax.random.PRNGKey(0)
    k1, k2, k3 = jax.random.split(key, 3)

    B = 2  # small batch; spatial dims (232, 13) are fixed by the module's constants
    sino = jax.random.normal(k1, (B, MEASURE_WIDTH, ANGLES), dtype=jnp.float32)

    # PyTorch __init__ zero-fills weight/bias; use deterministic random values
    # instead so the kernel computes something non-trivial and checkable.
    weight = 0.01 * jax.random.normal(k2, (HEIGHT, 1, KH, KW), dtype=jnp.float32)
    bias = 0.01 * jax.random.normal(k3, (HEIGHT,), dtype=jnp.float32)

    fwd = jax.jit(sino_reconstructor_forward)
    out = jax.block_until_ready(fwd(sino, weight, bias))
    assert out.shape == (B, HEIGHT, WIDTH), out.shape

    ref = _reference_forward(sino, weight, bias)
    err = float(jnp.max(jnp.abs(out - ref)))
    assert jnp.allclose(out, ref, atol=1e-4, rtol=1e-4), err

    print("KERNEL_OK")
</pallas_src>

<mosaic_0001>
module attributes {stable_mosaic.version = 11 : i64} {
  func.func @_sino_conv_kernel(%arg0: i32, %arg1: memref<1x13x232xf32, #tpu.memory_space<vmem>>, %arg2: memref<41x64x13xf32, #tpu.memory_space<vmem>>, %arg3: memref<64x1xf32, #tpu.memory_space<vmem>>, %arg4: memref<1x64x192xf32, #tpu.memory_space<vmem>>) attributes {dimension_semantics = [#tpu.dimension_semantics<parallel>], iteration_bounds = array<i64: 2>, scalar_prefetch = 0 : i64, scratch_operands = 0 : i64, tpu.core_type = #tpu.core_type<tc>, window_params = [{transform_indices = @transform_0, window_bounds = array<i64: 1, 13, 232>}, {pipeline_mode = #tpu.pipeline_mode<synchronous>, transform_indices = @transform_1, window_bounds = array<i64: 41, 64, 13>}, {pipeline_mode = #tpu.pipeline_mode<synchronous>, transform_indices = @transform_2, window_bounds = array<i64: 64, 1>}, {transform_indices = @transform_3, window_bounds = array<i64: 1, 64, 192>}]} {
    %c0 = arith.constant 0 : index
    %c0_0 = arith.constant 0 : index
    %c0_1 = arith.constant 0 : index
    %0 = vector.load %arg1[%c0, %c0_0, %c0_1] : memref<1x13x232xf32, #tpu.memory_space<vmem>>, vector<1x13x232xf32>
    %1 = vector.shape_cast %0 : vector<1x13x232xf32> to vector<13x232xf32>
    %cst = arith.constant 0.000000e+00 : f32
    %2 = vector.broadcast %cst : f32 to vector<64x192xf32>
    %c0_2 = arith.constant 0 : index
    %c0_3 = arith.constant 0 : index
    %c0_4 = arith.constant 0 : index
    %3 = vector.load %arg2[%c0_2, %c0_3, %c0_4] : memref<41x64x13xf32, #tpu.memory_space<vmem>>, vector<1x64x13xf32>
    %4 = vector.shape_cast %3 : vector<1x64x13xf32> to vector<64x13xf32>
    %5 = vector.extract_strided_slice %1 {offsets = [0, 0], sizes = [13, 192], strides = [1, 1]} : vector<13x232xf32> to vector<13x192xf32>
    %cst_5 = arith.constant dense<0.000000e+00> : vector<64x192xf32>
    %6 = tpu.matmul %4, %5, %cst_5 {dimension_numbers = #tpu.dot_dimension_numbers<[1], [0], [0], [1], [0, 0, 1, 1], [], []>} : vector<64x13xf32>, vector<13x192xf32>, vector<64x192xf32> -> vector<64x192xf32>
    %7 = arith.addf %2, %6 : vector<64x192xf32>
    %c1 = arith.constant 1 : index
    %c0_6 = arith.constant 0 : index
    %c0_7 = arith.constant 0 : index
    %8 = vector.load %arg2[%c1, %c0_6, %c0_7] : memref<41x64x13xf32, #tpu.memory_space<vmem>>, vector<1x64x13xf32>
    %9 = vector.shape_cast %8 : vector<1x64x13xf32> to vector<64x13xf32>
    %10 = vector.extract_strided_slice %1 {offsets = [0, 1], sizes = [13, 192], strides = [1, 1]} : vector<13x232xf32> to vector<13x192xf32>
    %cst_8 = arith.constant dense<0.000000e+00> : vector<64x192xf32>
    %11 = tpu.matmul %9, %10, %cst_8 {dimension_numbers = #tpu.dot_dimension_numbers<[1], [0], [0], [1], [0, 0, 1, 1], [], []>} : vector<64x13xf32>, vector<13x192xf32>, vector<64x192xf32> -> vector<64x192xf32>
    %12 = arith.addf %7, %11 : vector<64x192xf32>
    %c2 = arith.constant 2 : index
    %c0_9 = arith.constant 0 : index
    %c0_10 = arith.constant 0 : index
    %13 = vector.load %arg2[%c2, %c0_9, %c0_10] : memref<41x64x13xf32, #tpu.memory_space<vmem>>, vector<1x64x13xf32>
    %14 = vector.shape_cast %13 : vector<1x64x13xf32> to vector<64x13xf32>
    %15 = vector.extract_strided_slice %1 {offsets = [0, 2], sizes = [13, 192], strides = [1, 1]} : vector<13x232xf32> to vector<13x192xf32>
    %cst_11 = arith.constant dense<0.000000e+00> : vector<64x192xf32>
    %16 = tpu.matmul %14, %15, %cst_11 {dimension_numbers = #tpu.dot_dimension_numbers<[1], [0], [0], [1], [0, 0, 1, 1], [], []>} : vector<64x13xf32>, vector<13x192xf32>, vector<64x192xf32> -> vector<64x192xf32>
    %17 = arith.addf %12, %16 : vector<64x192xf32>
    %c3 = arith.constant 3 : index
    %c0_12 = arith.constant 0 : index
    %c0_13 = arith.constant 0 : index
    %18 = vector.load %arg2[%c3, %c0_12, %c0_13] : memref<41x64x13xf32, #tpu.memory_space<vmem>>, vector<1x64x13xf32>
    %19 = vector.shape_cast %18 : vector<1x64x13xf32> to vector<64x13xf32>
    %20 = vector.extract_strided_slice %1 {offsets = [0, 3], sizes = [13, 192], strides = [1, 1]} : vector<13x232xf32> to vector<13x192xf32>
    %cst_14 = arith.constant dense<0.000000e+00> : vector<64x192xf32>
    %21 = tpu.matmul %19, %20, %cst_14 {dimension_numbers = #tpu.dot_dimension_numbers<[1], [0], [0], [1], [0, 0, 1, 1], [], []>} : vector<64x13xf32>, vector<13x192xf32>, vector<64x192xf32> -> vector<64x192xf32>
    %22 = arith.addf %17, %21 : vector<64x192xf32>
    %c4 = arith.constant 4 : index
    %c0_15 = arith.constant 0 : index
    %c0_16 = arith.constant 0 : index
    %23 = vector.load %arg2[%c4, %c0_15, %c0_16] : memref<41x64x13xf32, #tpu.memory_space<vmem>>, vector<1x64x13xf32>
    %24 = vector.shape_cast %23 : vector<1x64x13xf32> to vector<64x13xf32>
    %25 = vector.extract_strided_slice %1 {offsets = [0, 4], sizes = [13, 192], strides = [1, 1]} : vector<13x232xf32> to vector<13x192xf32>
    %cst_17 = arith.constant dense<0.000000e+00> : vector<64x192xf32>
    %26 = tpu.matmul %24, %25, %cst_17 {dimension_numbers = #tpu.dot_dimension_numbers<[1], [0], [0], [1], [0, 0, 1, 1], [], []>} : vector<64x13xf32>, vector<13x192xf32>, vector<64x192xf32> -> vector<64x192xf32>
    %27 = arith.addf %22, %26 : vector<64x192xf32>
    %c5 = arith.constant 5 : index
    %c0_18 = arith.constant 0 : index
    %c0_19 = arith.constant 0 : index
    %28 = vector.load %arg2[%c5, %c0_18, %c0_19] : memref<41x64x13xf32, #tpu.memory_space<vmem>>, vector<1x64x13xf32>
    %29 = vector.shape_cast %28 : vector<1x64x13xf32> to vector<64x13xf32>
    %30 = vector.extract_strided_slice %1 {offsets = [0, 5], sizes = [13, 192], strides = [1, 1]} : vector<13x232xf32> to vector<13x192xf32>
    %cst_20 = arith.constant dense<0.000000e+00> : vector<64x192xf32>
    %31 = tpu.matmul %29, %30, %cst_20 {dimension_numbers = #tpu.dot_dimension_numbers<[1], [0], [0], [1], [0, 0, 1, 1], [], []>} : vector<64x13xf32>, vector<13x192xf32>, vector<64x192xf32> -> vector<64x192xf32>
    %32 = arith.addf %27, %31 : vector<64x192xf32>
    %c6 = arith.constant 6 : index
    %c0_21 = arith.constant 0 : index
    %c0_22 = arith.constant 0 : index
    %33 = vector.load %arg2[%c6, %c0_21, %c0_22] : memref<41x64x13xf32, #tpu.memory_space<vmem>>, vector<1x64x13xf32>
    %34 = vector.shape_cast %33 : vector<1x64x13xf32> to vector<64x13xf32>
    %35 = vector.extract_strided_slice %1 {offsets = [0, 6], sizes = [13, 192], strides = [1, 1]} : vector<13x232xf32> to vector<13x192xf32>
    %cst_23 = arith.constant dense<0.000000e+00> : vector<64x192xf32>
    %36 = tpu.matmul %34, %35, %cst_23 {dimension_numbers = #tpu.dot_dimension_numbers<[1], [0], [0], [1], [0, 0, 1, 1], [], []>} : vector<64x13xf32>, vector<13x192xf32>, vector<64x192xf32> -> vector<64x192xf32>
    %37 = arith.addf %32, %36 : vector<64x192xf32>
    %c7 = arith.constant 7 : index
    %c0_24 = arith.constant 0 : index
    %c0_25 = arith.constant 0 : index
    %38 = vector.load %arg2[%c7, %c0_24, %c0_25] : memref<41x64x13xf32, #tpu.memory_space<vmem>>, vector<1x64x13xf32>
    %39 = vector.shape_cast %38 : vector<1x64x13xf32> to vector<64x13xf32>
    %40 = vector.extract_strided_slice %1 {offsets = [0, 7], sizes = [13, 192], strides = [1, 1]} : vector<13x232xf32> to vector<13x192xf32>
    %cst_26 = arith.constant dense<0.000000e+00> : vector<64x192xf32>
    %41 = tpu.matmul %39, %40, %cst_26 {dimension_numbers = #tpu.dot_dimension_numbers<[1], [0], [0], [1], [0, 0, 1, 1], [], []>} : vector<64x13xf32>, vector<13x192xf32>, vector<64x192xf32> -> vector<64x192xf32>
    %42 = arith.addf %37, %41 : vector<64x192xf32>
    %c8 = arith.constant 8 : index
    %c0_27 = arith.constant 0 : index
    %c0_28 = arith.constant 0 : index
    %43 = vector.load %arg2[%c8, %c0_27, %c0_28] : memref<41x64x13xf32, #tpu.memory_space<vmem>>, vector<1x64x13xf32>
    %44 = vector.shape_cast %43 : vector<1x64x13xf32> to vector<64x13xf32>
    %45 = vector.extract_strided_slice %1 {offsets = [0, 8], sizes = [13, 192], strides = [1, 1]} : vector<13x232xf32> to vector<13x192xf32>
    %cst_29 = arith.constant dense<0.000000e+00> : vector<64x192xf32>
    %46 = tpu.matmul %44, %45, %cst_29 {dimension_numbers = #tpu.dot_dimension_numbers<[1], [0], [0], [1], [0, 0, 1, 1], [], []>} : vector<64x13xf32>, vector<13x192xf32>, vector<64x192xf32> -> vector<64x192xf32>
    %47 = arith.addf %42, %46 : vector<64x192xf32>
    %c9 = arith.constant 9 : index
    %c0_30 = arith.constant 0 : index
    %c0_31 = arith.constant 0 : index
    %48 = vector.load %arg2[%c9, %c0_30, %c0_31] : memref<41x64x13xf32, #tpu.memory_space<vmem>>, vector<1x64x13xf32>
    %49 = vector.shape_cast %48 : vector<1x64x13xf32> to vector<64x13xf32>
    %50 = vector.extract_strided_slice %1 {offsets = [0, 9], sizes = [13, 192], strides = [1, 1]} : vector<13x232xf32> to vector<13x192xf32>
    %cst_32 = arith.constant dense<0.000000e+00> : vector<64x192xf32>
    %51 = tpu.matmul %49, %50, %cst_32 {dimension_numbers = #tpu.dot_dimension_numbers<[1], [0], [0], [1], [0, 0, 1, 1], [], []>} : vector<64x13xf32>, vector<13x192xf32>, vector<64x192xf32> -> vector<64x192xf32>
    %52 = arith.addf %47, %51 : vector<64x192xf32>
    %c10 = arith.constant 10 : index
    %c0_33 = arith.constant 0 : index
    %c0_34 = arith.constant 0 : index
    %53 = vector.load %arg2[%c10, %c0_33, %c0_34] : memref<41x64x13xf32, #tpu.memory_space<vmem>>, vector<1x64x13xf32>
    %54 = vector.shape_cast %53 : vector<1x64x13xf32> to vector<64x13xf32>
    %55 = vector.extract_strided_slice %1 {offsets = [0, 10], sizes = [13, 192], strides = [1, 1]} : vector<13x232xf32> to vector<13x192xf32>
    %cst_35 = arith.constant dense<0.000000e+00> : vector<64x192xf32>
    %56 = tpu.matmul %54, %55, %cst_35 {dimension_numbers = #tpu.dot_dimension_numbers<[1], [0], [0], [1], [0, 0, 1, 1], [], []>} : vector<64x13xf32>, vector<13x192xf32>, vector<64x192xf32> -> vector<64x192xf32>
    %57 = arith.addf %52, %56 : vector<64x192xf32>
    %c11 = arith.constant 11 : index
    %c0_36 = arith.constant 0 : index
    %c0_37 = arith.constant 0 : index
    %58 = vector.load %arg2[%c11, %c0_36, %c0_37] : memref<41x64x13xf32, #tpu.memory_space<vmem>>, vector<1x64x13xf32>
    %59 = vector.shape_cast %58 : vector<1x64x13xf32> to vector<64x13xf32>
    %60 = vector.extract_strided_slice %1 {offsets = [0, 11], sizes = [13, 192], strides = [1, 1]} : vector<13x232xf32> to vector<13x192xf32>
    %cst_38 = arith.constant dense<0.000000e+00> : vector<64x192xf32>
    %61 = tpu.matmul %59, %60, %cst_38 {dimension_numbers = #tpu.dot_dimension_numbers<[1], [0], [0], [1], [0, 0, 1, 1], [], []>} : vector<64x13xf32>, vector<13x192xf32>, vector<64x192xf32> -> vector<64x192xf32>
    %62 = arith.addf %57, %61 : vector<64x192xf32>
    %c12 = arith.constant 12 : index
    %c0_39 = arith.constant 0 : index
    %c0_40 = arith.constant 0 : index
    %63 = vector.load %arg2[%c12, %c0_39, %c0_40] : memref<41x64x13xf32, #tpu.memory_space<vmem>>, vector<1x64x13xf32>
    %64 = vector.shape_cast %63 : vector<1x64x13xf32> to vector<64x13xf32>
    %65 = vector.extract_strided_slice %1 {offsets = [0, 12], sizes = [13, 192], strides = [1, 1]} : vector<13x232xf32> to vector<13x192xf32>
    %cst_41 = arith.constant dense<0.000000e+00> : vector<64x192xf32>
    %66 = tpu.matmul %64, %65, %cst_41 {dimension_numbers = #tpu.dot_dimension_numbers<[1], [0], [0], [1], [0, 0, 1, 1], [], []>} : vector<64x13xf32>, vector<13x192xf32>, vector<64x192xf32> -> vector<64x192xf32>
    %67 = arith.addf %62, %66 : vector<64x192xf32>
    %c13 = arith.constant 13 : index
    %c0_42 = arith.constant 0 : index
    %c0_43 = arith.constant 0 : index
    %68 = vector.load %arg2[%c13, %c0_42, %c0_43] : memref<41x64x13xf32, #tpu.memory_space<vmem>>, vector<1x64x13xf32>
    %69 = vector.shape_cast %68 : vector<1x64x13xf32> to vector<64x13xf32>
    %70 = vector.extract_strided_slice %1 {offsets = [0, 13], sizes = [13, 192], strides = [1, 1]} : vector<13x232xf32> to vector<13x192xf32>
    %cst_44 = arith.constant dense<0.000000e+00> : vector<64x192xf32>
    %71 = tpu.matmul %69, %70, %cst_44 {dimension_numbers = #tpu.dot_dimension_numbers<[1], [0], [0], [1], [0, 0, 1, 1], [], []>} : vector<64x13xf32>, vector<13x192xf32>, vector<64x192xf32> -> vector<64x192xf32>
    %72 = arith.addf %67, %71 : vector<64x192xf32>
    %c14 = arith.constant 14 : index
    %c0_45 = arith.constant 0 : index
    %c0_46 = arith.constant 0 : index
    %73 = vector.load %arg2[%c14, %c0_45, %c0_46] : memref<41x64x13xf32, #tpu.memory_space<vmem>>, vector<1x64x13xf32>
    %74 = vector.shape_cast %73 : vector<1x64x13xf32> to vector<64x13xf32>
    %75 = vector.extract_strided_slice %1 {offsets = [0, 14], sizes = [13, 192], strides = [1, 1]} : vector<13x232xf32> to vector<13x192xf32>
    %cst_47 = arith.constant dense<0.000000e+00> : vector<64x192xf32>
    %76 = tpu.matmul %74, %75, %cst_47 {dimension_numbers = #tpu.dot_dimension_numbers<[1], [0], [0], [1], [0, 0, 1, 1], [], []>} : vector<64x13xf32>, vector<13x192xf32>, vector<64x192xf32> -> vector<64x192xf32>
    %77 = arith.addf %72, %76 : vector<64x192xf32>
    %c15 = arith.constant 15 : index
    %c0_48 = arith.constant 0 : index
    %c0_49 = arith.constant 0 : index
    %78 = vector.load %arg2[%c15, %c0_48, %c0_49] : memref<41x64x13xf32, #tpu.memory_space<vmem>>, vector<1x64x13xf32>
    %79 = vector.shape_cast %78 : vector<1x64x13xf32> to vector<64x13xf32>
    %80 = vector.extract_strided_slice %1 {offsets = [0, 15], sizes = [13, 192], strides = [1, 1]} : vector<13x232xf32> to vector<13x192xf32>
    %cst_50 = arith.constant dense<0.000000e+00> : vector<64x192xf32>
    %81 = tpu.matmul %79, %80, %cst_50 {dimension_numbers = #tpu.dot_dimension_numbers<[1], [0], [0], [1], [0, 0, 1, 1], [], []>} : vector<64x13xf32>, vector<13x192xf32>, vector<64x192xf32> -> vector<64x192xf32>
    %82 = arith.addf %77, %81 : vector<64x192xf32>
    %c16 = arith.constant 16 : index
    %c0_51 = arith.constant 0 : index
    %c0_52 = arith.constant 0 : index
    %83 = vector.load %arg2[%c16, %c0_51, %c0_52] : memref<41x64x13xf32, #tpu.memory_space<vmem>>, vector<1x64x13xf32>
    %84 = vector.shape_cast %83 : vector<1x64x13xf32> to vector<64x13xf32>
    %85 = vector.extract_strided_slice %1 {offsets = [0, 16], sizes = [13, 192], strides = [1, 1]} : vector<13x232xf32> to vector<13x192xf32>
    %cst_53 = arith.constant dense<0.000000e+00> : vector<64x192xf32>
    %86 = tpu.matmul %84, %85, %cst_53 {dimension_numbers = #tpu.dot_dimension_numbers<[1], [0], [0], [1], [0, 0, 1, 1], [], []>} : vector<64x13xf32>, vector<13x192xf32>, vector<64x192xf32> -> vector<64x192xf32>
    %87 = arith.addf %82, %86 : vector<64x192xf32>
    %c17 = arith.constant 17 : index
    %c0_54 = arith.constant 0 : index
    %c0_55 = arith.constant 0 : index
    %88 = vector.load %arg2[%c17, %c0_54, %c0_55] : memref<41x64x13xf32, #tpu.memory_space<vmem>>, vector<1x64x13xf32>
    %89 = vector.shape_cast %88 : vector<1x64x13xf32> to vector<64x13xf32>
    %90 = vector.extract_strided_slice %1 {offsets = [0, 17], sizes = [13, 192], strides = [1, 1]} : vector<13x232xf32> to vector<13x192xf32>
    %cst_56 = arith.constant dense<0.000000e+00> : vector<64x192xf32>
    %91 = tpu.matmul %89, %90, %cst_56 {dimension_numbers = #tpu.dot_dimension_numbers<[1], [0], [0], [1], [0, 0, 1, 1], [], []>} : vector<64x13xf32>, vector<13x192xf32>, vector<64x192xf32> -> vector<64x192xf32>
    %92 = arith.addf %87, %91 : vector<64x192xf32>
    %c18 = arith.constant 18 : index
    %c0_57 = arith.constant 0 : index
    %c0_58 = arith.constant 0 : index
    %93 = vector.load %arg2[%c18, %c0_57, %c0_58] : memref<41x64x13xf32, #tpu.memory_space<vmem>>, vector<1x64x13xf32>
    %94 = vector.shape_cast %93 : vector<1x64x13xf32> to vector<64x13xf32>
    %95 = vector.extract_strided_slice %1 {offsets = [0, 18], sizes = [13, 192], strides = [1, 1]} : vector<13x232xf32> to vector<13x192xf32>
    %cst_59 = arith.constant dense<0.000000e+00> : vector<64x192xf32>
    %96 = tpu.matmul %94, %95, %cst_59 {dimension_numbers = #tpu.dot_dimension_numbers<[1], [0], [0], [1], [0, 0, 1, 1], [], []>} : vector<64x13xf32>, vector<13x192xf32>, vector<64x192xf32> -> vector<64x192xf32>
    %97 = arith.addf %92, %96 : vector<64x192xf32>
    %c19 = arith.constant 19 : index
    %c0_60 = arith.constant 0 : index
    %c0_61 = arith.constant 0 : index
    %98 = vector.load %arg2[%c19, %c0_60, %c0_61] : memref<41x64x13xf32, #tpu.memory_space<vmem>>, vector<1x64x13xf32>
    %99 = vector.shape_cast %98 : vector<1x64x13xf32> to vector<64x13xf32>
    %100 = vector.extract_strided_slice %1 {offsets = [0, 19], sizes = [13, 192], strides = [1, 1]} : vector<13x232xf32> to vector<13x192xf32>
    %cst_62 = arith.constant dense<0.000000e+00> : vector<64x192xf32>
    %101 = tpu.matmul %99, %100, %cst_62 {dimension_numbers = #tpu.dot_dimension_numbers<[1], [0], [0], [1], [0, 0, 1, 1], [], []>} : vector<64x13xf32>, vector<13x192xf32>, vector<64x192xf32> -> vector<64x192xf32>
    %102 = arith.addf %97, %101 : vector<64x192xf32>
    %c20 = arith.constant 20 : index
    %c0_63 = arith.constant 0 : index
    %c0_64 = arith.constant 0 : index
    %103 = vector.load %arg2[%c20, %c0_63, %c0_64] : memref<41x64x13xf32, #tpu.memory_space<vmem>>, vector<1x64x13xf32>
    %104 = vector.shape_cast %103 : vector<1x64x13xf32> to vector<64x13xf32>
    %105 = vector.extract_strided_slice %1 {offsets = [0, 20], sizes = [13, 192], strides = [1, 1]} : vector<13x232xf32> to vector<13x192xf32>
    %cst_65 = arith.constant dense<0.000000e+00> : vector<64x192xf32>
    %106 = tpu.matmul %104, %105, %cst_65 {dimension_numbers = #tpu.dot_dimension_numbers<[1], [0], [0], [1], [0, 0, 1, 1], [], []>} : vector<64x13xf32>, vector<13x192xf32>, vector<64x192xf32> -> vector<64x192xf32>
    %107 = arith.addf %102, %106 : vector<64x192xf32>
    %c21 = arith.constant 21 : index
    %c0_66 = arith.constant 0 : index
    %c0_67 = arith.constant 0 : index
    %108 = vector.load %arg2[%c21, %c0_66, %c0_67] : memref<41x64x13xf32, #tpu.memory_space<vmem>>, vector<1x64x13xf32>
    %109 = vector.shape_cast %108 : vector<1x64x13xf32> to vector<64x13xf32>
    %110 = vector.extract_strided_slice %1 {offsets = [0, 21], sizes = [13, 192], strides = [1, 1]} : vector<13x232xf32> to vector<13x192xf32>
    %cst_68 = arith.constant dense<0.000000e+00> : vector<64x192xf32>
    %111 = tpu.matmul %109, %110, %cst_68 {dimension_numbers = #tpu.dot_dimension_numbers<[1], [0], [0], [1], [0, 0, 1, 1], [], []>} : vector<64x13xf32>, vector<13x192xf32>, vector<64x192xf32> -> vector<64x192xf32>
    %112 = arith.addf %107, %111 : vector<64x192xf32>
    %c22 = arith.constant 22 : index
    %c0_69 = arith.constant 0 : index
    %c0_70 = arith.constant 0 : index
    %113 = vector.load %arg2[%c22, %c0_69, %c0_70] : memref<41x64x13xf32, #tpu.memory_space<vmem>>, vector<1x64x13xf32>
    %114 = vector.shape_cast %113 : vector<1x64x13xf32> to vector<64x13xf32>
    %115 = vector.extract_strided_slice %1 {offsets = [0, 22], sizes = [13, 192], strides = [1, 1]} : vector<13x232xf32> to vector<13x192xf32>
    %cst_71 = arith.constant dense<0.000000e+00> : vector<64x192xf32>
    %116 = tpu.matmul %114, %115, %cst_71 {dimension_numbers = #tpu.dot_dimension_numbers<[1], [0], [0], [1], [0, 0, 1, 1], [], []>} : vector<64x13xf32>, vector<13x192xf32>, vector<64x192xf32> -> vector<64x192xf32>
    %117 = arith.addf %112, %116 : vector<64x192xf32>
    %c23 = arith.constant 23 : index
    %c0_72 = arith.constant 0 : index
    %c0_73 = arith.constant 0 : index
    %118 = vector.load %arg2[%c23, %c0_72, %c0_73] : memref<41x64x13xf32, #tpu.memory_space<vmem>>, vector<1x64x13xf32>
    %119 = vector.shape_cast %118 : vector<1x64x13xf32> to vector<64x13xf32>
    %120 = vector.extract_strided_slice %1 {offsets = [0, 23], sizes = [13, 192], strides = [1, 1]} : vector<13x232xf32> to vector<13x192xf32>
    %cst_74 = arith.constant dense<0.000000e+00> : vector<64x192xf32>
    %121 = tpu.matmul %119, %120, %cst_74 {dimension_numbers = #tpu.dot_dimension_numbers<[1], [0], [0], [1], [0, 0, 1, 1], [], []>} : vector<64x13xf32>, vector<13x192xf32>, vector<64x192xf32> -> vector<64x192xf32>
    %122 = arith.addf %117, %121 : vector<64x192xf32>
    %c24 = arith.constant 24 : index
    %c0_75 = arith.constant 0 : index
    %c0_76 = arith.constant 0 : index
    %123 = vector.load %arg2[%c24, %c0_75, %c0_76] : memref<41x64x13xf32, #tpu.memory_space<vmem>>, vector<1x64x13xf32>
    %124 = vector.shape_cast %123 : vector<1x64x13xf32> to vector<64x13xf32>
    %125 = vector.extract_strided_slice %1 {offsets = [0, 24], sizes = [13, 192], strides = [1, 1]} : vector<13x232xf32> to vector<13x192xf32>
    %cst_77 = arith.constant dense<0.000000e+00> : vector<64x192xf32>
    %126 = tpu.matmul %124, %125, %cst_77 {dimension_numbers = #tpu.dot_dimension_numbers<[1], [0], [0], [1], [0, 0, 1, 1], [], []>} : vector<64x13xf32>, vector<13x192xf32>, vector<64x192xf32> -> vector<64x192xf32>
    %127 = arith.addf %122, %126 : vector<64x192xf32>
    %c25 = arith.constant 25 : index
    %c0_78 = arith.constant 0 : index
    %c0_79 = arith.constant 0 : index
    %128 = vector.load %arg2[%c25, %c0_78, %c0_79] : memref<41x64x13xf32, #tpu.memory_space<vmem>>, vector<1x64x13xf32>
    %129 = vector.shape_cast %128 : vector<1x64x13xf32> to vector<64x13xf32>
    %130 = vector.extract_strided_slice %1 {offsets = [0, 25], sizes = [13, 192], strides = [1, 1]} : vector<13x232xf32> to vector<13x192xf32>
    %cst_80 = arith.constant dense<0.000000e+00> : vector<64x192xf32>
    %131 = tpu.matmul %129, %130, %cst_80 {dimension_numbers = #tpu.dot_dimension_numbers<[1], [0], [0], [1], [0, 0, 1, 1], [], []>} : vector<64x13xf32>, vector<13x192xf32>, vector<64x192xf32> -> vector<64x192xf32>
    %132 = arith.addf %127, %131 : vector<64x192xf32>
    %c26 = arith.constant 26 : index
    %c0_81 = arith.constant 0 : index
    %c0_82 = arith.constant 0 : index
    %133 = vector.load %arg2[%c26, %c0_81, %c0_82] : memref<41x64x13xf32, #tpu.memory_space<vmem>>, vector<1x64x13xf32>
    %134 = vector.shape_cast %133 : vector<1x64x13xf32> to vector<64x13xf32>
    %135 = vector.extract_strided_slice %1 {offsets = [0, 26], sizes = [13, 192], strides = [1, 1]} : vector<13x232xf32> to vector<13x192xf32>
    %cst_83 = arith.constant dense<0.000000e+00> : vector<64x192xf32>
    %136 = tpu.matmul %134, %135, %cst_83 {dimension_numbers = #tpu.dot_dimension_numbers<[1], [0], [0], [1], [0, 0, 1, 1], [], []>} : vector<64x13xf32>, vector<13x192xf32>, vector<64x192xf32> -> vector<64x192xf32>
    %137 = arith.addf %132, %136 : vector<64x192xf32>
    %c27 = arith.constant 27 : index
    %c0_84 = arith.constant 0 : index
    %c0_85 = arith.constant 0 : index
    %138 = vector.load %arg2[%c27, %c0_84, %c0_85] : memref<41x64x13xf32, #tpu.memory_space<vmem>>, vector<1x64x13xf32>
    %139 = vector.shape_cast %138 : vector<1x64x13xf32> to vector<64x13xf32>
    %140 = vector.extract_strided_slice %1 {offsets = [0, 27], sizes = [13, 192], strides = [1, 1]} : vector<13x232xf32> to vector<13x192xf32>
    %cst_86 = arith.constant dense<0.000000e+00> : vector<64x192xf32>
    %141 = tpu.matmul %139, %140, %cst_86 {dimension_numbers = #tpu.dot_dimension_numbers<[1], [0], [0], [1], [0, 0, 1, 1], [], []>} : vector<64x13xf32>, vector<13x192xf32>, vector<64x192xf32> -> vector<64x192xf32>
    %142 = arith.addf %137, %141 : vector<64x192xf32>
    %c28 = arith.constant 28 : index
    %c0_87 = arith.constant 0 : index
    %c0_88 = arith.constant 0 : index
    %143 = vector.load %arg2[%c28, %c0_87, %c0_88] : memref<41x64x13xf32, #tpu.memory_space<vmem>>, vector<1x64x13xf32>
    %144 = vector.shape_cast %143 : vector<1x64x13xf32> to vector<64x13xf32>
    %145 = vector.extract_strided_slice %1 {offsets = [0, 28], sizes = [13, 192], strides = [1, 1]} : vector<13x232xf32> to vector<13x192xf32>
    %cst_89 = arith.constant dense<0.000000e+00> : vector<64x192xf32>
    %146 = tpu.matmul %144, %145, %cst_89 {dimension_numbers = #tpu.dot_dimension_numbers<[1], [0], [0], [1], [0, 0, 1, 1], [], []>} : vector<64x13xf32>, vector<13x192xf32>, vector<64x192xf32> -> vector<64x192xf32>
    %147 = arith.addf %142, %146 : vector<64x192xf32>
    %c29 = arith.constant 29 : index
    %c0_90 = arith.constant 0 : index
    %c0_91 = arith.constant 0 : index
    %148 = vector.load %arg2[%c29, %c0_90, %c0_91] : memref<41x64x13xf32, #tpu.memory_space<vmem>>, vector<1x64x13xf32>
    %149 = vector.shape_cast %148 : vector<1x64x13xf32> to vector<64x13xf32>
    %150 = vector.extract_strided_slice %1 {offsets = [0, 29], sizes = [13, 192], strides = [1, 1]} : vector<13x232xf32> to vector<13x192xf32>
    %cst_92 = arith.constant dense<0.000000e+00> : vector<64x192xf32>
    %151 = tpu.matmul %149, %150, %cst_92 {dimension_numbers = #tpu.dot_dimension_numbers<[1], [0], [0], [1], [0, 0, 1, 1], [], []>} : vector<64x13xf32>, vector<13x192xf32>, vector<64x192xf32> -> vector<64x192xf32>
    %152 = arith.addf %147, %151 : vector<64x192xf32>
    %c30 = arith.constant 30 : index
    %c0_93 = arith.constant 0 : index
    %c0_94 = arith.constant 0 : index
    %153 = vector.load %arg2[%c30, %c0_93, %c0_94] : memref<41x64x13xf32, #tpu.memory_space<vmem>>, vector<1x64x13xf32>
    %154 = vector.shape_cast %153 : vector<1x64x13xf32> to vector<64x13xf32>
    %155 = vector.extract_strided_slice %1 {offsets = [0, 30], sizes = [13, 192], strides = [1, 1]} : vector<13x232xf32> to vector<13x192xf32>
    %cst_95 = arith.constant dense<0.000000e+00> : vector<64x192xf32>
    %156 = tpu.matmul %154, %155, %cst_95 {dimension_numbers = #tpu.dot_dimension_numbers<[1], [0], [0], [1], [0, 0, 1, 1], [], []>} : vector<64x13xf32>, vector<13x192xf32>, vector<64x192xf32> -> vector<64x192xf32>
    %157 = arith.addf %152, %156 : vector<64x192xf32>
    %c31 = arith.constant 31 : index
    %c0_96 = arith.constant 0 : index
    %c0_97 = arith.constant 0 : index
    %158 = vector.load %arg2[%c31, %c0_96, %c0_97] : memref<41x64x13xf32, #tpu.memory_space<vmem>>, vector<1x64x13xf32>
    %159 = vector.shape_cast %158 : vector<1x64x13xf32> to vector<64x13xf32>
    %160 = vector.extract_strided_slice %1 {offsets = [0, 31], sizes = [13, 192], strides = [1, 1]} : vector<13x232xf32> to vector<13x192xf32>
    %cst_98 = arith.constant dense<0.000000e+00> : vector<64x192xf32>
    %161 = tpu.matmul %159, %160, %cst_98 {dimension_numbers = #tpu.dot_dimension_numbers<[1], [0], [0], [1], [0, 0, 1, 1], [], []>} : vector<64x13xf32>, vector<13x192xf32>, vector<64x192xf32> -> vector<64x192xf32>
    %162 = arith.addf %157, %161 : vector<64x192xf32>
    %c32 = arith.constant 32 : index
    %c0_99 = arith.constant 0 : index
    %c0_100 = arith.constant 0 : index
    %163 = vector.load %arg2[%c32, %c0_99, %c0_100] : memref<41x64x13xf32, #tpu.memory_space<vmem>>, vector<1x64x13xf32>
    %164 = vector.shape_cast %163 : vector<1x64x13xf32> to vector<64x13xf32>
    %165 = vector.extract_strided_slice %1 {offsets = [0, 32], sizes = [13, 192], strides = [1, 1]} : vector<13x232xf32> to vector<13x192xf32>
    %cst_101 = arith.constant dense<0.000000e+00> : vector<64x192xf32>
    %166 = tpu.matmul %164, %165, %cst_101 {dimension_numbers = #tpu.dot_dimension_numbers<[1], [0], [0], [1], [0, 0, 1, 1], [], []>} : vector<64x13xf32>, vector<13x192xf32>, vector<64x192xf32> -> vector<64x192xf32>
    %167 = arith.addf %162, %166 : vector<64x192xf32>
    %c33 = arith.constant 33 : index
    %c0_102 = arith.constant 0 : index
    %c0_103 = arith.constant 0 : index
    %168 = vector.load %arg2[%c33, %c0_102, %c0_103] : memref<41x64x13xf32, #tpu.memory_space<vmem>>, vector<1x64x13xf32>
    %169 = vector.shape_cast %168 : vector<1x64x13xf32> to vector<64x13xf32>
    %170 = vector.extract_strided_slice %1 {offsets = [0, 33], sizes = [13, 192], strides = [1, 1]} : vector<13x232xf32> to vector<13x192xf32>
    %cst_104 = arith.constant dense<0.000000e+00> : vector<64x192xf32>
    %171 = tpu.matmul %169, %170, %cst_104 {dimension_numbers = #tpu.dot_dimension_numbers<[1], [0], [0], [1], [0, 0, 1, 1], [], []>} : vector<64x13xf32>, vector<13x192xf32>, vector<64x192xf32> -> vector<64x192xf32>
    %172 = arith.addf %167, %171 : vector<64x192xf32>
    %c34 = arith.constant 34 : index
    %c0_105 = arith.constant 0 : index
    %c0_106 = arith.constant 0 : index
    %173 = vector.load %arg2[%c34, %c0_105, %c0_106] : memref<41x64x13xf32, #tpu.memory_space<vmem>>, vector<1x64x13xf32>
    %174 = vector.shape_cast %173 : vector<1x64x13xf32> to vector<64x13xf32>
    %175 = vector.extract_strided_slice %1 {offsets = [0, 34], sizes = [13, 192], strides = [1, 1]} : vector<13x232xf32> to vector<13x192xf32>
    %cst_107 = arith.constant dense<0.000000e+00> : vector<64x192xf32>
    %176 = tpu.matmul %174, %175, %cst_107 {dimension_numbers = #tpu.dot_dimension_numbers<[1], [0], [0], [1], [0, 0, 1, 1], [], []>} : vector<64x13xf32>, vector<13x192xf32>, vector<64x192xf32> -> vector<64x192xf32>
    %177 = arith.addf %172, %176 : vector<64x192xf32>
    %c35 = arith.constant 35 : index
    %c0_108 = arith.constant 0 : index
    %c0_109 = arith.constant 0 : index
    %178 = vector.load %arg2[%c35, %c0_108, %c0_109] : memref<41x64x13xf32, #tpu.memory_space<vmem>>, vector<1x64x13xf32>
    %179 = vector.shape_cast %178 : vector<1x64x13xf32> to vector<64x13xf32>
    %180 = vector.extract_strided_slice %1 {offsets = [0, 35], sizes = [13, 192], strides = [1, 1]} : vector<13x232xf32> to vector<13x192xf32>
    %cst_110 = arith.constant dense<0.000000e+00> : vector<64x192xf32>
    %181 = tpu.matmul %179, %180, %cst_110 {dimension_numbers = #tpu.dot_dimension_numbers<[1], [0], [0], [1], [0, 0, 1, 1], [], []>} : vector<64x13xf32>, vector<13x192xf32>, vector<64x192xf32> -> vector<64x192xf32>
    %182 = arith.addf %177, %181 : vector<64x192xf32>
    %c36 = arith.constant 36 : index
    %c0_111 = arith.constant 0 : index
    %c0_112 = arith.constant 0 : index
    %183 = vector.load %arg2[%c36, %c0_111, %c0_112] : memref<41x64x13xf32, #tpu.memory_space<vmem>>, vector<1x64x13xf32>
    %184 = vector.shape_cast %183 : vector<1x64x13xf32> to vector<64x13xf32>
    %185 = vector.extract_strided_slice %1 {offsets = [0, 36], sizes = [13, 192], strides = [1, 1]} : vector<13x232xf32> to vector<13x192xf32>
    %cst_113 = arith.constant dense<0.000000e+00> : vector<64x192xf32>
    %186 = tpu.matmul %184, %185, %cst_113 {dimension_numbers = #tpu.dot_dimension_numbers<[1], [0], [0], [1], [0, 0, 1, 1], [], []>} : vector<64x13xf32>, vector<13x192xf32>, vector<64x192xf32> -> vector<64x192xf32>
    %187 = arith.addf %182, %186 : vector<64x192xf32>
    %c37 = arith.constant 37 : index
    %c0_114 = arith.constant 0 : index
    %c0_115 = arith.constant 0 : index
    %188 = vector.load %arg2[%c37, %c0_114, %c0_115] : memref<41x64x13xf32, #tpu.memory_space<vmem>>, vector<1x64x13xf32>
    %189 = vector.shape_cast %188 : vector<1x64x13xf32> to vector<64x13xf32>
    %190 = vector.extract_strided_slice %1 {offsets = [0, 37], sizes = [13, 192], strides = [1, 1]} : vector<13x232xf32> to vector<13x192xf32>
    %cst_116 = arith.constant dense<0.000000e+00> : vector<64x192xf32>
    %191 = tpu.matmul %189, %190, %cst_116 {dimension_numbers = #tpu.dot_dimension_numbers<[1], [0], [0], [1], [0, 0, 1, 1], [], []>} : vector<64x13xf32>, vector<13x192xf32>, vector<64x192xf32> -> vector<64x192xf32>
    %192 = arith.addf %187, %191 : vector<64x192xf32>
    %c38 = arith.constant 38 : index
    %c0_117 = arith.constant 0 : index
    %c0_118 = arith.constant 0 : index
    %193 = vector.load %arg2[%c38, %c0_117, %c0_118] : memref<41x64x13xf32, #tpu.memory_space<vmem>>, vector<1x64x13xf32>
    %194 = vector.shape_cast %193 : vector<1x64x13xf32> to vector<64x13xf32>
    %195 = vector.extract_strided_slice %1 {offsets = [0, 38], sizes = [13, 192], strides = [1, 1]} : vector<13x232xf32> to vector<13x192xf32>
    %cst_119 = arith.constant dense<0.000000e+00> : vector<64x192xf32>
    %196 = tpu.matmul %194, %195, %cst_119 {dimension_numbers = #tpu.dot_dimension_numbers<[1], [0], [0], [1], [0, 0, 1, 1], [], []>} : vector<64x13xf32>, vector<13x192xf32>, vector<64x192xf32> -> vector<64x192xf32>
    %197 = arith.addf %192, %196 : vector<64x192xf32>
    %c39 = arith.constant 39 : index
    %c0_120 = arith.constant 0 : index
    %c0_121 = arith.constant 0 : index
    %198 = vector.load %arg2[%c39, %c0_120, %c0_121] : memref<41x64x13xf32, #tpu.memory_space<vmem>>, vector<1x64x13xf32>
    %199 = vector.shape_cast %198 : vector<1x64x13xf32> to vector<64x13xf32>
    %200 = vector.extract_strided_slice %1 {offsets = [0, 39], sizes = [13, 192], strides = [1, 1]} : vector<13x232xf32> to vector<13x192xf32>
    %cst_122 = arith.constant dense<0.000000e+00> : vector<64x192xf32>
    %201 = tpu.matmul %199, %200, %cst_122 {dimension_numbers = #tpu.dot_dimension_numbers<[1], [0], [0], [1], [0, 0, 1, 1], [], []>} : vector<64x13xf32>, vector<13x192xf32>, vector<64x192xf32> -> vector<64x192xf32>
    %202 = arith.addf %197, %201 : vector<64x192xf32>
    %c40 = arith.constant 40 : index
    %c0_123 = arith.constant 0 : index
    %c0_124 = arith.constant 0 : index
    %203 = vector.load %arg2[%c40, %c0_123, %c0_124] : memref<41x64x13xf32, #tpu.memory_space<vmem>>, vector<1x64x13xf32>
    %204 = vector.shape_cast %203 : vector<1x64x13xf32> to vector<64x13xf32>
    %205 = vector.extract_strided_slice %1 {offsets = [0, 40], sizes = [13, 192], strides = [1, 1]} : vector<13x232xf32> to vector<13x192xf32>
    %cst_125 = arith.constant dense<0.000000e+00> : vector<64x192xf32>
    %206 = tpu.matmul %204, %205, %cst_125 {dimension_numbers = #tpu.dot_dimension_numbers<[1], [0], [0], [1], [0, 0, 1, 1], [], []>} : vector<64x13xf32>, vector<13x192xf32>, vector<64x192xf32> -> vector<64x192xf32>
    %207 = arith.addf %202, %206 : vector<64x192xf32>
    %c0_126 = arith.constant 0 : index
    %c0_127 = arith.constant 0 : index
    %208 = vector.load %arg3[%c0_126, %c0_127] : memref<64x1xf32, #tpu.memory_space<vmem>>, vector<64x1xf32>
    %209 = vector.broadcast %208 : vector<64x1xf32> to vector<64x192xf32>
    %210 = arith.addf %207, %209 : vector<64x192xf32>
    %c0_128 = arith.constant 0 : index
    %c0_129 = arith.constant 0 : index
    %c0_130 = arith.constant 0 : index
    %211 = vector.load %arg4[%c0_128, %c0_129, %c0_130] : memref<1x64x192xf32, #tpu.memory_space<vmem>>, vector<1x64x192xf32>
    %212 = vector.shape_cast %211 : vector<1x64x192xf32> to vector<64x192xf32>
    %213 = vector.shape_cast %210 : vector<64x192xf32> to vector<1x64x192xf32>
    tpu.vector_store %arg4[%c0_128, %c0_129, %c0_130], %213 {strides = array<i32>} : memref<1x64x192xf32, #tpu.memory_space<vmem>>, vector<1x64x192xf32>,
    return
  }
  func.func @transform_0(%arg0: i32) -> (i32, i32, i32) {
    %c0_i32 = arith.constant 0 : i32
    %c0_i32_0 = arith.constant 0 : i32
    %c0_i32_1 = arith.constant 0 : i32
    return %arg0, %c0_i32, %c0_i32_0 : i32, i32, i32
  }
  func.func @transform_1(%arg0: i32) -> (i32, i32, i32) {
    %c0_i32 = arith.constant 0 : i32
    %c0_i32_0 = arith.constant 0 : i32
    %c0_i32_1 = arith.constant 0 : i32
    %c0_i32_2 = arith.constant 0 : i32
    return %c0_i32, %c0_i32_0, %c0_i32_1 : i32, i32, i32
  }
  func.func @transform_2(%arg0: i32) -> (i32, i32) {
    %c0_i32 = arith.constant 0 : i32
    %c0_i32_0 = arith.constant 0 : i32
    %c0_i32_1 = arith.constant 0 : i32
    return %c0_i32, %c0_i32_0 : i32, i32
  }
  func.func @transform_3(%arg0: i32) -> (i32, i32, i32) {
    %c0_i32 = arith.constant 0 : i32
    %c0_i32_0 = arith.constant 0 : i32
    %c0_i32_1 = arith.constant 0 : i32
    return %arg0, %c0_i32, %c0_i32_0 : i32, i32, i32
  }
}

</mosaic_0001>

<llo_original>
// kernel: sino_reconstructor_forward.1
$region0: #{sino_reconstructor_forward.1}
  #allocation0 [shape = 'u32[]', space=smem, size = 0x4, offset = 0x4, fixed_abs, tag = 'smem constant byte address 0x4 - core index']
  #allocation1 [shape = 'u32[144,128]{1,0:T(1,128)}', space=vmem, size = 0x12000, scoped, tag = 'internal scratch']
  %s0 = inlined_call_operand.vmem [shape: f32[2,13,232], index: 0, kind: input, shape index: {}]
  %s1 = inlined_call_operand.vmem [shape: f32[41,64,13], index: 1, kind: input, shape index: {}]
  %s2 = inlined_call_operand.vmem [shape: f32[64,1], index: 2, kind: input, shape index: {}]
  %s3 = inlined_call_operand.hbm [shape: f32[2,64,192], index: 3, kind: output, shape index: {}]
  %s4 = sld [smem:[#allocation0]]
  $region45: #{sino_reconstructor_forward.1} parent=0
    _
  %s6 = ssub.s32 1, %s4
  %s7 = scalar_select 0, %s6, %s4
  $region1: #{sino_reconstructor_forward.1} parent=0
    #allocation2 [shape = 'u8[131072]{0}', space=vmem, size = 0x20000, scoped, tag = 'output window, operand 0']
    #allocation3 [shape = 's32[2]{0}', space=sflag, size = 0x8, scoped, tag = 'scoped memory for sino_reconstructor_forward.1']
    %8 = vsyncpa [#allocation3], 0
    %s9 = scalar_lea.sflag [#allocation3], 1
    %10 = vsyncpa %s9, 0
    loop: start=0, step=1, limit=4
    $region2: #{sino_reconstructor_forward.1} parent=1 // loop_pre_header
      _
    $region3: #{sino_reconstructor_forward.1} parent=1 // loop_header
      %s12 = sphi 0, %s16
      %p13 = scmp.ge.s32.totalorder %s12, 4
      %s22 = sphi 0, %s24
      %s25 = sphi 0, %s22
      %s26 = sphi 0, %s25
      %s42 = sphi 0, %s26
      %s46 = sphi 0, %s46
      %s48 = sphi 0, %s46
      %s49 = sphi 0, %s48
      %s63 = sphi 0, %s49
      %s67 = sphi 0, %s67
      %s69 = sphi 0, %s67
      %s70 = sphi 0, %s69
      %s84 = sphi 0, %s70
      %s90 = sphi 0, %s92
      %s93 = sphi 0, %s90
      %s94 = sphi 0, %s93
      %s110 = sphi 0, %s94
    $region4: #{sino_reconstructor_forward.1} parent=1 // loop_header_branch
      %15 = sbr.rel (%p13) target = $region8
    $region5: #{sino_reconstructor_forward.1} parent=1 // loop_body
      %s17 = ssub.s32 %s12, 1
      %s18 = ssub.s32 %s12, 2
      %s19 = sadd.s32 %s12, 1
      %s20 = ssub.s32 %s12, %s19
      %p21 = scmp.eq.s32.totalorder %s20, 0
      %s23 = sadd.s32 %s22, 1
      %s24 = scalar_select %p21, %s22, %s23
      %p27 = pneg %p21
      %p28 = scmp.eq.s32.totalorder %s12, 1
      %p29 = por %p27, %p28
      %p30 = scmp.ne.s32.totalorder %s22, %s25
      %p31 = scmp.eq.s32.totalorder %s12, 0
      %p32 = por %p30, %p31
      %p33 = scmp.ne.s32.totalorder %s22, %s25
      %p34 = scmp.eq.s32.totalorder %s17, 1
      %p35 = por %p33, %p34
      %p36 = scmp.ne.s32.totalorder %s25, %s26
      %p37 = scmp.eq.s32.totalorder %s17, 0
      %p38 = por %p36, %p37
      %p39 = scmp.ne.s32.totalorder %s25, %s26
      %p40 = scmp.eq.s32.totalorder %s18, 1
      %p41 = por %p39, %p40
      %p43 = scmp.ne.s32.totalorder %s26, %s42
      %p44 = scmp.eq.s32.totalorder %s18, 0
      %p45 = por %p43, %p44
      %s47 = sadd.s32 %s46, 1
      %p50 = scmp.eq.s32.totalorder %s12, 1
      %p51 = scmp.ne.s32.totalorder %s46, %s48
      %p52 = scmp.eq.s32.totalorder %s12, 0
      %p53 = por %p51, %p52
      %p54 = scmp.ne.s32.totalorder %s46, %s48
      %p55 = scmp.eq.s32.totalorder %s17, 1
      %p56 = por %p54, %p55
      %p57 = scmp.ne.s32.totalorder %s48, %s49
      %p58 = scmp.eq.s32.totalorder %s17, 0
      %p59 = por %p57, %p58
      %p60 = scmp.ne.s32.totalorder %s48, %s49
      %p61 = scmp.eq.s32.totalorder %s18, 1
      %p62 = por %p60, %p61
      %p64 = scmp.ne.s32.totalorder %s49, %s63
      %p65 = scmp.eq.s32.totalorder %s18, 0
      %p66 = por %p64, %p65
      %s68 = sadd.s32 %s67, 1
      %p71 = scmp.eq.s32.totalorder %s12, 1
      %p72 = scmp.ne.s32.totalorder %s67, %s69
      %p73 = scmp.eq.s32.totalorder %s12, 0
      %p74 = por %p72, %p73
      %p75 = scmp.ne.s32.totalorder %s67, %s69
      %p76 = scmp.eq.s32.totalorder %s17, 1
      %p77 = por %p75, %p76
      %p78 = scmp.ne.s32.totalorder %s69, %s70
      %p79 = scmp.eq.s32.totalorder %s17, 0
      %p80 = por %p78, %p79
      %p81 = scmp.ne.s32.totalorder %s69, %s70
      %p82 = scmp.eq.s32.totalorder %s18, 1
      %p83 = por %p81, %p82
      %p85 = scmp.ne.s32.totalorder %s70, %s84
      %p86 = scmp.eq.s32.totalorder %s18, 0
      %p87 = por %p85, %p86
      %s88 = ssub.s32 %s12, %s19
      %p89 = scmp.eq.s32.totalorder %s88, 0
      %s91 = sadd.s32 %s90, 1
      %s92 = scalar_select %p89, %s90, %s91
      %p95 = pneg %p89
      %p96 = scmp.eq.s32.totalorder %s12, 1
      %p97 = por %p95, %p96
      %p98 = scmp.ne.s32.totalorder %s90, %s93
      %p99 = scmp.eq.s32.totalorder %s12, 0
      %p100 = por %p98, %p99
      %p101 = scmp.ne.s32.totalorder %s90, %s93
      %p102 = scmp.eq.s32.totalorder %s17, 1
      %p103 = por %p101, %p102
      %p104 = scmp.ne.s32.totalorder %s93, %s94
      %p105 = scmp.eq.s32.totalorder %s17, 0
      %p106 = por %p104, %p105
      %p107 = scmp.ne.s32.totalorder %s93, %s94
      %p108 = scmp.eq.s32.totalorder %s18, 1
      %p109 = por %p107, %p108
      %p111 = scmp.ne.s32.totalorder %s94, %s110
      %p112 = scmp.eq.s32.totalorder %s18, 0
      %p113 = por %p111, %p112
      %p114 = scmp.le.s32.totalorder 1, %s12
      %p115 = scmp.lt.s32.totalorder %s12, 3
      %p116 = pnand %p114, %p115
      %p117 = pneg %p116
      // Predicated region
      $region9: #{sino_reconstructor_forward.1} parent=5 // pred_check
        _
      $region10: #{sino_reconstructor_forward.1} parent=5 // pred_check_branch
        %119 = sbr.rel (%p116) target = $region12
      $region11: #{sino_reconstructor_forward.1} parent=5 // pred_region
        %s120 = ssub.s32 %s12, 1
        // Predicated region
        $region13: #{sino_reconstructor_forward.1} parent=11 // pred_check
          %p121 = pneg %p59
        $region14: #{sino_reconstructor_forward.1} parent=11 // pred_check_branch
          %123 = sbr.rel (%p121) target = $region16
        $region15: #{sino_reconstructor_forward.1} parent=11 // pred_region
          _
        $region16: #{sino_reconstructor_forward.1} parent=11 // pred_fallthru
          _
        // Predicated region
        $region17: #{sino_reconstructor_forward.1} parent=11 // pred_check
          %p124 = pneg %p80
        $region18: #{sino_reconstructor_forward.1} parent=11 // pred_check_branch
          %126 = sbr.rel (%p124) target = $region20
        $region19: #{sino_reconstructor_forward.1} parent=11 // pred_region
          _
        $region20: #{sino_reconstructor_forward.1} parent=11 // pred_fallthru
          _
      $region12: #{sino_reconstructor_forward.1} parent=5 // pred_fallthru
        _
      %p127 = scmp.lt.s32.totalorder %s12, 2
      // Predicated region
      $region21: #{sino_reconstructor_forward.1} parent=5 // pred_check
        %p128 = pneg %p127
      $region22: #{sino_reconstructor_forward.1} parent=5 // pred_check_branch
        %130 = sbr.rel (%p128) target = $region24
      $region23: #{sino_reconstructor_forward.1} parent=5 // pred_region
        // Predicated region
        $region25: #{sino_reconstructor_forward.1} parent=23 // pred_check
          %p131 = pneg %p32
        $region26: #{sino_reconstructor_forward.1} parent=23 // pred_check_branch
          %133 = sbr.rel (%p131) target = $region28
        $region27: #{sino_reconstructor_forward.1} parent=23 // pred_region
          %p134 = scmp.lt.s32.totalorder %s12, 1
          %s135 = scalar_select %p134, %s12, 1
          %s136 = smul.addr %s135, 4
          %s137 = smul.addr %s136, 8
          %s138 = scalar_lea.vmem %s0, %s137
        $region28: #{sino_reconstructor_forward.1} parent=23 // pred_fallthru
          _
      $region24: #{sino_reconstructor_forward.1} parent=5 // pred_fallthru
        _
      %p139 = scmp.le.s32.totalorder 1, %s12
      %p140 = scmp.lt.s32.totalorder %s12, 3
      %p141 = pnand %p139, %p140
      %p142 = pneg %p141
      // Predicated region
      $region29: #{sino_reconstructor_forward.1} parent=5 // pred_check
        _
      $region30: #{sino_reconstructor_forward.1} parent=5 // pred_check_branch
        %144 = sbr.rel (%p141) target = $region32
      $region31: #{sino_reconstructor_forward.1} parent=5 // pred_region
        %s145 = ssub.s32 %s12, 1
        %p146 = scmp.lt.s32.totalorder %s17, 1
        %s147 = scalar_select %p146, %s17, 1
        %s148 = smul.addr %s147, 4
        %s149 = smul.addr %s148, 8
        %s150 = scalar_lea.vmem %s0, %s149
        %p151 = pneg %p38
        %p152 = pneg %p35
        %p153 = pneg %p59
        %p154 = pneg %p56
        %p155 = pneg %p80
        %p156 = pneg %p77
        %p157 = pneg %p106
        %p158 = pneg %p103
        %s159 = sand.u32 %s93, 1
        %s160 = scalar_lea.sflag [#allocation3], %s159
        %s161 = sand.u32 %s93, 1
        %s162 = smul.addr %s161, 128
        %s163 = scalar_lea.vmem [#allocation2], %s162
        %p164 = scmp.lt.s32.totalorder %s17, 1
        %s165 = scalar_select %p164, %s17, 1
        %s166 = smul.addr %s165, 4
        %s167 = smul.addr %s166, 8
        %s168 = scalar_lea.vmem %s0, %s167
        %v169 = vld [vmem:[%s168] sm:$0xff]
        %v170 = vld [vmem:[%s168 + $0x8] sm:$0xff]
        %v171 = vld [vmem:[%s168 + $0x10] sm:$0x1f]
        %v172 = vld [vmem:[%s168 + $0x18] sm:$0x1f]
        %v173 = vld [vmem:[%s1] sm:$0xff]
        %v174 = vld [vmem:[%s1 + $0x8] sm:$0xff]
        %v175 = vld [vmem:[%s1 + $0x10] sm:$0xff]
        %v176 = vld [vmem:[%s1 + $0x18] sm:$0xff]
        %v177 = vld [vmem:[%s1 + $0x20] sm:$0xff]
        %v178 = vld [vmem:[%s1 + $0x28] sm:$0xff]
        %v179 = vld [vmem:[%s1 + $0x30] sm:$0xff]
        %v180 = vld [vmem:[%s1 + $0x38] sm:$0xff]
        %s181 = scalar_lea.vmem %s1, 64
        %v182 = vld [vmem:[%s181] sm:$0xff]
        %v183 = vld [vmem:[%s181 + $0x8] sm:$0xff]
        %v184 = vld [vmem:[%s181 + $0x10] sm:$0xff]
        %v185 = vld [vmem:[%s181 + $0x18] sm:$0xff]
        %v186 = vld [vmem:[%s181 + $0x20] sm:$0xff]
        %v187 = vld [vmem:[%s181 + $0x28] sm:$0xff]
        %v188 = vld [vmem:[%s181 + $0x30] sm:$0xff]
        %v189 = vld [vmem:[%s181 + $0x38] sm:$0xff]
        %194 = vrot.lane.b32.xlu0 %v169, 127
        %v195 = vpop.permute.xlu0 %194
        %196 = vrot.lane.b32.xlu0 %v170, 127
        %v197 = vpop.permute.xlu0 %196
        %198 = vrot.lane.b32.xlu0 %v171, 127
        %v199 = vpop.permute.xlu0 %198
        %200 = vrot.lane.b32.xlu0 %v172, 127
        %v201 = vpop.permute.xlu0 %200
        %vm202 = vcmask 1039360
        %v203 = vsel %vm202, %v195, %v197
        %v204 = vsel %vm202, %v199, %v201
        %vm207 = vcmask 105472
        %v209 = vsel %vm207, %v182, 0
        %v212 = vsel %vm207, %v183, 0
        %v215 = vsel %vm207, %v184, 0
        %v218 = vsel %vm207, %v185, 0
        %v221 = vsel %vm207, %v186, 0
        %v224 = vsel %vm207, %v187, 0
        %v227 = vsel %vm207, %v188, 0
        %v230 = vsel %vm207, %v189, 0
        %vm232 = vcmask 1044480
        %v233 = vsel %vm232, %v204, 0
        %v235 = vsel %vm232, %v201, 0
        %237 = vmatprep.subr.mxu0 0.0
        %238 = vmatpush1.msra.mxu0 0.0
        %239 = vmatprep.subr.mxu0 0.0
        %240 = vmatpush1.msra.mxu0 0.0
        %241 = vmatprep.subr.mxu0 0.0
        %242 = vmatpush1.msra.mxu0 0.0
        %243 = vmatprep.subr.mxu0 0.0
        %244 = vmatpush1.msra.mxu0 0.0
        %245 = vmatprep.subr.mxu0 0.0
        %246 = vmatpush1.msra.mxu0 0.0
        %247 = vmatprep.subr.mxu0 0.0
        %248 = vmatpush1.msra.mxu0 0.0
        %249 = vmatprep.subr.mxu0 0.0
        %250 = vmatpush1.msra.mxu0 0.0
        %251 = vmatprep.subr.mxu0 0.0
        %252 = vmatpush1.msra.mxu0 0.0
        %253 = vmatprep.subr.mxu0 0.0
        %254 = vmatpush1.msra.mxu0 0.0
        %255 = vmatprep.subr.mxu0 0.0
        %256 = vmatpush1.msra.mxu0 0.0
        %257 = vmatprep.subr.mxu0 0.0
        %258 = vmatpush1.msra.mxu0 0.0
        %259 = vmatprep.subr.mxu0 0.0
        %260 = vmatpush1.msra.mxu0 0.0
        %261 = vmatprep.subr.mxu0 0.0
        %262 = vmatpush1.msra.mxu0 0.0
        %263 = vmatprep.subr.mxu0 0.0
        %264 = vmatpush1.msra.mxu0 0.0
        %265 = vmatprep.subr.mxu0 %v235
        %266 = vmatpush1.msra.mxu0 %v233
        %267 = vmatprep.subr.mxu0 %v197
        %268 = vmatpush1.msra.mxu0 %v203
        %269 = vmatprep.subr.mxu0 0.0
        %270 = vmatpush2.msra.mxu0 0.0
        %271 = vmatprep.subr.mxu0 0.0
        %272 = vmatpush2.msra.mxu0 0.0
        %273 = vmatprep.subr.mxu0 0.0
        %274 = vmatpush2.msra.mxu0 0.0
        %275 = vmatprep.subr.mxu0 0.0
        %276 = vmatpush2.msra.mxu0 0.0
        %277 = vmatprep.subr.mxu0 0.0
        %278 = vmatpush2.msra.mxu0 0.0
        %279 = vmatprep.subr.mxu0 0.0
        %280 = vmatpush2.msra.mxu0 0.0
        %281 = vmatprep.subr.mxu0 0.0
        %282 = vmatpush2.msra.mxu0 0.0
        %283 = vmatprep.subr.mxu0 0.0
        %284 = vmatpush2.msra.mxu0 0.0
        %285 = vmatprep.subr.mxu0 0.0
        %286 = vmatpush2.msra.mxu0 0.0
        %287 = vmatprep.subr.mxu0 0.0
        %288 = vmatpush2.msra.mxu0 0.0
        %289 = vmatprep.subr.mxu0 0.0
        %290 = vmatpush2.msra.mxu0 0.0
        %291 = vmatprep.subr.mxu0 0.0
        %292 = vmatpush2.msra.mxu0 0.0
        %293 = vmatprep.subr.mxu0 0.0
        %294 = vmatpush2.msra.mxu0 0.0
        %295 = vmatprep.subr.mxu0 0.0
        %296 = vmatpush2.msra.mxu0 0.0
        %297 = vmatprep.subr.mxu0 0.0
        %298 = vmatpush2.msra.mxu0 0.0
        %299 = vmatprep.subr.mxu0 0.0
        %300 = vmatpush2.msra.mxu0 0.0
        %301 = vmatprep.mubr.f32.mxu0 0.0
        %302 = vmatmul.mubr.f32.gmra.mxu0 %v209
        %v303 = vpop.f32.mrf.mxu0
        %v304 = vadd.f32 0.0, %v303
        %v305 = vpop.f32.mrf.mxu0
        %v306 = vadd.f32 0.0, %v305
        %307 = vmatprep.mubr.f32.mxu0 0.0
        %308 = vmatmul.mubr.f32.gmra.mxu0 %v212
        %v309 = vpop.f32.mrf.mxu0
        %v310 = vadd.f32 0.0, %v309
        %v311 = vpop.f32.mrf.mxu0
        %v312 = vadd.f32 0.0, %v311
        %313 = vmatprep.mubr.f32.mxu0 0.0
        %314 = vmatmul.mubr.f32.gmra.mxu0 %v215
        %v315 = vpop.f32.mrf.mxu0
        %v316 = vadd.f32 0.0, %v315
        %v317 = vpop.f32.mrf.mxu0
        %v318 = vadd.f32 0.0, %v317
        %319 = vmatprep.mubr.f32.mxu0 0.0
        %320 = vmatmul.mubr.f32.gmra.mxu0 %v218
        %v321 = vpop.f32.mrf.mxu0
        %v322 = vadd.f32 0.0, %v321
        %v323 = vpop.f32.mrf.mxu0
        %v324 = vadd.f32 0.0, %v323
        %325 = vmatprep.mubr.f32.mxu0 0.0
        %326 = vmatmul.mubr.f32.gmra.mxu0 %v221
        %v327 = vpop.f32.mrf.mxu0
        %v328 = vadd.f32 0.0, %v327
        %v329 = vpop.f32.mrf.mxu0
        %v330 = vadd.f32 0.0, %v329
        %331 = vmatprep.mubr.f32.mxu0 0.0
        %332 = vmatmul.mubr.f32.gmra.mxu0 %v224
        %v333 = vpop.f32.mrf.mxu0
        %v334 = vadd.f32 0.0, %v333
        %v335 = vpop.f32.mrf.mxu0
        %v336 = vadd.f32 0.0, %v335
        %337 = vmatprep.mubr.f32.mxu0 0.0
        %338 = vmatmul.mubr.f32.gmra.mxu0 %v227
        %v339 = vpop.f32.mrf.mxu0
        %v340 = vadd.f32 0.0, %v339
        %v341 = vpop.f32.mrf.mxu0
        %v342 = vadd.f32 0.0, %v341
        %343 = vmatprep.mubr.f32.mxu0 0.0
        %344 = vmatmul.mubr.f32.gmra.mxu0 %v230
        %v345 = vpop.f32.mrf.mxu0
        %v346 = vadd.f32 0.0, %v345
        %v347 = vpop.f32.mrf.mxu0
        %v348 = vadd.f32 0.0, %v347
        %349 = vdwg.mxu0
        %v351 = vsel %vm207, %v173, 0
        %v354 = vsel %vm207, %v174, 0
        %v357 = vsel %vm207, %v175, 0
        %v360 = vsel %vm207, %v176, 0
        %v363 = vsel %vm207, %v177, 0
        %v366 = vsel %vm207, %v178, 0
        %v369 = vsel %vm207, %v179, 0
        %v372 = vsel %vm207, %v180, 0
        %v374 = vsel %vm232, %v171, 0
        %v376 = vsel %vm232, %v172, 0
        %378 = vmatprep.subr.mxu0 0.0
        %379 = vmatpush1.msra.mxu0 0.0
        %380 = vmatprep.subr.mxu0 0.0
        %381 = vmatpush1.msra.mxu0 0.0
        %382 = vmatprep.subr.mxu0 0.0
        %383 = vmatpush1.msra.mxu0 0.0
        %384 = vmatprep.subr.mxu0 0.0
        %385 = vmatpush1.msra.mxu0 0.0
        %386 = vmatprep.subr.mxu0 0.0
        %387 = vmatpush1.msra.mxu0 0.0
        %388 = vmatprep.subr.mxu0 0.0
        %389 = vmatpush1.msra.mxu0 0.0
        %390 = vmatprep.subr.mxu0 0.0
        %391 = vmatpush1.msra.mxu0 0.0
        %392 = vmatprep.subr.mxu0 0.0
        %393 = vmatpush1.msra.mxu0 0.0
        %394 = vmatprep.subr.mxu0 0.0
        %395 = vmatpush1.msra.mxu0 0.0
        %396 = vmatprep.subr.mxu0 0.0
        %397 = vmatpush1.msra.mxu0 0.0
        %398 = vmatprep.subr.mxu0 0.0
        %399 = vmatpush1.msra.mxu0 0.0
        %400 = vmatprep.subr.mxu0 0.0
        %401 = vmatpush1.msra.mxu0 0.0
        %402 = vmatprep.subr.mxu0 0.0
        %403 = vmatpush1.msra.mxu0 0.0
        %404 = vmatprep.subr.mxu0 0.0
        %405 = vmatpush1.msra.mxu0 0.0
        %406 = vmatprep.subr.mxu0 %v376
        %407 = vmatpush1.msra.mxu0 %v374
        %408 = vmatprep.subr.mxu0 %v170
        %409 = vmatpush1.msra.mxu0 %v169
        %410 = vmatprep.subr.mxu0 0.0
        %411 = vmatpush2.msra.mxu0 0.0
        %412 = vmatprep.subr.mxu0 0.0
        %413 = vmatpush2.msra.mxu0 0.0
        %414 = vmatprep.subr.mxu0 0.0
        %415 = vmatpush2.msra.mxu0 0.0
        %416 = vmatprep.subr.mxu0 0.0
        %417 = vmatpush2.msra.mxu0 0.0
        %418 = vmatprep.subr.mxu0 0.0
        %419 = vmatpush2.msra.mxu0 0.0
        %420 = vmatprep.subr.mxu0 0.0
        %421 = vmatpush2.msra.mxu0 0.0
        %422 = vmatprep.subr.mxu0 0.0
        %423 = vmatpush2.msra.mxu0 0.0
        %424 = vmatprep.subr.mxu0 0.0
        %425 = vmatpush2.msra.mxu0 0.0
        %426 = vmatprep.subr.mxu0 0.0
        %427 = vmatpush2.msra.mxu0 0.0
        %428 = vmatprep.subr.mxu0 0.0
        %429 = vmatpush2.msra.mxu0 0.0
        %430 = vmatprep.subr.mxu0 0.0
        %431 = vmatpush2.msra.mxu0 0.0
        %432 = vmatprep.subr.mxu0 0.0
        %433 = vmatpush2.msra.mxu0 0.0
        %434 = vmatprep.subr.mxu0 0.0
        %435 = vmatpush2.msra.mxu0 0.0
        %436 = vmatprep.subr.mxu0 0.0
        %437 = vmatpush2.msra.mxu0 0.0
        %438 = vmatprep.subr.mxu0 0.0
        %439 = vmatpush2.msra.mxu0 0.0
        %440 = vmatprep.subr.mxu0 0.0
        %441 = vmatpush2.msra.mxu0 0.0
        %442 = vmatprep.mubr.f32.mxu0 0.0
        %443 = vmatmul.mubr.f32.gmra.mxu0 %v351
        %v444 = vpop.f32.mrf.mxu0
        %v445 = vadd.f32 %v304, %v444
        %v446 = vpop.f32.mrf.mxu0
        %v447 = vadd.f32 %v306, %v446
        %448 = vmatprep.mubr.f32.mxu0 0.0
        %449 = vmatmul.mubr.f32.gmra.mxu0 %v354
        %v450 = vpop.f32.mrf.mxu0
        %v451 = vadd.f32 %v310, %v450
        %v452 = vpop.f32.mrf.mxu0
        %v453 = vadd.f32 %v312, %v452
        %454 = vmatprep.mubr.f32.mxu0 0.0
        %455 = vmatmul.mubr.f32.gmra.mxu0 %v357
        %v456 = vpop.f32.mrf.mxu0
        %v457 = vadd.f32 %v316, %v456
        %v458 = vpop.f32.mrf.mxu0
        %v459 = vadd.f32 %v318, %v458
        %460 = vmatprep.mubr.f32.mxu0 0.0
        %461 = vmatmul.mubr.f32.gmra.mxu0 %v360
        %v462 = vpop.f32.mrf.mxu0
        %v463 = vadd.f32 %v322, %v462
        %v464 = vpop.f32.mrf.mxu0
        %v465 = vadd.f32 %v324, %v464
        %466 = vmatprep.mubr.f32.mxu0 0.0
        %467 = vmatmul.mubr.f32.gmra.mxu0 %v363
        %v468 = vpop.f32.mrf.mxu0
        %v469 = vadd.f32 %v328, %v468
        %v470 = vpop.f32.mrf.mxu0
        %v471 = vadd.f32 %v330, %v470
        %472 = vmatprep.mubr.f32.mxu0 0.0
        %473 = vmatmul.mubr.f32.gmra.mxu0 %v366
        %v474 = vpop.f32.mrf.mxu0
        %v475 = vadd.f32 %v334, %v474
        %v476 = vpop.f32.mrf.mxu0
        %v477 = vadd.f32 %v336, %v476
        %478 = vmatprep.mubr.f32.mxu0 0.0
        %479 = vmatmul.mubr.f32.gmra.mxu0 %v369
        %v480 = vpop.f32.mrf.mxu0
        %v481 = vadd.f32 %v340, %v480
        %v482 = vpop.f32.mrf.mxu0
        %v483 = vadd.f32 %v342, %v482
        %484 = vmatprep.mubr.f32.mxu0 0.0
        %485 = vmatmul.mubr.f32.gmra.mxu0 %v372
        %v486 = vpop.f32.mrf.mxu0
        %v487 = vadd.f32 %v346, %v486
        %v488 = vpop.f32.mrf.mxu0
        %v489 = vadd.f32 %v348, %v488
        %490 = vdwg.mxu0
        %s491 = scalar_lea.vmem %s1, 128
        %v492 = vld [vmem:[%s491] sm:$0xff]
        %v493 = vld [vmem:[%s491 + $0x8] sm:$0xff]
        %v494 = vld [vmem:[%s491 + $0x10] sm:$0xff]
        %v495 = vld [vmem:[%s491 + $0x18] sm:$0xff]
        %v496 = vld [vmem:[%s491 + $0x20] sm:$0xff]
        %v497 = vld [vmem:[%s491 + $0x28] sm:$0xff]
        %v498 = vld [vmem:[%s491 + $0x30] sm:$0xff]
        %v499 = vld [vmem:[%s491 + $0x38] sm:$0xff]
        %500 = vrot.lane.b32.xlu0 %v169, 126
        %v501 = vpop.permute.xlu0 %500
        %502 = vrot.lane.b32.xlu0 %v170, 126
        %v503 = vpop.permute.xlu0 %502
        %504 = vrot.lane.b32.xlu0 %v171, 126
        %v505 = vpop.permute.xlu0 %504
        %506 = vrot.lane.b32.xlu0 %v172, 126
        %v507 = vpop.permute.xlu0 %506
        %vm508 = vcmask 1031168
        %v509 = vsel %vm508, %v501, %v503
        %v510 = vsel %vm508, %v505, %v507
        %v514 = vsel %vm207, %v492, 0
        %v517 = vsel %vm207, %v493, 0
        %v520 = vsel %vm207, %v494, 0
        %v523 = vsel %vm207, %v495, 0
        %v526 = vsel %vm207, %v496, 0
        %v529 = vsel %vm207, %v497, 0
        %v532 = vsel %vm207, %v498, 0
        %v535 = vsel %vm207, %v499, 0
        %v537 = vsel %vm232, %v510, 0
        %v539 = vsel %vm232, %v507, 0
        %541 = vmatprep.subr.mxu0 0.0
        %542 = vmatpush1.msra.mxu0 0.0
        %543 = vmatprep.subr.mxu0 0.0
        %544 = vmatpush1.msra.mxu0 0.0
        %545 = vmatprep.subr.mxu0 0.0
        %546 = vmatpush1.msra.mxu0 0.0
        %547 = vmatprep.subr.mxu0 0.0
        %548 = vmatpush1.msra.mxu0 0.0
        %549 = vmatprep.subr.mxu0 0.0
        %550 = vmatpush1.msra.mxu0 0.0
        %551 = vmatprep.subr.mxu0 0.0
        %552 = vmatpush1.msra.mxu0 0.0
        %553 = vmatprep.subr.mxu0 0.0
        %554 = vmatpush1.msra.mxu0 0.0
        %555 = vmatprep.subr.mxu0 0.0
        %556 = vmatpush1.msra.mxu0 0.0
        %557 = vmatprep.subr.mxu0 0.0
        %558 = vmatpush1.msra.mxu0 0.0
        %559 = vmatprep.subr.mxu0 0.0
        %560 = vmatpush1.msra.mxu0 0.0
        %561 = vmatprep.subr.mxu0 0.0
        %562 = vmatpush1.msra.mxu0 0.0
        %563 = vmatprep.subr.mxu0 0.0
        %564 = vmatpush1.msra.mxu0 0.0
        %565 = vmatprep.subr.mxu0 0.0
        %566 = vmatpush1.msra.mxu0 0.0
        %567 = vmatprep.subr.mxu0 0.0
        %568 = vmatpush1.msra.mxu0 0.0
        %569 = vmatprep.subr.mxu0 %v539
        %570 = vmatpush1.msra.mxu0 %v537
        %571 = vmatprep.subr.mxu0 %v503
        %572 = vmatpush1.msra.mxu0 %v509
        %573 = vmatprep.subr.mxu0 0.0
        %574 = vmatpush2.msra.mxu0 0.0
        %575 = vmatprep.subr.mxu0 0.0
        %576 = vmatpush2.msra.mxu0 0.0
        %577 = vmatprep.subr.mxu0 0.0
        %578 = vmatpush2.msra.mxu0 0.0
        %579 = vmatprep.subr.mxu0 0.0
        %580 = vmatpush2.msra.mxu0 0.0
        %581 = vmatprep.subr.mxu0 0.0
        %582 = vmatpush2.msra.mxu0 0.0
        %583 = vmatprep.subr.mxu0 0.0
        %584 = vmatpush2.msra.mxu0 0.0
        %585 = vmatprep.subr.mxu0 0.0
        %586 = vmatpush2.msra.mxu0 0.0
        %587 = vmatprep.subr.mxu0 0.0
        %588 = vmatpush2.msra.mxu0 0.0
        %589 = vmatprep.subr.mxu0 0.0
        %590 = vmatpush2.msra.mxu0 0.0
        %591 = vmatprep.subr.mxu0 0.0
        %592 = vmatpush2.msra.mxu0 0.0
        %593 = vmatprep.subr.mxu0 0.0
        %594 = vmatpush2.msra.mxu0 0.0
        %595 = vmatprep.subr.mxu0 0.0
        %596 = vmatpush2.msra.mxu0 0.0
        %597 = vmatprep.subr.mxu0 0.0
        %598 = vmatpush2.msra.mxu0 0.0
        %599 = vmatprep.subr.mxu0 0.0
        %600 = vmatpush2.msra.mxu0 0.0
        %601 = vmatprep.subr.mxu0 0.0
        %602 = vmatpush2.msra.mxu0 0.0
        %603 = vmatprep.subr.mxu0 0.0
        %604 = vmatpush2.msra.mxu0 0.0
        %605 = vmatprep.mubr.f32.mxu0 0.0
        %606 = vmatmul.mubr.f32.gmra.mxu0 %v514
        %v607 = vpop.f32.mrf.mxu0
        %v608 = vadd.f32 0.0, %v607
        %v609 = vpop.f32.mrf.mxu0
        %v610 = vadd.f32 0.0, %v609
        %611 = vmatprep.mubr.f32.mxu0 0.0
        %612 = vmatmul.mubr.f32.gmra.mxu0 %v517
        %v613 = vpop.f32.mrf.mxu0
        %v614 = vadd.f32 0.0, %v613
        %v615 = vpop.f32.mrf.mxu0
        %v616 = vadd.f32 0.0, %v615
        %617 = vmatprep.mubr.f32.mxu0 0.0
        %618 = vmatmul.mubr.f32.gmra.mxu0 %v520
        %v619 = vpop.f32.mrf.mxu0
        %v620 = vadd.f32 0.0, %v619
        %v621 = vpop.f32.mrf.mxu0
        %v622 = vadd.f32 0.0, %v621
        %623 = vmatprep.mubr.f32.mxu0 0.0
        %624 = vmatmul.mubr.f32.gmra.mxu0 %v523
        %v625 = vpop.f32.mrf.mxu0
        %v626 = vadd.f32 0.0, %v625
        %v627 = vpop.f32.mrf.mxu0
        %v628 = vadd.f32 0.0, %v627
        %629 = vmatprep.mubr.f32.mxu0 0.0
        %630 = vmatmul.mubr.f32.gmra.mxu0 %v526
        %v631 = vpop.f32.mrf.mxu0
        %v632 = vadd.f32 0.0, %v631
        %v633 = vpop.f32.mrf.mxu0
        %v634 = vadd.f32 0.0, %v633
        %635 = vmatprep.mubr.f32.mxu0 0.0
        %636 = vmatmul.mubr.f32.gmra.mxu0 %v529
        %v637 = vpop.f32.mrf.mxu0
        %v638 = vadd.f32 0.0, %v637
        %v639 = vpop.f32.mrf.mxu0
        %v640 = vadd.f32 0.0, %v639
        %641 = vmatprep.mubr.f32.mxu0 0.0
        %642 = vmatmul.mubr.f32.gmra.mxu0 %v532
        %v643 = vpop.f32.mrf.mxu0
        %v644 = vadd.f32 0.0, %v643
        %v645 = vpop.f32.mrf.mxu0
        %v646 = vadd.f32 0.0, %v645
        %647 = vmatprep.mubr.f32.mxu0 0.0
        %648 = vmatmul.mubr.f32.gmra.mxu0 %v535
        %v649 = vpop.f32.mrf.mxu0
        %v650 = vadd.f32 0.0, %v649
        %v651 = vpop.f32.mrf.mxu0
        %v652 = vadd.f32 0.0, %v651
        %653 = vdwg.mxu0
        %v654 = vadd.f32 %v445, %v608
        %v655 = vadd.f32 %v447, %v610
        %v656 = vadd.f32 %v451, %v614
        %v657 = vadd.f32 %v453, %v616
        %v658 = vadd.f32 %v457, %v620
        %v659 = vadd.f32 %v459, %v622
        %v660 = vadd.f32 %v463, %v626
        %v661 = vadd.f32 %v465, %v628
        %v662 = vadd.f32 %v469, %v632
        %v663 = vadd.f32 %v471, %v634
        %v664 = vadd.f32 %v475, %v638
        %v665 = vadd.f32 %v477, %v640
        %v666 = vadd.f32 %v481, %v644
        %v667 = vadd.f32 %v483, %v646
        %v668 = vadd.f32 %v487, %v650
        %v669 = vadd.f32 %v489, %v652
        %s670 = scalar_lea.vmem %s1, 192
        %v671 = vld [vmem:[%s670] sm:$0xff]
        %v672 = vld [vmem:[%s670 + $0x8] sm:$0xff]
        %v673 = vld [vmem:[%s670 + $0x10] sm:$0xff]
        %v674 = vld [vmem:[%s670 + $0x18] sm:$0xff]
        %v675 = vld [vmem:[%s670 + $0x20] sm:$0xff]
        %v676 = vld [vmem:[%s670 + $0x28] sm:$0xff]
        %v677 = vld [vmem:[%s670 + $0x30] sm:$0xff]
        %v678 = vld [vmem:[%s670 + $0x38] sm:$0xff]
        %679 = vrot.lane.b32.xlu0 %v169, 125
        %v680 = vpop.permute.xlu0 %679
        %681 = vrot.lane.b32.xlu0 %v170, 125
        %v682 = vpop.permute.xlu0 %681
        %683 = vrot.lane.b32.xlu0 %v171, 125
        %v684 = vpop.permute.xlu0 %683
        %685 = vrot.lane.b32.xlu0 %v172, 125
        %v686 = vpop.permute.xlu0 %685
        %vm687 = vcmask 1022976
        %v688 = vsel %vm687, %v680, %v682
        %v689 = vsel %vm687, %v684, %v686
        %v693 = vsel %vm207, %v671, 0
        %v696 = vsel %vm207, %v672, 0
        %v699 = vsel %vm207, %v673, 0
        %v702 = vsel %vm207, %v674, 0
        %v705 = vsel %vm207, %v675, 0
        %v708 = vsel %vm207, %v676, 0
        %v711 = vsel %vm207, %v677, 0
        %v714 = vsel %vm207, %v678, 0
        %v716 = vsel %vm232, %v689, 0
        %v718 = vsel %vm232, %v686, 0
        %720 = vmatprep.subr.mxu0 0.0
        %721 = vmatpush1.msra.mxu0 0.0
        %722 = vmatprep.subr.mxu0 0.0
        %723 = vmatpush1.msra.mxu0 0.0
        %724 = vmatprep.subr.mxu0 0.0
        %725 = vmatpush1.msra.mxu0 0.0
        %726 = vmatprep.subr.mxu0 0.0
        %727 = vmatpush1.msra.mxu0 0.0
        %728 = vmatprep.subr.mxu0 0.0
        %729 = vmatpush1.msra.mxu0 0.0
        %730 = vmatprep.subr.mxu0 0.0
        %731 = vmatpush1.msra.mxu0 0.0
        %732 = vmatprep.subr.mxu0 0.0
        %733 = vmatpush1.msra.mxu0 0.0
        %734 = vmatprep.subr.mxu0 0.0
        %735 = vmatpush1.msra.mxu0 0.0
        %736 = vmatprep.subr.mxu0 0.0
        %737 = vmatpush1.msra.mxu0 0.0
        %738 = vmatprep.subr.mxu0 0.0
        %739 = vmatpush1.msra.mxu0 0.0
        %740 = vmatprep.subr.mxu0 0.0
        %741 = vmatpush1.msra.mxu0 0.0
        %742 = vmatprep.subr.mxu0 0.0
        %743 = vmatpush1.msra.mxu0 0.0
        %744 = vmatprep.subr.mxu0 0.0
        %745 = vmatpush1.msra.mxu0 0.0
        %746 = vmatprep.subr.mxu0 0.0
        %747 = vmatpush1.msra.mxu0 0.0
        %748 = vmatprep.subr.mxu0 %v718
        %749 = vmatpush1.msra.mxu0 %v716
        %750 = vmatprep.subr.mxu0 %v682
        %751 = vmatpush1.msra.mxu0 %v688
        %752 = vmatprep.subr.mxu0 0.0
        %753 = vmatpush2.msra.mxu0 0.0
        %754 = vmatprep.subr.mxu0 0.0
        %755 = vmatpush2.msra.mxu0 0.0
        %756 = vmatprep.subr.mxu0 0.0
        %757 = vmatpush2.msra.mxu0 0.0
        %758 = vmatprep.subr.mxu0 0.0
        %759 = vmatpush2.msra.mxu0 0.0
        %760 = vmatprep.subr.mxu0 0.0
        %761 = vmatpush2.msra.mxu0 0.0
        %762 = vmatprep.subr.mxu0 0.0
        %763 = vmatpush2.msra.mxu0 0.0
        %764 = vmatprep.subr.mxu0 0.0
        %765 = vmatpush2.msra.mxu0 0.0
        %766 = vmatprep.subr.mxu0 0.0
        %767 = vmatpush2.msra.mxu0 0.0
        %768 = vmatprep.subr.mxu0 0.0
        %769 = vmatpush2.msra.mxu0 0.0
        %770 = vmatprep.subr.mxu0 0.0
        %771 = vmatpush2.msra.mxu0 0.0
        %772 = vmatprep.subr.mxu0 0.0
        %773 = vmatpush2.msra.mxu0 0.0
        %774 = vmatprep.subr.mxu0 0.0
        %775 = vmatpush2.msra.mxu0 0.0
        %776 = vmatprep.subr.mxu0 0.0
        %777 = vmatpush2.msra.mxu0 0.0
        %778 = vmatprep.subr.mxu0 0.0
        %779 = vmatpush2.msra.mxu0 0.0
        %780 = vmatprep.subr.mxu0 0.0
        %781 = vmatpush2.msra.mxu0 0.0
        %782 = vmatprep.subr.mxu0 0.0
        %783 = vmatpush2.msra.mxu0 0.0
        %784 = vmatprep.mubr.f32.mxu0 0.0
        %785 = vmatmul.mubr.f32.gmra.mxu0 %v693
        %v786 = vpop.f32.mrf.mxu0
        %v787 = vadd.f32 0.0, %v786
        %v788 = vpop.f32.mrf.mxu0
        %v789 = vadd.f32 0.0, %v788
        %790 = vmatprep.mubr.f32.mxu0 0.0
        %791 = vmatmul.mubr.f32.gmra.mxu0 %v696
        %v792 = vpop.f32.mrf.mxu0
        %v793 = vadd.f32 0.0, %v792
        %v794 = vpop.f32.mrf.mxu0
        %v795 = vadd.f32 0.0, %v794
        %796 = vmatprep.mubr.f32.mxu0 0.0
        %797 = vmatmul.mubr.f32.gmra.mxu0 %v699
        %v798 = vpop.f32.mrf.mxu0
        %v799 = vadd.f32 0.0, %v798
        %v800 = vpop.f32.mrf.mxu0
        %v801 = vadd.f32 0.0, %v800
        %802 = vmatprep.mubr.f32.mxu0 0.0
        %803 = vmatmul.mubr.f32.gmra.mxu0 %v702
        %v804 = vpop.f32.mrf.mxu0
        %v805 = vadd.f32 0.0, %v804
        %v806 = vpop.f32.mrf.mxu0
        %v807 = vadd.f32 0.0, %v806
        %808 = vmatprep.mubr.f32.mxu0 0.0
        %809 = vmatmul.mubr.f32.gmra.mxu0 %v705
        %v810 = vpop.f32.mrf.mxu0
        %v811 = vadd.f32 0.0, %v810
        %v812 = vpop.f32.mrf.mxu0
        %v813 = vadd.f32 0.0, %v812
        %814 = vmatprep.mubr.f32.mxu0 0.0
        %815 = vmatmul.mubr.f32.gmra.mxu0 %v708
        %v816 = vpop.f32.mrf.mxu0
        %v817 = vadd.f32 0.0, %v816
        %v818 = vpop.f32.mrf.mxu0
        %v819 = vadd.f32 0.0, %v818
        %820 = vmatprep.mubr.f32.mxu0 0.0
        %821 = vmatmul.mubr.f32.gmra.mxu0 %v711
        %v822 = vpop.f32.mrf.mxu0
        %v823 = vadd.f32 0.0, %v822
        %v824 = vpop.f32.mrf.mxu0
        %v825 = vadd.f32 0.0, %v824
        %826 = vmatprep.mubr.f32.mxu0 0.0
        %827 = vmatmul.mubr.f32.gmra.mxu0 %v714
        %v828 = vpop.f32.mrf.mxu0
        %v829 = vadd.f32 0.0, %v828
        %v830 = vpop.f32.mrf.mxu0
        %v831 = vadd.f32 0.0, %v830
        %832 = vdwg.mxu0
        %v833 = vadd.f32 %v654, %v787
        %v834 = vadd.f32 %v655, %v789
        %v835 = vadd.f32 %v656, %v793
        %v836 = vadd.f32 %v657, %v795
        %v837 = vadd.f32 %v658, %v799
        %v838 = vadd.f32 %v659, %v801
        %v839 = vadd.f32 %v660, %v805
        %v840 = vadd.f32 %v661, %v807
        %v841 = vadd.f32 %v662, %v811
        %v842 = vadd.f32 %v663, %v813
        %v843 = vadd.f32 %v664, %v817
        %v844 = vadd.f32 %v665, %v819
        %v845 = vadd.f32 %v666, %v823
        %v846 = vadd.f32 %v667, %v825
        %v847 = vadd.f32 %v668, %v829
        %v848 = vadd.f32 %v669, %v831
        %s849 = scalar_lea.vmem %s1, 256
        %v850 = vld [vmem:[%s849] sm:$0xff]
        %v851 = vld [vmem:[%s849 + $0x8] sm:$0xff]
        %v852 = vld [vmem:[%s849 + $0x10] sm:$0xff]
        %v853 = vld [vmem:[%s849 + $0x18] sm:$0xff]
        %v854 = vld [vmem:[%s849 + $0x20] sm:$0xff]
        %v855 = vld [vmem:[%s849 + $0x28] sm:$0xff]
        %v856 = vld [vmem:[%s849 + $0x30] sm:$0xff]
        %v857 = vld [vmem:[%s849 + $0x38] sm:$0xff]
        %858 = vrot.lane.b32.xlu0 %v169, 124
        %v859 = vpop.permute.xlu0 %858
        %860 = vrot.lane.b32.xlu0 %v170, 124
        %v861 = vpop.permute.xlu0 %860
        %862 = vrot.lane.b32.xlu0 %v171, 124
        %v863 = vpop.permute.xlu0 %862
        %864 = vrot.lane.b32.xlu0 %v172, 124
        %v865 = vpop.permute.xlu0 %864
        %vm866 = vcmask 1014784
        %v867 = vsel %vm866, %v859, %v861
        %v868 = vsel %vm866, %v863, %v865
        %v872 = vsel %vm207, %v850, 0
        %v875 = vsel %vm207, %v851, 0
        %v878 = vsel %vm207, %v852, 0
        %v881 = vsel %vm207, %v853, 0
        %v884 = vsel %vm207, %v854, 0
        %v887 = vsel %vm207, %v855, 0
        %v890 = vsel %vm207, %v856, 0
        %v893 = vsel %vm207, %v857, 0
        %v895 = vsel %vm232, %v868, 0
        %v897 = vsel %vm232, %v865, 0
        %899 = vmatprep.subr.mxu0 0.0
        %900 = vmatpush1.msra.mxu0 0.0
        %901 = vmatprep.subr.mxu0 0.0
        %902 = vmatpush1.msra.mxu0 0.0
        %903 = vmatprep.subr.mxu0 0.0
        %904 = vmatpush1.msra.mxu0 0.0
        %905 = vmatprep.subr.mxu0 0.0
        %906 = vmatpush1.msra.mxu0 0.0
        %907 = vmatprep.subr.mxu0 0.0
        %908 = vmatpush1.msra.mxu0 0.0
        %909 = vmatprep.subr.mxu0 0.0
        %910 = vmatpush1.msra.mxu0 0.0
        %911 = vmatprep.subr.mxu0 0.0
        %912 = vmatpush1.msra.mxu0 0.0
        %913 = vmatprep.subr.mxu0 0.0
        %914 = vmatpush1.msra.mxu0 0.0
        %915 = vmatprep.subr.mxu0 0.0
        %916 = vmatpush1.msra.mxu0 0.0
        %917 = vmatprep.subr.mxu0 0.0
        %918 = vmatpush1.msra.mxu0 0.0
        %919 = vmatprep.subr.mxu0 0.0
        %920 = vmatpush1.msra.mxu0 0.0
        %921 = vmatprep.subr.mxu0 0.0
        %922 = vmatpush1.msra.mxu0 0.0
        %923 = vmatprep.subr.mxu0 0.0
        %924 = vmatpush1.msra.mxu0 0.0
        %925 = vmatprep.subr.mxu0 0.0
        %926 = vmatpush1.msra.mxu0 0.0
        %927 = vmatprep.subr.mxu0 %v897
        %928 = vmatpush1.msra.mxu0 %v895
        %929 = vmatprep.subr.mxu0 %v861
        %930 = vmatpush1.msra.mxu0 %v867
        %931 = vmatprep.subr.mxu0 0.0
        %932 = vmatpush2.msra.mxu0 0.0
        %933 = vmatprep.subr.mxu0 0.0
        %934 = vmatpush2.msra.mxu0 0.0
        %935 = vmatprep.subr.mxu0 0.0
        %936 = vmatpush2.msra.mxu0 0.0
        %937 = vmatprep.subr.mxu0 0.0
        %938 = vmatpush2.msra.mxu0 0.0
        %939 = vmatprep.subr.mxu0 0.0
        %940 = vmatpush2.msra.mxu0 0.0
        %941 = vmatprep.subr.mxu0 0.0
        %942 = vmatpush2.msra.mxu0 0.0
        %943 = vmatprep.subr.mxu0 0.0
        %944 = vmatpush2.msra.mxu0 0.0
        %945 = vmatprep.subr.mxu0 0.0
        %946 = vmatpush2.msra.mxu0 0.0
        %947 = vmatprep.subr.mxu0 0.0
        %948 = vmatpush2.msra.mxu0 0.0
        %949 = vmatprep.subr.mxu0 0.0
        %950 = vmatpush2.msra.mxu0 0.0
        %951 = vmatprep.subr.mxu0 0.0
        %952 = vmatpush2.msra.mxu0 0.0
        %953 = vmatprep.subr.mxu0 0.0
        %954 = vmatpush2.msra.mxu0 0.0
        %955 = vmatprep.subr.mxu0 0.0
        %956 = vmatpush2.msra.mxu0 0.0
        %957 = vmatprep.subr.mxu0 0.0
        %958 = vmatpush2.msra.mxu0 0.0
        %959 = vmatprep.subr.mxu0 0.0
        %960 = vmatpush2.msra.mxu0 0.0
        %961 = vmatprep.subr.mxu0 0.0
        %962 = vmatpush2.msra.mxu0 0.0
        %963 = vmatprep.mubr.f32.mxu0 0.0
        %964 = vmatmul.mubr.f32.gmra.mxu0 %v872
        %v965 = vpop.f32.mrf.mxu0
        %v966 = vadd.f32 0.0, %v965
        %v967 = vpop.f32.mrf.mxu0
        %v968 = vadd.f32 0.0, %v967
        %969 = vmatprep.mubr.f32.mxu0 0.0
        %970 = vmatmul.mubr.f32.gmra.mxu0 %v875
        %v971 = vpop.f32.mrf.mxu0
        %v972 = vadd.f32 0.0, %v971
        %v973 = vpop.f32.mrf.mxu0
        %v974 = vadd.f32 0.0, %v973
        %975 = vmatprep.mubr.f32.mxu0 0.0
        %976 = vmatmul.mubr.f32.gmra.mxu0 %v878
        %v977 = vpop.f32.mrf.mxu0
        %v978 = vadd.f32 0.0, %v977
        %v979 = vpop.f32.mrf.mxu0
        %v980 = vadd.f32 0.0, %v979
        %981 = vmatprep.mubr.f32.mxu0 0.0
        %982 = vmatmul.mubr.f32.gmra.mxu0 %v881
        %v983 = vpop.f32.mrf.mxu0
        %v984 = vadd.f32 0.0, %v983
        %v985 = vpop.f32.mrf.mxu0
        %v986 = vadd.f32 0.0, %v985
        %987 = vmatprep.mubr.f32.mxu0 0.0
        %988 = vmatmul.mubr.f32.gmra.mxu0 %v884
        %v989 = vpop.f32.mrf.mxu0
        %v990 = vadd.f32 0.0, %v989
        %v991 = vpop.f32.mrf.mxu0
        %v992 = vadd.f32 0.0, %v991
        %993 = vmatprep.mubr.f32.mxu0 0.0
        %994 = vmatmul.mubr.f32.gmra.mxu0 %v887
        %v995 = vpop.f32.mrf.mxu0
        %v996 = vadd.f32 0.0, %v995
        %v997 = vpop.f32.mrf.mxu0
        %v998 = vadd.f32 0.0, %v997
        %999 = vmatprep.mubr.f32.mxu0 0.0
        %1000 = vmatmul.mubr.f32.gmra.mxu0 %v890
        %v1001 = vpop.f32.mrf.mxu0
        %v1002 = vadd.f32 0.0, %v1001
        %v1003 = vpop.f32.mrf.mxu0
        %v1004 = vadd.f32 0.0, %v1003
        %1005 = vmatprep.mubr.f32.mxu0 0.0
        %1006 = vmatmul.mubr.f32.gmra.mxu0 %v893
        %v1007 = vpop.f32.mrf.mxu0
        %v1008 = vadd.f32 0.0, %v1007
        %v1009 = vpop.f32.mrf.mxu0
        %v1010 = vadd.f32 0.0, %v1009
        %1011 = vdwg.mxu0
        %v1012 = vadd.f32 %v833, %v966
        %v1013 = vadd.f32 %v834, %v968
        %v1014 = vadd.f32 %v835, %v972
        %v1015 = vadd.f32 %v836, %v974
        %v1016 = vadd.f32 %v837, %v978
        %v1017 = vadd.f32 %v838, %v980
        %v1018 = vadd.f32 %v839, %v984
        %v1019 = vadd.f32 %v840, %v986
        %v1020 = vadd.f32 %v841, %v990
        %v1021 = vadd.f32 %v842, %v992
        %v1022 = vadd.f32 %v843, %v996
        %v1023 = vadd.f32 %v844, %v998
        %v1024 = vadd.f32 %v845, %v1002
        %v1025 = vadd.f32 %v846, %v1004
        %v1026 = vadd.f32 %v847, %v1008
        %v1027 = vadd.f32 %v848, %v1010
        %s1028 = scalar_lea.vmem %s1, 320
        %v1029 = vld [vmem:[%s1028] sm:$0xff]
        %v1030 = vld [vmem:[%s1028 + $0x8] sm:$0xff]
        %v1031 = vld [vmem:[%s1028 + $0x10] sm:$0xff]
        %v1032 = vld [vmem:[%s1028 + $0x18] sm:$0xff]
        %v1033 = vld [vmem:[%s1028 + $0x20] sm:$0xff]
        %v1034 = vld [vmem:[%s1028 + $0x28] sm:$0xff]
        %v1035 = vld [vmem:[%s1028 + $0x30] sm:$0xff]
        %v1036 = vld [vmem:[%s1028 + $0x38] sm:$0xff]
        %1037 = vrot.lane.b32.xlu0 %v169, 123
        %v1038 = vpop.permute.xlu0 %1037
        %1039 = vrot.lane.b32.xlu0 %v170, 123
        %v1040 = vpop.permute.xlu0 %1039
        %1041 = vrot.lane.b32.xlu0 %v171, 123
        %v1042 = vpop.permute.xlu0 %1041
        %1043 = vrot.lane.b32.xlu0 %v172, 123
        %v1044 = vpop.permute.xlu0 %1043
        %vm1045 = vcmask 1006592
        %v1046 = vsel %vm1045, %v1038, %v1040
        %v1047 = vsel %vm1045, %v1042, %v1044
        %v1051 = vsel %vm207, %v1029, 0
        %v1054 = vsel %vm207, %v1030, 0
        %v1057 = vsel %vm207, %v1031, 0
        %v1060 = vsel %vm207, %v1032, 0
        %v1063 = vsel %vm207, %v1033, 0
        %v1066 = vsel %vm207, %v1034, 0
        %v1069 = vsel %vm207, %v1035, 0
        %v1072 = vsel %vm207, %v1036, 0
        %v1074 = vsel %vm232, %v1047, 0
        %v1076 = vsel %vm232, %v1044, 0
        %1078 = vmatprep.subr.mxu0 0.0
        %1079 = vmatpush1.msra.mxu0 0.0
        %1080 = vmatprep.subr.mxu0 0.0
        %1081 = vmatpush1.msra.mxu0 0.0
        %1082 = vmatprep.subr.mxu0 0.0
        %1083 = vmatpush1.msra.mxu0 0.0
        %1084 = vmatprep.subr.mxu0 0.0
        %1085 = vmatpush1.msra.mxu0 0.0
        %1086 = vmatprep.subr.mxu0 0.0
        %1087 = vmatpush1.msra.mxu0 0.0
        %1088 = vmatprep.subr.mxu0 0.0
        %1089 = vmatpush1.msra.mxu0 0.0
        %1090 = vmatprep.subr.mxu0 0.0
        %1091 = vmatpush1.msra.mxu0 0.0
        %1092 = vmatprep.subr.mxu0 0.0
        %1093 = vmatpush1.msra.mxu0 0.0
        %1094 = vmatprep.subr.mxu0 0.0
        %1095 = vmatpush1.msra.mxu0 0.0
        %1096 = vmatprep.subr.mxu0 0.0
        %1097 = vmatpush1.msra.mxu0 0.0
        %1098 = vmatprep.subr.mxu0 0.0
        %1099 = vmatpush1.msra.mxu0 0.0
        %1100 = vmatprep.subr.mxu0 0.0
        %1101 = vmatpush1.msra.mxu0 0.0
        %1102 = vmatprep.subr.mxu0 0.0
        %1103 = vmatpush1.msra.mxu0 0.0
        %1104 = vmatprep.subr.mxu0 0.0
        %1105 = vmatpush1.msra.mxu0 0.0
        %1106 = vmatprep.subr.mxu0 %v1076
        %1107 = vmatpush1.msra.mxu0 %v1074
        %1108 = vmatprep.subr.mxu0 %v1040
        %1109 = vmatpush1.msra.mxu0 %v1046
        %1110 = vmatprep.subr.mxu0 0.0
        %1111 = vmatpush2.msra.mxu0 0.0
        %1112 = vmatprep.subr.mxu0 0.0
        %1113 = vmatpush2.msra.mxu0 0.0
        %1114 = vmatprep.subr.mxu0 0.0
        %1115 = vmatpush2.msra.mxu0 0.0
        %1116 = vmatprep.subr.mxu0 0.0
        %1117 = vmatpush2.msra.mxu0 0.0
        %1118 = vmatprep.subr.mxu0 0.0
        %1119 = vmatpush2.msra.mxu0 0.0
        %1120 = vmatprep.subr.mxu0 0.0
        %1121 = vmatpush2.msra.mxu0 0.0
        %1122 = vmatprep.subr.mxu0 0.0
        %1123 = vmatpush2.msra.mxu0 0.0
        %1124 = vmatprep.subr.mxu0 0.0
        %1125 = vmatpush2.msra.mxu0 0.0
        %1126 = vmatprep.subr.mxu0 0.0
        %1127 = vmatpush2.msra.mxu0 0.0
        %1128 = vmatprep.subr.mxu0 0.0
        %1129 = vmatpush2.msra.mxu0 0.0
        %1130 = vmatprep.subr.mxu0 0.0
        %1131 = vmatpush2.msra.mxu0 0.0
        %1132 = vmatprep.subr.mxu0 0.0
        %1133 = vmatpush2.msra.mxu0 0.0
        %1134 = vmatprep.subr.mxu0 0.0
        %1135 = vmatpush2.msra.mxu0 0.0
        %1136 = vmatprep.subr.mxu0 0.0
        %1137 = vmatpush2.msra.mxu0 0.0
        %1138 = vmatprep.subr.mxu0 0.0
        %1139 = vmatpush2.msra.mxu0 0.0
        %1140 = vmatprep.subr.mxu0 0.0
        %1141 = vmatpush2.msra.mxu0 0.0
        %1142 = vmatprep.mubr.f32.mxu0 0.0
        %1143 = vmatmul.mubr.f32.gmra.mxu0 %v1051
        %v1144 = vpop.f32.mrf.mxu0
        %v1145 = vadd.f32 0.0, %v1144
        %v1146 = vpop.f32.mrf.mxu0
        %v1147 = vadd.f32 0.0, %v1146
        %1148 = vmatprep.mubr.f32.mxu0 0.0
        %1149 = vmatmul.mubr.f32.gmra.mxu0 %v1054
        %v1150 = vpop.f32.mrf.mxu0
        %v1151 = vadd.f32 0.0, %v1150
        %v1152 = vpop.f32.mrf.mxu0
        %v1153 = vadd.f32 0.0, %v1152
        %1154 = vmatprep.mubr.f32.mxu0 0.0
        %1155 = vmatmul.mubr.f32.gmra.mxu0 %v1057
        %v1156 = vpop.f32.mrf.mxu0
        %v1157 = vadd.f32 0.0, %v1156
        %v1158 = vpop.f32.mrf.mxu0
        %v1159 = vadd.f32 0.0, %v1158
        %1160 = vmatprep.mubr.f32.mxu0 0.0
        %1161 = vmatmul.mubr.f32.gmra.mxu0 %v1060
        %v1162 = vpop.f32.mrf.mxu0
        %v1163 = vadd.f32 0.0, %v1162
        %v1164 = vpop.f32.mrf.mxu0
        %v1165 = vadd.f32 0.0, %v1164
        %1166 = vmatprep.mubr.f32.mxu0 0.0
        %1167 = vmatmul.mubr.f32.gmra.mxu0 %v1063
        %v1168 = vpop.f32.mrf.mxu0
        %v1169 = vadd.f32 0.0, %v1168
        %v1170 = vpop.f32.mrf.mxu0
        %v1171 = vadd.f32 0.0, %v1170
        %1172 = vmatprep.mubr.f32.mxu0 0.0
        %1173 = vmatmul.mubr.f32.gmra.mxu0 %v1066
        %v1174 = vpop.f32.mrf.mxu0
        %v1175 = vadd.f32 0.0, %v1174
        %v1176 = vpop.f32.mrf.mxu0
        %v1177 = vadd.f32 0.0, %v1176
        %1178 = vmatprep.mubr.f32.mxu0 0.0
        %1179 = vmatmul.mubr.f32.gmra.mxu0 %v1069
        %v1180 = vpop.f32.mrf.mxu0
        %v1181 = vadd.f32 0.0, %v1180
        %v1182 = vpop.f32.mrf.mxu0
        %v1183 = vadd.f32 0.0, %v1182
        %1184 = vmatprep.mubr.f32.mxu0 0.0
        %1185 = vmatmul.mubr.f32.gmra.mxu0 %v1072
        %v1186 = vpop.f32.mrf.mxu0
        %v1187 = vadd.f32 0.0, %v1186
        %v1188 = vpop.f32.mrf.mxu0
        %v1189 = vadd.f32 0.0, %v1188
        %1190 = vdwg.mxu0
        %v1191 = vadd.f32 %v1012, %v1145
        %v1192 = vadd.f32 %v1013, %v1147
        %v1193 = vadd.f32 %v1014, %v1151
        %v1194 = vadd.f32 %v1015, %v1153
        %v1195 = vadd.f32 %v1016, %v1157
        %v1196 = vadd.f32 %v1017, %v1159
        %v1197 = vadd.f32 %v1018, %v1163
        %v1198 = vadd.f32 %v1019, %v1165
        %v1199 = vadd.f32 %v1020, %v1169
        %v1200 = vadd.f32 %v1021, %v1171
        %v1201 = vadd.f32 %v1022, %v1175
        %v1202 = vadd.f32 %v1023, %v1177
        %v1203 = vadd.f32 %v1024, %v1181
        %v1204 = vadd.f32 %v1025, %v1183
        %v1205 = vadd.f32 %v1026, %v1187
        %v1206 = vadd.f32 %v1027, %v1189
        %s1207 = scalar_lea.vmem %s1, 384
        %v1208 = vld [vmem:[%s1207] sm:$0xff]
        %v1209 = vld [vmem:[%s1207 + $0x8] sm:$0xff]
        %v1210 = vld [vmem:[%s1207 + $0x10] sm:$0xff]
        %v1211 = vld [vmem:[%s1207 + $0x18] sm:$0xff]
        %v1212 = vld [vmem:[%s1207 + $0x20] sm:$0xff]
        %v1213 = vld [vmem:[%s1207 + $0x28] sm:$0xff]
        %v1214 = vld [vmem:[%s1207 + $0x30] sm:$0xff]
        %v1215 = vld [vmem:[%s1207 + $0x38] sm:$0xff]
        %1216 = vrot.lane.b32.xlu0 %v169, 122
        %v1217 = vpop.permute.xlu0 %1216
        %1218 = vrot.lane.b32.xlu0 %v170, 122
        %v1219 = vpop.permute.xlu0 %1218
        %1220 = vrot.lane.b32.xlu0 %v171, 122
        %v1221 = vpop.permute.xlu0 %1220
        %1222 = vrot.lane.b32.xlu0 %v172, 122
        %v1223 = vpop.permute.xlu0 %1222
        %vm1224 = vcmask 998400
        %v1225 = vsel %vm1224, %v1217, %v1219
        %v1226 = vsel %vm1224, %v1221, %v1223
        %v1230 = vsel %vm207, %v1208, 0
        %v1233 = vsel %vm207, %v1209, 0
        %v1236 = vsel %vm207, %v1210, 0
        %v1239 = vsel %vm207, %v1211, 0
        %v1242 = vsel %vm207, %v1212, 0
        %v1245 = vsel %vm207, %v1213, 0
        %v1248 = vsel %vm207, %v1214, 0
        %v1251 = vsel %vm207, %v1215, 0
        %v1253 = vsel %vm232, %v1226, 0
        %v1255 = vsel %vm232, %v1223, 0
        %1257 = vmatprep.subr.mxu0 0.0
        %1258 = vmatpush1.msra.mxu0 0.0
        %1259 = vmatprep.subr.mxu0 0.0
        %1260 = vmatpush1.msra.mxu0 0.0
        %1261 = vmatprep.subr.mxu0 0.0
        %1262 = vmatpush1.msra.mxu0 0.0
        %1263 = vmatprep.subr.mxu0 0.0
        %1264 = vmatpush1.msra.mxu0 0.0
        %1265 = vmatprep.subr.mxu0 0.0
        %1266 = vmatpush1.msra.mxu0 0.0
        %1267 = vmatprep.subr.mxu0 0.0
        %1268 = vmatpush1.msra.mxu0 0.0
        %1269 = vmatprep.subr.mxu0 0.0
        %1270 = vmatpush1.msra.mxu0 0.0
        %1271 = vmatprep.subr.mxu0 0.0
        %1272 = vmatpush1.msra.mxu0 0.0
        %1273 = vmatprep.subr.mxu0 0.0
        %1274 = vmatpush1.msra.mxu0 0.0
        %1275 = vmatprep.subr.mxu0 0.0
        %1276 = vmatpush1.msra.mxu0 0.0
        %1277 = vmatprep.subr.mxu0 0.0
        %1278 = vmatpush1.msra.mxu0 0.0
        %1279 = vmatprep.subr.mxu0 0.0
        %1280 = vmatpush1.msra.mxu0 0.0
        %1281 = vmatprep.subr.mxu0 0.0
        %1282 = vmatpush1.msra.mxu0 0.0
        %1283 = vmatprep.subr.mxu0 0.0
        %1284 = vmatpush1.msra.mxu0 0.0
        %1285 = vmatprep.subr.mxu0 %v1255
        %1286 = vmatpush1.msra.mxu0 %v1253
        %1287 = vmatprep.subr.mxu0 %v1219
        %1288 = vmatpush1.msra.mxu0 %v1225
        %1289 = vmatprep.subr.mxu0 0.0
        %1290 = vmatpush2.msra.mxu0 0.0
        %1291 = vmatprep.subr.mxu0 0.0
        %1292 = vmatpush2.msra.mxu0 0.0
        %1293 = vmatprep.subr.mxu0 0.0
        %1294 = vmatpush2.msra.mxu0 0.0
        %1295 = vmatprep.subr.mxu0 0.0
        %1296 = vmatpush2.msra.mxu0 0.0
        %1297 = vmatprep.subr.mxu0 0.0
        %1298 = vmatpush2.msra.mxu0 0.0
        %1299 = vmatprep.subr.mxu0 0.0
        %1300 = vmatpush2.msra.mxu0 0.0
        %1301 = vmatprep.subr.mxu0 0.0
        %1302 = vmatpush2.msra.mxu0 0.0
        %1303 = vmatprep.subr.mxu0 0.0
        %1304 = vmatpush2.msra.mxu0 0.0
        %1305 = vmatprep.subr.mxu0 0.0
        %1306 = vmatpush2.msra.mxu0 0.0
        %1307 = vmatprep.subr.mxu0 0.0
        %1308 = vmatpush2.msra.mxu0 0.0
        %1309 = vmatprep.subr.mxu0 0.0
        %1310 = vmatpush2.msra.mxu0 0.0
        %1311 = vmatprep.subr.mxu0 0.0
        %1312 = vmatpush2.msra.mxu0 0.0
        %1313 = vmatprep.subr.mxu0 0.0
        %1314 = vmatpush2.msra.mxu0 0.0
        %1315 = vmatprep.subr.mxu0 0.0
        %1316 = vmatpush2.msra.mxu0 0.0
        %1317 = vmatprep.subr.mxu0 0.0
        %1318 = vmatpush2.msra.mxu0 0.0
        %1319 = vmatprep.subr.mxu0 0.0
        %1320 = vmatpush2.msra.mxu0 0.0
        %1321 = vmatprep.mubr.f32.mxu0 0.0
        %1322 = vmatmul.mubr.f32.gmra.mxu0 %v1230
        %v1323 = vpop.f32.mrf.mxu0
        %v1324 = vadd.f32 0.0, %v1323
        %v1325 = vpop.f32.mrf.mxu0
        %v1326 = vadd.f32 0.0, %v1325
        %1327 = vmatprep.mubr.f32.mxu0 0.0
        %1328 = vmatmul.mubr.f32.gmra.mxu0 %v1233
        %v1329 = vpop.f32.mrf.mxu0
        %v1330 = vadd.f32 0.0, %v1329
        %v1331 = vpop.f32.mrf.mxu0
        %v1332 = vadd.f32 0.0, %v1331
        %1333 = vmatprep.mubr.f32.mxu0 0.0
        %1334 = vmatmul.mubr.f32.gmra.mxu0 %v1236
        %v1335 = vpop.f32.mrf.mxu0
        %v1336 = vadd.f32 0.0, %v1335
        %v1337 = vpop.f32.mrf.mxu0
        %v1338 = vadd.f32 0.0, %v1337
        %1339 = vmatprep.mubr.f32.mxu0 0.0
        %1340 = vmatmul.mubr.f32.gmra.mxu0 %v1239
        %v1341 = vpop.f32.mrf.mxu0
        %v1342 = vadd.f32 0.0, %v1341
        %v1343 = vpop.f32.mrf.mxu0
        %v1344 = vadd.f32 0.0, %v1343
        %1345 = vmatprep.mubr.f32.mxu0 0.0
        %1346 = vmatmul.mubr.f32.gmra.mxu0 %v1242
        %v1347 = vpop.f32.mrf.mxu0
        %v1348 = vadd.f32 0.0, %v1347
        %v1349 = vpop.f32.mrf.mxu0
        %v1350 = vadd.f32 0.0, %v1349
        %1351 = vmatprep.mubr.f32.mxu0 0.0
        %1352 = vmatmul.mubr.f32.gmra.mxu0 %v1245
        %v1353 = vpop.f32.mrf.mxu0
        %v1354 = vadd.f32 0.0, %v1353
        %v1355 = vpop.f32.mrf.mxu0
        %v1356 = vadd.f32 0.0, %v1355
        %1357 = vmatprep.mubr.f32.mxu0 0.0
        %1358 = vmatmul.mubr.f32.gmra.mxu0 %v1248
        %v1359 = vpop.f32.mrf.mxu0
        %v1360 = vadd.f32 0.0, %v1359
        %v1361 = vpop.f32.mrf.mxu0
        %v1362 = vadd.f32 0.0, %v1361
        %1363 = vmatprep.mubr.f32.mxu0 0.0
        %1364 = vmatmul.mubr.f32.gmra.mxu0 %v1251
        %v1365 = vpop.f32.mrf.mxu0
        %v1366 = vadd.f32 0.0, %v1365
        %v1367 = vpop.f32.mrf.mxu0
        %v1368 = vadd.f32 0.0, %v1367
        %1369 = vdwg.mxu0
        %v1370 = vadd.f32 %v1191, %v1324
        %v1371 = vadd.f32 %v1192, %v1326
        %v1372 = vadd.f32 %v1193, %v1330
        %v1373 = vadd.f32 %v1194, %v1332
        %v1374 = vadd.f32 %v1195, %v1336
        %v1375 = vadd.f32 %v1196, %v1338
        %v1376 = vadd.f32 %v1197, %v1342
        %v1377 = vadd.f32 %v1198, %v1344
        %v1378 = vadd.f32 %v1199, %v1348
        %v1379 = vadd.f32 %v1200, %v1350
        %v1380 = vadd.f32 %v1201, %v1354
        %v1381 = vadd.f32 %v1202, %v1356
        %v1382 = vadd.f32 %v1203, %v1360
        %v1383 = vadd.f32 %v1204, %v1362
        %v1384 = vadd.f32 %v1205, %v1366
        %v1385 = vadd.f32 %v1206, %v1368
        %s1386 = scalar_lea.vmem %s1, 448
        %v1387 = vld [vmem:[%s1386] sm:$0xff]
        %v1388 = vld [vmem:[%s1386 + $0x8] sm:$0xff]
        %v1389 = vld [vmem:[%s1386 + $0x10] sm:$0xff]
        %v1390 = vld [vmem:[%s1386 + $0x18] sm:$0xff]
        %v1391 = vld [vmem:[%s1386 + $0x20] sm:$0xff]
        %v1392 = vld [vmem:[%s1386 + $0x28] sm:$0xff]
        %v1393 = vld [vmem:[%s1386 + $0x30] sm:$0xff]
        %v1394 = vld [vmem:[%s1386 + $0x38] sm:$0xff]
        %1395 = vrot.lane.b32.xlu0 %v169, 121
        %v1396 = vpop.permute.xlu0 %1395
        %1397 = vrot.lane.b32.xlu0 %v170, 121
        %v1398 = vpop.permute.xlu0 %1397
        %1399 = vrot.lane.b32.xlu0 %v171, 121
        %v1400 = vpop.permute.xlu0 %1399
        %1401 = vrot.lane.b32.xlu0 %v172, 121
        %v1402 = vpop.permute.xlu0 %1401
        %vm1403 = vcmask 990208
        %v1404 = vsel %vm1403, %v1396, %v1398
        %v1405 = vsel %vm1403, %v1400, %v1402
        %v1409 = vsel %vm207, %v1387, 0
        %v1412 = vsel %vm207, %v1388, 0
        %v1415 = vsel %vm207, %v1389, 0
        %v1418 = vsel %vm207, %v1390, 0
        %v1421 = vsel %vm207, %v1391, 0
        %v1424 = vsel %vm207, %v1392, 0
        %v1427 = vsel %vm207, %v1393, 0
        %v1430 = vsel %vm207, %v1394, 0
        %v1432 = vsel %vm232, %v1405, 0
        %v1434 = vsel %vm232, %v1402, 0
        %1436 = vmatprep.subr.mxu0 0.0
        %1437 = vmatpush1.msra.mxu0 0.0
        %1438 = vmatprep.subr.mxu0 0.0
        %1439 = vmatpush1.msra.mxu0 0.0
        %1440 = vmatprep.subr.mxu0 0.0
        %1441 = vmatpush1.msra.mxu0 0.0
        %1442 = vmatprep.subr.mxu0 0.0
        %1443 = vmatpush1.msra.mxu0 0.0
        %1444 = vmatprep.subr.mxu0 0.0
        %1445 = vmatpush1.msra.mxu0 0.0
        %1446 = vmatprep.subr.mxu0 0.0
        %1447 = vmatpush1.msra.mxu0 0.0
        %1448 = vmatprep.subr.mxu0 0.0
        %1449 = vmatpush1.msra.mxu0 0.0
        %1450 = vmatprep.subr.mxu0 0.0
        %1451 = vmatpush1.msra.mxu0 0.0
        %1452 = vmatprep.subr.mxu0 0.0
        %1453 = vmatpush1.msra.mxu0 0.0
        %1454 = vmatprep.subr.mxu0 0.0
        %1455 = vmatpush1.msra.mxu0 0.0
        %1456 = vmatprep.subr.mxu0 0.0
        %1457 = vmatpush1.msra.mxu0 0.0
        %1458 = vmatprep.subr.mxu0 0.0
        %1459 = vmatpush1.msra.mxu0 0.0
        %1460 = vmatprep.subr.mxu0 0.0
        %1461 = vmatpush1.msra.mxu0 0.0
        %1462 = vmatprep.subr.mxu0 0.0
        %1463 = vmatpush1.msra.mxu0 0.0
        %1464 = vmatprep.subr.mxu0 %v1434
        %1465 = vmatpush1.msra.mxu0 %v1432
        %1466 = vmatprep.subr.mxu0 %v1398
        %1467 = vmatpush1.msra.mxu0 %v1404
        %1468 = vmatprep.subr.mxu0 0.0
        %1469 = vmatpush2.msra.mxu0 0.0
        %1470 = vmatprep.subr.mxu0 0.0
        %1471 = vmatpush2.msra.mxu0 0.0
        %1472 = vmatprep.subr.mxu0 0.0
        %1473 = vmatpush2.msra.mxu0 0.0
        %1474 = vmatprep.subr.mxu0 0.0
        %1475 = vmatpush2.msra.mxu0 0.0
        %1476 = vmatprep.subr.mxu0 0.0
        %1477 = vmatpush2.msra.mxu0 0.0
        %1478 = vmatprep.subr.mxu0 0.0
        %1479 = vmatpush2.msra.mxu0 0.0
        %1480 = vmatprep.subr.mxu0 0.0
        %1481 = vmatpush2.msra.mxu0 0.0
        %1482 = vmatprep.subr.mxu0 0.0
        %1483 = vmatpush2.msra.mxu0 0.0
        %1484 = vmatprep.subr.mxu0 0.0
        %1485 = vmatpush2.msra.mxu0 0.0
        %1486 = vmatprep.subr.mxu0 0.0
        %1487 = vmatpush2.msra.mxu0 0.0
        %1488 = vmatprep.subr.mxu0 0.0
        %1489 = vmatpush2.msra.mxu0 0.0
        %1490 = vmatprep.subr.mxu0 0.0
        %1491 = vmatpush2.msra.mxu0 0.0
        %1492 = vmatprep.subr.mxu0 0.0
        %1493 = vmatpush2.msra.mxu0 0.0
        %1494 = vmatprep.subr.mxu0 0.0
        %1495 = vmatpush2.msra.mxu0 0.0
        %1496 = vmatprep.subr.mxu0 0.0
        %1497 = vmatpush2.msra.mxu0 0.0
        %1498 = vmatprep.subr.mxu0 0.0
        %1499 = vmatpush2.msra.mxu0 0.0
        %1500 = vmatprep.mubr.f32.mxu0 0.0
        %1501 = vmatmul.mubr.f32.gmra.mxu0 %v1409
        %v1502 = vpop.f32.mrf.mxu0
        %v1503 = vadd.f32 0.0, %v1502
        %v1504 = vpop.f32.mrf.mxu0
        %v1505 = vadd.f32 0.0, %v1504
        %1506 = vmatprep.mubr.f32.mxu0 0.0
        %1507 = vmatmul.mubr.f32.gmra.mxu0 %v1412
        %v1508 = vpop.f32.mrf.mxu0
        %v1509 = vadd.f32 0.0, %v1508
        %v1510 = vpop.f32.mrf.mxu0
        %v1511 = vadd.f32 0.0, %v1510
        %1512 = vmatprep.mubr.f32.mxu0 0.0
        %1513 = vmatmul.mubr.f32.gmra.mxu0 %v1415
        %v1514 = vpop.f32.mrf.mxu0
        %v1515 = vadd.f32 0.0, %v1514
        %v1516 = vpop.f32.mrf.mxu0
        %v1517 = vadd.f32 0.0, %v1516
        %1518 = vmatprep.mubr.f32.mxu0 0.0
        %1519 = vmatmul.mubr.f32.gmra.mxu0 %v1418
        %v1520 = vpop.f32.mrf.mxu0
        %v1521 = vadd.f32 0.0, %v1520
        %v1522 = vpop.f32.mrf.mxu0
        %v1523 = vadd.f32 0.0, %v1522
        %1524 = vmatprep.mubr.f32.mxu0 0.0
        %1525 = vmatmul.mubr.f32.gmra.mxu0 %v1421
        %v1526 = vpop.f32.mrf.mxu0
        %v1527 = vadd.f32 0.0, %v1526
        %v1528 = vpop.f32.mrf.mxu0
        %v1529 = vadd.f32 0.0, %v1528
        %1530 = vmatprep.mubr.f32.mxu0 0.0
        %1531 = vmatmul.mubr.f32.gmra.mxu0 %v1424
        %v1532 = vpop.f32.mrf.mxu0
        %v1533 = vadd.f32 0.0, %v1532
        %v1534 = vpop.f32.mrf.mxu0
        %v1535 = vadd.f32 0.0, %v1534
        %1536 = vmatprep.mubr.f32.mxu0 0.0
        %1537 = vmatmul.mubr.f32.gmra.mxu0 %v1427
        %v1538 = vpop.f32.mrf.mxu0
        %v1539 = vadd.f32 0.0, %v1538
        %v1540 = vpop.f32.mrf.mxu0
        %v1541 = vadd.f32 0.0, %v1540
        %1542 = vmatprep.mubr.f32.mxu0 0.0
        %1543 = vmatmul.mubr.f32.gmra.mxu0 %v1430
        %v1544 = vpop.f32.mrf.mxu0
        %v1545 = vadd.f32 0.0, %v1544
        %v1546 = vpop.f32.mrf.mxu0
        %v1547 = vadd.f32 0.0, %v1546
        %1548 = vdwg.mxu0
        %v1549 = vadd.f32 %v1370, %v1503
        %v1550 = vadd.f32 %v1371, %v1505
        %v1551 = vadd.f32 %v1372, %v1509
        %v1552 = vadd.f32 %v1373, %v1511
        %v1553 = vadd.f32 %v1374, %v1515
        %v1554 = vadd.f32 %v1375, %v1517
        %v1555 = vadd.f32 %v1376, %v1521
        %v1556 = vadd.f32 %v1377, %v1523
        %v1557 = vadd.f32 %v1378, %v1527
        %v1558 = vadd.f32 %v1379, %v1529
        %v1559 = vadd.f32 %v1380, %v1533
        %v1560 = vadd.f32 %v1381, %v1535
        %v1561 = vadd.f32 %v1382, %v1539
        %v1562 = vadd.f32 %v1383, %v1541
        %v1563 = vadd.f32 %v1384, %v1545
        %v1564 = vadd.f32 %v1385, %v1547
        %s1565 = scalar_lea.vmem %s1, 512
        %v1566 = vld [vmem:[%s1565] sm:$0xff]
        %v1567 = vld [vmem:[%s1565 + $0x8] sm:$0xff]
        %v1568 = vld [vmem:[%s1565 + $0x10] sm:$0xff]
        %v1569 = vld [vmem:[%s1565 + $0x18] sm:$0xff]
        %v1570 = vld [vmem:[%s1565 + $0x20] sm:$0xff]
        %v1571 = vld [vmem:[%s1565 + $0x28] sm:$0xff]
        %v1572 = vld [vmem:[%s1565 + $0x30] sm:$0xff]
        %v1573 = vld [vmem:[%s1565 + $0x38] sm:$0xff]
        %1574 = vrot.lane.b32.xlu0 %v169, 120
        %v1575 = vpop.permute.xlu0 %1574
        %1576 = vrot.lane.b32.xlu0 %v170, 120
        %v1577 = vpop.permute.xlu0 %1576
        %1578 = vrot.lane.b32.xlu0 %v171, 120
        %v1579 = vpop.permute.xlu0 %1578
        %1580 = vrot.lane.b32.xlu0 %v172, 120
        %v1581 = vpop.permute.xlu0 %1580
        %vm1582 = vcmask 982016
        %v1583 = vsel %vm1582, %v1575, %v1577
        %v1584 = vsel %vm1582, %v1579, %v1581
        %v1588 = vsel %vm207, %v1566, 0
        %v1591 = vsel %vm207, %v1567, 0
        %v1594 = vsel %vm207, %v1568, 0
        %v1597 = vsel %vm207, %v1569, 0
        %v1600 = vsel %vm207, %v1570, 0
        %v1603 = vsel %vm207, %v1571, 0
        %v1606 = vsel %vm207, %v1572, 0
        %v1609 = vsel %vm207, %v1573, 0
        %v1611 = vsel %vm232, %v1584, 0
        %v1613 = vsel %vm232, %v1581, 0
        %1615 = vmatprep.subr.mxu0 0.0
        %1616 = vmatpush1.msra.mxu0 0.0
        %1617 = vmatprep.subr.mxu0 0.0
        %1618 = vmatpush1.msra.mxu0 0.0
        %1619 = vmatprep.subr.mxu0 0.0
        %1620 = vmatpush1.msra.mxu0 0.0
        %1621 = vmatprep.subr.mxu0 0.0
        %1622 = vmatpush1.msra.mxu0 0.0
        %1623 = vmatprep.subr.mxu0 0.0
        %1624 = vmatpush1.msra.mxu0 0.0
        %1625 = vmatprep.subr.mxu0 0.0
        %1626 = vmatpush1.msra.mxu0 0.0
        %1627 = vmatprep.subr.mxu0 0.0
        %1628 = vmatpush1.msra.mxu0 0.0
        %1629 = vmatprep.subr.mxu0 0.0
        %1630 = vmatpush1.msra.mxu0 0.0
        %1631 = vmatprep.subr.mxu0 0.0
        %1632 = vmatpush1.msra.mxu0 0.0
        %1633 = vmatprep.subr.mxu0 0.0
        %1634 = vmatpush1.msra.mxu0 0.0
        %1635 = vmatprep.subr.mxu0 0.0
        %1636 = vmatpush1.msra.mxu0 0.0
        %1637 = vmatprep.subr.mxu0 0.0
        %1638 = vmatpush1.msra.mxu0 0.0
        %1639 = vmatprep.subr.mxu0 0.0
        %1640 = vmatpush1.msra.mxu0 0.0
        %1641 = vmatprep.subr.mxu0 0.0
        %1642 = vmatpush1.msra.mxu0 0.0
        %1643 = vmatprep.subr.mxu0 %v1613
        %1644 = vmatpush1.msra.mxu0 %v1611
        %1645 = vmatprep.subr.mxu0 %v1577
        %1646 = vmatpush1.msra.mxu0 %v1583
        %1647 = vmatprep.subr.mxu0 0.0
        %1648 = vmatpush2.msra.mxu0 0.0
        %1649 = vmatprep.subr.mxu0 0.0
        %1650 = vmatpush2.msra.mxu0 0.0
        %1651 = vmatprep.subr.mxu0 0.0
        %1652 = vmatpush2.msra.mxu0 0.0
        %1653 = vmatprep.subr.mxu0 0.0
        %1654 = vmatpush2.msra.mxu0 0.0
        %1655 = vmatprep.subr.mxu0 0.0
        %1656 = vmatpush2.msra.mxu0 0.0
        %1657 = vmatprep.subr.mxu0 0.0
        %1658 = vmatpush2.msra.mxu0 0.0
        %1659 = vmatprep.subr.mxu0 0.0
        %1660 = vmatpush2.msra.mxu0 0.0
        %1661 = vmatprep.subr.mxu0 0.0
        %1662 = vmatpush2.msra.mxu0 0.0
        %1663 = vmatprep.subr.mxu0 0.0
        %1664 = vmatpush2.msra.mxu0 0.0
        %1665 = vmatprep.subr.mxu0 0.0
        %1666 = vmatpush2.msra.mxu0 0.0
        %1667 = vmatprep.subr.mxu0 0.0
        %1668 = vmatpush2.msra.mxu0 0.0
        %1669 = vmatprep.subr.mxu0 0.0
        %1670 = vmatpush2.msra.mxu0 0.0
        %1671 = vmatprep.subr.mxu0 0.0
        %1672 = vmatpush2.msra.mxu0 0.0
        %1673 = vmatprep.subr.mxu0 0.0
        %1674 = vmatpush2.msra.mxu0 0.0
        %1675 = vmatprep.subr.mxu0 0.0
        %1676 = vmatpush2.msra.mxu0 0.0
        %1677 = vmatprep.subr.mxu0 0.0
        %1678 = vmatpush2.msra.mxu0 0.0
        %1679 = vmatprep.mubr.f32.mxu0 0.0
        %1680 = vmatmul.mubr.f32.gmra.mxu0 %v1588
        %v1681 = vpop.f32.mrf.mxu0
        %v1682 = vadd.f32 0.0, %v1681
        %v1683 = vpop.f32.mrf.mxu0
        %v1684 = vadd.f32 0.0, %v1683
        %1685 = vmatprep.mubr.f32.mxu0 0.0
        %1686 = vmatmul.mubr.f32.gmra.mxu0 %v1591
        %v1687 = vpop.f32.mrf.mxu0
        %v1688 = vadd.f32 0.0, %v1687
        %v1689 = vpop.f32.mrf.mxu0
        %v1690 = vadd.f32 0.0, %v1689
        %1691 = vmatprep.mubr.f32.mxu0 0.0
        %1692 = vmatmul.mubr.f32.gmra.mxu0 %v1594
        %v1693 = vpop.f32.mrf.mxu0
        %v1694 = vadd.f32 0.0, %v1693
        %v1695 = vpop.f32.mrf.mxu0
        %v1696 = vadd.f32 0.0, %v1695
        %1697 = vmatprep.mubr.f32.mxu0 0.0
        %1698 = vmatmul.mubr.f32.gmra.mxu0 %v1597
        %v1699 = vpop.f32.mrf.mxu0
        %v1700 = vadd.f32 0.0, %v1699
        %v1701 = vpop.f32.mrf.mxu0
        %v1702 = vadd.f32 0.0, %v1701
        %1703 = vmatprep.mubr.f32.mxu0 0.0
        %1704 = vmatmul.mubr.f32.gmra.mxu0 %v1600
        %v1705 = vpop.f32.mrf.mxu0
        %v1706 = vadd.f32 0.0, %v1705
        %v1707 = vpop.f32.mrf.mxu0
        %v1708 = vadd.f32 0.0, %v1707
        %1709 = vmatprep.mubr.f32.mxu0 0.0
        %1710 = vmatmul.mubr.f32.gmra.mxu0 %v1603
        %v1711 = vpop.f32.mrf.mxu0
        %v1712 = vadd.f32 0.0, %v1711
        %v1713 = vpop.f32.mrf.mxu0
        %v1714 = vadd.f32 0.0, %v1713
        %1715 = vmatprep.mubr.f32.mxu0 0.0
        %1716 = vmatmul.mubr.f32.gmra.mxu0 %v1606
        %v1717 = vpop.f32.mrf.mxu0
        %v1718 = vadd.f32 0.0, %v1717
        %v1719 = vpop.f32.mrf.mxu0
        %v1720 = vadd.f32 0.0, %v1719
        %1721 = vmatprep.mubr.f32.mxu0 0.0
        %1722 = vmatmul.mubr.f32.gmra.mxu0 %v1609
        %v1723 = vpop.f32.mrf.mxu0
        %v1724 = vadd.f32 0.0, %v1723
        %v1725 = vpop.f32.mrf.mxu0
        %v1726 = vadd.f32 0.0, %v1725
        %1727 = vdwg.mxu0
        %v1728 = vadd.f32 %v1549, %v1682
        %v1729 = vadd.f32 %v1550, %v1684
        %v1730 = vadd.f32 %v1551, %v1688
        %v1731 = vadd.f32 %v1552, %v1690
        %v1732 = vadd.f32 %v1553, %v1694
        %v1733 = vadd.f32 %v1554, %v1696
        %v1734 = vadd.f32 %v1555, %v1700
        %v1735 = vadd.f32 %v1556, %v1702
        %v1736 = vadd.f32 %v1557, %v1706
        %v1737 = vadd.f32 %v1558, %v1708
        %v1738 = vadd.f32 %v1559, %v1712
        %v1739 = vadd.f32 %v1560, %v1714
        %v1740 = vadd.f32 %v1561, %v1718
        %v1741 = vadd.f32 %v1562, %v1720
        %v1742 = vadd.f32 %v1563, %v1724
        %v1743 = vadd.f32 %v1564, %v1726
        %s1744 = scalar_lea.vmem %s1, 576
        %v1745 = vld [vmem:[%s1744] sm:$0xff]
        %v1746 = vld [vmem:[%s1744 + $0x8] sm:$0xff]
        %v1747 = vld [vmem:[%s1744 + $0x10] sm:$0xff]
        %v1748 = vld [vmem:[%s1744 + $0x18] sm:$0xff]
        %v1749 = vld [vmem:[%s1744 + $0x20] sm:$0xff]
        %v1750 = vld [vmem:[%s1744 + $0x28] sm:$0xff]
        %v1751 = vld [vmem:[%s1744 + $0x30] sm:$0xff]
        %v1752 = vld [vmem:[%s1744 + $0x38] sm:$0xff]
        %1753 = vrot.lane.b32.xlu0 %v169, 119
        %v1754 = vpop.permute.xlu0 %1753
        %1755 = vrot.lane.b32.xlu0 %v170, 119
        %v1756 = vpop.permute.xlu0 %1755
        %1757 = vrot.lane.b32.xlu0 %v171, 119
        %v1758 = vpop.permute.xlu0 %1757
        %1759 = vrot.lane.b32.xlu0 %v172, 119
        %v1760 = vpop.permute.xlu0 %1759
        %vm1761 = vcmask 973824
        %v1762 = vsel %vm1761, %v1754, %v1756
        %v1763 = vsel %vm1761, %v1758, %v1760
        %v1767 = vsel %vm207, %v1745, 0
        %v1770 = vsel %vm207, %v1746, 0
        %v1773 = vsel %vm207, %v1747, 0
        %v1776 = vsel %vm207, %v1748, 0
        %v1779 = vsel %vm207, %v1749, 0
        %v1782 = vsel %vm207, %v1750, 0
        %v1785 = vsel %vm207, %v1751, 0
        %v1788 = vsel %vm207, %v1752, 0
        %v1790 = vsel %vm232, %v1763, 0
        %v1792 = vsel %vm232, %v1760, 0
        %1794 = vmatprep.subr.mxu0 0.0
        %1795 = vmatpush1.msra.mxu0 0.0
        %1796 = vmatprep.subr.mxu0 0.0
        %1797 = vmatpush1.msra.mxu0 0.0
        %1798 = vmatprep.subr.mxu0 0.0
        %1799 = vmatpush1.msra.mxu0 0.0
        %1800 = vmatprep.subr.mxu0 0.0
        %1801 = vmatpush1.msra.mxu0 0.0
        %1802 = vmatprep.subr.mxu0 0.0
        %1803 = vmatpush1.msra.mxu0 0.0
        %1804 = vmatprep.subr.mxu0 0.0
        %1805 = vmatpush1.msra.mxu0 0.0
        %1806 = vmatprep.subr.mxu0 0.0
        %1807 = vmatpush1.msra.mxu0 0.0
        %1808 = vmatprep.subr.mxu0 0.0
        %1809 = vmatpush1.msra.mxu0 0.0
        %1810 = vmatprep.subr.mxu0 0.0
        %1811 = vmatpush1.msra.mxu0 0.0
        %1812 = vmatprep.subr.mxu0 0.0
        %1813 = vmatpush1.msra.mxu0 0.0
        %1814 = vmatprep.subr.mxu0 0.0
        %1815 = vmatpush1.msra.mxu0 0.0
        %1816 = vmatprep.subr.mxu0 0.0
        %1817 = vmatpush1.msra.mxu0 0.0
        %1818 = vmatprep.subr.mxu0 0.0
        %1819 = vmatpush1.msra.mxu0 0.0
        %1820 = vmatprep.subr.mxu0 0.0
        %1821 = vmatpush1.msra.mxu0 0.0
        %1822 = vmatprep.subr.mxu0 %v1792
        %1823 = vmatpush1.msra.mxu0 %v1790
        %1824 = vmatprep.subr.mxu0 %v1756
        %1825 = vmatpush1.msra.mxu0 %v1762
        %1826 = vmatprep.subr.mxu0 0.0
        %1827 = vmatpush2.msra.mxu0 0.0
        %1828 = vmatprep.subr.mxu0 0.0
        %1829 = vmatpush2.msra.mxu0 0.0
        %1830 = vmatprep.subr.mxu0 0.0
        %1831 = vmatpush2.msra.mxu0 0.0
        %1832 = vmatprep.subr.mxu0 0.0
        %1833 = vmatpush2.msra.mxu0 0.0
        %1834 = vmatprep.subr.mxu0 0.0
        %1835 = vmatpush2.msra.mxu0 0.0
        %1836 = vmatprep.subr.mxu0 0.0
        %1837 = vmatpush2.msra.mxu0 0.0
        %1838 = vmatprep.subr.mxu0 0.0
        %1839 = vmatpush2.msra.mxu0 0.0
        %1840 = vmatprep.subr.mxu0 0.0
        %1841 = vmatpush2.msra.mxu0 0.0
        %1842 = vmatprep.subr.mxu0 0.0
        %1843 = vmatpush2.msra.mxu0 0.0
        %1844 = vmatprep.subr.mxu0 0.0
        %1845 = vmatpush2.msra.mxu0 0.0
        %1846 = vmatprep.subr.mxu0 0.0
        %1847 = vmatpush2.msra.mxu0 0.0
        %1848 = vmatprep.subr.mxu0 0.0
        %1849 = vmatpush2.msra.mxu0 0.0
        %1850 = vmatprep.subr.mxu0 0.0
        %1851 = vmatpush2.msra.mxu0 0.0
        %1852 = vmatprep.subr.mxu0 0.0
        %1853 = vmatpush2.msra.mxu0 0.0
        %1854 = vmatprep.subr.mxu0 0.0
        %1855 = vmatpush2.msra.mxu0 0.0
        %1856 = vmatprep.subr.mxu0 0.0
        %1857 = vmatpush2.msra.mxu0 0.0
        %1858 = vmatprep.mubr.f32.mxu0 0.0
        %1859 = vmatmul.mubr.f32.gmra.mxu0 %v1767
        %v1860 = vpop.f32.mrf.mxu0
        %v1861 = vadd.f32 0.0, %v1860
        %v1862 = vpop.f32.mrf.mxu0
        %v1863 = vadd.f32 0.0, %v1862
        %1864 = vmatprep.mubr.f32.mxu0 0.0
        %1865 = vmatmul.mubr.f32.gmra.mxu0 %v1770
        %v1866 = vpop.f32.mrf.mxu0
        %v1867 = vadd.f32 0.0, %v1866
        %v1868 = vpop.f32.mrf.mxu0
        %v1869 = vadd.f32 0.0, %v1868
        %1870 = vmatprep.mubr.f32.mxu0 0.0
        %1871 = vmatmul.mubr.f32.gmra.mxu0 %v1773
        %v1872 = vpop.f32.mrf.mxu0
        %v1873 = vadd.f32 0.0, %v1872
        %v1874 = vpop.f32.mrf.mxu0
        %v1875 = vadd.f32 0.0, %v1874
        %1876 = vmatprep.mubr.f32.mxu0 0.0
        %1877 = vmatmul.mubr.f32.gmra.mxu0 %v1776
        %v1878 = vpop.f32.mrf.mxu0
        %v1879 = vadd.f32 0.0, %v1878
        %v1880 = vpop.f32.mrf.mxu0
        %v1881 = vadd.f32 0.0, %v1880
        %1882 = vmatprep.mubr.f32.mxu0 0.0
        %1883 = vmatmul.mubr.f32.gmra.mxu0 %v1779
        %v1884 = vpop.f32.mrf.mxu0
        %v1885 = vadd.f32 0.0, %v1884
        %v1886 = vpop.f32.mrf.mxu0
        %v1887 = vadd.f32 0.0, %v1886
        %1888 = vmatprep.mubr.f32.mxu0 0.0
        %1889 = vmatmul.mubr.f32.gmra.mxu0 %v1782
        %v1890 = vpop.f32.mrf.mxu0
        %v1891 = vadd.f32 0.0, %v1890
        %v1892 = vpop.f32.mrf.mxu0
        %v1893 = vadd.f32 0.0, %v1892
        %1894 = vmatprep.mubr.f32.mxu0 0.0
        %1895 = vmatmul.mubr.f32.gmra.mxu0 %v1785
        %v1896 = vpop.f32.mrf.mxu0
        %v1897 = vadd.f32 0.0, %v1896
        %v1898 = vpop.f32.mrf.mxu0
        %v1899 = vadd.f32 0.0, %v1898
        %1900 = vmatprep.mubr.f32.mxu0 0.0
        %1901 = vmatmul.mubr.f32.gmra.mxu0 %v1788
        %v1902 = vpop.f32.mrf.mxu0
        %v1903 = vadd.f32 0.0, %v1902
        %v1904 = vpop.f32.mrf.mxu0
        %v1905 = vadd.f32 0.0, %v1904
        %1906 = vdwg.mxu0
        %v1907 = vadd.f32 %v1728, %v1861
        %v1908 = vadd.f32 %v1729, %v1863
        %v1909 = vadd.f32 %v1730, %v1867
        %v1910 = vadd.f32 %v1731, %v1869
        %v1911 = vadd.f32 %v1732, %v1873
        %v1912 = vadd.f32 %v1733, %v1875
        %v1913 = vadd.f32 %v1734, %v1879
        %v1914 = vadd.f32 %v1735, %v1881
        %v1915 = vadd.f32 %v1736, %v1885
        %v1916 = vadd.f32 %v1737, %v1887
        %v1917 = vadd.f32 %v1738, %v1891
        %v1918 = vadd.f32 %v1739, %v1893
        %v1919 = vadd.f32 %v1740, %v1897
        %v1920 = vadd.f32 %v1741, %v1899
        %v1921 = vadd.f32 %v1742, %v1903
        %v1922 = vadd.f32 %v1743, %v1905
        %s1923 = scalar_lea.vmem %s1, 640
        %v1924 = vld [vmem:[%s1923] sm:$0xff]
        %v1925 = vld [vmem:[%s1923 + $0x8] sm:$0xff]
        %v1926 = vld [vmem:[%s1923 + $0x10] sm:$0xff]
        %v1927 = vld [vmem:[%s1923 + $0x18] sm:$0xff]
        %v1928 = vld [vmem:[%s1923 + $0x20] sm:$0xff]
        %v1929 = vld [vmem:[%s1923 + $0x28] sm:$0xff]
        %v1930 = vld [vmem:[%s1923 + $0x30] sm:$0xff]
        %v1931 = vld [vmem:[%s1923 + $0x38] sm:$0xff]
        %1932 = vrot.lane.b32.xlu0 %v169, 118
        %v1933 = vpop.permute.xlu0 %1932
        %1934 = vrot.lane.b32.xlu0 %v170, 118
        %v1935 = vpop.permute.xlu0 %1934
        %1936 = vrot.lane.b32.xlu0 %v171, 118
        %v1937 = vpop.permute.xlu0 %1936
        %1938 = vrot.lane.b32.xlu0 %v172, 118
        %v1939 = vpop.permute.xlu0 %1938
        %vm1940 = vcmask 965632
        %v1941 = vsel %vm1940, %v1933, %v1935
        %v1942 = vsel %vm1940, %v1937, %v1939
        %v1946 = vsel %vm207, %v1924, 0
        %v1949 = vsel %vm207, %v1925, 0
        %v1952 = vsel %vm207, %v1926, 0
        %v1955 = vsel %vm207, %v1927, 0
        %v1958 = vsel %vm207, %v1928, 0
        %v1961 = vsel %vm207, %v1929, 0
        %v1964 = vsel %vm207, %v1930, 0
        %v1967 = vsel %vm207, %v1931, 0
        %v1969 = vsel %vm232, %v1942, 0
        %v1971 = vsel %vm232, %v1939, 0
        %1973 = vmatprep.subr.mxu0 0.0
        %1974 = vmatpush1.msra.mxu0 0.0
        %1975 = vmatprep.subr.mxu0 0.0
        %1976 = vmatpush1.msra.mxu0 0.0
        %1977 = vmatprep.subr.mxu0 0.0
        %1978 = vmatpush1.msra.mxu0 0.0
        %1979 = vmatprep.subr.mxu0 0.0
        %1980 = vmatpush1.msra.mxu0 0.0
        %1981 = vmatprep.subr.mxu0 0.0
        %1982 = vmatpush1.msra.mxu0 0.0
        %1983 = vmatprep.subr.mxu0 0.0
        %1984 = vmatpush1.msra.mxu0 0.0
        %1985 = vmatprep.subr.mxu0 0.0
        %1986 = vmatpush1.msra.mxu0 0.0
        %1987 = vmatprep.subr.mxu0 0.0
        %1988 = vmatpush1.msra.mxu0 0.0
        %1989 = vmatprep.subr.mxu0 0.0
        %1990 = vmatpush1.msra.mxu0 0.0
        %1991 = vmatprep.subr.mxu0 0.0
        %1992 = vmatpush1.msra.mxu0 0.0
        %1993 = vmatprep.subr.mxu0 0.0
        %1994 = vmatpush1.msra.mxu0 0.0
        %1995 = vmatprep.subr.mxu0 0.0
        %1996 = vmatpush1.msra.mxu0 0.0
        %1997 = vmatprep.subr.mxu0 0.0
        %1998 = vmatpush1.msra.mxu0 0.0
        %1999 = vmatprep.subr.mxu0 0.0
        %2000 = vmatpush1.msra.mxu0 0.0
        %2001 = vmatprep.subr.mxu0 %v1971
        %2002 = vmatpush1.msra.mxu0 %v1969
        %2003 = vmatprep.subr.mxu0 %v1935
        %2004 = vmatpush1.msra.mxu0 %v1941
        %2005 = vmatprep.subr.mxu0 0.0
        %2006 = vmatpush2.msra.mxu0 0.0
        %2007 = vmatprep.subr.mxu0 0.0
        %2008 = vmatpush2.msra.mxu0 0.0
        %2009 = vmatprep.subr.mxu0 0.0
        %2010 = vmatpush2.msra.mxu0 0.0
        %2011 = vmatprep.subr.mxu0 0.0
        %2012 = vmatpush2.msra.mxu0 0.0
        %2013 = vmatprep.subr.mxu0 0.0
        %2014 = vmatpush2.msra.mxu0 0.0
        %2015 = vmatprep.subr.mxu0 0.0
        %2016 = vmatpush2.msra.mxu0 0.0
        %2017 = vmatprep.subr.mxu0 0.0
        %2018 = vmatpush2.msra.mxu0 0.0
        %2019 = vmatprep.subr.mxu0 0.0
        %2020 = vmatpush2.msra.mxu0 0.0
        %2021 = vmatprep.subr.mxu0 0.0
        %2022 = vmatpush2.msra.mxu0 0.0
        %2023 = vmatprep.subr.mxu0 0.0
        %2024 = vmatpush2.msra.mxu0 0.0
        %2025 = vmatprep.subr.mxu0 0.0
        %2026 = vmatpush2.msra.mxu0 0.0
        %2027 = vmatprep.subr.mxu0 0.0
        %2028 = vmatpush2.msra.mxu0 0.0
        %2029 = vmatprep.subr.mxu0 0.0
        %2030 = vmatpush2.msra.mxu0 0.0
        %2031 = vmatprep.subr.mxu0 0.0
        %2032 = vmatpush2.msra.mxu0 0.0
        %2033 = vmatprep.subr.mxu0 0.0
        %2034 = vmatpush2.msra.mxu0 0.0
        %2035 = vmatprep.subr.mxu0 0.0
        %2036 = vmatpush2.msra.mxu0 0.0
        %2037 = vmatprep.mubr.f32.mxu0 0.0
        %2038 = vmatmul.mubr.f32.gmra.mxu0 %v1946
        %v2039 = vpop.f32.mrf.mxu0
        %v2040 = vadd.f32 0.0, %v2039
        %v2041 = vpop.f32.mrf.mxu0
        %v2042 = vadd.f32 0.0, %v2041
        %2043 = vmatprep.mubr.f32.mxu0 0.0
        %2044 = vmatmul.mubr.f32.gmra.mxu0 %v1949
        %v2045 = vpop.f32.mrf.mxu0
        %v2046 = vadd.f32 0.0, %v2045
        %v2047 = vpop.f32.mrf.mxu0
        %v2048 = vadd.f32 0.0, %v2047
        %2049 = vmatprep.mubr.f32.mxu0 0.0
        %2050 = vmatmul.mubr.f32.gmra.mxu0 %v1952
        %v2051 = vpop.f32.mrf.mxu0
        %v2052 = vadd.f32 0.0, %v2051
        %v2053 = vpop.f32.mrf.mxu0
        %v2054 = vadd.f32 0.0, %v2053
        %2055 = vmatprep.mubr.f32.mxu0 0.0
        %2056 = vmatmul.mubr.f32.gmra.mxu0 %v1955
        %v2057 = vpop.f32.mrf.mxu0
        %v2058 = vadd.f32 0.0, %v2057
        %v2059 = vpop.f32.mrf.mxu0
        %v2060 = vadd.f32 0.0, %v2059
        %2061 = vmatprep.mubr.f32.mxu0 0.0
        %2062 = vmatmul.mubr.f32.gmra.mxu0 %v1958
        %v2063 = vpop.f32.mrf.mxu0
        %v2064 = vadd.f32 0.0, %v2063
        %v2065 = vpop.f32.mrf.mxu0
        %v2066 = vadd.f32 0.0, %v2065
        %2067 = vmatprep.mubr.f32.mxu0 0.0
        %2068 = vmatmul.mubr.f32.gmra.mxu0 %v1961
        %v2069 = vpop.f32.mrf.mxu0
        %v2070 = vadd.f32 0.0, %v2069
        %v2071 = vpop.f32.mrf.mxu0
        %v2072 = vadd.f32 0.0, %v2071
        %2073 = vmatprep.mubr.f32.mxu0 0.0
        %2074 = vmatmul.mubr.f32.gmra.mxu0 %v1964
        %v2075 = vpop.f32.mrf.mxu0
        %v2076 = vadd.f32 0.0, %v2075
        %v2077 = vpop.f32.mrf.mxu0
        %v2078 = vadd.f32 0.0, %v2077
        %2079 = vmatprep.mubr.f32.mxu0 0.0
        %2080 = vmatmul.mubr.f32.gmra.mxu0 %v1967
        %v2081 = vpop.f32.mrf.mxu0
        %v2082 = vadd.f32 0.0, %v2081
        %v2083 = vpop.f32.mrf.mxu0
        %v2084 = vadd.f32 0.0, %v2083
        %2085 = vdwg.mxu0
        %v2086 = vadd.f32 %v1907, %v2040
        %v2087 = vadd.f32 %v1908, %v2042
        %v2088 = vadd.f32 %v1909, %v2046
        %v2089 = vadd.f32 %v1910, %v2048
        %v2090 = vadd.f32 %v1911, %v2052
        %v2091 = vadd.f32 %v1912, %v2054
        %v2092 = vadd.f32 %v1913, %v2058
        %v2093 = vadd.f32 %v1914, %v2060
        %v2094 = vadd.f32 %v1915, %v2064
        %v2095 = vadd.f32 %v1916, %v2066
        %v2096 = vadd.f32 %v1917, %v2070
        %v2097 = vadd.f32 %v1918, %v2072
        %v2098 = vadd.f32 %v1919, %v2076
        %v2099 = vadd.f32 %v1920, %v2078
        %v2100 = vadd.f32 %v1921, %v2082
        %v2101 = vadd.f32 %v1922, %v2084
        %s2102 = scalar_lea.vmem %s1, 704
        %v2103 = vld [vmem:[%s2102] sm:$0xff]
        %v2104 = vld [vmem:[%s2102 + $0x8] sm:$0xff]
        %v2105 = vld [vmem:[%s2102 + $0x10] sm:$0xff]
        %v2106 = vld [vmem:[%s2102 + $0x18] sm:$0xff]
        %v2107 = vld [vmem:[%s2102 + $0x20] sm:$0xff]
        %v2108 = vld [vmem:[%s2102 + $0x28] sm:$0xff]
        %v2109 = vld [vmem:[%s2102 + $0x30] sm:$0xff]
        %v2110 = vld [vmem:[%s2102 + $0x38] sm:$0xff]
        %2111 = vrot.lane.b32.xlu0 %v169, 117
        %v2112 = vpop.permute.xlu0 %2111
        %2113 = vrot.lane.b32.xlu0 %v170, 117
        %v2114 = vpop.permute.xlu0 %2113
        %2115 = vrot.lane.b32.xlu0 %v171, 117
        %v2116 = vpop.permute.xlu0 %2115
        %2117 = vrot.lane.b32.xlu0 %v172, 117
        %v2118 = vpop.permute.xlu0 %2117
        %vm2119 = vcmask 957440
        %v2120 = vsel %vm2119, %v2112, %v2114
        %v2121 = vsel %vm2119, %v2116, %v2118
        %v2125 = vsel %vm207, %v2103, 0
        %v2128 = vsel %vm207, %v2104, 0
        %v2131 = vsel %vm207, %v2105, 0
        %v2134 = vsel %vm207, %v2106, 0
        %v2137 = vsel %vm207, %v2107, 0
        %v2140 = vsel %vm207, %v2108, 0
        %v2143 = vsel %vm207, %v2109, 0
        %v2146 = vsel %vm207, %v2110, 0
        %v2148 = vsel %vm232, %v2121, 0
        %v2150 = vsel %vm232, %v2118, 0
        %2152 = vmatprep.subr.mxu0 0.0
        %2153 = vmatpush1.msra.mxu0 0.0
        %2154 = vmatprep.subr.mxu0 0.0
        %2155 = vmatpush1.msra.mxu0 0.0
        %2156 = vmatprep.subr.mxu0 0.0
        %2157 = vmatpush1.msra.mxu0 0.0
        %2158 = vmatprep.subr.mxu0 0.0
        %2159 = vmatpush1.msra.mxu0 0.0
        %2160 = vmatprep.subr.mxu0 0.0
        %2161 = vmatpush1.msra.mxu0 0.0
        %2162 = vmatprep.subr.mxu0 0.0
        %2163 = vmatpush1.msra.mxu0 0.0
        %2164 = vmatprep.subr.mxu0 0.0
        %2165 = vmatpush1.msra.mxu0 0.0
        %2166 = vmatprep.subr.mxu0 0.0
        %2167 = vmatpush1.msra.mxu0 0.0
        %2168 = vmatprep.subr.mxu0 0.0
        %2169 = vmatpush1.msra.mxu0 0.0
        %2170 = vmatprep.subr.mxu0 0.0
        %2171 = vmatpush1.msra.mxu0 0.0
        %2172 = vmatprep.subr.mxu0 0.0
        %2173 = vmatpush1.msra.mxu0 0.0
        %2174 = vmatprep.subr.mxu0 0.0
        %2175 = vmatpush1.msra.mxu0 0.0
        %2176 = vmatprep.subr.mxu0 0.0
        %2177 = vmatpush1.msra.mxu0 0.0
        %2178 = vmatprep.subr.mxu0 0.0
        %2179 = vmatpush1.msra.mxu0 0.0
        %2180 = vmatprep.subr.mxu0 %v2150
        %2181 = vmatpush1.msra.mxu0 %v2148
        %2182 = vmatprep.subr.mxu0 %v2114
        %2183 = vmatpush1.msra.mxu0 %v2120
        %2184 = vmatprep.subr.mxu0 0.0
        %2185 = vmatpush2.msra.mxu0 0.0
        %2186 = vmatprep.subr.mxu0 0.0
        %2187 = vmatpush2.msra.mxu0 0.0
        %2188 = vmatprep.subr.mxu0 0.0
        %2189 = vmatpush2.msra.mxu0 0.0
        %2190 = vmatprep.subr.mxu0 0.0
        %2191 = vmatpush2.msra.mxu0 0.0
        %2192 = vmatprep.subr.mxu0 0.0
        %2193 = vmatpush2.msra.mxu0 0.0
        %2194 = vmatprep.subr.mxu0 0.0
        %2195 = vmatpush2.msra.mxu0 0.0
        %2196 = vmatprep.subr.mxu0 0.0
        %2197 = vmatpush2.msra.mxu0 0.0
        %2198 = vmatprep.subr.mxu0 0.0
        %2199 = vmatpush2.msra.mxu0 0.0
        %2200 = vmatprep.subr.mxu0 0.0
        %2201 = vmatpush2.msra.mxu0 0.0
        %2202 = vmatprep.subr.mxu0 0.0
        %2203 = vmatpush2.msra.mxu0 0.0
        %2204 = vmatprep.subr.mxu0 0.0
        %2205 = vmatpush2.msra.mxu0 0.0
        %2206 = vmatprep.subr.mxu0 0.0
        %2207 = vmatpush2.msra.mxu0 0.0
        %2208 = vmatprep.subr.mxu0 0.0
        %2209 = vmatpush2.msra.mxu0 0.0
        %2210 = vmatprep.subr.mxu0 0.0
        %2211 = vmatpush2.msra.mxu0 0.0
        %2212 = vmatprep.subr.mxu0 0.0
        %2213 = vmatpush2.msra.mxu0 0.0
        %2214 = vmatprep.subr.mxu0 0.0
        %2215 = vmatpush2.msra.mxu0 0.0
        %2216 = vmatprep.mubr.f32.mxu0 0.0
        %2217 = vmatmul.mubr.f32.gmra.mxu0 %v2125
        %v2218 = vpop.f32.mrf.mxu0
        %v2219 = vadd.f32 0.0, %v2218
        %v2220 = vpop.f32.mrf.mxu0
        %v2221 = vadd.f32 0.0, %v2220
        %2222 = vmatprep.mubr.f32.mxu0 0.0
        %2223 = vmatmul.mubr.f32.gmra.mxu0 %v2128
        %v2224 = vpop.f32.mrf.mxu0
        %v2225 = vadd.f32 0.0, %v2224
        %v2226 = vpop.f32.mrf.mxu0
        %v2227 = vadd.f32 0.0, %v2226
        %2228 = vmatprep.mubr.f32.mxu0 0.0
        %2229 = vmatmul.mubr.f32.gmra.mxu0 %v2131
        %v2230 = vpop.f32.mrf.mxu0
        %v2231 = vadd.f32 0.0, %v2230
        %v2232 = vpop.f32.mrf.mxu0
        %v2233 = vadd.f32 0.0, %v2232
        %2234 = vmatprep.mubr.f32.mxu0 0.0
        %2235 = vmatmul.mubr.f32.gmra.mxu0 %v2134
        %v2236 = vpop.f32.mrf.mxu0
        %v2237 = vadd.f32 0.0, %v2236
        %v2238 = vpop.f32.mrf.mxu0
        %v2239 = vadd.f32 0.0, %v2238
        %2240 = vmatprep.mubr.f32.mxu0 0.0
        %2241 = vmatmul.mubr.f32.gmra.mxu0 %v2137
        %v2242 = vpop.f32.mrf.mxu0
        %v2243 = vadd.f32 0.0, %v2242
        %v2244 = vpop.f32.mrf.mxu0
        %v2245 = vadd.f32 0.0, %v2244
        %2246 = vmatprep.mubr.f32.mxu0 0.0
        %2247 = vmatmul.mubr.f32.gmra.mxu0 %v2140
        %v2248 = vpop.f32.mrf.mxu0
        %v2249 = vadd.f32 0.0, %v2248
        %v2250 = vpop.f32.mrf.mxu0
        %v2251 = vadd.f32 0.0, %v2250
        %2252 = vmatprep.mubr.f32.mxu0 0.0
        %2253 = vmatmul.mubr.f32.gmra.mxu0 %v2143
        %v2254 = vpop.f32.mrf.mxu0
        %v2255 = vadd.f32 0.0, %v2254
        %v2256 = vpop.f32.mrf.mxu0
        %v2257 = vadd.f32 0.0, %v2256
        %2258 = vmatprep.mubr.f32.mxu0 0.0
        %2259 = vmatmul.mubr.f32.gmra.mxu0 %v2146
        %v2260 = vpop.f32.mrf.mxu0
        %v2261 = vadd.f32 0.0, %v2260
        %v2262 = vpop.f32.mrf.mxu0
        %v2263 = vadd.f32 0.0, %v2262
        %2264 = vdwg.mxu0
        %v2265 = vadd.f32 %v2086, %v2219
        %v2266 = vadd.f32 %v2087, %v2221
        %v2267 = vadd.f32 %v2088, %v2225
        %v2268 = vadd.f32 %v2089, %v2227
        %v2269 = vadd.f32 %v2090, %v2231
        %v2270 = vadd.f32 %v2091, %v2233
        %v2271 = vadd.f32 %v2092, %v2237
        %v2272 = vadd.f32 %v2093, %v2239
        %v2273 = vadd.f32 %v2094, %v2243
        %v2274 = vadd.f32 %v2095, %v2245
        %v2275 = vadd.f32 %v2096, %v2249
        %v2276 = vadd.f32 %v2097, %v2251
        %v2277 = vadd.f32 %v2098, %v2255
        %v2278 = vadd.f32 %v2099, %v2257
        %v2279 = vadd.f32 %v2100, %v2261
        %v2280 = vadd.f32 %v2101, %v2263
        %s2281 = scalar_lea.vmem %s1, 768
        %v2282 = vld [vmem:[%s2281] sm:$0xff]
        %v2283 = vld [vmem:[%s2281 + $0x8] sm:$0xff]
        %v2284 = vld [vmem:[%s2281 + $0x10] sm:$0xff]
        %v2285 = vld [vmem:[%s2281 + $0x18] sm:$0xff]
        %v2286 = vld [vmem:[%s2281 + $0x20] sm:$0xff]
        %v2287 = vld [vmem:[%s2281 + $0x28] sm:$0xff]
        %v2288 = vld [vmem:[%s2281 + $0x30] sm:$0xff]
        %v2289 = vld [vmem:[%s2281 + $0x38] sm:$0xff]
        %2290 = vrot.lane.b32.xlu0 %v169, 116
        %v2291 = vpop.permute.xlu0 %2290
        %2292 = vrot.lane.b32.xlu0 %v170, 116
        %v2293 = vpop.permute.xlu0 %2292
        %2294 = vrot.lane.b32.xlu0 %v171, 116
        %v2295 = vpop.permute.xlu0 %2294
        %2296 = vrot.lane.b32.xlu0 %v172, 116
        %v2297 = vpop.permute.xlu0 %2296
        %vm2298 = vcmask 949248
        %v2299 = vsel %vm2298, %v2291, %v2293
        %v2300 = vsel %vm2298, %v2295, %v2297
        %v2304 = vsel %vm207, %v2282, 0
        %v2307 = vsel %vm207, %v2283, 0
        %v2310 = vsel %vm207, %v2284, 0
        %v2313 = vsel %vm207, %v2285, 0
        %v2316 = vsel %vm207, %v2286, 0
        %v2319 = vsel %vm207, %v2287, 0
        %v2322 = vsel %vm207, %v2288, 0
        %v2325 = vsel %vm207, %v2289, 0
        %v2327 = vsel %vm232, %v2300, 0
        %v2329 = vsel %vm232, %v2297, 0
        %2331 = vmatprep.subr.mxu0 0.0
        %2332 = vmatpush1.msra.mxu0 0.0
        %2333 = vmatprep.subr.mxu0 0.0
        %2334 = vmatpush1.msra.mxu0 0.0
        %2335 = vmatprep.subr.mxu0 0.0
        %2336 = vmatpush1.msra.mxu0 0.0
        %2337 = vmatprep.subr.mxu0 0.0
        %2338 = vmatpush1.msra.mxu0 0.0
        %2339 = vmatprep.subr.mxu0 0.0
        %2340 = vmatpush1.msra.mxu0 0.0
        %2341 = vmatprep.subr.mxu0 0.0
        %2342 = vmatpush1.msra.mxu0 0.0
        %2343 = vmatprep.subr.mxu0 0.0
        %2344 = vmatpush1.msra.mxu0 0.0
        %2345 = vmatprep.subr.mxu0 0.0
        %2346 = vmatpush1.msra.mxu0 0.0
        %2347 = vmatprep.subr.mxu0 0.0
        %2348 = vmatpush1.msra.mxu0 0.0
        %2349 = vmatprep.subr.mxu0 0.0
        %2350 = vmatpush1.msra.mxu0 0.0
        %2351 = vmatprep.subr.mxu0 0.0
        %2352 = vmatpush1.msra.mxu0 0.0
        %2353 = vmatprep.subr.mxu0 0.0
        %2354 = vmatpush1.msra.mxu0 0.0
        %2355 = vmatprep.subr.mxu0 0.0
        %2356 = vmatpush1.msra.mxu0 0.0
        %2357 = vmatprep.subr.mxu0 0.0
        %2358 = vmatpush1.msra.mxu0 0.0
        %2359 = vmatprep.subr.mxu0 %v2329
        %2360 = vmatpush1.msra.mxu0 %v2327
        %2361 = vmatprep.subr.mxu0 %v2293
        %2362 = vmatpush1.msra.mxu0 %v2299
        %2363 = vmatprep.subr.mxu0 0.0
        %2364 = vmatpush2.msra.mxu0 0.0
        %2365 = vmatprep.subr.mxu0 0.0
        %2366 = vmatpush2.msra.mxu0 0.0
        %2367 = vmatprep.subr.mxu0 0.0
        %2368 = vmatpush2.msra.mxu0 0.0
        %2369 = vmatprep.subr.mxu0 0.0
        %2370 = vmatpush2.msra.mxu0 0.0
        %2371 = vmatprep.subr.mxu0 0.0
        %2372 = vmatpush2.msra.mxu0 0.0
        %2373 = vmatprep.subr.mxu0 0.0
        %2374 = vmatpush2.msra.mxu0 0.0
        %2375 = vmatprep.subr.mxu0 0.0
        %2376 = vmatpush2.msra.mxu0 0.0
        %2377 = vmatprep.subr.mxu0 0.0
        %2378 = vmatpush2.msra.mxu0 0.0
        %2379 = vmatprep.subr.mxu0 0.0
        %2380 = vmatpush2.msra.mxu0 0.0
        %2381 = vmatprep.subr.mxu0 0.0
        %2382 = vmatpush2.msra.mxu0 0.0
        %2383 = vmatprep.subr.mxu0 0.0
        %2384 = vmatpush2.msra.mxu0 0.0
        %2385 = vmatprep.subr.mxu0 0.0
        %2386 = vmatpush2.msra.mxu0 0.0
        %2387 = vmatprep.subr.mxu0 0.0
        %2388 = vmatpush2.msra.mxu0 0.0
        %2389 = vmatprep.subr.mxu0 0.0
        %2390 = vmatpush2.msra.mxu0 0.0
        %2391 = vmatprep.subr.mxu0 0.0
        %2392 = vmatpush2.msra.mxu0 0.0
        %2393 = vmatprep.subr.mxu0 0.0
        %2394 = vmatpush2.msra.mxu0 0.0
        %2395 = vmatprep.mubr.f32.mxu0 0.0
        %2396 = vmatmul.mubr.f32.gmra.mxu0 %v2304
        %v2397 = vpop.f32.mrf.mxu0
        %v2398 = vadd.f32 0.0, %v2397
        %v2399 = vpop.f32.mrf.mxu0
        %v2400 = vadd.f32 0.0, %v2399
        %2401 = vmatprep.mubr.f32.mxu0 0.0
        %2402 = vmatmul.mubr.f32.gmra.mxu0 %v2307
        %v2403 = vpop.f32.mrf.mxu0
        %v2404 = vadd.f32 0.0, %v2403
        %v2405 = vpop.f32.mrf.mxu0
        %v2406 = vadd.f32 0.0, %v2405
        %2407 = vmatprep.mubr.f32.mxu0 0.0
        %2408 = vmatmul.mubr.f32.gmra.mxu0 %v2310
        %v2409 = vpop.f32.mrf.mxu0
        %v2410 = vadd.f32 0.0, %v2409
        %v2411 = vpop.f32.mrf.mxu0
        %v2412 = vadd.f32 0.0, %v2411
        %2413 = vmatprep.mubr.f32.mxu0 0.0
        %2414 = vmatmul.mubr.f32.gmra.mxu0 %v2313
        %v2415 = vpop.f32.mrf.mxu0
        %v2416 = vadd.f32 0.0, %v2415
        %v2417 = vpop.f32.mrf.mxu0
        %v2418 = vadd.f32 0.0, %v2417
        %2419 = vmatprep.mubr.f32.mxu0 0.0
        %2420 = vmatmul.mubr.f32.gmra.mxu0 %v2316
        %v2421 = vpop.f32.mrf.mxu0
        %v2422 = vadd.f32 0.0, %v2421
        %v2423 = vpop.f32.mrf.mxu0
        %v2424 = vadd.f32 0.0, %v2423
        %2425 = vmatprep.mubr.f32.mxu0 0.0
        %2426 = vmatmul.mubr.f32.gmra.mxu0 %v2319
        %v2427 = vpop.f32.mrf.mxu0
        %v2428 = vadd.f32 0.0, %v2427
        %v2429 = vpop.f32.mrf.mxu0
        %v2430 = vadd.f32 0.0, %v2429
        %2431 = vmatprep.mubr.f32.mxu0 0.0
        %2432 = vmatmul.mubr.f32.gmra.mxu0 %v2322
        %v2433 = vpop.f32.mrf.mxu0
        %v2434 = vadd.f32 0.0, %v2433
        %v2435 = vpop.f32.mrf.mxu0
        %v2436 = vadd.f32 0.0, %v2435
        %2437 = vmatprep.mubr.f32.mxu0 0.0
        %2438 = vmatmul.mubr.f32.gmra.mxu0 %v2325
        %v2439 = vpop.f32.mrf.mxu0
        %v2440 = vadd.f32 0.0, %v2439
        %v2441 = vpop.f32.mrf.mxu0
        %v2442 = vadd.f32 0.0, %v2441
        %2443 = vdwg.mxu0
        %v2444 = vadd.f32 %v2265, %v2398
        %v2445 = vadd.f32 %v2266, %v2400
        %v2446 = vadd.f32 %v2267, %v2404
        %v2447 = vadd.f32 %v2268, %v2406
        %v2448 = vadd.f32 %v2269, %v2410
        %v2449 = vadd.f32 %v2270, %v2412
        %v2450 = vadd.f32 %v2271, %v2416
        %v2451 = vadd.f32 %v2272, %v2418
        %v2452 = vadd.f32 %v2273, %v2422
        %v2453 = vadd.f32 %v2274, %v2424
        %v2454 = vadd.f32 %v2275, %v2428
        %v2455 = vadd.f32 %v2276, %v2430
        %v2456 = vadd.f32 %v2277, %v2434
        %v2457 = vadd.f32 %v2278, %v2436
        %v2458 = vadd.f32 %v2279, %v2440
        %v2459 = vadd.f32 %v2280, %v2442
        %s2460 = scalar_lea.vmem %s1, 832
        %v2461 = vld [vmem:[%s2460] sm:$0xff]
        %v2462 = vld [vmem:[%s2460 + $0x8] sm:$0xff]
        %v2463 = vld [vmem:[%s2460 + $0x10] sm:$0xff]
        %v2464 = vld [vmem:[%s2460 + $0x18] sm:$0xff]
        %v2465 = vld [vmem:[%s2460 + $0x20] sm:$0xff]
        %v2466 = vld [vmem:[%s2460 + $0x28] sm:$0xff]
        %v2467 = vld [vmem:[%s2460 + $0x30] sm:$0xff]
        %v2468 = vld [vmem:[%s2460 + $0x38] sm:$0xff]
        %2469 = vrot.lane.b32.xlu0 %v169, 115
        %v2470 = vpop.permute.xlu0 %2469
        %2471 = vrot.lane.b32.xlu0 %v170, 115
        %v2472 = vpop.permute.xlu0 %2471
        %2473 = vrot.lane.b32.xlu0 %v171, 115
        %v2474 = vpop.permute.xlu0 %2473
        %2475 = vrot.lane.b32.xlu0 %v172, 115
        %v2476 = vpop.permute.xlu0 %2475
        %vm2477 = vcmask 941056
        %v2478 = vsel %vm2477, %v2470, %v2472
        %v2479 = vsel %vm2477, %v2474, %v2476
        %v2483 = vsel %vm207, %v2461, 0
        %v2486 = vsel %vm207, %v2462, 0
        %v2489 = vsel %vm207, %v2463, 0
        %v2492 = vsel %vm207, %v2464, 0
        %v2495 = vsel %vm207, %v2465, 0
        %v2498 = vsel %vm207, %v2466, 0
        %v2501 = vsel %vm207, %v2467, 0
        %v2504 = vsel %vm207, %v2468, 0
        %v2506 = vsel %vm232, %v2479, 0
        %v2508 = vsel %vm232, %v2476, 0
        %2510 = vmatprep.subr.mxu0 0.0
        %2511 = vmatpush1.msra.mxu0 0.0
        %2512 = vmatprep.subr.mxu0 0.0
        %2513 = vmatpush1.msra.mxu0 0.0
        %2514 = vmatprep.subr.mxu0 0.0
        %2515 = vmatpush1.msra.mxu0 0.0
        %2516 = vmatprep.subr.mxu0 0.0
        %2517 = vmatpush1.msra.mxu0 0.0
        %2518 = vmatprep.subr.mxu0 0.0
        %2519 = vmatpush1.msra.mxu0 0.0
        %2520 = vmatprep.subr.mxu0 0.0
        %2521 = vmatpush1.msra.mxu0 0.0
        %2522 = vmatprep.subr.mxu0 0.0
        %2523 = vmatpush1.msra.mxu0 0.0
        %2524 = vmatprep.subr.mxu0 0.0
        %2525 = vmatpush1.msra.mxu0 0.0
        %2526 = vmatprep.subr.mxu0 0.0
        %2527 = vmatpush1.msra.mxu0 0.0
        %2528 = vmatprep.subr.mxu0 0.0
        %2529 = vmatpush1.msra.mxu0 0.0
        %2530 = vmatprep.subr.mxu0 0.0
        %2531 = vmatpush1.msra.mxu0 0.0
        %2532 = vmatprep.subr.mxu0 0.0
        %2533 = vmatpush1.msra.mxu0 0.0
        %2534 = vmatprep.subr.mxu0 0.0
        %2535 = vmatpush1.msra.mxu0 0.0
        %2536 = vmatprep.subr.mxu0 0.0
        %2537 = vmatpush1.msra.mxu0 0.0
        %2538 = vmatprep.subr.mxu0 %v2508
        %2539 = vmatpush1.msra.mxu0 %v2506
        %2540 = vmatprep.subr.mxu0 %v2472
        %2541 = vmatpush1.msra.mxu0 %v2478
        %2542 = vmatprep.subr.mxu0 0.0
        %2543 = vmatpush2.msra.mxu0 0.0
        %2544 = vmatprep.subr.mxu0 0.0
        %2545 = vmatpush2.msra.mxu0 0.0
        %2546 = vmatprep.subr.mxu0 0.0
        %2547 = vmatpush2.msra.mxu0 0.0
        %2548 = vmatprep.subr.mxu0 0.0
        %2549 = vmatpush2.msra.mxu0 0.0
        %2550 = vmatprep.subr.mxu0 0.0
        %2551 = vmatpush2.msra.mxu0 0.0
        %2552 = vmatprep.subr.mxu0 0.0
        %2553 = vmatpush2.msra.mxu0 0.0
        %2554 = vmatprep.subr.mxu0 0.0
        %2555 = vmatpush2.msra.mxu0 0.0
        %2556 = vmatprep.subr.mxu0 0.0
        %2557 = vmatpush2.msra.mxu0 0.0
        %2558 = vmatprep.subr.mxu0 0.0
        %2559 = vmatpush2.msra.mxu0 0.0
        %2560 = vmatprep.subr.mxu0 0.0
        %2561 = vmatpush2.msra.mxu0 0.0
        %2562 = vmatprep.subr.mxu0 0.0
        %2563 = vmatpush2.msra.mxu0 0.0
        %2564 = vmatprep.subr.mxu0 0.0
        %2565 = vmatpush2.msra.mxu0 0.0
        %2566 = vmatprep.subr.mxu0 0.0
        %2567 = vmatpush2.msra.mxu0 0.0
        %2568 = vmatprep.subr.mxu0 0.0
        %2569 = vmatpush2.msra.mxu0 0.0
        %2570 = vmatprep.subr.mxu0 0.0
        %2571 = vmatpush2.msra.mxu0 0.0
        %2572 = vmatprep.subr.mxu0 0.0
        %2573 = vmatpush2.msra.mxu0 0.0
        %2574 = vmatprep.mubr.f32.mxu0 0.0
        %2575 = vmatmul.mubr.f32.gmra.mxu0 %v2483
        %v2576 = vpop.f32.mrf.mxu0
        %v2577 = vadd.f32 0.0, %v2576
        %v2578 = vpop.f32.mrf.mxu0
        %v2579 = vadd.f32 0.0, %v2578
        %2580 = vmatprep.mubr.f32.mxu0 0.0
        %2581 = vmatmul.mubr.f32.gmra.mxu0 %v2486
        %v2582 = vpop.f32.mrf.mxu0
        %v2583 = vadd.f32 0.0, %v2582
        %v2584 = vpop.f32.mrf.mxu0
        %v2585 = vadd.f32 0.0, %v2584
        %2586 = vmatprep.mubr.f32.mxu0 0.0
        %2587 = vmatmul.mubr.f32.gmra.mxu0 %v2489
        %v2588 = vpop.f32.mrf.mxu0
        %v2589 = vadd.f32 0.0, %v2588
        %v2590 = vpop.f32.mrf.mxu0
        %v2591 = vadd.f32 0.0, %v2590
        %2592 = vmatprep.mubr.f32.mxu0 0.0
        %2593 = vmatmul.mubr.f32.gmra.mxu0 %v2492
        %v2594 = vpop.f32.mrf.mxu0
        %v2595 = vadd.f32 0.0, %v2594
        %v2596 = vpop.f32.mrf.mxu0
        %v2597 = vadd.f32 0.0, %v2596
        %2598 = vmatprep.mubr.f32.mxu0 0.0
        %2599 = vmatmul.mubr.f32.gmra.mxu0 %v2495
        %v2600 = vpop.f32.mrf.mxu0
        %v2601 = vadd.f32 0.0, %v2600
        %v2602 = vpop.f32.mrf.mxu0
        %v2603 = vadd.f32 0.0, %v2602
        %2604 = vmatprep.mubr.f32.mxu0 0.0
        %2605 = vmatmul.mubr.f32.gmra.mxu0 %v2498
        %v2606 = vpop.f32.mrf.mxu0
        %v2607 = vadd.f32 0.0, %v2606
        %v2608 = vpop.f32.mrf.mxu0
        %v2609 = vadd.f32 0.0, %v2608
        %2610 = vmatprep.mubr.f32.mxu0 0.0
        %2611 = vmatmul.mubr.f32.gmra.mxu0 %v2501
        %v2612 = vpop.f32.mrf.mxu0
        %v2613 = vadd.f32 0.0, %v2612
        %v2614 = vpop.f32.mrf.mxu0
        %v2615 = vadd.f32 0.0, %v2614
        %2616 = vmatprep.mubr.f32.mxu0 0.0
        %2617 = vmatmul.mubr.f32.gmra.mxu0 %v2504
        %v2618 = vpop.f32.mrf.mxu0
        %v2619 = vadd.f32 0.0, %v2618
        %v2620 = vpop.f32.mrf.mxu0
        %v2621 = vadd.f32 0.0, %v2620
        %2622 = vdwg.mxu0
        %v2623 = vadd.f32 %v2444, %v2577
        %v2624 = vadd.f32 %v2445, %v2579
        %v2625 = vadd.f32 %v2446, %v2583
        %v2626 = vadd.f32 %v2447, %v2585
        %v2627 = vadd.f32 %v2448, %v2589
        %v2628 = vadd.f32 %v2449, %v2591
        %v2629 = vadd.f32 %v2450, %v2595
        %v2630 = vadd.f32 %v2451, %v2597
        %v2631 = vadd.f32 %v2452, %v2601
        %v2632 = vadd.f32 %v2453, %v2603
        %v2633 = vadd.f32 %v2454, %v2607
        %v2634 = vadd.f32 %v2455, %v2609
        %v2635 = vadd.f32 %v2456, %v2613
        %v2636 = vadd.f32 %v2457, %v2615
        %v2637 = vadd.f32 %v2458, %v2619
        %v2638 = vadd.f32 %v2459, %v2621
        %s2639 = scalar_lea.vmem %s1, 896
        %v2640 = vld [vmem:[%s2639] sm:$0xff]
        %v2641 = vld [vmem:[%s2639 + $0x8] sm:$0xff]
        %v2642 = vld [vmem:[%s2639 + $0x10] sm:$0xff]
        %v2643 = vld [vmem:[%s2639 + $0x18] sm:$0xff]
        %v2644 = vld [vmem:[%s2639 + $0x20] sm:$0xff]
        %v2645 = vld [vmem:[%s2639 + $0x28] sm:$0xff]
        %v2646 = vld [vmem:[%s2639 + $0x30] sm:$0xff]
        %v2647 = vld [vmem:[%s2639 + $0x38] sm:$0xff]
        %2648 = vrot.lane.b32.xlu0 %v169, 114
        %v2649 = vpop.permute.xlu0 %2648
        %2650 = vrot.lane.b32.xlu0 %v170, 114
        %v2651 = vpop.permute.xlu0 %2650
        %2652 = vrot.lane.b32.xlu0 %v171, 114
        %v2653 = vpop.permute.xlu0 %2652
        %2654 = vrot.lane.b32.xlu0 %v172, 114
        %v2655 = vpop.permute.xlu0 %2654
        %vm2656 = vcmask 932864
        %v2657 = vsel %vm2656, %v2649, %v2651
        %v2658 = vsel %vm2656, %v2653, %v2655
        %v2662 = vsel %vm207, %v2640, 0
        %v2665 = vsel %vm207, %v2641, 0
        %v2668 = vsel %vm207, %v2642, 0
        %v2671 = vsel %vm207, %v2643, 0
        %v2674 = vsel %vm207, %v2644, 0
        %v2677 = vsel %vm207, %v2645, 0
        %v2680 = vsel %vm207, %v2646, 0
        %v2683 = vsel %vm207, %v2647, 0
        %v2685 = vsel %vm232, %v2658, 0
        %v2687 = vsel %vm232, %v2655, 0
        %2689 = vmatprep.subr.mxu0 0.0
        %2690 = vmatpush1.msra.mxu0 0.0
        %2691 = vmatprep.subr.mxu0 0.0
        %2692 = vmatpush1.msra.mxu0 0.0
        %2693 = vmatprep.subr.mxu0 0.0
        %2694 = vmatpush1.msra.mxu0 0.0
        %2695 = vmatprep.subr.mxu0 0.0
        %2696 = vmatpush1.msra.mxu0 0.0
        %2697 = vmatprep.subr.mxu0 0.0
        %2698 = vmatpush1.msra.mxu0 0.0
        %2699 = vmatprep.subr.mxu0 0.0
        %2700 = vmatpush1.msra.mxu0 0.0
        %2701 = vmatprep.subr.mxu0 0.0
        %2702 = vmatpush1.msra.mxu0 0.0
        %2703 = vmatprep.subr.mxu0 0.0
        %2704 = vmatpush1.msra.mxu0 0.0
        %2705 = vmatprep.subr.mxu0 0.0
        %2706 = vmatpush1.msra.mxu0 0.0
        %2707 = vmatprep.subr.mxu0 0.0
        %2708 = vmatpush1.msra.mxu0 0.0
        %2709 = vmatprep.subr.mxu0 0.0
        %2710 = vmatpush1.msra.mxu0 0.0
        %2711 = vmatprep.subr.mxu0 0.0
        %2712 = vmatpush1.msra.mxu0 0.0
        %2713 = vmatprep.subr.mxu0 0.0
        %2714 = vmatpush1.msra.mxu0 0.0
        %2715 = vmatprep.subr.mxu0 0.0
        %2716 = vmatpush1.msra.mxu0 0.0
        %2717 = vmatprep.subr.mxu0 %v2687
        %2718 = vmatpush1.msra.mxu0 %v2685
        %2719 = vmatprep.subr.mxu0 %v2651
        %2720 = vmatpush1.msra.mxu0 %v2657
        %2721 = vmatprep.subr.mxu0 0.0
        %2722 = vmatpush2.msra.mxu0 0.0
        %2723 = vmatprep.subr.mxu0 0.0
        %2724 = vmatpush2.msra.mxu0 0.0
        %2725 = vmatprep.subr.mxu0 0.0
        %2726 = vmatpush2.msra.mxu0 0.0
        %2727 = vmatprep.subr.mxu0 0.0
        %2728 = vmatpush2.msra.mxu0 0.0
        %2729 = vmatprep.subr.mxu0 0.0
        %2730 = vmatpush2.msra.mxu0 0.0
        %2731 = vmatprep.subr.mxu0 0.0
        %2732 = vmatpush2.msra.mxu0 0.0
        %2733 = vmatprep.subr.mxu0 0.0
        %2734 = vmatpush2.msra.mxu0 0.0
        %2735 = vmatprep.subr.mxu0 0.0
        %2736 = vmatpush2.msra.mxu0 0.0
        %2737 = vmatprep.subr.mxu0 0.0
        %2738 = vmatpush2.msra.mxu0 0.0
        %2739 = vmatprep.subr.mxu0 0.0
        %2740 = vmatpush2.msra.mxu0 0.0
        %2741 = vmatprep.subr.mxu0 0.0
        %2742 = vmatpush2.msra.mxu0 0.0
        %2743 = vmatprep.subr.mxu0 0.0
        %2744 = vmatpush2.msra.mxu0 0.0
        %2745 = vmatprep.subr.mxu0 0.0
        %2746 = vmatpush2.msra.mxu0 0.0
        %2747 = vmatprep.subr.mxu0 0.0
        %2748 = vmatpush2.msra.mxu0 0.0
        %2749 = vmatprep.subr.mxu0 0.0
        %2750 = vmatpush2.msra.mxu0 0.0
        %2751 = vmatprep.subr.mxu0 0.0
        %2752 = vmatpush2.msra.mxu0 0.0
        %2753 = vmatprep.mubr.f32.mxu0 0.0
        %2754 = vmatmul.mubr.f32.gmra.mxu0 %v2662
        %v2755 = vpop.f32.mrf.mxu0
        %v2756 = vadd.f32 0.0, %v2755
        %v2757 = vpop.f32.mrf.mxu0
        %v2758 = vadd.f32 0.0, %v2757
        %2759 = vmatprep.mubr.f32.mxu0 0.0
        %2760 = vmatmul.mubr.f32.gmra.mxu0 %v2665
        %v2761 = vpop.f32.mrf.mxu0
        %v2762 = vadd.f32 0.0, %v2761
        %v2763 = vpop.f32.mrf.mxu0
        %v2764 = vadd.f32 0.0, %v2763
        %2765 = vmatprep.mubr.f32.mxu0 0.0
        %2766 = vmatmul.mubr.f32.gmra.mxu0 %v2668
        %v2767 = vpop.f32.mrf.mxu0
        %v2768 = vadd.f32 0.0, %v2767
        %v2769 = vpop.f32.mrf.mxu0
        %v2770 = vadd.f32 0.0, %v2769
        %2771 = vmatprep.mubr.f32.mxu0 0.0
        %2772 = vmatmul.mubr.f32.gmra.mxu0 %v2671
        %v2773 = vpop.f32.mrf.mxu0
        %v2774 = vadd.f32 0.0, %v2773
        %v2775 = vpop.f32.mrf.mxu0
        %v2776 = vadd.f32 0.0, %v2775
        %2777 = vmatprep.mubr.f32.mxu0 0.0
        %2778 = vmatmul.mubr.f32.gmra.mxu0 %v2674
        %v2779 = vpop.f32.mrf.mxu0
        %v2780 = vadd.f32 0.0, %v2779
        %v2781 = vpop.f32.mrf.mxu0
        %v2782 = vadd.f32 0.0, %v2781
        %2783 = vmatprep.mubr.f32.mxu0 0.0
        %2784 = vmatmul.mubr.f32.gmra.mxu0 %v2677
        %v2785 = vpop.f32.mrf.mxu0
        %v2786 = vadd.f32 0.0, %v2785
        %v2787 = vpop.f32.mrf.mxu0
        %v2788 = vadd.f32 0.0, %v2787
        %2789 = vmatprep.mubr.f32.mxu0 0.0
        %2790 = vmatmul.mubr.f32.gmra.mxu0 %v2680
        %v2791 = vpop.f32.mrf.mxu0
        %v2792 = vadd.f32 0.0, %v2791
        %v2793 = vpop.f32.mrf.mxu0
        %v2794 = vadd.f32 0.0, %v2793
        %2795 = vmatprep.mubr.f32.mxu0 0.0
        %2796 = vmatmul.mubr.f32.gmra.mxu0 %v2683
        %v2797 = vpop.f32.mrf.mxu0
        %v2798 = vadd.f32 0.0, %v2797
        %v2799 = vpop.f32.mrf.mxu0
        %v2800 = vadd.f32 0.0, %v2799
        %2801 = vdwg.mxu0
        %v2802 = vadd.f32 %v2623, %v2756
        %v2803 = vadd.f32 %v2624, %v2758
        %v2804 = vadd.f32 %v2625, %v2762
        %v2805 = vadd.f32 %v2626, %v2764
        %v2806 = vadd.f32 %v2627, %v2768
        %v2807 = vadd.f32 %v2628, %v2770
        %v2808 = vadd.f32 %v2629, %v2774
        %v2809 = vadd.f32 %v2630, %v2776
        %v2810 = vadd.f32 %v2631, %v2780
        %v2811 = vadd.f32 %v2632, %v2782
        %v2812 = vadd.f32 %v2633, %v2786
        %v2813 = vadd.f32 %v2634, %v2788
        %v2814 = vadd.f32 %v2635, %v2792
        %v2815 = vadd.f32 %v2636, %v2794
        %v2816 = vadd.f32 %v2637, %v2798
        %v2817 = vadd.f32 %v2638, %v2800
        %s2818 = scalar_lea.vmem %s1, 960
        %v2819 = vld [vmem:[%s2818] sm:$0xff]
        %v2820 = vld [vmem:[%s2818 + $0x8] sm:$0xff]
        %v2821 = vld [vmem:[%s2818 + $0x10] sm:$0xff]
        %v2822 = vld [vmem:[%s2818 + $0x18] sm:$0xff]
        %v2823 = vld [vmem:[%s2818 + $0x20] sm:$0xff]
        %v2824 = vld [vmem:[%s2818 + $0x28] sm:$0xff]
        %v2825 = vld [vmem:[%s2818 + $0x30] sm:$0xff]
        %v2826 = vld [vmem:[%s2818 + $0x38] sm:$0xff]
        %2827 = vrot.lane.b32.xlu0 %v169, 113
        %v2828 = vpop.permute.xlu0 %2827
        %2829 = vrot.lane.b32.xlu0 %v170, 113
        %v2830 = vpop.permute.xlu0 %2829
        %2831 = vrot.lane.b32.xlu0 %v171, 113
        %v2832 = vpop.permute.xlu0 %2831
        %2833 = vrot.lane.b32.xlu0 %v172, 113
        %v2834 = vpop.permute.xlu0 %2833
        %vm2835 = vcmask 924672
        %v2836 = vsel %vm2835, %v2828, %v2830
        %v2837 = vsel %vm2835, %v2832, %v2834
        %v2841 = vsel %vm207, %v2819, 0
        %v2844 = vsel %vm207, %v2820, 0
        %v2847 = vsel %vm207, %v2821, 0
        %v2850 = vsel %vm207, %v2822, 0
        %v2853 = vsel %vm207, %v2823, 0
        %v2856 = vsel %vm207, %v2824, 0
        %v2859 = vsel %vm207, %v2825, 0
        %v2862 = vsel %vm207, %v2826, 0
        %v2864 = vsel %vm232, %v2837, 0
        %v2866 = vsel %vm232, %v2834, 0
        %2868 = vmatprep.subr.mxu0 0.0
        %2869 = vmatpush1.msra.mxu0 0.0
        %2870 = vmatprep.subr.mxu0 0.0
        %2871 = vmatpush1.msra.mxu0 0.0
        %2872 = vmatprep.subr.mxu0 0.0
        %2873 = vmatpush1.msra.mxu0 0.0
        %2874 = vmatprep.subr.mxu0 0.0
        %2875 = vmatpush1.msra.mxu0 0.0
        %2876 = vmatprep.subr.mxu0 0.0
        %2877 = vmatpush1.msra.mxu0 0.0
        %2878 = vmatprep.subr.mxu0 0.0
        %2879 = vmatpush1.msra.mxu0 0.0
        %2880 = vmatprep.subr.mxu0 0.0
        %2881 = vmatpush1.msra.mxu0 0.0
        %2882 = vmatprep.subr.mxu0 0.0
        %2883 = vmatpush1.msra.mxu0 0.0
        %2884 = vmatprep.subr.mxu0 0.0
        %2885 = vmatpush1.msra.mxu0 0.0
        %2886 = vmatprep.subr.mxu0 0.0
        %2887 = vmatpush1.msra.mxu0 0.0
        %2888 = vmatprep.subr.mxu0 0.0
        %2889 = vmatpush1.msra.mxu0 0.0
        %2890 = vmatprep.subr.mxu0 0.0
        %2891 = vmatpush1.msra.mxu0 0.0
        %2892 = vmatprep.subr.mxu0 0.0
        %2893 = vmatpush1.msra.mxu0 0.0
        %2894 = vmatprep.subr.mxu0 0.0
        %2895 = vmatpush1.msra.mxu0 0.0
        %2896 = vmatprep.subr.mxu0 %v2866
        %2897 = vmatpush1.msra.mxu0 %v2864
        %2898 = vmatprep.subr.mxu0 %v2830
        %2899 = vmatpush1.msra.mxu0 %v2836
        %2900 = vmatprep.subr.mxu0 0.0
        %2901 = vmatpush2.msra.mxu0 0.0
        %2902 = vmatprep.subr.mxu0 0.0
        %2903 = vmatpush2.msra.mxu0 0.0
        %2904 = vmatprep.subr.mxu0 0.0
        %2905 = vmatpush2.msra.mxu0 0.0
        %2906 = vmatprep.subr.mxu0 0.0
        %2907 = vmatpush2.msra.mxu0 0.0
        %2908 = vmatprep.subr.mxu0 0.0
        %2909 = vmatpush2.msra.mxu0 0.0
        %2910 = vmatprep.subr.mxu0 0.0
        %2911 = vmatpush2.msra.mxu0 0.0
        %2912 = vmatprep.subr.mxu0 0.0
        %2913 = vmatpush2.msra.mxu0 0.0
        %2914 = vmatprep.subr.mxu0 0.0
        %2915 = vmatpush2.msra.mxu0 0.0
        %2916 = vmatprep.subr.mxu0 0.0
        %2917 = vmatpush2.msra.mxu0 0.0
        %2918 = vmatprep.subr.mxu0 0.0
        %2919 = vmatpush2.msra.mxu0 0.0
        %2920 = vmatprep.subr.mxu0 0.0
        %2921 = vmatpush2.msra.mxu0 0.0
        %2922 = vmatprep.subr.mxu0 0.0
        %2923 = vmatpush2.msra.mxu0 0.0
        %2924 = vmatprep.subr.mxu0 0.0
        %2925 = vmatpush2.msra.mxu0 0.0
        %2926 = vmatprep.subr.mxu0 0.0
        %2927 = vmatpush2.msra.mxu0 0.0
        %2928 = vmatprep.subr.mxu0 0.0
        %2929 = vmatpush2.msra.mxu0 0.0
        %2930 = vmatprep.subr.mxu0 0.0
        %2931 = vmatpush2.msra.mxu0 0.0
        %2932 = vmatprep.mubr.f32.mxu0 0.0
        %2933 = vmatmul.mubr.f32.gmra.mxu0 %v2841
        %v2934 = vpop.f32.mrf.mxu0
        %v2935 = vadd.f32 0.0, %v2934
        %v2936 = vpop.f32.mrf.mxu0
        %v2937 = vadd.f32 0.0, %v2936
        %2938 = vmatprep.mubr.f32.mxu0 0.0
        %2939 = vmatmul.mubr.f32.gmra.mxu0 %v2844
        %v2940 = vpop.f32.mrf.mxu0
        %v2941 = vadd.f32 0.0, %v2940
        %v2942 = vpop.f32.mrf.mxu0
        %v2943 = vadd.f32 0.0, %v2942
        %2944 = vmatprep.mubr.f32.mxu0 0.0
        %2945 = vmatmul.mubr.f32.gmra.mxu0 %v2847
        %v2946 = vpop.f32.mrf.mxu0
        %v2947 = vadd.f32 0.0, %v2946
        %v2948 = vpop.f32.mrf.mxu0
        %v2949 = vadd.f32 0.0, %v2948
        %2950 = vmatprep.mubr.f32.mxu0 0.0
        %2951 = vmatmul.mubr.f32.gmra.mxu0 %v2850
        %v2952 = vpop.f32.mrf.mxu0
        %v2953 = vadd.f32 0.0, %v2952
        %v2954 = vpop.f32.mrf.mxu0
        %v2955 = vadd.f32 0.0, %v2954
        %2956 = vmatprep.mubr.f32.mxu0 0.0
        %2957 = vmatmul.mubr.f32.gmra.mxu0 %v2853
        %v2958 = vpop.f32.mrf.mxu0
        %v2959 = vadd.f32 0.0, %v2958
        %v2960 = vpop.f32.mrf.mxu0
        %v2961 = vadd.f32 0.0, %v2960
        %2962 = vmatprep.mubr.f32.mxu0 0.0
        %2963 = vmatmul.mubr.f32.gmra.mxu0 %v2856
        %v2964 = vpop.f32.mrf.mxu0
        %v2965 = vadd.f32 0.0, %v2964
        %v2966 = vpop.f32.mrf.mxu0
        %v2967 = vadd.f32 0.0, %v2966
        %2968 = vmatprep.mubr.f32.mxu0 0.0
        %2969 = vmatmul.mubr.f32.gmra.mxu0 %v2859
        %v2970 = vpop.f32.mrf.mxu0
        %v2971 = vadd.f32 0.0, %v2970
        %v2972 = vpop.f32.mrf.mxu0
        %v2973 = vadd.f32 0.0, %v2972
        %2974 = vmatprep.mubr.f32.mxu0 0.0
        %2975 = vmatmul.mubr.f32.gmra.mxu0 %v2862
        %v2976 = vpop.f32.mrf.mxu0
        %v2977 = vadd.f32 0.0, %v2976
        %v2978 = vpop.f32.mrf.mxu0
        %v2979 = vadd.f32 0.0, %v2978
        %2980 = vdwg.mxu0
        %v2981 = vadd.f32 %v2802, %v2935
        %v2982 = vadd.f32 %v2803, %v2937
        %v2983 = vadd.f32 %v2804, %v2941
        %v2984 = vadd.f32 %v2805, %v2943
        %v2985 = vadd.f32 %v2806, %v2947
        %v2986 = vadd.f32 %v2807, %v2949
        %v2987 = vadd.f32 %v2808, %v2953
        %v2988 = vadd.f32 %v2809, %v2955
        %v2989 = vadd.f32 %v2810, %v2959
        %v2990 = vadd.f32 %v2811, %v2961
        %v2991 = vadd.f32 %v2812, %v2965
        %v2992 = vadd.f32 %v2813, %v2967
        %v2993 = vadd.f32 %v2814, %v2971
        %v2994 = vadd.f32 %v2815, %v2973
        %v2995 = vadd.f32 %v2816, %v2977
        %v2996 = vadd.f32 %v2817, %v2979
        %s2997 = scalar_lea.vmem %s1, 1024
        %v2998 = vld [vmem:[%s2997] sm:$0xff]
        %v2999 = vld [vmem:[%s2997 + $0x8] sm:$0xff]
        %v3000 = vld [vmem:[%s2997 + $0x10] sm:$0xff]
        %v3001 = vld [vmem:[%s2997 + $0x18] sm:$0xff]
        %v3002 = vld [vmem:[%s2997 + $0x20] sm:$0xff]
        %v3003 = vld [vmem:[%s2997 + $0x28] sm:$0xff]
        %v3004 = vld [vmem:[%s2997 + $0x30] sm:$0xff]
        %v3005 = vld [vmem:[%s2997 + $0x38] sm:$0xff]
        %3006 = vrot.lane.b32.xlu0 %v169, 112
        %v3007 = vpop.permute.xlu0 %3006
        %3008 = vrot.lane.b32.xlu0 %v170, 112
        %v3009 = vpop.permute.xlu0 %3008
        %3010 = vrot.lane.b32.xlu0 %v171, 112
        %v3011 = vpop.permute.xlu0 %3010
        %3012 = vrot.lane.b32.xlu0 %v172, 112
        %v3013 = vpop.permute.xlu0 %3012
        %vm3014 = vcmask 916480
        %v3015 = vsel %vm3014, %v3007, %v3009
        %v3016 = vsel %vm3014, %v3011, %v3013
        %v3020 = vsel %vm207, %v2998, 0
        %v3023 = vsel %vm207, %v2999, 0
        %v3026 = vsel %vm207, %v3000, 0
        %v3029 = vsel %vm207, %v3001, 0
        %v3032 = vsel %vm207, %v3002, 0
        %v3035 = vsel %vm207, %v3003, 0
        %v3038 = vsel %vm207, %v3004, 0
        %v3041 = vsel %vm207, %v3005, 0
        %v3043 = vsel %vm232, %v3016, 0
        %v3045 = vsel %vm232, %v3013, 0
        %3047 = vmatprep.subr.mxu0 0.0
        %3048 = vmatpush1.msra.mxu0 0.0
        %3049 = vmatprep.subr.mxu0 0.0
        %3050 = vmatpush1.msra.mxu0 0.0
        %3051 = vmatprep.subr.mxu0 0.0
        %3052 = vmatpush1.msra.mxu0 0.0
        %3053 = vmatprep.subr.mxu0 0.0
        %3054 = vmatpush1.msra.mxu0 0.0
        %3055 = vmatprep.subr.mxu0 0.0
        %3056 = vmatpush1.msra.mxu0 0.0
        %3057 = vmatprep.subr.mxu0 0.0
        %3058 = vmatpush1.msra.mxu0 0.0
        %3059 = vmatprep.subr.mxu0 0.0
        %3060 = vmatpush1.msra.mxu0 0.0
        %3061 = vmatprep.subr.mxu0 0.0
        %3062 = vmatpush1.msra.mxu0 0.0
        %3063 = vmatprep.subr.mxu0 0.0
        %3064 = vmatpush1.msra.mxu0 0.0
        %3065 = vmatprep.subr.mxu0 0.0
        %3066 = vmatpush1.msra.mxu0 0.0
        %3067 = vmatprep.subr.mxu0 0.0
        %3068 = vmatpush1.msra.mxu0 0.0
        %3069 = vmatprep.subr.mxu0 0.0
        %3070 = vmatpush1.msra.mxu0 0.0
        %3071 = vmatprep.subr.mxu0 0.0
        %3072 = vmatpush1.msra.mxu0 0.0
        %3073 = vmatprep.subr.mxu0 0.0
        %3074 = vmatpush1.msra.mxu0 0.0
        %3075 = vmatprep.subr.mxu0 %v3045
        %3076 = vmatpush1.msra.mxu0 %v3043
        %3077 = vmatprep.subr.mxu0 %v3009
        %3078 = vmatpush1.msra.mxu0 %v3015
        %3079 = vmatprep.subr.mxu0 0.0
        %3080 = vmatpush2.msra.mxu0 0.0
        %3081 = vmatprep.subr.mxu0 0.0
        %3082 = vmatpush2.msra.mxu0 0.0
        %3083 = vmatprep.subr.mxu0 0.0
        %3084 = vmatpush2.msra.mxu0 0.0
        %3085 = vmatprep.subr.mxu0 0.0
        %3086 = vmatpush2.msra.mxu0 0.0
        %3087 = vmatprep.subr.mxu0 0.0
        %3088 = vmatpush2.msra.mxu0 0.0
        %3089 = vmatprep.subr.mxu0 0.0
        %3090 = vmatpush2.msra.mxu0 0.0
        %3091 = vmatprep.subr.mxu0 0.0
        %3092 = vmatpush2.msra.mxu0 0.0
        %3093 = vmatprep.subr.mxu0 0.0
        %3094 = vmatpush2.msra.mxu0 0.0
        %3095 = vmatprep.subr.mxu0 0.0
        %3096 = vmatpush2.msra.mxu0 0.0
        %3097 = vmatprep.subr.mxu0 0.0
        %3098 = vmatpush2.msra.mxu0 0.0
        %3099 = vmatprep.subr.mxu0 0.0
        %3100 = vmatpush2.msra.mxu0 0.0
        %3101 = vmatprep.subr.mxu0 0.0
        %3102 = vmatpush2.msra.mxu0 0.0
        %3103 = vmatprep.subr.mxu0 0.0
        %3104 = vmatpush2.msra.mxu0 0.0
        %3105 = vmatprep.subr.mxu0 0.0
        %3106 = vmatpush2.msra.mxu0 0.0
        %3107 = vmatprep.subr.mxu0 0.0
        %3108 = vmatpush2.msra.mxu0 0.0
        %3109 = vmatprep.subr.mxu0 0.0
        %3110 = vmatpush2.msra.mxu0 0.0
        %3111 = vmatprep.mubr.f32.mxu0 0.0
        %3112 = vmatmul.mubr.f32.gmra.mxu0 %v3020
        %v3113 = vpop.f32.mrf.mxu0
        %v3114 = vadd.f32 0.0, %v3113
        %v3115 = vpop.f32.mrf.mxu0
        %v3116 = vadd.f32 0.0, %v3115
        %3117 = vmatprep.mubr.f32.mxu0 0.0
        %3118 = vmatmul.mubr.f32.gmra.mxu0 %v3023
        %v3119 = vpop.f32.mrf.mxu0
        %v3120 = vadd.f32 0.0, %v3119
        %v3121 = vpop.f32.mrf.mxu0
        %v3122 = vadd.f32 0.0, %v3121
        %3123 = vmatprep.mubr.f32.mxu0 0.0
        %3124 = vmatmul.mubr.f32.gmra.mxu0 %v3026
        %v3125 = vpop.f32.mrf.mxu0
        %v3126 = vadd.f32 0.0, %v3125
        %v3127 = vpop.f32.mrf.mxu0
        %v3128 = vadd.f32 0.0, %v3127
        %3129 = vmatprep.mubr.f32.mxu0 0.0
        %3130 = vmatmul.mubr.f32.gmra.mxu0 %v3029
        %v3131 = vpop.f32.mrf.mxu0
        %v3132 = vadd.f32 0.0, %v3131
        %v3133 = vpop.f32.mrf.mxu0
        %v3134 = vadd.f32 0.0, %v3133
        %3135 = vmatprep.mubr.f32.mxu0 0.0
        %3136 = vmatmul.mubr.f32.gmra.mxu0 %v3032
        %v3137 = vpop.f32.mrf.mxu0
        %v3138 = vadd.f32 0.0, %v3137
        %v3139 = vpop.f32.mrf.mxu0
        %v3140 = vadd.f32 0.0, %v3139
        %3141 = vmatprep.mubr.f32.mxu0 0.0
        %3142 = vmatmul.mubr.f32.gmra.mxu0 %v3035
        %v3143 = vpop.f32.mrf.mxu0
        %v3144 = vadd.f32 0.0, %v3143
        %v3145 = vpop.f32.mrf.mxu0
        %v3146 = vadd.f32 0.0, %v3145
        %3147 = vmatprep.mubr.f32.mxu0 0.0
        %3148 = vmatmul.mubr.f32.gmra.mxu0 %v3038
        %v3149 = vpop.f32.mrf.mxu0
        %v3150 = vadd.f32 0.0, %v3149
        %v3151 = vpop.f32.mrf.mxu0
        %v3152 = vadd.f32 0.0, %v3151
        %3153 = vmatprep.mubr.f32.mxu0 0.0
        %3154 = vmatmul.mubr.f32.gmra.mxu0 %v3041
        %v3155 = vpop.f32.mrf.mxu0
        %v3156 = vadd.f32 0.0, %v3155
        %v3157 = vpop.f32.mrf.mxu0
        %v3158 = vadd.f32 0.0, %v3157
        %3159 = vdwg.mxu0
        %v3160 = vadd.f32 %v2981, %v3114
        %v3161 = vadd.f32 %v2982, %v3116
        %v3162 = vadd.f32 %v2983, %v3120
        %v3163 = vadd.f32 %v2984, %v3122
        %v3164 = vadd.f32 %v2985, %v3126
        %v3165 = vadd.f32 %v2986, %v3128
        %v3166 = vadd.f32 %v2987, %v3132
        %v3167 = vadd.f32 %v2988, %v3134
        %v3168 = vadd.f32 %v2989, %v3138
        %v3169 = vadd.f32 %v2990, %v3140
        %v3170 = vadd.f32 %v2991, %v3144
        %v3171 = vadd.f32 %v2992, %v3146
        %v3172 = vadd.f32 %v2993, %v3150
        %v3173 = vadd.f32 %v2994, %v3152
        %v3174 = vadd.f32 %v2995, %v3156
        %v3175 = vadd.f32 %v2996, %v3158
        %s3176 = scalar_lea.vmem %s1, 1088
        %v3177 = vld [vmem:[%s3176] sm:$0xff]
        %v3178 = vld [vmem:[%s3176 + $0x8] sm:$0xff]
        %v3179 = vld [vmem:[%s3176 + $0x10] sm:$0xff]
        %v3180 = vld [vmem:[%s3176 + $0x18] sm:$0xff]
        %v3181 = vld [vmem:[%s3176 + $0x20] sm:$0xff]
        %v3182 = vld [vmem:[%s3176 + $0x28] sm:$0xff]
        %v3183 = vld [vmem:[%s3176 + $0x30] sm:$0xff]
        %v3184 = vld [vmem:[%s3176 + $0x38] sm:$0xff]
        %3185 = vrot.lane.b32.xlu0 %v169, 111
        %v3186 = vpop.permute.xlu0 %3185
        %3187 = vrot.lane.b32.xlu0 %v170, 111
        %v3188 = vpop.permute.xlu0 %3187
        %3189 = vrot.lane.b32.xlu0 %v171, 111
        %v3190 = vpop.permute.xlu0 %3189
        %3191 = vrot.lane.b32.xlu0 %v172, 111
        %v3192 = vpop.permute.xlu0 %3191
        %vm3193 = vcmask 908288
        %v3194 = vsel %vm3193, %v3186, %v3188
        %v3195 = vsel %vm3193, %v3190, %v3192
        %v3199 = vsel %vm207, %v3177, 0
        %v3202 = vsel %vm207, %v3178, 0
        %v3205 = vsel %vm207, %v3179, 0
        %v3208 = vsel %vm207, %v3180, 0
        %v3211 = vsel %vm207, %v3181, 0
        %v3214 = vsel %vm207, %v3182, 0
        %v3217 = vsel %vm207, %v3183, 0
        %v3220 = vsel %vm207, %v3184, 0
        %v3222 = vsel %vm232, %v3195, 0
        %v3224 = vsel %vm232, %v3192, 0
        %3226 = vmatprep.subr.mxu0 0.0
        %3227 = vmatpush1.msra.mxu0 0.0
        %3228 = vmatprep.subr.mxu0 0.0
        %3229 = vmatpush1.msra.mxu0 0.0
        %3230 = vmatprep.subr.mxu0 0.0
        %3231 = vmatpush1.msra.mxu0 0.0
        %3232 = vmatprep.subr.mxu0 0.0
        %3233 = vmatpush1.msra.mxu0 0.0
        %3234 = vmatprep.subr.mxu0 0.0
        %3235 = vmatpush1.msra.mxu0 0.0
        %3236 = vmatprep.subr.mxu0 0.0
        %3237 = vmatpush1.msra.mxu0 0.0
        %3238 = vmatprep.subr.mxu0 0.0
        %3239 = vmatpush1.msra.mxu0 0.0
        %3240 = vmatprep.subr.mxu0 0.0
        %3241 = vmatpush1.msra.mxu0 0.0
        %3242 = vmatprep.subr.mxu0 0.0
        %3243 = vmatpush1.msra.mxu0 0.0
        %3244 = vmatprep.subr.mxu0 0.0
        %3245 = vmatpush1.msra.mxu0 0.0
        %3246 = vmatprep.subr.mxu0 0.0
        %3247 = vmatpush1.msra.mxu0 0.0
        %3248 = vmatprep.subr.mxu0 0.0
        %3249 = vmatpush1.msra.mxu0 0.0
        %3250 = vmatprep.subr.mxu0 0.0
        %3251 = vmatpush1.msra.mxu0 0.0
        %3252 = vmatprep.subr.mxu0 0.0
        %3253 = vmatpush1.msra.mxu0 0.0
        %3254 = vmatprep.subr.mxu0 %v3224
        %3255 = vmatpush1.msra.mxu0 %v3222
        %3256 = vmatprep.subr.mxu0 %v3188
        %3257 = vmatpush1.msra.mxu0 %v3194
        %3258 = vmatprep.subr.mxu0 0.0
        %3259 = vmatpush2.msra.mxu0 0.0
        %3260 = vmatprep.subr.mxu0 0.0
        %3261 = vmatpush2.msra.mxu0 0.0
        %3262 = vmatprep.subr.mxu0 0.0
        %3263 = vmatpush2.msra.mxu0 0.0
        %3264 = vmatprep.subr.mxu0 0.0
        %3265 = vmatpush2.msra.mxu0 0.0
        %3266 = vmatprep.subr.mxu0 0.0
        %3267 = vmatpush2.msra.mxu0 0.0
        %3268 = vmatprep.subr.mxu0 0.0
        %3269 = vmatpush2.msra.mxu0 0.0
        %3270 = vmatprep.subr.mxu0 0.0
        %3271 = vmatpush2.msra.mxu0 0.0
        %3272 = vmatprep.subr.mxu0 0.0
        %3273 = vmatpush2.msra.mxu0 0.0
        %3274 = vmatprep.subr.mxu0 0.0
        %3275 = vmatpush2.msra.mxu0 0.0
        %3276 = vmatprep.subr.mxu0 0.0
        %3277 = vmatpush2.msra.mxu0 0.0
        %3278 = vmatprep.subr.mxu0 0.0
        %3279 = vmatpush2.msra.mxu0 0.0
        %3280 = vmatprep.subr.mxu0 0.0
        %3281 = vmatpush2.msra.mxu0 0.0
        %3282 = vmatprep.subr.mxu0 0.0
        %3283 = vmatpush2.msra.mxu0 0.0
        %3284 = vmatprep.subr.mxu0 0.0
        %3285 = vmatpush2.msra.mxu0 0.0
        %3286 = vmatprep.subr.mxu0 0.0
        %3287 = vmatpush2.msra.mxu0 0.0
        %3288 = vmatprep.subr.mxu0 0.0
        %3289 = vmatpush2.msra.mxu0 0.0
        %3290 = vmatprep.mubr.f32.mxu0 0.0
        %3291 = vmatmul.mubr.f32.gmra.mxu0 %v3199
        %v3292 = vpop.f32.mrf.mxu0
        %v3293 = vadd.f32 0.0, %v3292
        %v3294 = vpop.f32.mrf.mxu0
        %v3295 = vadd.f32 0.0, %v3294
        %3296 = vmatprep.mubr.f32.mxu0 0.0
        %3297 = vmatmul.mubr.f32.gmra.mxu0 %v3202
        %v3298 = vpop.f32.mrf.mxu0
        %v3299 = vadd.f32 0.0, %v3298
        %v3300 = vpop.f32.mrf.mxu0
        %v3301 = vadd.f32 0.0, %v3300
        %3302 = vmatprep.mubr.f32.mxu0 0.0
        %3303 = vmatmul.mubr.f32.gmra.mxu0 %v3205
        %v3304 = vpop.f32.mrf.mxu0
        %v3305 = vadd.f32 0.0, %v3304
        %v3306 = vpop.f32.mrf.mxu0
        %v3307 = vadd.f32 0.0, %v3306
        %3308 = vmatprep.mubr.f32.mxu0 0.0
        %3309 = vmatmul.mubr.f32.gmra.mxu0 %v3208
        %v3310 = vpop.f32.mrf.mxu0
        %v3311 = vadd.f32 0.0, %v3310
        %v3312 = vpop.f32.mrf.mxu0
        %v3313 = vadd.f32 0.0, %v3312
        %3314 = vmatprep.mubr.f32.mxu0 0.0
        %3315 = vmatmul.mubr.f32.gmra.mxu0 %v3211
        %v3316 = vpop.f32.mrf.mxu0
        %v3317 = vadd.f32 0.0, %v3316
        %v3318 = vpop.f32.mrf.mxu0
        %v3319 = vadd.f32 0.0, %v3318
        %3320 = vmatprep.mubr.f32.mxu0 0.0
        %3321 = vmatmul.mubr.f32.gmra.mxu0 %v3214
        %v3322 = vpop.f32.mrf.mxu0
        %v3323 = vadd.f32 0.0, %v3322
        %v3324 = vpop.f32.mrf.mxu0
        %v3325 = vadd.f32 0.0, %v3324
        %3326 = vmatprep.mubr.f32.mxu0 0.0
        %3327 = vmatmul.mubr.f32.gmra.mxu0 %v3217
        %v3328 = vpop.f32.mrf.mxu0
        %v3329 = vadd.f32 0.0, %v3328
        %v3330 = vpop.f32.mrf.mxu0
        %v3331 = vadd.f32 0.0, %v3330
        %3332 = vmatprep.mubr.f32.mxu0 0.0
        %3333 = vmatmul.mubr.f32.gmra.mxu0 %v3220
        %v3334 = vpop.f32.mrf.mxu0
        %v3335 = vadd.f32 0.0, %v3334
        %v3336 = vpop.f32.mrf.mxu0
        %v3337 = vadd.f32 0.0, %v3336
        %3338 = vdwg.mxu0
        %v3339 = vadd.f32 %v3160, %v3293
        %v3340 = vadd.f32 %v3161, %v3295
        %v3341 = vadd.f32 %v3162, %v3299
        %v3342 = vadd.f32 %v3163, %v3301
        %v3343 = vadd.f32 %v3164, %v3305
        %v3344 = vadd.f32 %v3165, %v3307
        %v3345 = vadd.f32 %v3166, %v3311
        %v3346 = vadd.f32 %v3167, %v3313
        %v3347 = vadd.f32 %v3168, %v3317
        %v3348 = vadd.f32 %v3169, %v3319
        %v3349 = vadd.f32 %v3170, %v3323
        %v3350 = vadd.f32 %v3171, %v3325
        %v3351 = vadd.f32 %v3172, %v3329
        %v3352 = vadd.f32 %v3173, %v3331
        %v3353 = vadd.f32 %v3174, %v3335
        %v3354 = vadd.f32 %v3175, %v3337
        %s3355 = scalar_lea.vmem %s1, 1152
        %v3356 = vld [vmem:[%s3355] sm:$0xff]
        %v3357 = vld [vmem:[%s3355 + $0x8] sm:$0xff]
        %v3358 = vld [vmem:[%s3355 + $0x10] sm:$0xff]
        %v3359 = vld [vmem:[%s3355 + $0x18] sm:$0xff]
        %v3360 = vld [vmem:[%s3355 + $0x20] sm:$0xff]
        %v3361 = vld [vmem:[%s3355 + $0x28] sm:$0xff]
        %v3362 = vld [vmem:[%s3355 + $0x30] sm:$0xff]
        %v3363 = vld [vmem:[%s3355 + $0x38] sm:$0xff]
        %3364 = vrot.lane.b32.xlu0 %v169, 110
        %v3365 = vpop.permute.xlu0 %3364
        %3366 = vrot.lane.b32.xlu0 %v170, 110
        %v3367 = vpop.permute.xlu0 %3366
        %3368 = vrot.lane.b32.xlu0 %v171, 110
        %v3369 = vpop.permute.xlu0 %3368
        %3370 = vrot.lane.b32.xlu0 %v172, 110
        %v3371 = vpop.permute.xlu0 %3370
        %vm3372 = vcmask 900096
        %v3373 = vsel %vm3372, %v3365, %v3367
        %v3374 = vsel %vm3372, %v3369, %v3371
        %v3378 = vsel %vm207, %v3356, 0
        %v3381 = vsel %vm207, %v3357, 0
        %v3384 = vsel %vm207, %v3358, 0
        %v3387 = vsel %vm207, %v3359, 0
        %v3390 = vsel %vm207, %v3360, 0
        %v3393 = vsel %vm207, %v3361, 0
        %v3396 = vsel %vm207, %v3362, 0
        %v3399 = vsel %vm207, %v3363, 0
        %v3401 = vsel %vm232, %v3374, 0
        %v3403 = vsel %vm232, %v3371, 0
        %3405 = vmatprep.subr.mxu0 0.0
        %3406 = vmatpush1.msra.mxu0 0.0
        %3407 = vmatprep.subr.mxu0 0.0
        %3408 = vmatpush1.msra.mxu0 0.0
        %3409 = vmatprep.subr.mxu0 0.0
        %3410 = vmatpush1.msra.mxu0 0.0
        %3411 = vmatprep.subr.mxu0 0.0
        %3412 = vmatpush1.msra.mxu0 0.0
        %3413 = vmatprep.subr.mxu0 0.0
        %3414 = vmatpush1.msra.mxu0 0.0
        %3415 = vmatprep.subr.mxu0 0.0
        %3416 = vmatpush1.msra.mxu0 0.0
        %3417 = vmatprep.subr.mxu0 0.0
        %3418 = vmatpush1.msra.mxu0 0.0
        %3419 = vmatprep.subr.mxu0 0.0
        %3420 = vmatpush1.msra.mxu0 0.0
        %3421 = vmatprep.subr.mxu0 0.0
        %3422 = vmatpush1.msra.mxu0 0.0
        %3423 = vmatprep.subr.mxu0 0.0
        %3424 = vmatpush1.msra.mxu0 0.0
        %3425 = vmatprep.subr.mxu0 0.0
        %3426 = vmatpush1.msra.mxu0 0.0
        %3427 = vmatprep.subr.mxu0 0.0
        %3428 = vmatpush1.msra.mxu0 0.0
        %3429 = vmatprep.subr.mxu0 0.0
        %3430 = vmatpush1.msra.mxu0 0.0
        %3431 = vmatprep.subr.mxu0 0.0
        %3432 = vmatpush1.msra.mxu0 0.0
        %3433 = vmatprep.subr.mxu0 %v3403
        %3434 = vmatpush1.msra.mxu0 %v3401
        %3435 = vmatprep.subr.mxu0 %v3367
        %3436 = vmatpush1.msra.mxu0 %v3373
        %3437 = vmatprep.subr.mxu0 0.0
        %3438 = vmatpush2.msra.mxu0 0.0
        %3439 = vmatprep.subr.mxu0 0.0
        %3440 = vmatpush2.msra.mxu0 0.0
        %3441 = vmatprep.subr.mxu0 0.0
        %3442 = vmatpush2.msra.mxu0 0.0
        %3443 = vmatprep.subr.mxu0 0.0
        %3444 = vmatpush2.msra.mxu0 0.0
        %3445 = vmatprep.subr.mxu0 0.0
        %3446 = vmatpush2.msra.mxu0 0.0
        %3447 = vmatprep.subr.mxu0 0.0
        %3448 = vmatpush2.msra.mxu0 0.0
        %3449 = vmatprep.subr.mxu0 0.0
        %3450 = vmatpush2.msra.mxu0 0.0
        %3451 = vmatprep.subr.mxu0 0.0
        %3452 = vmatpush2.msra.mxu0 0.0
        %3453 = vmatprep.subr.mxu0 0.0
        %3454 = vmatpush2.msra.mxu0 0.0
        %3455 = vmatprep.subr.mxu0 0.0
        %3456 = vmatpush2.msra.mxu0 0.0
        %3457 = vmatprep.subr.mxu0 0.0
        %3458 = vmatpush2.msra.mxu0 0.0
        %3459 = vmatprep.subr.mxu0 0.0
        %3460 = vmatpush2.msra.mxu0 0.0
        %3461 = vmatprep.subr.mxu0 0.0
        %3462 = vmatpush2.msra.mxu0 0.0
        %3463 = vmatprep.subr.mxu0 0.0
        %3464 = vmatpush2.msra.mxu0 0.0
        %3465 = vmatprep.subr.mxu0 0.0
        %3466 = vmatpush2.msra.mxu0 0.0
        %3467 = vmatprep.subr.mxu0 0.0
        %3468 = vmatpush2.msra.mxu0 0.0
        %3469 = vmatprep.mubr.f32.mxu0 0.0
        %3470 = vmatmul.mubr.f32.gmra.mxu0 %v3378
        %v3471 = vpop.f32.mrf.mxu0
        %v3472 = vadd.f32 0.0, %v3471
        %v3473 = vpop.f32.mrf.mxu0
        %v3474 = vadd.f32 0.0, %v3473
        %3475 = vmatprep.mubr.f32.mxu0 0.0
        %3476 = vmatmul.mubr.f32.gmra.mxu0 %v3381
        %v3477 = vpop.f32.mrf.mxu0
        %v3478 = vadd.f32 0.0, %v3477
        %v3479 = vpop.f32.mrf.mxu0
        %v3480 = vadd.f32 0.0, %v3479
        %3481 = vmatprep.mubr.f32.mxu0 0.0
        %3482 = vmatmul.mubr.f32.gmra.mxu0 %v3384
        %v3483 = vpop.f32.mrf.mxu0
        %v3484 = vadd.f32 0.0, %v3483
        %v3485 = vpop.f32.mrf.mxu0
        %v3486 = vadd.f32 0.0, %v3485
        %3487 = vmatprep.mubr.f32.mxu0 0.0
        %3488 = vmatmul.mubr.f32.gmra.mxu0 %v3387
        %v3489 = vpop.f32.mrf.mxu0
        %v3490 = vadd.f32 0.0, %v3489
        %v3491 = vpop.f32.mrf.mxu0
        %v3492 = vadd.f32 0.0, %v3491
        %3493 = vmatprep.mubr.f32.mxu0 0.0
        %3494 = vmatmul.mubr.f32.gmra.mxu0 %v3390
        %v3495 = vpop.f32.mrf.mxu0
        %v3496 = vadd.f32 0.0, %v3495
        %v3497 = vpop.f32.mrf.mxu0
        %v3498 = vadd.f32 0.0, %v3497
        %3499 = vmatprep.mubr.f32.mxu0 0.0
        %3500 = vmatmul.mubr.f32.gmra.mxu0 %v3393
        %v3501 = vpop.f32.mrf.mxu0
        %v3502 = vadd.f32 0.0, %v3501
        %v3503 = vpop.f32.mrf.mxu0
        %v3504 = vadd.f32 0.0, %v3503
        %3505 = vmatprep.mubr.f32.mxu0 0.0
        %3506 = vmatmul.mubr.f32.gmra.mxu0 %v3396
        %v3507 = vpop.f32.mrf.mxu0
        %v3508 = vadd.f32 0.0, %v3507
        %v3509 = vpop.f32.mrf.mxu0
        %v3510 = vadd.f32 0.0, %v3509
        %3511 = vmatprep.mubr.f32.mxu0 0.0
        %3512 = vmatmul.mubr.f32.gmra.mxu0 %v3399
        %v3513 = vpop.f32.mrf.mxu0
        %v3514 = vadd.f32 0.0, %v3513
        %v3515 = vpop.f32.mrf.mxu0
        %v3516 = vadd.f32 0.0, %v3515
        %3517 = vdwg.mxu0
        %v3518 = vadd.f32 %v3339, %v3472
        %v3519 = vadd.f32 %v3340, %v3474
        %v3520 = vadd.f32 %v3341, %v3478
        %v3521 = vadd.f32 %v3342, %v3480
        %v3522 = vadd.f32 %v3343, %v3484
        %v3523 = vadd.f32 %v3344, %v3486
        %v3524 = vadd.f32 %v3345, %v3490
        %v3525 = vadd.f32 %v3346, %v3492
        %v3526 = vadd.f32 %v3347, %v3496
        %v3527 = vadd.f32 %v3348, %v3498
        %v3528 = vadd.f32 %v3349, %v3502
        %v3529 = vadd.f32 %v3350, %v3504
        %v3530 = vadd.f32 %v3351, %v3508
        %v3531 = vadd.f32 %v3352, %v3510
        %v3532 = vadd.f32 %v3353, %v3514
        %v3533 = vadd.f32 %v3354, %v3516
        %s3534 = scalar_lea.vmem %s1, 1216
        %v3535 = vld [vmem:[%s3534] sm:$0xff]
        %v3536 = vld [vmem:[%s3534 + $0x8] sm:$0xff]
        %v3537 = vld [vmem:[%s3534 + $0x10] sm:$0xff]
        %v3538 = vld [vmem:[%s3534 + $0x18] sm:$0xff]
        %v3539 = vld [vmem:[%s3534 + $0x20] sm:$0xff]
        %v3540 = vld [vmem:[%s3534 + $0x28] sm:$0xff]
        %v3541 = vld [vmem:[%s3534 + $0x30] sm:$0xff]
        %v3542 = vld [vmem:[%s3534 + $0x38] sm:$0xff]
        %3543 = vrot.lane.b32.xlu0 %v169, 109
        %v3544 = vpop.permute.xlu0 %3543
        %3545 = vrot.lane.b32.xlu0 %v170, 109
        %v3546 = vpop.permute.xlu0 %3545
        %3547 = vrot.lane.b32.xlu0 %v171, 109
        %v3548 = vpop.permute.xlu0 %3547
        %3549 = vrot.lane.b32.xlu0 %v172, 109
        %v3550 = vpop.permute.xlu0 %3549
        %vm3551 = vcmask 891904
        %v3552 = vsel %vm3551, %v3544, %v3546
        %v3553 = vsel %vm3551, %v3548, %v3550
        %v3557 = vsel %vm207, %v3535, 0
        %v3560 = vsel %vm207, %v3536, 0
        %v3563 = vsel %vm207, %v3537, 0
        %v3566 = vsel %vm207, %v3538, 0
        %v3569 = vsel %vm207, %v3539, 0
        %v3572 = vsel %vm207, %v3540, 0
        %v3575 = vsel %vm207, %v3541, 0
        %v3578 = vsel %vm207, %v3542, 0
        %v3580 = vsel %vm232, %v3553, 0
        %v3582 = vsel %vm232, %v3550, 0
        %3584 = vmatprep.subr.mxu0 0.0
        %3585 = vmatpush1.msra.mxu0 0.0
        %3586 = vmatprep.subr.mxu0 0.0
        %3587 = vmatpush1.msra.mxu0 0.0
        %3588 = vmatprep.subr.mxu0 0.0
        %3589 = vmatpush1.msra.mxu0 0.0
        %3590 = vmatprep.subr.mxu0 0.0
        %3591 = vmatpush1.msra.mxu0 0.0
        %3592 = vmatprep.subr.mxu0 0.0
        %3593 = vmatpush1.msra.mxu0 0.0
        %3594 = vmatprep.subr.mxu0 0.0
        %3595 = vmatpush1.msra.mxu0 0.0
        %3596 = vmatprep.subr.mxu0 0.0
        %3597 = vmatpush1.msra.mxu0 0.0
        %3598 = vmatprep.subr.mxu0 0.0
        %3599 = vmatpush1.msra.mxu0 0.0
        %3600 = vmatprep.subr.mxu0 0.0
        %3601 = vmatpush1.msra.mxu0 0.0
        %3602 = vmatprep.subr.mxu0 0.0
        %3603 = vmatpush1.msra.mxu0 0.0
        %3604 = vmatprep.subr.mxu0 0.0
        %3605 = vmatpush1.msra.mxu0 0.0
        %3606 = vmatprep.subr.mxu0 0.0
        %3607 = vmatpush1.msra.mxu0 0.0
        %3608 = vmatprep.subr.mxu0 0.0
        %3609 = vmatpush1.msra.mxu0 0.0
        %3610 = vmatprep.subr.mxu0 0.0
        %3611 = vmatpush1.msra.mxu0 0.0
        %3612 = vmatprep.subr.mxu0 %v3582
        %3613 = vmatpush1.msra.mxu0 %v3580
        %3614 = vmatprep.subr.mxu0 %v3546
        %3615 = vmatpush1.msra.mxu0 %v3552
        %3616 = vmatprep.subr.mxu0 0.0
        %3617 = vmatpush2.msra.mxu0 0.0
        %3618 = vmatprep.subr.mxu0 0.0
        %3619 = vmatpush2.msra.mxu0 0.0
        %3620 = vmatprep.subr.mxu0 0.0
        %3621 = vmatpush2.msra.mxu0 0.0
        %3622 = vmatprep.subr.mxu0 0.0
        %3623 = vmatpush2.msra.mxu0 0.0
        %3624 = vmatprep.subr.mxu0 0.0
        %3625 = vmatpush2.msra.mxu0 0.0
        %3626 = vmatprep.subr.mxu0 0.0
        %3627 = vmatpush2.msra.mxu0 0.0
        %3628 = vmatprep.subr.mxu0 0.0
        %3629 = vmatpush2.msra.mxu0 0.0
        %3630 = vmatprep.subr.mxu0 0.0
        %3631 = vmatpush2.msra.mxu0 0.0
        %3632 = vmatprep.subr.mxu0 0.0
        %3633 = vmatpush2.msra.mxu0 0.0
        %3634 = vmatprep.subr.mxu0 0.0
        %3635 = vmatpush2.msra.mxu0 0.0
        %3636 = vmatprep.subr.mxu0 0.0
        %3637 = vmatpush2.msra.mxu0 0.0
        %3638 = vmatprep.subr.mxu0 0.0
        %3639 = vmatpush2.msra.mxu0 0.0
        %3640 = vmatprep.subr.mxu0 0.0
        %3641 = vmatpush2.msra.mxu0 0.0
        %3642 = vmatprep.subr.mxu0 0.0
        %3643 = vmatpush2.msra.mxu0 0.0
        %3644 = vmatprep.subr.mxu0 0.0
        %3645 = vmatpush2.msra.mxu0 0.0
        %3646 = vmatprep.subr.mxu0 0.0
        %3647 = vmatpush2.msra.mxu0 0.0
        %3648 = vmatprep.mubr.f32.mxu0 0.0
        %3649 = vmatmul.mubr.f32.gmra.mxu0 %v3557
        %v3650 = vpop.f32.mrf.mxu0
        %v3651 = vadd.f32 0.0, %v3650
        %v3652 = vpop.f32.mrf.mxu0
        %v3653 = vadd.f32 0.0, %v3652
        %3654 = vmatprep.mubr.f32.mxu0 0.0
        %3655 = vmatmul.mubr.f32.gmra.mxu0 %v3560
        %v3656 = vpop.f32.mrf.mxu0
        %v3657 = vadd.f32 0.0, %v3656
        %v3658 = vpop.f32.mrf.mxu0
        %v3659 = vadd.f32 0.0, %v3658
        %3660 = vmatprep.mubr.f32.mxu0 0.0
        %3661 = vmatmul.mubr.f32.gmra.mxu0 %v3563
        %v3662 = vpop.f32.mrf.mxu0
        %v3663 = vadd.f32 0.0, %v3662
        %v3664 = vpop.f32.mrf.mxu0
        %v3665 = vadd.f32 0.0, %v3664
        %3666 = vmatprep.mubr.f32.mxu0 0.0
        %3667 = vmatmul.mubr.f32.gmra.mxu0 %v3566
        %v3668 = vpop.f32.mrf.mxu0
        %v3669 = vadd.f32 0.0, %v3668
        %v3670 = vpop.f32.mrf.mxu0
        %v3671 = vadd.f32 0.0, %v3670
        %3672 = vmatprep.mubr.f32.mxu0 0.0
        %3673 = vmatmul.mubr.f32.gmra.mxu0 %v3569
        %v3674 = vpop.f32.mrf.mxu0
        %v3675 = vadd.f32 0.0, %v3674
        %v3676 = vpop.f32.mrf.mxu0
        %v3677 = vadd.f32 0.0, %v3676
        %3678 = vmatprep.mubr.f32.mxu0 0.0
        %3679 = vmatmul.mubr.f32.gmra.mxu0 %v3572
        %v3680 = vpop.f32.mrf.mxu0
        %v3681 = vadd.f32 0.0, %v3680
        %v3682 = vpop.f32.mrf.mxu0
        %v3683 = vadd.f32 0.0, %v3682
        %3684 = vmatprep.mubr.f32.mxu0 0.0
        %3685 = vmatmul.mubr.f32.gmra.mxu0 %v3575
        %v3686 = vpop.f32.mrf.mxu0
        %v3687 = vadd.f32 0.0, %v3686
        %v3688 = vpop.f32.mrf.mxu0
        %v3689 = vadd.f32 0.0, %v3688
        %3690 = vmatprep.mubr.f32.mxu0 0.0
        %3691 = vmatmul.mubr.f32.gmra.mxu0 %v3578
        %v3692 = vpop.f32.mrf.mxu0
        %v3693 = vadd.f32 0.0, %v3692
        %v3694 = vpop.f32.mrf.mxu0
        %v3695 = vadd.f32 0.0, %v3694
        %3696 = vdwg.mxu0
        %v3697 = vadd.f32 %v3518, %v3651
        %v3698 = vadd.f32 %v3519, %v3653
        %v3699 = vadd.f32 %v3520, %v3657
        %v3700 = vadd.f32 %v3521, %v3659
        %v3701 = vadd.f32 %v3522, %v3663
        %v3702 = vadd.f32 %v3523, %v3665
        %v3703 = vadd.f32 %v3524, %v3669
        %v3704 = vadd.f32 %v3525, %v3671
        %v3705 = vadd.f32 %v3526, %v3675
        %v3706 = vadd.f32 %v3527, %v3677
        %v3707 = vadd.f32 %v3528, %v3681
        %v3708 = vadd.f32 %v3529, %v3683
        %v3709 = vadd.f32 %v3530, %v3687
        %v3710 = vadd.f32 %v3531, %v3689
        %v3711 = vadd.f32 %v3532, %v3693
        %v3712 = vadd.f32 %v3533, %v3695
        %s3713 = scalar_lea.vmem %s1, 1280
        %v3714 = vld [vmem:[%s3713] sm:$0xff]
        %v3715 = vld [vmem:[%s3713 + $0x8] sm:$0xff]
        %v3716 = vld [vmem:[%s3713 + $0x10] sm:$0xff]
        %v3717 = vld [vmem:[%s3713 + $0x18] sm:$0xff]
        %v3718 = vld [vmem:[%s3713 + $0x20] sm:$0xff]
        %v3719 = vld [vmem:[%s3713 + $0x28] sm:$0xff]
        %v3720 = vld [vmem:[%s3713 + $0x30] sm:$0xff]
        %v3721 = vld [vmem:[%s3713 + $0x38] sm:$0xff]
        %3722 = vrot.lane.b32.xlu0 %v169, 108
        %v3723 = vpop.permute.xlu0 %3722
        %3724 = vrot.lane.b32.xlu0 %v170, 108
        %v3725 = vpop.permute.xlu0 %3724
        %3726 = vrot.lane.b32.xlu0 %v171, 108
        %v3727 = vpop.permute.xlu0 %3726
        %3728 = vrot.lane.b32.xlu0 %v172, 108
        %v3729 = vpop.permute.xlu0 %3728
        %vm3730 = vcmask 883712
        %v3731 = vsel %vm3730, %v3723, %v3725
        %v3732 = vsel %vm3730, %v3727, %v3729
        %v3736 = vsel %vm207, %v3714, 0
        %v3739 = vsel %vm207, %v3715, 0
        %v3742 = vsel %vm207, %v3716, 0
        %v3745 = vsel %vm207, %v3717, 0
        %v3748 = vsel %vm207, %v3718, 0
        %v3751 = vsel %vm207, %v3719, 0
        %v3754 = vsel %vm207, %v3720, 0
        %v3757 = vsel %vm207, %v3721, 0
        %v3759 = vsel %vm232, %v3732, 0
        %v3761 = vsel %vm232, %v3729, 0
        %3763 = vmatprep.subr.mxu0 0.0
        %3764 = vmatpush1.msra.mxu0 0.0
        %3765 = vmatprep.subr.mxu0 0.0
        %3766 = vmatpush1.msra.mxu0 0.0
        %3767 = vmatprep.subr.mxu0 0.0
        %3768 = vmatpush1.msra.mxu0 0.0
        %3769 = vmatprep.subr.mxu0 0.0
        %3770 = vmatpush1.msra.mxu0 0.0
        %3771 = vmatprep.subr.mxu0 0.0
        %3772 = vmatpush1.msra.mxu0 0.0
        %3773 = vmatprep.subr.mxu0 0.0
        %3774 = vmatpush1.msra.mxu0 0.0
        %3775 = vmatprep.subr.mxu0 0.0
        %3776 = vmatpush1.msra.mxu0 0.0
        %3777 = vmatprep.subr.mxu0 0.0
        %3778 = vmatpush1.msra.mxu0 0.0
        %3779 = vmatprep.subr.mxu0 0.0
        %3780 = vmatpush1.msra.mxu0 0.0
        %3781 = vmatprep.subr.mxu0 0.0
        %3782 = vmatpush1.msra.mxu0 0.0
        %3783 = vmatprep.subr.mxu0 0.0
        %3784 = vmatpush1.msra.mxu0 0.0
        %3785 = vmatprep.subr.mxu0 0.0
        %3786 = vmatpush1.msra.mxu0 0.0
        %3787 = vmatprep.subr.mxu0 0.0
        %3788 = vmatpush1.msra.mxu0 0.0
        %3789 = vmatprep.subr.mxu0 0.0
        %3790 = vmatpush1.msra.mxu0 0.0
        %3791 = vmatprep.subr.mxu0 %v3761
        %3792 = vmatpush1.msra.mxu0 %v3759
        %3793 = vmatprep.subr.mxu0 %v3725
        %3794 = vmatpush1.msra.mxu0 %v3731
        %3795 = vmatprep.subr.mxu0 0.0
        %3796 = vmatpush2.msra.mxu0 0.0
        %3797 = vmatprep.subr.mxu0 0.0
        %3798 = vmatpush2.msra.mxu0 0.0
        %3799 = vmatprep.subr.mxu0 0.0
        %3800 = vmatpush2.msra.mxu0 0.0
        %3801 = vmatprep.subr.mxu0 0.0
        %3802 = vmatpush2.msra.mxu0 0.0
        %3803 = vmatprep.subr.mxu0 0.0
        %3804 = vmatpush2.msra.mxu0 0.0
        %3805 = vmatprep.subr.mxu0 0.0
        %3806 = vmatpush2.msra.mxu0 0.0
        %3807 = vmatprep.subr.mxu0 0.0
        %3808 = vmatpush2.msra.mxu0 0.0
        %3809 = vmatprep.subr.mxu0 0.0
        %3810 = vmatpush2.msra.mxu0 0.0
        %3811 = vmatprep.subr.mxu0 0.0
        %3812 = vmatpush2.msra.mxu0 0.0
        %3813 = vmatprep.subr.mxu0 0.0
        %3814 = vmatpush2.msra.mxu0 0.0
        %3815 = vmatprep.subr.mxu0 0.0
        %3816 = vmatpush2.msra.mxu0 0.0
        %3817 = vmatprep.subr.mxu0 0.0
        %3818 = vmatpush2.msra.mxu0 0.0
        %3819 = vmatprep.subr.mxu0 0.0
        %3820 = vmatpush2.msra.mxu0 0.0
        %3821 = vmatprep.subr.mxu0 0.0
        %3822 = vmatpush2.msra.mxu0 0.0
        %3823 = vmatprep.subr.mxu0 0.0
        %3824 = vmatpush2.msra.mxu0 0.0
        %3825 = vmatprep.subr.mxu0 0.0
        %3826 = vmatpush2.msra.mxu0 0.0
        %3827 = vmatprep.mubr.f32.mxu0 0.0
        %3828 = vmatmul.mubr.f32.gmra.mxu0 %v3736
        %v3829 = vpop.f32.mrf.mxu0
        %v3830 = vadd.f32 0.0, %v3829
        %v3831 = vpop.f32.mrf.mxu0
        %v3832 = vadd.f32 0.0, %v3831
        %3833 = vmatprep.mubr.f32.mxu0 0.0
        %3834 = vmatmul.mubr.f32.gmra.mxu0 %v3739
        %v3835 = vpop.f32.mrf.mxu0
        %v3836 = vadd.f32 0.0, %v3835
        %v3837 = vpop.f32.mrf.mxu0
        %v3838 = vadd.f32 0.0, %v3837
        %3839 = vmatprep.mubr.f32.mxu0 0.0
        %3840 = vmatmul.mubr.f32.gmra.mxu0 %v3742
        %v3841 = vpop.f32.mrf.mxu0
        %v3842 = vadd.f32 0.0, %v3841
        %v3843 = vpop.f32.mrf.mxu0
        %v3844 = vadd.f32 0.0, %v3843
        %3845 = vmatprep.mubr.f32.mxu0 0.0
        %3846 = vmatmul.mubr.f32.gmra.mxu0 %v3745
        %v3847 = vpop.f32.mrf.mxu0
        %v3848 = vadd.f32 0.0, %v3847
        %v3849 = vpop.f32.mrf.mxu0
        %v3850 = vadd.f32 0.0, %v3849
        %3851 = vmatprep.mubr.f32.mxu0 0.0
        %3852 = vmatmul.mubr.f32.gmra.mxu0 %v3748
        %v3853 = vpop.f32.mrf.mxu0
        %v3854 = vadd.f32 0.0, %v3853
        %v3855 = vpop.f32.mrf.mxu0
        %v3856 = vadd.f32 0.0, %v3855
        %3857 = vmatprep.mubr.f32.mxu0 0.0
        %3858 = vmatmul.mubr.f32.gmra.mxu0 %v3751
        %v3859 = vpop.f32.mrf.mxu0
        %v3860 = vadd.f32 0.0, %v3859
        %v3861 = vpop.f32.mrf.mxu0
        %v3862 = vadd.f32 0.0, %v3861
        %3863 = vmatprep.mubr.f32.mxu0 0.0
        %3864 = vmatmul.mubr.f32.gmra.mxu0 %v3754
        %v3865 = vpop.f32.mrf.mxu0
        %v3866 = vadd.f32 0.0, %v3865
        %v3867 = vpop.f32.mrf.mxu0
        %v3868 = vadd.f32 0.0, %v3867
        %3869 = vmatprep.mubr.f32.mxu0 0.0
        %3870 = vmatmul.mubr.f32.gmra.mxu0 %v3757
        %v3871 = vpop.f32.mrf.mxu0
        %v3872 = vadd.f32 0.0, %v3871
        %v3873 = vpop.f32.mrf.mxu0
        %v3874 = vadd.f32 0.0, %v3873
        %3875 = vdwg.mxu0
        %v3876 = vadd.f32 %v3697, %v3830
        %v3877 = vadd.f32 %v3698, %v3832
        %v3878 = vadd.f32 %v3699, %v3836
        %v3879 = vadd.f32 %v3700, %v3838
        %v3880 = vadd.f32 %v3701, %v3842
        %v3881 = vadd.f32 %v3702, %v3844
        %v3882 = vadd.f32 %v3703, %v3848
        %v3883 = vadd.f32 %v3704, %v3850
        %v3884 = vadd.f32 %v3705, %v3854
        %v3885 = vadd.f32 %v3706, %v3856
        %v3886 = vadd.f32 %v3707, %v3860
        %v3887 = vadd.f32 %v3708, %v3862
        %v3888 = vadd.f32 %v3709, %v3866
        %v3889 = vadd.f32 %v3710, %v3868
        %v3890 = vadd.f32 %v3711, %v3872
        %v3891 = vadd.f32 %v3712, %v3874
        %s3892 = scalar_lea.vmem %s1, 1344
        %v3893 = vld [vmem:[%s3892] sm:$0xff]
        %v3894 = vld [vmem:[%s3892 + $0x8] sm:$0xff]
        %v3895 = vld [vmem:[%s3892 + $0x10] sm:$0xff]
        %v3896 = vld [vmem:[%s3892 + $0x18] sm:$0xff]
        %v3897 = vld [vmem:[%s3892 + $0x20] sm:$0xff]
        %v3898 = vld [vmem:[%s3892 + $0x28] sm:$0xff]
        %v3899 = vld [vmem:[%s3892 + $0x30] sm:$0xff]
        %v3900 = vld [vmem:[%s3892 + $0x38] sm:$0xff]
        %3901 = vrot.lane.b32.xlu0 %v169, 107
        %v3902 = vpop.permute.xlu0 %3901
        %3903 = vrot.lane.b32.xlu0 %v170, 107
        %v3904 = vpop.permute.xlu0 %3903
        %3905 = vrot.lane.b32.xlu0 %v171, 107
        %v3906 = vpop.permute.xlu0 %3905
        %3907 = vrot.lane.b32.xlu0 %v172, 107
        %v3908 = vpop.permute.xlu0 %3907
        %vm3909 = vcmask 875520
        %v3910 = vsel %vm3909, %v3902, %v3904
        %v3911 = vsel %vm3909, %v3906, %v3908
        %v3915 = vsel %vm207, %v3893, 0
        %v3918 = vsel %vm207, %v3894, 0
        %v3921 = vsel %vm207, %v3895, 0
        %v3924 = vsel %vm207, %v3896, 0
        %v3927 = vsel %vm207, %v3897, 0
        %v3930 = vsel %vm207, %v3898, 0
        %v3933 = vsel %vm207, %v3899, 0
        %v3936 = vsel %vm207, %v3900, 0
        %v3938 = vsel %vm232, %v3911, 0
        %v3940 = vsel %vm232, %v3908, 0
        %3942 = vmatprep.subr.mxu0 0.0
        %3943 = vmatpush1.msra.mxu0 0.0
        %3944 = vmatprep.subr.mxu0 0.0
        %3945 = vmatpush1.msra.mxu0 0.0
        %3946 = vmatprep.subr.mxu0 0.0
        %3947 = vmatpush1.msra.mxu0 0.0
        %3948 = vmatprep.subr.mxu0 0.0
        %3949 = vmatpush1.msra.mxu0 0.0
        %3950 = vmatprep.subr.mxu0 0.0
        %3951 = vmatpush1.msra.mxu0 0.0
        %3952 = vmatprep.subr.mxu0 0.0
        %3953 = vmatpush1.msra.mxu0 0.0
        %3954 = vmatprep.subr.mxu0 0.0
        %3955 = vmatpush1.msra.mxu0 0.0
        %3956 = vmatprep.subr.mxu0 0.0
        %3957 = vmatpush1.msra.mxu0 0.0
        %3958 = vmatprep.subr.mxu0 0.0
        %3959 = vmatpush1.msra.mxu0 0.0
        %3960 = vmatprep.subr.mxu0 0.0
        %3961 = vmatpush1.msra.mxu0 0.0
        %3962 = vmatprep.subr.mxu0 0.0
        %3963 = vmatpush1.msra.mxu0 0.0
        %3964 = vmatprep.subr.mxu0 0.0
        %3965 = vmatpush1.msra.mxu0 0.0
        %3966 = vmatprep.subr.mxu0 0.0
        %3967 = vmatpush1.msra.mxu0 0.0
        %3968 = vmatprep.subr.mxu0 0.0
        %3969 = vmatpush1.msra.mxu0 0.0
        %3970 = vmatprep.subr.mxu0 %v3940
        %3971 = vmatpush1.msra.mxu0 %v3938
        %3972 = vmatprep.subr.mxu0 %v3904
        %3973 = vmatpush1.msra.mxu0 %v3910
        %3974 = vmatprep.subr.mxu0 0.0
        %3975 = vmatpush2.msra.mxu0 0.0
        %3976 = vmatprep.subr.mxu0 0.0
        %3977 = vmatpush2.msra.mxu0 0.0
        %3978 = vmatprep.subr.mxu0 0.0
        %3979 = vmatpush2.msra.mxu0 0.0
        %3980 = vmatprep.subr.mxu0 0.0
        %3981 = vmatpush2.msra.mxu0 0.0
        %3982 = vmatprep.subr.mxu0 0.0
        %3983 = vmatpush2.msra.mxu0 0.0
        %3984 = vmatprep.subr.mxu0 0.0
        %3985 = vmatpush2.msra.mxu0 0.0
        %3986 = vmatprep.subr.mxu0 0.0
        %3987 = vmatpush2.msra.mxu0 0.0
        %3988 = vmatprep.subr.mxu0 0.0
        %3989 = vmatpush2.msra.mxu0 0.0
        %3990 = vmatprep.subr.mxu0 0.0
        %3991 = vmatpush2.msra.mxu0 0.0
        %3992 = vmatprep.subr.mxu0 0.0
        %3993 = vmatpush2.msra.mxu0 0.0
        %3994 = vmatprep.subr.mxu0 0.0
        %3995 = vmatpush2.msra.mxu0 0.0
        %3996 = vmatprep.subr.mxu0 0.0
        %3997 = vmatpush2.msra.mxu0 0.0
        %3998 = vmatprep.subr.mxu0 0.0
        %3999 = vmatpush2.msra.mxu0 0.0
        %4000 = vmatprep.subr.mxu0 0.0
        %4001 = vmatpush2.msra.mxu0 0.0
        %4002 = vmatprep.subr.mxu0 0.0
        %4003 = vmatpush2.msra.mxu0 0.0
        %4004 = vmatprep.subr.mxu0 0.0
        %4005 = vmatpush2.msra.mxu0 0.0
        %4006 = vmatprep.mubr.f32.mxu0 0.0
        %4007 = vmatmul.mubr.f32.gmra.mxu0 %v3915
        %v4008 = vpop.f32.mrf.mxu0
        %v4009 = vadd.f32 0.0, %v4008
        %v4010 = vpop.f32.mrf.mxu0
        %v4011 = vadd.f32 0.0, %v4010
        %4012 = vmatprep.mubr.f32.mxu0 0.0
        %4013 = vmatmul.mubr.f32.gmra.mxu0 %v3918
        %v4014 = vpop.f32.mrf.mxu0
        %v4015 = vadd.f32 0.0, %v4014
        %v4016 = vpop.f32.mrf.mxu0
        %v4017 = vadd.f32 0.0, %v4016
        %4018 = vmatprep.mubr.f32.mxu0 0.0
        %4019 = vmatmul.mubr.f32.gmra.mxu0 %v3921
        %v4020 = vpop.f32.mrf.mxu0
        %v4021 = vadd.f32 0.0, %v4020
        %v4022 = vpop.f32.mrf.mxu0
        %v4023 = vadd.f32 0.0, %v4022
        %4024 = vmatprep.mubr.f32.mxu0 0.0
        %4025 = vmatmul.mubr.f32.gmra.mxu0 %v3924
        %v4026 = vpop.f32.mrf.mxu0
        %v4027 = vadd.f32 0.0, %v4026
        %v4028 = vpop.f32.mrf.mxu0
        %v4029 = vadd.f32 0.0, %v4028
        %4030 = vmatprep.mubr.f32.mxu0 0.0
        %4031 = vmatmul.mubr.f32.gmra.mxu0 %v3927
        %v4032 = vpop.f32.mrf.mxu0
        %v4033 = vadd.f32 0.0, %v4032
        %v4034 = vpop.f32.mrf.mxu0
        %v4035 = vadd.f32 0.0, %v4034
        %4036 = vmatprep.mubr.f32.mxu0 0.0
        %4037 = vmatmul.mubr.f32.gmra.mxu0 %v3930
        %v4038 = vpop.f32.mrf.mxu0
        %v4039 = vadd.f32 0.0, %v4038
        %v4040 = vpop.f32.mrf.mxu0
        %v4041 = vadd.f32 0.0, %v4040
        %4042 = vmatprep.mubr.f32.mxu0 0.0
        %4043 = vmatmul.mubr.f32.gmra.mxu0 %v3933
        %v4044 = vpop.f32.mrf.mxu0
        %v4045 = vadd.f32 0.0, %v4044
        %v4046 = vpop.f32.mrf.mxu0
        %v4047 = vadd.f32 0.0, %v4046
        %4048 = vmatprep.mubr.f32.mxu0 0.0
        %4049 = vmatmul.mubr.f32.gmra.mxu0 %v3936
        %v4050 = vpop.f32.mrf.mxu0
        %v4051 = vadd.f32 0.0, %v4050
        %v4052 = vpop.f32.mrf.mxu0
        %v4053 = vadd.f32 0.0, %v4052
        %4054 = vdwg.mxu0
        %v4055 = vadd.f32 %v3876, %v4009
        %v4056 = vadd.f32 %v3877, %v4011
        %v4057 = vadd.f32 %v3878, %v4015
        %v4058 = vadd.f32 %v3879, %v4017
        %v4059 = vadd.f32 %v3880, %v4021
        %v4060 = vadd.f32 %v3881, %v4023
        %v4061 = vadd.f32 %v3882, %v4027
        %v4062 = vadd.f32 %v3883, %v4029
        %v4063 = vadd.f32 %v3884, %v4033
        %v4064 = vadd.f32 %v3885, %v4035
        %v4065 = vadd.f32 %v3886, %v4039
        %v4066 = vadd.f32 %v3887, %v4041
        %v4067 = vadd.f32 %v3888, %v4045
        %v4068 = vadd.f32 %v3889, %v4047
        %v4069 = vadd.f32 %v3890, %v4051
        %v4070 = vadd.f32 %v3891, %v4053
        %s4071 = scalar_lea.vmem %s1, 1408
        %v4072 = vld [vmem:[%s4071] sm:$0xff]
        %v4073 = vld [vmem:[%s4071 + $0x8] sm:$0xff]
        %v4074 = vld [vmem:[%s4071 + $0x10] sm:$0xff]
        %v4075 = vld [vmem:[%s4071 + $0x18] sm:$0xff]
        %v4076 = vld [vmem:[%s4071 + $0x20] sm:$0xff]
        %v4077 = vld [vmem:[%s4071 + $0x28] sm:$0xff]
        %v4078 = vld [vmem:[%s4071 + $0x30] sm:$0xff]
        %v4079 = vld [vmem:[%s4071 + $0x38] sm:$0xff]
        %4080 = vrot.lane.b32.xlu0 %v169, 106
        %v4081 = vpop.permute.xlu0 %4080
        %4082 = vrot.lane.b32.xlu0 %v170, 106
        %v4083 = vpop.permute.xlu0 %4082
        %4084 = vrot.lane.b32.xlu0 %v171, 106
        %v4085 = vpop.permute.xlu0 %4084
        %4086 = vrot.lane.b32.xlu0 %v172, 106
        %v4087 = vpop.permute.xlu0 %4086
        %vm4088 = vcmask 867328
        %v4089 = vsel %vm4088, %v4081, %v4083
        %v4090 = vsel %vm4088, %v4085, %v4087
        %v4094 = vsel %vm207, %v4072, 0
        %v4097 = vsel %vm207, %v4073, 0
        %v4100 = vsel %vm207, %v4074, 0
        %v4103 = vsel %vm207, %v4075, 0
        %v4106 = vsel %vm207, %v4076, 0
        %v4109 = vsel %vm207, %v4077, 0
        %v4112 = vsel %vm207, %v4078, 0
        %v4115 = vsel %vm207, %v4079, 0
        %v4117 = vsel %vm232, %v4090, 0
        %v4119 = vsel %vm232, %v4087, 0
        %4121 = vmatprep.subr.mxu0 0.0
        %4122 = vmatpush1.msra.mxu0 0.0
        %4123 = vmatprep.subr.mxu0 0.0
        %4124 = vmatpush1.msra.mxu0 0.0
        %4125 = vmatprep.subr.mxu0 0.0
        %4126 = vmatpush1.msra.mxu0 0.0
        %4127 = vmatprep.subr.mxu0 0.0
        %4128 = vmatpush1.msra.mxu0 0.0
        %4129 = vmatprep.subr.mxu0 0.0
        %4130 = vmatpush1.msra.mxu0 0.0
        %4131 = vmatprep.subr.mxu0 0.0
        %4132 = vmatpush1.msra.mxu0 0.0
        %4133 = vmatprep.subr.mxu0 0.0
        %4134 = vmatpush1.msra.mxu0 0.0
        %4135 = vmatprep.subr.mxu0 0.0
        %4136 = vmatpush1.msra.mxu0 0.0
        %4137 = vmatprep.subr.mxu0 0.0
        %4138 = vmatpush1.msra.mxu0 0.0
        %4139 = vmatprep.subr.mxu0 0.0
        %4140 = vmatpush1.msra.mxu0 0.0
        %4141 = vmatprep.subr.mxu0 0.0
        %4142 = vmatpush1.msra.mxu0 0.0
        %4143 = vmatprep.subr.mxu0 0.0
        %4144 = vmatpush1.msra.mxu0 0.0
        %4145 = vmatprep.subr.mxu0 0.0
        %4146 = vmatpush1.msra.mxu0 0.0
        %4147 = vmatprep.subr.mxu0 0.0
        %4148 = vmatpush1.msra.mxu0 0.0
        %4149 = vmatprep.subr.mxu0 %v4119
        %4150 = vmatpush1.msra.mxu0 %v4117
        %4151 = vmatprep.subr.mxu0 %v4083
        %4152 = vmatpush1.msra.mxu0 %v4089
        %4153 = vmatprep.subr.mxu0 0.0
        %4154 = vmatpush2.msra.mxu0 0.0
        %4155 = vmatprep.subr.mxu0 0.0
        %4156 = vmatpush2.msra.mxu0 0.0
        %4157 = vmatprep.subr.mxu0 0.0
        %4158 = vmatpush2.msra.mxu0 0.0
        %4159 = vmatprep.subr.mxu0 0.0
        %4160 = vmatpush2.msra.mxu0 0.0
        %4161 = vmatprep.subr.mxu0 0.0
        %4162 = vmatpush2.msra.mxu0 0.0
        %4163 = vmatprep.subr.mxu0 0.0
        %4164 = vmatpush2.msra.mxu0 0.0
        %4165 = vmatprep.subr.mxu0 0.0
        %4166 = vmatpush2.msra.mxu0 0.0
        %4167 = vmatprep.subr.mxu0 0.0
        %4168 = vmatpush2.msra.mxu0 0.0
        %4169 = vmatprep.subr.mxu0 0.0
        %4170 = vmatpush2.msra.mxu0 0.0
        %4171 = vmatprep.subr.mxu0 0.0
        %4172 = vmatpush2.msra.mxu0 0.0
        %4173 = vmatprep.subr.mxu0 0.0
        %4174 = vmatpush2.msra.mxu0 0.0
        %4175 = vmatprep.subr.mxu0 0.0
        %4176 = vmatpush2.msra.mxu0 0.0
        %4177 = vmatprep.subr.mxu0 0.0
        %4178 = vmatpush2.msra.mxu0 0.0
        %4179 = vmatprep.subr.mxu0 0.0
        %4180 = vmatpush2.msra.mxu0 0.0
        %4181 = vmatprep.subr.mxu0 0.0
        %4182 = vmatpush2.msra.mxu0 0.0
        %4183 = vmatprep.subr.mxu0 0.0
        %4184 = vmatpush2.msra.mxu0 0.0
        %4185 = vmatprep.mubr.f32.mxu0 0.0
        %4186 = vmatmul.mubr.f32.gmra.mxu0 %v4094
        %v4187 = vpop.f32.mrf.mxu0
        %v4188 = vadd.f32 0.0, %v4187
        %v4189 = vpop.f32.mrf.mxu0
        %v4190 = vadd.f32 0.0, %v4189
        %4191 = vmatprep.mubr.f32.mxu0 0.0
        %4192 = vmatmul.mubr.f32.gmra.mxu0 %v4097
        %v4193 = vpop.f32.mrf.mxu0
        %v4194 = vadd.f32 0.0, %v4193
        %v4195 = vpop.f32.mrf.mxu0
        %v4196 = vadd.f32 0.0, %v4195
        %4197 = vmatprep.mubr.f32.mxu0 0.0
        %4198 = vmatmul.mubr.f32.gmra.mxu0 %v4100
        %v4199 = vpop.f32.mrf.mxu0
        %v4200 = vadd.f32 0.0, %v4199
        %v4201 = vpop.f32.mrf.mxu0
        %v4202 = vadd.f32 0.0, %v4201
        %4203 = vmatprep.mubr.f32.mxu0 0.0
        %4204 = vmatmul.mubr.f32.gmra.mxu0 %v4103
        %v4205 = vpop.f32.mrf.mxu0
        %v4206 = vadd.f32 0.0, %v4205
        %v4207 = vpop.f32.mrf.mxu0
        %v4208 = vadd.f32 0.0, %v4207
        %4209 = vmatprep.mubr.f32.mxu0 0.0
        %4210 = vmatmul.mubr.f32.gmra.mxu0 %v4106
        %v4211 = vpop.f32.mrf.mxu0
        %v4212 = vadd.f32 0.0, %v4211
        %v4213 = vpop.f32.mrf.mxu0
        %v4214 = vadd.f32 0.0, %v4213
        %4215 = vmatprep.mubr.f32.mxu0 0.0
        %4216 = vmatmul.mubr.f32.gmra.mxu0 %v4109
        %v4217 = vpop.f32.mrf.mxu0
        %v4218 = vadd.f32 0.0, %v4217
        %v4219 = vpop.f32.mrf.mxu0
        %v4220 = vadd.f32 0.0, %v4219
        %4221 = vmatprep.mubr.f32.mxu0 0.0
        %4222 = vmatmul.mubr.f32.gmra.mxu0 %v4112
        %v4223 = vpop.f32.mrf.mxu0
        %v4224 = vadd.f32 0.0, %v4223
        %v4225 = vpop.f32.mrf.mxu0
        %v4226 = vadd.f32 0.0, %v4225
        %4227 = vmatprep.mubr.f32.mxu0 0.0
        %4228 = vmatmul.mubr.f32.gmra.mxu0 %v4115
        %v4229 = vpop.f32.mrf.mxu0
        %v4230 = vadd.f32 0.0, %v4229
        %v4231 = vpop.f32.mrf.mxu0
        %v4232 = vadd.f32 0.0, %v4231
        %4233 = vdwg.mxu0
        %v4234 = vadd.f32 %v4055, %v4188
        %v4235 = vadd.f32 %v4056, %v4190
        %v4236 = vadd.f32 %v4057, %v4194
        %v4237 = vadd.f32 %v4058, %v4196
        %v4238 = vadd.f32 %v4059, %v4200
        %v4239 = vadd.f32 %v4060, %v4202
        %v4240 = vadd.f32 %v4061, %v4206
        %v4241 = vadd.f32 %v4062, %v4208
        %v4242 = vadd.f32 %v4063, %v4212
        %v4243 = vadd.f32 %v4064, %v4214
        %v4244 = vadd.f32 %v4065, %v4218
        %v4245 = vadd.f32 %v4066, %v4220
        %v4246 = vadd.f32 %v4067, %v4224
        %v4247 = vadd.f32 %v4068, %v4226
        %v4248 = vadd.f32 %v4069, %v4230
        %v4249 = vadd.f32 %v4070, %v4232
        %s4250 = scalar_lea.vmem %s1, 1472
        %v4251 = vld [vmem:[%s4250] sm:$0xff]
        %v4252 = vld [vmem:[%s4250 + $0x8] sm:$0xff]
        %v4253 = vld [vmem:[%s4250 + $0x10] sm:$0xff]
        %v4254 = vld [vmem:[%s4250 + $0x18] sm:$0xff]
        %v4255 = vld [vmem:[%s4250 + $0x20] sm:$0xff]
        %v4256 = vld [vmem:[%s4250 + $0x28] sm:$0xff]
        %v4257 = vld [vmem:[%s4250 + $0x30] sm:$0xff]
        %v4258 = vld [vmem:[%s4250 + $0x38] sm:$0xff]
        %4259 = vrot.lane.b32.xlu0 %v169, 105
        %v4260 = vpop.permute.xlu0 %4259
        %4261 = vrot.lane.b32.xlu0 %v170, 105
        %v4262 = vpop.permute.xlu0 %4261
        %4263 = vrot.lane.b32.xlu0 %v171, 105
        %v4264 = vpop.permute.xlu0 %4263
        %4265 = vrot.lane.b32.xlu0 %v172, 105
        %v4266 = vpop.permute.xlu0 %4265
        %vm4267 = vcmask 859136
        %v4268 = vsel %vm4267, %v4260, %v4262
        %v4269 = vsel %vm4267, %v4264, %v4266
        %v4273 = vsel %vm207, %v4251, 0
        %v4276 = vsel %vm207, %v4252, 0
        %v4279 = vsel %vm207, %v4253, 0
        %v4282 = vsel %vm207, %v4254, 0
        %v4285 = vsel %vm207, %v4255, 0
        %v4288 = vsel %vm207, %v4256, 0
        %v4291 = vsel %vm207, %v4257, 0
        %v4294 = vsel %vm207, %v4258, 0
        %v4296 = vsel %vm232, %v4269, 0
        %v4298 = vsel %vm232, %v4266, 0
        %4300 = vmatprep.subr.mxu0 0.0
        %4301 = vmatpush1.msra.mxu0 0.0
        %4302 = vmatprep.subr.mxu0 0.0
        %4303 = vmatpush1.msra.mxu0 0.0
        %4304 = vmatprep.subr.mxu0 0.0
        %4305 = vmatpush1.msra.mxu0 0.0
        %4306 = vmatprep.subr.mxu0 0.0
        %4307 = vmatpush1.msra.mxu0 0.0
        %4308 = vmatprep.subr.mxu0 0.0
        %4309 = vmatpush1.msra.mxu0 0.0
        %4310 = vmatprep.subr.mxu0 0.0
        %4311 = vmatpush1.msra.mxu0 0.0
        %4312 = vmatprep.subr.mxu0 0.0
        %4313 = vmatpush1.msra.mxu0 0.0
        %4314 = vmatprep.subr.mxu0 0.0
        %4315 = vmatpush1.msra.mxu0 0.0
        %4316 = vmatprep.subr.mxu0 0.0
        %4317 = vmatpush1.msra.mxu0 0.0
        %4318 = vmatprep.subr.mxu0 0.0
        %4319 = vmatpush1.msra.mxu0 0.0
        %4320 = vmatprep.subr.mxu0 0.0
        %4321 = vmatpush1.msra.mxu0 0.0
        %4322 = vmatprep.subr.mxu0 0.0
        %4323 = vmatpush1.msra.mxu0 0.0
        %4324 = vmatprep.subr.mxu0 0.0
        %4325 = vmatpush1.msra.mxu0 0.0
        %4326 = vmatprep.subr.mxu0 0.0
        %4327 = vmatpush1.msra.mxu0 0.0
        %4328 = vmatprep.subr.mxu0 %v4298
        %4329 = vmatpush1.msra.mxu0 %v4296
        %4330 = vmatprep.subr.mxu0 %v4262
        %4331 = vmatpush1.msra.mxu0 %v4268
        %4332 = vmatprep.subr.mxu0 0.0
        %4333 = vmatpush2.msra.mxu0 0.0
        %4334 = vmatprep.subr.mxu0 0.0
        %4335 = vmatpush2.msra.mxu0 0.0
        %4336 = vmatprep.subr.mxu0 0.0
        %4337 = vmatpush2.msra.mxu0 0.0
        %4338 = vmatprep.subr.mxu0 0.0
        %4339 = vmatpush2.msra.mxu0 0.0
        %4340 = vmatprep.subr.mxu0 0.0
        %4341 = vmatpush2.msra.mxu0 0.0
        %4342 = vmatprep.subr.mxu0 0.0
        %4343 = vmatpush2.msra.mxu0 0.0
        %4344 = vmatprep.subr.mxu0 0.0
        %4345 = vmatpush2.msra.mxu0 0.0
        %4346 = vmatprep.subr.mxu0 0.0
        %4347 = vmatpush2.msra.mxu0 0.0
        %4348 = vmatprep.subr.mxu0 0.0
        %4349 = vmatpush2.msra.mxu0 0.0
        %4350 = vmatprep.subr.mxu0 0.0
        %4351 = vmatpush2.msra.mxu0 0.0
        %4352 = vmatprep.subr.mxu0 0.0
        %4353 = vmatpush2.msra.mxu0 0.0
        %4354 = vmatprep.subr.mxu0 0.0
        %4355 = vmatpush2.msra.mxu0 0.0
        %4356 = vmatprep.subr.mxu0 0.0
        %4357 = vmatpush2.msra.mxu0 0.0
        %4358 = vmatprep.subr.mxu0 0.0
        %4359 = vmatpush2.msra.mxu0 0.0
        %4360 = vmatprep.subr.mxu0 0.0
        %4361 = vmatpush2.msra.mxu0 0.0
        %4362 = vmatprep.subr.mxu0 0.0
        %4363 = vmatpush2.msra.mxu0 0.0
        %4364 = vmatprep.mubr.f32.mxu0 0.0
        %4365 = vmatmul.mubr.f32.gmra.mxu0 %v4273
        %v4366 = vpop.f32.mrf.mxu0
        %v4367 = vadd.f32 0.0, %v4366
        %v4368 = vpop.f32.mrf.mxu0
        %v4369 = vadd.f32 0.0, %v4368
        %4370 = vmatprep.mubr.f32.mxu0 0.0
        %4371 = vmatmul.mubr.f32.gmra.mxu0 %v4276
        %v4372 = vpop.f32.mrf.mxu0
        %v4373 = vadd.f32 0.0, %v4372
        %v4374 = vpop.f32.mrf.mxu0
        %v4375 = vadd.f32 0.0, %v4374
        %4376 = vmatprep.mubr.f32.mxu0 0.0
        %4377 = vmatmul.mubr.f32.gmra.mxu0 %v4279
        %v4378 = vpop.f32.mrf.mxu0
        %v4379 = vadd.f32 0.0, %v4378
        %v4380 = vpop.f32.mrf.mxu0
        %v4381 = vadd.f32 0.0, %v4380
        %4382 = vmatprep.mubr.f32.mxu0 0.0
        %4383 = vmatmul.mubr.f32.gmra.mxu0 %v4282
        %v4384 = vpop.f32.mrf.mxu0
        %v4385 = vadd.f32 0.0, %v4384
        %v4386 = vpop.f32.mrf.mxu0
        %v4387 = vadd.f32 0.0, %v4386
        %4388 = vmatprep.mubr.f32.mxu0 0.0
        %4389 = vmatmul.mubr.f32.gmra.mxu0 %v4285
        %v4390 = vpop.f32.mrf.mxu0
        %v4391 = vadd.f32 0.0, %v4390
        %v4392 = vpop.f32.mrf.mxu0
        %v4393 = vadd.f32 0.0, %v4392
        %4394 = vmatprep.mubr.f32.mxu0 0.0
        %4395 = vmatmul.mubr.f32.gmra.mxu0 %v4288
        %v4396 = vpop.f32.mrf.mxu0
        %v4397 = vadd.f32 0.0, %v4396
        %v4398 = vpop.f32.mrf.mxu0
        %v4399 = vadd.f32 0.0, %v4398
        %4400 = vmatprep.mubr.f32.mxu0 0.0
        %4401 = vmatmul.mubr.f32.gmra.mxu0 %v4291
        %v4402 = vpop.f32.mrf.mxu0
        %v4403 = vadd.f32 0.0, %v4402
        %v4404 = vpop.f32.mrf.mxu0
        %v4405 = vadd.f32 0.0, %v4404
        %4406 = vmatprep.mubr.f32.mxu0 0.0
        %4407 = vmatmul.mubr.f32.gmra.mxu0 %v4294
        %v4408 = vpop.f32.mrf.mxu0
        %v4409 = vadd.f32 0.0, %v4408
        %v4410 = vpop.f32.mrf.mxu0
        %v4411 = vadd.f32 0.0, %v4410
        %4412 = vdwg.mxu0
        %v4413 = vadd.f32 %v4234, %v4367
        %v4414 = vadd.f32 %v4235, %v4369
        %v4415 = vadd.f32 %v4236, %v4373
        %v4416 = vadd.f32 %v4237, %v4375
        %v4417 = vadd.f32 %v4238, %v4379
        %v4418 = vadd.f32 %v4239, %v4381
        %v4419 = vadd.f32 %v4240, %v4385
        %v4420 = vadd.f32 %v4241, %v4387
        %v4421 = vadd.f32 %v4242, %v4391
        %v4422 = vadd.f32 %v4243, %v4393
        %v4423 = vadd.f32 %v4244, %v4397
        %v4424 = vadd.f32 %v4245, %v4399
        %v4425 = vadd.f32 %v4246, %v4403
        %v4426 = vadd.f32 %v4247, %v4405
        %v4427 = vadd.f32 %v4248, %v4409
        %v4428 = vadd.f32 %v4249, %v4411
        %s4429 = scalar_lea.vmem %s1, 1536
        %v4430 = vld [vmem:[%s4429] sm:$0xff]
        %v4431 = vld [vmem:[%s4429 + $0x8] sm:$0xff]
        %v4432 = vld [vmem:[%s4429 + $0x10] sm:$0xff]
        %v4433 = vld [vmem:[%s4429 + $0x18] sm:$0xff]
        %v4434 = vld [vmem:[%s4429 + $0x20] sm:$0xff]
        %v4435 = vld [vmem:[%s4429 + $0x28] sm:$0xff]
        %v4436 = vld [vmem:[%s4429 + $0x30] sm:$0xff]
        %v4437 = vld [vmem:[%s4429 + $0x38] sm:$0xff]
        %4438 = vrot.lane.b32.xlu0 %v169, 104
        %v4439 = vpop.permute.xlu0 %4438
        %4440 = vrot.lane.b32.xlu0 %v170, 104
        %v4441 = vpop.permute.xlu0 %4440
        %4442 = vrot.lane.b32.xlu0 %v171, 104
        %v4443 = vpop.permute.xlu0 %4442
        %4444 = vrot.lane.b32.xlu0 %v172, 104
        %v4445 = vpop.permute.xlu0 %4444
        %vm4446 = vcmask 850944
        %v4447 = vsel %vm4446, %v4439, %v4441
        %v4448 = vsel %vm4446, %v4443, %v4445
        %v4452 = vsel %vm207, %v4430, 0
        %v4455 = vsel %vm207, %v4431, 0
        %v4458 = vsel %vm207, %v4432, 0
        %v4461 = vsel %vm207, %v4433, 0
        %v4464 = vsel %vm207, %v4434, 0
        %v4467 = vsel %vm207, %v4435, 0
        %v4470 = vsel %vm207, %v4436, 0
        %v4473 = vsel %vm207, %v4437, 0
        %v4475 = vsel %vm232, %v4448, 0
        %v4477 = vsel %vm232, %v4445, 0
        %4479 = vmatprep.subr.mxu0 0.0
        %4480 = vmatpush1.msra.mxu0 0.0
        %4481 = vmatprep.subr.mxu0 0.0
        %4482 = vmatpush1.msra.mxu0 0.0
        %4483 = vmatprep.subr.mxu0 0.0
        %4484 = vmatpush1.msra.mxu0 0.0
        %4485 = vmatprep.subr.mxu0 0.0
        %4486 = vmatpush1.msra.mxu0 0.0
        %4487 = vmatprep.subr.mxu0 0.0
        %4488 = vmatpush1.msra.mxu0 0.0
        %4489 = vmatprep.subr.mxu0 0.0
        %4490 = vmatpush1.msra.mxu0 0.0
        %4491 = vmatprep.subr.mxu0 0.0
        %4492 = vmatpush1.msra.mxu0 0.0
        %4493 = vmatprep.subr.mxu0 0.0
        %4494 = vmatpush1.msra.mxu0 0.0
        %4495 = vmatprep.subr.mxu0 0.0
        %4496 = vmatpush1.msra.mxu0 0.0
        %4497 = vmatprep.subr.mxu0 0.0
        %4498 = vmatpush1.msra.mxu0 0.0
        %4499 = vmatprep.subr.mxu0 0.0
        %4500 = vmatpush1.msra.mxu0 0.0
        %4501 = vmatprep.subr.mxu0 0.0
        %4502 = vmatpush1.msra.mxu0 0.0
        %4503 = vmatprep.subr.mxu0 0.0
        %4504 = vmatpush1.msra.mxu0 0.0
        %4505 = vmatprep.subr.mxu0 0.0
        %4506 = vmatpush1.msra.mxu0 0.0
        %4507 = vmatprep.subr.mxu0 %v4477
        %4508 = vmatpush1.msra.mxu0 %v4475
        %4509 = vmatprep.subr.mxu0 %v4441
        %4510 = vmatpush1.msra.mxu0 %v4447
        %4511 = vmatprep.subr.mxu0 0.0
        %4512 = vmatpush2.msra.mxu0 0.0
        %4513 = vmatprep.subr.mxu0 0.0
        %4514 = vmatpush2.msra.mxu0 0.0
        %4515 = vmatprep.subr.mxu0 0.0
        %4516 = vmatpush2.msra.mxu0 0.0
        %4517 = vmatprep.subr.mxu0 0.0
        %4518 = vmatpush2.msra.mxu0 0.0
        %4519 = vmatprep.subr.mxu0 0.0
        %4520 = vmatpush2.msra.mxu0 0.0
        %4521 = vmatprep.subr.mxu0 0.0
        %4522 = vmatpush2.msra.mxu0 0.0
        %4523 = vmatprep.subr.mxu0 0.0
        %4524 = vmatpush2.msra.mxu0 0.0
        %4525 = vmatprep.subr.mxu0 0.0
        %4526 = vmatpush2.msra.mxu0 0.0
        %4527 = vmatprep.subr.mxu0 0.0
        %4528 = vmatpush2.msra.mxu0 0.0
        %4529 = vmatprep.subr.mxu0 0.0
        %4530 = vmatpush2.msra.mxu0 0.0
        %4531 = vmatprep.subr.mxu0 0.0
        %4532 = vmatpush2.msra.mxu0 0.0
        %4533 = vmatprep.subr.mxu0 0.0
        %4534 = vmatpush2.msra.mxu0 0.0
        %4535 = vmatprep.subr.mxu0 0.0
        %4536 = vmatpush2.msra.mxu0 0.0
        %4537 = vmatprep.subr.mxu0 0.0
        %4538 = vmatpush2.msra.mxu0 0.0
        %4539 = vmatprep.subr.mxu0 0.0
        %4540 = vmatpush2.msra.mxu0 0.0
        %4541 = vmatprep.subr.mxu0 0.0
        %4542 = vmatpush2.msra.mxu0 0.0
        %4543 = vmatprep.mubr.f32.mxu0 0.0
        %4544 = vmatmul.mubr.f32.gmra.mxu0 %v4452
        %v4545 = vpop.f32.mrf.mxu0
        %v4546 = vadd.f32 0.0, %v4545
        %v4547 = vpop.f32.mrf.mxu0
        %v4548 = vadd.f32 0.0, %v4547
        %4549 = vmatprep.mubr.f32.mxu0 0.0
        %4550 = vmatmul.mubr.f32.gmra.mxu0 %v4455
        %v4551 = vpop.f32.mrf.mxu0
        %v4552 = vadd.f32 0.0, %v4551
        %v4553 = vpop.f32.mrf.mxu0
        %v4554 = vadd.f32 0.0, %v4553
        %4555 = vmatprep.mubr.f32.mxu0 0.0
        %4556 = vmatmul.mubr.f32.gmra.mxu0 %v4458
        %v4557 = vpop.f32.mrf.mxu0
        %v4558 = vadd.f32 0.0, %v4557
        %v4559 = vpop.f32.mrf.mxu0
        %v4560 = vadd.f32 0.0, %v4559
        %4561 = vmatprep.mubr.f32.mxu0 0.0
        %4562 = vmatmul.mubr.f32.gmra.mxu0 %v4461
        %v4563 = vpop.f32.mrf.mxu0
        %v4564 = vadd.f32 0.0, %v4563
        %v4565 = vpop.f32.mrf.mxu0
        %v4566 = vadd.f32 0.0, %v4565
        %4567 = vmatprep.mubr.f32.mxu0 0.0
        %4568 = vmatmul.mubr.f32.gmra.mxu0 %v4464
        %v4569 = vpop.f32.mrf.mxu0
        %v4570 = vadd.f32 0.0, %v4569
        %v4571 = vpop.f32.mrf.mxu0
        %v4572 = vadd.f32 0.0, %v4571
        %4573 = vmatprep.mubr.f32.mxu0 0.0
        %4574 = vmatmul.mubr.f32.gmra.mxu0 %v4467
        %v4575 = vpop.f32.mrf.mxu0
        %v4576 = vadd.f32 0.0, %v4575
        %v4577 = vpop.f32.mrf.mxu0
        %v4578 = vadd.f32 0.0, %v4577
        %4579 = vmatprep.mubr.f32.mxu0 0.0
        %4580 = vmatmul.mubr.f32.gmra.mxu0 %v4470
        %v4581 = vpop.f32.mrf.mxu0
        %v4582 = vadd.f32 0.0, %v4581
        %v4583 = vpop.f32.mrf.mxu0
        %v4584 = vadd.f32 0.0, %v4583
        %4585 = vmatprep.mubr.f32.mxu0 0.0
        %4586 = vmatmul.mubr.f32.gmra.mxu0 %v4473
        %v4587 = vpop.f32.mrf.mxu0
        %v4588 = vadd.f32 0.0, %v4587
        %v4589 = vpop.f32.mrf.mxu0
        %v4590 = vadd.f32 0.0, %v4589
        %4591 = vdwg.mxu0
        %v4592 = vadd.f32 %v4413, %v4546
        %v4593 = vadd.f32 %v4414, %v4548
        %v4594 = vadd.f32 %v4415, %v4552
        %v4595 = vadd.f32 %v4416, %v4554
        %v4596 = vadd.f32 %v4417, %v4558
        %v4597 = vadd.f32 %v4418, %v4560
        %v4598 = vadd.f32 %v4419, %v4564
        %v4599 = vadd.f32 %v4420, %v4566
        %v4600 = vadd.f32 %v4421, %v4570
        %v4601 = vadd.f32 %v4422, %v4572
        %v4602 = vadd.f32 %v4423, %v4576
        %v4603 = vadd.f32 %v4424, %v4578
        %v4604 = vadd.f32 %v4425, %v4582
        %v4605 = vadd.f32 %v4426, %v4584
        %v4606 = vadd.f32 %v4427, %v4588
        %v4607 = vadd.f32 %v4428, %v4590
        %s4608 = scalar_lea.vmem %s1, 1600
        %v4609 = vld [vmem:[%s4608] sm:$0xff]
        %v4610 = vld [vmem:[%s4608 + $0x8] sm:$0xff]
        %v4611 = vld [vmem:[%s4608 + $0x10] sm:$0xff]
        %v4612 = vld [vmem:[%s4608 + $0x18] sm:$0xff]
        %v4613 = vld [vmem:[%s4608 + $0x20] sm:$0xff]
        %v4614 = vld [vmem:[%s4608 + $0x28] sm:$0xff]
        %v4615 = vld [vmem:[%s4608 + $0x30] sm:$0xff]
        %v4616 = vld [vmem:[%s4608 + $0x38] sm:$0xff]
        %4617 = vrot.lane.b32.xlu0 %v169, 103
        %v4618 = vpop.permute.xlu0 %4617
        %4619 = vrot.lane.b32.xlu0 %v170, 103
        %v4620 = vpop.permute.xlu0 %4619
        %4621 = vrot.lane.b32.xlu0 %v171, 103
        %v4622 = vpop.permute.xlu0 %4621
        %4623 = vrot.lane.b32.xlu0 %v172, 103
        %v4624 = vpop.permute.xlu0 %4623
        %vm4625 = vcmask 842752
        %v4626 = vsel %vm4625, %v4618, %v4620
        %v4627 = vsel %vm4625, %v4622, %v4624
        %v4631 = vsel %vm207, %v4609, 0
        %v4634 = vsel %vm207, %v4610, 0
        %v4637 = vsel %vm207, %v4611, 0
        %v4640 = vsel %vm207, %v4612, 0
        %v4643 = vsel %vm207, %v4613, 0
        %v4646 = vsel %vm207, %v4614, 0
        %v4649 = vsel %vm207, %v4615, 0
        %v4652 = vsel %vm207, %v4616, 0
        %v4654 = vsel %vm232, %v4627, 0
        %v4656 = vsel %vm232, %v4624, 0
        %4658 = vmatprep.subr.mxu0 0.0
        %4659 = vmatpush1.msra.mxu0 0.0
        %4660 = vmatprep.subr.mxu0 0.0
        %4661 = vmatpush1.msra.mxu0 0.0
        %4662 = vmatprep.subr.mxu0 0.0
        %4663 = vmatpush1.msra.mxu0 0.0
        %4664 = vmatprep.subr.mxu0 0.0
        %4665 = vmatpush1.msra.mxu0 0.0
        %4666 = vmatprep.subr.mxu0 0.0
        %4667 = vmatpush1.msra.mxu0 0.0
        %4668 = vmatprep.subr.mxu0 0.0
        %4669 = vmatpush1.msra.mxu0 0.0
        %4670 = vmatprep.subr.mxu0 0.0
        %4671 = vmatpush1.msra.mxu0 0.0
        %4672 = vmatprep.subr.mxu0 0.0
        %4673 = vmatpush1.msra.mxu0 0.0
        %4674 = vmatprep.subr.mxu0 0.0
        %4675 = vmatpush1.msra.mxu0 0.0
        %4676 = vmatprep.subr.mxu0 0.0
        %4677 = vmatpush1.msra.mxu0 0.0
        %4678 = vmatprep.subr.mxu0 0.0
        %4679 = vmatpush1.msra.mxu0 0.0
        %4680 = vmatprep.subr.mxu0 0.0
        %4681 = vmatpush1.msra.mxu0 0.0
        %4682 = vmatprep.subr.mxu0 0.0
        %4683 = vmatpush1.msra.mxu0 0.0
        %4684 = vmatprep.subr.mxu0 0.0
        %4685 = vmatpush1.msra.mxu0 0.0
        %4686 = vmatprep.subr.mxu0 %v4656
        %4687 = vmatpush1.msra.mxu0 %v4654
        %4688 = vmatprep.subr.mxu0 %v4620
        %4689 = vmatpush1.msra.mxu0 %v4626
        %4690 = vmatprep.subr.mxu0 0.0
        %4691 = vmatpush2.msra.mxu0 0.0
        %4692 = vmatprep.subr.mxu0 0.0
        %4693 = vmatpush2.msra.mxu0 0.0
        %4694 = vmatprep.subr.mxu0 0.0
        %4695 = vmatpush2.msra.mxu0 0.0
        %4696 = vmatprep.subr.mxu0 0.0
        %4697 = vmatpush2.msra.mxu0 0.0
        %4698 = vmatprep.subr.mxu0 0.0
        %4699 = vmatpush2.msra.mxu0 0.0
        %4700 = vmatprep.subr.mxu0 0.0
        %4701 = vmatpush2.msra.mxu0 0.0
        %4702 = vmatprep.subr.mxu0 0.0
        %4703 = vmatpush2.msra.mxu0 0.0
        %4704 = vmatprep.subr.mxu0 0.0
        %4705 = vmatpush2.msra.mxu0 0.0
        %4706 = vmatprep.subr.mxu0 0.0
        %4707 = vmatpush2.msra.mxu0 0.0
        %4708 = vmatprep.subr.mxu0 0.0
        %4709 = vmatpush2.msra.mxu0 0.0
        %4710 = vmatprep.subr.mxu0 0.0
        %4711 = vmatpush2.msra.mxu0 0.0
        %4712 = vmatprep.subr.mxu0 0.0
        %4713 = vmatpush2.msra.mxu0 0.0
        %4714 = vmatprep.subr.mxu0 0.0
        %4715 = vmatpush2.msra.mxu0 0.0
        %4716 = vmatprep.subr.mxu0 0.0
        %4717 = vmatpush2.msra.mxu0 0.0
        %4718 = vmatprep.subr.mxu0 0.0
        %4719 = vmatpush2.msra.mxu0 0.0
        %4720 = vmatprep.subr.mxu0 0.0
        %4721 = vmatpush2.msra.mxu0 0.0
        %4722 = vmatprep.mubr.f32.mxu0 0.0
        %4723 = vmatmul.mubr.f32.gmra.mxu0 %v4631
        %v4724 = vpop.f32.mrf.mxu0
        %v4725 = vadd.f32 0.0, %v4724
        %v4726 = vpop.f32.mrf.mxu0
        %v4727 = vadd.f32 0.0, %v4726
        %4728 = vmatprep.mubr.f32.mxu0 0.0
        %4729 = vmatmul.mubr.f32.gmra.mxu0 %v4634
        %v4730 = vpop.f32.mrf.mxu0
        %v4731 = vadd.f32 0.0, %v4730
        %v4732 = vpop.f32.mrf.mxu0
        %v4733 = vadd.f32 0.0, %v4732
        %4734 = vmatprep.mubr.f32.mxu0 0.0
        %4735 = vmatmul.mubr.f32.gmra.mxu0 %v4637
        %v4736 = vpop.f32.mrf.mxu0
        %v4737 = vadd.f32 0.0, %v4736
        %v4738 = vpop.f32.mrf.mxu0
        %v4739 = vadd.f32 0.0, %v4738
        %4740 = vmatprep.mubr.f32.mxu0 0.0
        %4741 = vmatmul.mubr.f32.gmra.mxu0 %v4640
        %v4742 = vpop.f32.mrf.mxu0
        %v4743 = vadd.f32 0.0, %v4742
        %v4744 = vpop.f32.mrf.mxu0
        %v4745 = vadd.f32 0.0, %v4744
        %4746 = vmatprep.mubr.f32.mxu0 0.0
        %4747 = vmatmul.mubr.f32.gmra.mxu0 %v4643
        %v4748 = vpop.f32.mrf.mxu0
        %v4749 = vadd.f32 0.0, %v4748
        %v4750 = vpop.f32.mrf.mxu0
        %v4751 = vadd.f32 0.0, %v4750
        %4752 = vmatprep.mubr.f32.mxu0 0.0
        %4753 = vmatmul.mubr.f32.gmra.mxu0 %v4646
        %v4754 = vpop.f32.mrf.mxu0
        %v4755 = vadd.f32 0.0, %v4754
        %v4756 = vpop.f32.mrf.mxu0
        %v4757 = vadd.f32 0.0, %v4756
        %4758 = vmatprep.mubr.f32.mxu0 0.0
        %4759 = vmatmul.mubr.f32.gmra.mxu0 %v4649
        %v4760 = vpop.f32.mrf.mxu0
        %v4761 = vadd.f32 0.0, %v4760
        %v4762 = vpop.f32.mrf.mxu0
        %v4763 = vadd.f32 0.0, %v4762
        %4764 = vmatprep.mubr.f32.mxu0 0.0
        %4765 = vmatmul.mubr.f32.gmra.mxu0 %v4652
        %v4766 = vpop.f32.mrf.mxu0
        %v4767 = vadd.f32 0.0, %v4766
        %v4768 = vpop.f32.mrf.mxu0
        %v4769 = vadd.f32 0.0, %v4768
        %4770 = vdwg.mxu0
        %v4771 = vadd.f32 %v4592, %v4725
        %v4772 = vadd.f32 %v4593, %v4727
        %v4773 = vadd.f32 %v4594, %v4731
        %v4774 = vadd.f32 %v4595, %v4733
        %v4775 = vadd.f32 %v4596, %v4737
        %v4776 = vadd.f32 %v4597, %v4739
        %v4777 = vadd.f32 %v4598, %v4743
        %v4778 = vadd.f32 %v4599, %v4745
        %v4779 = vadd.f32 %v4600, %v4749
        %v4780 = vadd.f32 %v4601, %v4751
        %v4781 = vadd.f32 %v4602, %v4755
        %v4782 = vadd.f32 %v4603, %v4757
        %v4783 = vadd.f32 %v4604, %v4761
        %v4784 = vadd.f32 %v4605, %v4763
        %v4785 = vadd.f32 %v4606, %v4767
        %v4786 = vadd.f32 %v4607, %v4769
        %s4787 = scalar_lea.vmem %s1, 1664
        %v4788 = vld [vmem:[%s4787] sm:$0xff]
        %v4789 = vld [vmem:[%s4787 + $0x8] sm:$0xff]
        %v4790 = vld [vmem:[%s4787 + $0x10] sm:$0xff]
        %v4791 = vld [vmem:[%s4787 + $0x18] sm:$0xff]
        %v4792 = vld [vmem:[%s4787 + $0x20] sm:$0xff]
        %v4793 = vld [vmem:[%s4787 + $0x28] sm:$0xff]
        %v4794 = vld [vmem:[%s4787 + $0x30] sm:$0xff]
        %v4795 = vld [vmem:[%s4787 + $0x38] sm:$0xff]
        %4796 = vrot.lane.b32.xlu0 %v169, 102
        %v4797 = vpop.permute.xlu0 %4796
        %4798 = vrot.lane.b32.xlu0 %v170, 102
        %v4799 = vpop.permute.xlu0 %4798
        %4800 = vrot.lane.b32.xlu0 %v171, 102
        %v4801 = vpop.permute.xlu0 %4800
        %4802 = vrot.lane.b32.xlu0 %v172, 102
        %v4803 = vpop.permute.xlu0 %4802
        %vm4804 = vcmask 834560
        %v4805 = vsel %vm4804, %v4797, %v4799
        %v4806 = vsel %vm4804, %v4801, %v4803
        %v4810 = vsel %vm207, %v4788, 0
        %v4813 = vsel %vm207, %v4789, 0
        %v4816 = vsel %vm207, %v4790, 0
        %v4819 = vsel %vm207, %v4791, 0
        %v4822 = vsel %vm207, %v4792, 0
        %v4825 = vsel %vm207, %v4793, 0
        %v4828 = vsel %vm207, %v4794, 0
        %v4831 = vsel %vm207, %v4795, 0
        %v4833 = vsel %vm232, %v4806, 0
        %v4835 = vsel %vm232, %v4803, 0
        %4837 = vmatprep.subr.mxu0 0.0
        %4838 = vmatpush1.msra.mxu0 0.0
        %4839 = vmatprep.subr.mxu0 0.0
        %4840 = vmatpush1.msra.mxu0 0.0
        %4841 = vmatprep.subr.mxu0 0.0
        %4842 = vmatpush1.msra.mxu0 0.0
        %4843 = vmatprep.subr.mxu0 0.0
        %4844 = vmatpush1.msra.mxu0 0.0
        %4845 = vmatprep.subr.mxu0 0.0
        %4846 = vmatpush1.msra.mxu0 0.0
        %4847 = vmatprep.subr.mxu0 0.0
        %4848 = vmatpush1.msra.mxu0 0.0
        %4849 = vmatprep.subr.mxu0 0.0
        %4850 = vmatpush1.msra.mxu0 0.0
        %4851 = vmatprep.subr.mxu0 0.0
        %4852 = vmatpush1.msra.mxu0 0.0
        %4853 = vmatprep.subr.mxu0 0.0
        %4854 = vmatpush1.msra.mxu0 0.0
        %4855 = vmatprep.subr.mxu0 0.0
        %4856 = vmatpush1.msra.mxu0 0.0
        %4857 = vmatprep.subr.mxu0 0.0
        %4858 = vmatpush1.msra.mxu0 0.0
        %4859 = vmatprep.subr.mxu0 0.0
        %4860 = vmatpush1.msra.mxu0 0.0
        %4861 = vmatprep.subr.mxu0 0.0
        %4862 = vmatpush1.msra.mxu0 0.0
        %4863 = vmatprep.subr.mxu0 0.0
        %4864 = vmatpush1.msra.mxu0 0.0
        %4865 = vmatprep.subr.mxu0 %v4835
        %4866 = vmatpush1.msra.mxu0 %v4833
        %4867 = vmatprep.subr.mxu0 %v4799
        %4868 = vmatpush1.msra.mxu0 %v4805
        %4869 = vmatprep.subr.mxu0 0.0
        %4870 = vmatpush2.msra.mxu0 0.0
        %4871 = vmatprep.subr.mxu0 0.0
        %4872 = vmatpush2.msra.mxu0 0.0
        %4873 = vmatprep.subr.mxu0 0.0
        %4874 = vmatpush2.msra.mxu0 0.0
        %4875 = vmatprep.subr.mxu0 0.0
        %4876 = vmatpush2.msra.mxu0 0.0
        %4877 = vmatprep.subr.mxu0 0.0
        %4878 = vmatpush2.msra.mxu0 0.0
        %4879 = vmatprep.subr.mxu0 0.0
        %4880 = vmatpush2.msra.mxu0 0.0
        %4881 = vmatprep.subr.mxu0 0.0
        %4882 = vmatpush2.msra.mxu0 0.0
        %4883 = vmatprep.subr.mxu0 0.0
        %4884 = vmatpush2.msra.mxu0 0.0
        %4885 = vmatprep.subr.mxu0 0.0
        %4886 = vmatpush2.msra.mxu0 0.0
        %4887 = vmatprep.subr.mxu0 0.0
        %4888 = vmatpush2.msra.mxu0 0.0
        %4889 = vmatprep.subr.mxu0 0.0
        %4890 = vmatpush2.msra.mxu0 0.0
        %4891 = vmatprep.subr.mxu0 0.0
        %4892 = vmatpush2.msra.mxu0 0.0
        %4893 = vmatprep.subr.mxu0 0.0
        %4894 = vmatpush2.msra.mxu0 0.0
        %4895 = vmatprep.subr.mxu0 0.0
        %4896 = vmatpush2.msra.mxu0 0.0
        %4897 = vmatprep.subr.mxu0 0.0
        %4898 = vmatpush2.msra.mxu0 0.0
        %4899 = vmatprep.subr.mxu0 0.0
        %4900 = vmatpush2.msra.mxu0 0.0
        %4901 = vmatprep.mubr.f32.mxu0 0.0
        %4902 = vmatmul.mubr.f32.gmra.mxu0 %v4810
        %v4903 = vpop.f32.mrf.mxu0
        %v4904 = vadd.f32 0.0, %v4903
        %v4905 = vpop.f32.mrf.mxu0
        %v4906 = vadd.f32 0.0, %v4905
        %4907 = vmatprep.mubr.f32.mxu0 0.0
        %4908 = vmatmul.mubr.f32.gmra.mxu0 %v4813
        %v4909 = vpop.f32.mrf.mxu0
        %v4910 = vadd.f32 0.0, %v4909
        %v4911 = vpop.f32.mrf.mxu0
        %v4912 = vadd.f32 0.0, %v4911
        %4913 = vmatprep.mubr.f32.mxu0 0.0
        %4914 = vmatmul.mubr.f32.gmra.mxu0 %v4816
        %v4915 = vpop.f32.mrf.mxu0
        %v4916 = vadd.f32 0.0, %v4915
        %v4917 = vpop.f32.mrf.mxu0
        %v4918 = vadd.f32 0.0, %v4917
        %4919 = vmatprep.mubr.f32.mxu0 0.0
        %4920 = vmatmul.mubr.f32.gmra.mxu0 %v4819
        %v4921 = vpop.f32.mrf.mxu0
        %v4922 = vadd.f32 0.0, %v4921
        %v4923 = vpop.f32.mrf.mxu0
        %v4924 = vadd.f32 0.0, %v4923
        %4925 = vmatprep.mubr.f32.mxu0 0.0
        %4926 = vmatmul.mubr.f32.gmra.mxu0 %v4822
        %v4927 = vpop.f32.mrf.mxu0
        %v4928 = vadd.f32 0.0, %v4927
        %v4929 = vpop.f32.mrf.mxu0
        %v4930 = vadd.f32 0.0, %v4929
        %4931 = vmatprep.mubr.f32.mxu0 0.0
        %4932 = vmatmul.mubr.f32.gmra.mxu0 %v4825
        %v4933 = vpop.f32.mrf.mxu0
        %v4934 = vadd.f32 0.0, %v4933
        %v4935 = vpop.f32.mrf.mxu0
        %v4936 = vadd.f32 0.0, %v4935
        %4937 = vmatprep.mubr.f32.mxu0 0.0
        %4938 = vmatmul.mubr.f32.gmra.mxu0 %v4828
        %v4939 = vpop.f32.mrf.mxu0
        %v4940 = vadd.f32 0.0, %v4939
        %v4941 = vpop.f32.mrf.mxu0
        %v4942 = vadd.f32 0.0, %v4941
        %4943 = vmatprep.mubr.f32.mxu0 0.0
        %4944 = vmatmul.mubr.f32.gmra.mxu0 %v4831
        %v4945 = vpop.f32.mrf.mxu0
        %v4946 = vadd.f32 0.0, %v4945
        %v4947 = vpop.f32.mrf.mxu0
        %v4948 = vadd.f32 0.0, %v4947
        %4949 = vdwg.mxu0
        %v4950 = vadd.f32 %v4771, %v4904
        %v4951 = vadd.f32 %v4772, %v4906
        %v4952 = vadd.f32 %v4773, %v4910
        %v4953 = vadd.f32 %v4774, %v4912
        %v4954 = vadd.f32 %v4775, %v4916
        %v4955 = vadd.f32 %v4776, %v4918
        %v4956 = vadd.f32 %v4777, %v4922
        %v4957 = vadd.f32 %v4778, %v4924
        %v4958 = vadd.f32 %v4779, %v4928
        %v4959 = vadd.f32 %v4780, %v4930
        %v4960 = vadd.f32 %v4781, %v4934
        %v4961 = vadd.f32 %v4782, %v4936
        %v4962 = vadd.f32 %v4783, %v4940
        %v4963 = vadd.f32 %v4784, %v4942
        %v4964 = vadd.f32 %v4785, %v4946
        %v4965 = vadd.f32 %v4786, %v4948
        %s4966 = scalar_lea.vmem %s1, 1728
        %v4967 = vld [vmem:[%s4966] sm:$0xff]
        %v4968 = vld [vmem:[%s4966 + $0x8] sm:$0xff]
        %v4969 = vld [vmem:[%s4966 + $0x10] sm:$0xff]
        %v4970 = vld [vmem:[%s4966 + $0x18] sm:$0xff]
        %v4971 = vld [vmem:[%s4966 + $0x20] sm:$0xff]
        %v4972 = vld [vmem:[%s4966 + $0x28] sm:$0xff]
        %v4973 = vld [vmem:[%s4966 + $0x30] sm:$0xff]
        %v4974 = vld [vmem:[%s4966 + $0x38] sm:$0xff]
        %4975 = vrot.lane.b32.xlu0 %v169, 101
        %v4976 = vpop.permute.xlu0 %4975
        %4977 = vrot.lane.b32.xlu0 %v170, 101
        %v4978 = vpop.permute.xlu0 %4977
        %4979 = vrot.lane.b32.xlu0 %v171, 101
        %v4980 = vpop.permute.xlu0 %4979
        %4981 = vrot.lane.b32.xlu0 %v172, 101
        %v4982 = vpop.permute.xlu0 %4981
        %vm4983 = vcmask 826368
        %v4984 = vsel %vm4983, %v4976, %v4978
        %v4985 = vsel %vm4983, %v4980, %v4982
        %v4989 = vsel %vm207, %v4967, 0
        %v4992 = vsel %vm207, %v4968, 0
        %v4995 = vsel %vm207, %v4969, 0
        %v4998 = vsel %vm207, %v4970, 0
        %v5001 = vsel %vm207, %v4971, 0
        %v5004 = vsel %vm207, %v4972, 0
        %v5007 = vsel %vm207, %v4973, 0
        %v5010 = vsel %vm207, %v4974, 0
        %v5012 = vsel %vm232, %v4985, 0
        %v5014 = vsel %vm232, %v4982, 0
        %5016 = vmatprep.subr.mxu0 0.0
        %5017 = vmatpush1.msra.mxu0 0.0
        %5018 = vmatprep.subr.mxu0 0.0
        %5019 = vmatpush1.msra.mxu0 0.0
        %5020 = vmatprep.subr.mxu0 0.0
        %5021 = vmatpush1.msra.mxu0 0.0
        %5022 = vmatprep.subr.mxu0 0.0
        %5023 = vmatpush1.msra.mxu0 0.0
        %5024 = vmatprep.subr.mxu0 0.0
        %5025 = vmatpush1.msra.mxu0 0.0
        %5026 = vmatprep.subr.mxu0 0.0
        %5027 = vmatpush1.msra.mxu0 0.0
        %5028 = vmatprep.subr.mxu0 0.0
        %5029 = vmatpush1.msra.mxu0 0.0
        %5030 = vmatprep.subr.mxu0 0.0
        %5031 = vmatpush1.msra.mxu0 0.0
        %5032 = vmatprep.subr.mxu0 0.0
        %5033 = vmatpush1.msra.mxu0 0.0
        %5034 = vmatprep.subr.mxu0 0.0
        %5035 = vmatpush1.msra.mxu0 0.0
        %5036 = vmatprep.subr.mxu0 0.0
        %5037 = vmatpush1.msra.mxu0 0.0
        %5038 = vmatprep.subr.mxu0 0.0
        %5039 = vmatpush1.msra.mxu0 0.0
        %5040 = vmatprep.subr.mxu0 0.0
        %5041 = vmatpush1.msra.mxu0 0.0
        %5042 = vmatprep.subr.mxu0 0.0
        %5043 = vmatpush1.msra.mxu0 0.0
        %5044 = vmatprep.subr.mxu0 %v5014
        %5045 = vmatpush1.msra.mxu0 %v5012
        %5046 = vmatprep.subr.mxu0 %v4978
        %5047 = vmatpush1.msra.mxu0 %v4984
        %5048 = vmatprep.subr.mxu0 0.0
        %5049 = vmatpush2.msra.mxu0 0.0
        %5050 = vmatprep.subr.mxu0 0.0
        %5051 = vmatpush2.msra.mxu0 0.0
        %5052 = vmatprep.subr.mxu0 0.0
        %5053 = vmatpush2.msra.mxu0 0.0
        %5054 = vmatprep.subr.mxu0 0.0
        %5055 = vmatpush2.msra.mxu0 0.0
        %5056 = vmatprep.subr.mxu0 0.0
        %5057 = vmatpush2.msra.mxu0 0.0
        %5058 = vmatprep.subr.mxu0 0.0
        %5059 = vmatpush2.msra.mxu0 0.0
        %5060 = vmatprep.subr.mxu0 0.0
        %5061 = vmatpush2.msra.mxu0 0.0
        %5062 = vmatprep.subr.mxu0 0.0
        %5063 = vmatpush2.msra.mxu0 0.0
        %5064 = vmatprep.subr.mxu0 0.0
        %5065 = vmatpush2.msra.mxu0 0.0
        %5066 = vmatprep.subr.mxu0 0.0
        %5067 = vmatpush2.msra.mxu0 0.0
        %5068 = vmatprep.subr.mxu0 0.0
        %5069 = vmatpush2.msra.mxu0 0.0
        %5070 = vmatprep.subr.mxu0 0.0
        %5071 = vmatpush2.msra.mxu0 0.0
        %5072 = vmatprep.subr.mxu0 0.0
        %5073 = vmatpush2.msra.mxu0 0.0
        %5074 = vmatprep.subr.mxu0 0.0
        %5075 = vmatpush2.msra.mxu0 0.0
        %5076 = vmatprep.subr.mxu0 0.0
        %5077 = vmatpush2.msra.mxu0 0.0
        %5078 = vmatprep.subr.mxu0 0.0
        %5079 = vmatpush2.msra.mxu0 0.0
        %5080 = vmatprep.mubr.f32.mxu0 0.0
        %5081 = vmatmul.mubr.f32.gmra.mxu0 %v4989
        %v5082 = vpop.f32.mrf.mxu0
        %v5083 = vadd.f32 0.0, %v5082
        %v5084 = vpop.f32.mrf.mxu0
        %v5085 = vadd.f32 0.0, %v5084
        %5086 = vmatprep.mubr.f32.mxu0 0.0
        %5087 = vmatmul.mubr.f32.gmra.mxu0 %v4992
        %v5088 = vpop.f32.mrf.mxu0
        %v5089 = vadd.f32 0.0, %v5088
        %v5090 = vpop.f32.mrf.mxu0
        %v5091 = vadd.f32 0.0, %v5090
        %5092 = vmatprep.mubr.f32.mxu0 0.0
        %5093 = vmatmul.mubr.f32.gmra.mxu0 %v4995
        %v5094 = vpop.f32.mrf.mxu0
        %v5095 = vadd.f32 0.0, %v5094
        %v5096 = vpop.f32.mrf.mxu0
        %v5097 = vadd.f32 0.0, %v5096
        %5098 = vmatprep.mubr.f32.mxu0 0.0
        %5099 = vmatmul.mubr.f32.gmra.mxu0 %v4998
        %v5100 = vpop.f32.mrf.mxu0
        %v5101 = vadd.f32 0.0, %v5100
        %v5102 = vpop.f32.mrf.mxu0
        %v5103 = vadd.f32 0.0, %v5102
        %5104 = vmatprep.mubr.f32.mxu0 0.0
        %5105 = vmatmul.mubr.f32.gmra.mxu0 %v5001
        %v5106 = vpop.f32.mrf.mxu0
        %v5107 = vadd.f32 0.0, %v5106
        %v5108 = vpop.f32.mrf.mxu0
        %v5109 = vadd.f32 0.0, %v5108
        %5110 = vmatprep.mubr.f32.mxu0 0.0
        %5111 = vmatmul.mubr.f32.gmra.mxu0 %v5004
        %v5112 = vpop.f32.mrf.mxu0
        %v5113 = vadd.f32 0.0, %v5112
        %v5114 = vpop.f32.mrf.mxu0
        %v5115 = vadd.f32 0.0, %v5114
        %5116 = vmatprep.mubr.f32.mxu0 0.0
        %5117 = vmatmul.mubr.f32.gmra.mxu0 %v5007
        %v5118 = vpop.f32.mrf.mxu0
        %v5119 = vadd.f32 0.0, %v5118
        %v5120 = vpop.f32.mrf.mxu0
        %v5121 = vadd.f32 0.0, %v5120
        %5122 = vmatprep.mubr.f32.mxu0 0.0
        %5123 = vmatmul.mubr.f32.gmra.mxu0 %v5010
        %v5124 = vpop.f32.mrf.mxu0
        %v5125 = vadd.f32 0.0, %v5124
        %v5126 = vpop.f32.mrf.mxu0
        %v5127 = vadd.f32 0.0, %v5126
        %5128 = vdwg.mxu0
        %v5129 = vadd.f32 %v4950, %v5083
        %v5130 = vadd.f32 %v4951, %v5085
        %v5131 = vadd.f32 %v4952, %v5089
        %v5132 = vadd.f32 %v4953, %v5091
        %v5133 = vadd.f32 %v4954, %v5095
        %v5134 = vadd.f32 %v4955, %v5097
        %v5135 = vadd.f32 %v4956, %v5101
        %v5136 = vadd.f32 %v4957, %v5103
        %v5137 = vadd.f32 %v4958, %v5107
        %v5138 = vadd.f32 %v4959, %v5109
        %v5139 = vadd.f32 %v4960, %v5113
        %v5140 = vadd.f32 %v4961, %v5115
        %v5141 = vadd.f32 %v4962, %v5119
        %v5142 = vadd.f32 %v4963, %v5121
        %v5143 = vadd.f32 %v4964, %v5125
        %v5144 = vadd.f32 %v4965, %v5127
        %s5145 = scalar_lea.vmem %s1, 1792
        %v5146 = vld [vmem:[%s5145] sm:$0xff]
        %v5147 = vld [vmem:[%s5145 + $0x8] sm:$0xff]
        %v5148 = vld [vmem:[%s5145 + $0x10] sm:$0xff]
        %v5149 = vld [vmem:[%s5145 + $0x18] sm:$0xff]
        %v5150 = vld [vmem:[%s5145 + $0x20] sm:$0xff]
        %v5151 = vld [vmem:[%s5145 + $0x28] sm:$0xff]
        %v5152 = vld [vmem:[%s5145 + $0x30] sm:$0xff]
        %v5153 = vld [vmem:[%s5145 + $0x38] sm:$0xff]
        %5154 = vrot.lane.b32.xlu0 %v169, 100
        %v5155 = vpop.permute.xlu0 %5154
        %5156 = vrot.lane.b32.xlu0 %v170, 100
        %v5157 = vpop.permute.xlu0 %5156
        %5158 = vrot.lane.b32.xlu0 %v171, 100
        %v5159 = vpop.permute.xlu0 %5158
        %5160 = vrot.lane.b32.xlu0 %v172, 100
        %v5161 = vpop.permute.xlu0 %5160
        %vm5162 = vcmask 818176
        %v5163 = vsel %vm5162, %v5155, %v5157
        %v5164 = vsel %vm5162, %v5159, %v5161
        %v5168 = vsel %vm207, %v5146, 0
        %v5171 = vsel %vm207, %v5147, 0
        %v5174 = vsel %vm207, %v5148, 0
        %v5177 = vsel %vm207, %v5149, 0
        %v5180 = vsel %vm207, %v5150, 0
        %v5183 = vsel %vm207, %v5151, 0
        %v5186 = vsel %vm207, %v5152, 0
        %v5189 = vsel %vm207, %v5153, 0
        %v5191 = vsel %vm232, %v5164, 0
        %v5193 = vsel %vm232, %v5161, 0
        %5195 = vmatprep.subr.mxu0 0.0
        %5196 = vmatpush1.msra.mxu0 0.0
        %5197 = vmatprep.subr.mxu0 0.0
        %5198 = vmatpush1.msra.mxu0 0.0
        %5199 = vmatprep.subr.mxu0 0.0
        %5200 = vmatpush1.msra.mxu0 0.0
        %5201 = vmatprep.subr.mxu0 0.0
        %5202 = vmatpush1.msra.mxu0 0.0
        %5203 = vmatprep.subr.mxu0 0.0
        %5204 = vmatpush1.msra.mxu0 0.0
        %5205 = vmatprep.subr.mxu0 0.0
        %5206 = vmatpush1.msra.mxu0 0.0
        %5207 = vmatprep.subr.mxu0 0.0
        %5208 = vmatpush1.msra.mxu0 0.0
        %5209 = vmatprep.subr.mxu0 0.0
        %5210 = vmatpush1.msra.mxu0 0.0
        %5211 = vmatprep.subr.mxu0 0.0
        %5212 = vmatpush1.msra.mxu0 0.0
        %5213 = vmatprep.subr.mxu0 0.0
        %5214 = vmatpush1.msra.mxu0 0.0
        %5215 = vmatprep.subr.mxu0 0.0
        %5216 = vmatpush1.msra.mxu0 0.0
        %5217 = vmatprep.subr.mxu0 0.0
        %5218 = vmatpush1.msra.mxu0 0.0
        %5219 = vmatprep.subr.mxu0 0.0
        %5220 = vmatpush1.msra.mxu0 0.0
        %5221 = vmatprep.subr.mxu0 0.0
        %5222 = vmatpush1.msra.mxu0 0.0
        %5223 = vmatprep.subr.mxu0 %v5193
        %5224 = vmatpush1.msra.mxu0 %v5191
        %5225 = vmatprep.subr.mxu0 %v5157
        %5226 = vmatpush1.msra.mxu0 %v5163
        %5227 = vmatprep.subr.mxu0 0.0
        %5228 = vmatpush2.msra.mxu0 0.0
        %5229 = vmatprep.subr.mxu0 0.0
        %5230 = vmatpush2.msra.mxu0 0.0
        %5231 = vmatprep.subr.mxu0 0.0
        %5232 = vmatpush2.msra.mxu0 0.0
        %5233 = vmatprep.subr.mxu0 0.0
        %5234 = vmatpush2.msra.mxu0 0.0
        %5235 = vmatprep.subr.mxu0 0.0
        %5236 = vmatpush2.msra.mxu0 0.0
        %5237 = vmatprep.subr.mxu0 0.0
        %5238 = vmatpush2.msra.mxu0 0.0
        %5239 = vmatprep.subr.mxu0 0.0
        %5240 = vmatpush2.msra.mxu0 0.0
        %5241 = vmatprep.subr.mxu0 0.0
        %5242 = vmatpush2.msra.mxu0 0.0
        %5243 = vmatprep.subr.mxu0 0.0
        %5244 = vmatpush2.msra.mxu0 0.0
        %5245 = vmatprep.subr.mxu0 0.0
        %5246 = vmatpush2.msra.mxu0 0.0
        %5247 = vmatprep.subr.mxu0 0.0
        %5248 = vmatpush2.msra.mxu0 0.0
        %5249 = vmatprep.subr.mxu0 0.0
        %5250 = vmatpush2.msra.mxu0 0.0
        %5251 = vmatprep.subr.mxu0 0.0
        %5252 = vmatpush2.msra.mxu0 0.0
        %5253 = vmatprep.subr.mxu0 0.0
        %5254 = vmatpush2.msra.mxu0 0.0
        %5255 = vmatprep.subr.mxu0 0.0
        %5256 = vmatpush2.msra.mxu0 0.0
        %5257 = vmatprep.subr.mxu0 0.0
        %5258 = vmatpush2.msra.mxu0 0.0
        %5259 = vmatprep.mubr.f32.mxu0 0.0
        %5260 = vmatmul.mubr.f32.gmra.mxu0 %v5168
        %v5261 = vpop.f32.mrf.mxu0
        %v5262 = vadd.f32 0.0, %v5261
        %v5263 = vpop.f32.mrf.mxu0
        %v5264 = vadd.f32 0.0, %v5263
        %5265 = vmatprep.mubr.f32.mxu0 0.0
        %5266 = vmatmul.mubr.f32.gmra.mxu0 %v5171
        %v5267 = vpop.f32.mrf.mxu0
        %v5268 = vadd.f32 0.0, %v5267
        %v5269 = vpop.f32.mrf.mxu0
        %v5270 = vadd.f32 0.0, %v5269
        %5271 = vmatprep.mubr.f32.mxu0 0.0
        %5272 = vmatmul.mubr.f32.gmra.mxu0 %v5174
        %v5273 = vpop.f32.mrf.mxu0
        %v5274 = vadd.f32 0.0, %v5273
        %v5275 = vpop.f32.mrf.mxu0
        %v5276 = vadd.f32 0.0, %v5275
        %5277 = vmatprep.mubr.f32.mxu0 0.0
        %5278 = vmatmul.mubr.f32.gmra.mxu0 %v5177
        %v5279 = vpop.f32.mrf.mxu0
        %v5280 = vadd.f32 0.0, %v5279
        %v5281 = vpop.f32.mrf.mxu0
        %v5282 = vadd.f32 0.0, %v5281
        %5283 = vmatprep.mubr.f32.mxu0 0.0
        %5284 = vmatmul.mubr.f32.gmra.mxu0 %v5180
        %v5285 = vpop.f32.mrf.mxu0
        %v5286 = vadd.f32 0.0, %v5285
        %v5287 = vpop.f32.mrf.mxu0
        %v5288 = vadd.f32 0.0, %v5287
        %5289 = vmatprep.mubr.f32.mxu0 0.0
        %5290 = vmatmul.mubr.f32.gmra.mxu0 %v5183
        %v5291 = vpop.f32.mrf.mxu0
        %v5292 = vadd.f32 0.0, %v5291
        %v5293 = vpop.f32.mrf.mxu0
        %v5294 = vadd.f32 0.0, %v5293
        %5295 = vmatprep.mubr.f32.mxu0 0.0
        %5296 = vmatmul.mubr.f32.gmra.mxu0 %v5186
        %v5297 = vpop.f32.mrf.mxu0
        %v5298 = vadd.f32 0.0, %v5297
        %v5299 = vpop.f32.mrf.mxu0
        %v5300 = vadd.f32 0.0, %v5299
        %5301 = vmatprep.mubr.f32.mxu0 0.0
        %5302 = vmatmul.mubr.f32.gmra.mxu0 %v5189
        %v5303 = vpop.f32.mrf.mxu0
        %v5304 = vadd.f32 0.0, %v5303
        %v5305 = vpop.f32.mrf.mxu0
        %v5306 = vadd.f32 0.0, %v5305
        %5307 = vdwg.mxu0
        %v5308 = vadd.f32 %v5129, %v5262
        %v5309 = vadd.f32 %v5130, %v5264
        %v5310 = vadd.f32 %v5131, %v5268
        %v5311 = vadd.f32 %v5132, %v5270
        %v5312 = vadd.f32 %v5133, %v5274
        %v5313 = vadd.f32 %v5134, %v5276
        %v5314 = vadd.f32 %v5135, %v5280
        %v5315 = vadd.f32 %v5136, %v5282
        %v5316 = vadd.f32 %v5137, %v5286
        %v5317 = vadd.f32 %v5138, %v5288
        %v5318 = vadd.f32 %v5139, %v5292
        %v5319 = vadd.f32 %v5140, %v5294
        %v5320 = vadd.f32 %v5141, %v5298
        %v5321 = vadd.f32 %v5142, %v5300
        %v5322 = vadd.f32 %v5143, %v5304
        %v5323 = vadd.f32 %v5144, %v5306
        %s5324 = scalar_lea.vmem %s1, 1856
        %v5325 = vld [vmem:[%s5324] sm:$0xff]
        %v5326 = vld [vmem:[%s5324 + $0x8] sm:$0xff]
        %v5327 = vld [vmem:[%s5324 + $0x10] sm:$0xff]
        %v5328 = vld [vmem:[%s5324 + $0x18] sm:$0xff]
        %v5329 = vld [vmem:[%s5324 + $0x20] sm:$0xff]
        %v5330 = vld [vmem:[%s5324 + $0x28] sm:$0xff]
        %v5331 = vld [vmem:[%s5324 + $0x30] sm:$0xff]
        %v5332 = vld [vmem:[%s5324 + $0x38] sm:$0xff]
        %5333 = vrot.lane.b32.xlu0 %v169, 99
        %v5334 = vpop.permute.xlu0 %5333
        %5335 = vrot.lane.b32.xlu0 %v170, 99
        %v5336 = vpop.permute.xlu0 %5335
        %5337 = vrot.lane.b32.xlu0 %v171, 99
        %v5338 = vpop.permute.xlu0 %5337
        %5339 = vrot.lane.b32.xlu0 %v172, 99
        %v5340 = vpop.permute.xlu0 %5339
        %vm5341 = vcmask 809984
        %v5342 = vsel %vm5341, %v5334, %v5336
        %v5343 = vsel %vm5341, %v5338, %v5340
        %v5347 = vsel %vm207, %v5325, 0
        %v5350 = vsel %vm207, %v5326, 0
        %v5353 = vsel %vm207, %v5327, 0
        %v5356 = vsel %vm207, %v5328, 0
        %v5359 = vsel %vm207, %v5329, 0
        %v5362 = vsel %vm207, %v5330, 0
        %v5365 = vsel %vm207, %v5331, 0
        %v5368 = vsel %vm207, %v5332, 0
        %v5370 = vsel %vm232, %v5343, 0
        %v5372 = vsel %vm232, %v5340, 0
        %5374 = vmatprep.subr.mxu0 0.0
        %5375 = vmatpush1.msra.mxu0 0.0
        %5376 = vmatprep.subr.mxu0 0.0
        %5377 = vmatpush1.msra.mxu0 0.0
        %5378 = vmatprep.subr.mxu0 0.0
        %5379 = vmatpush1.msra.mxu0 0.0
        %5380 = vmatprep.subr.mxu0 0.0
        %5381 = vmatpush1.msra.mxu0 0.0
        %5382 = vmatprep.subr.mxu0 0.0
        %5383 = vmatpush1.msra.mxu0 0.0
        %5384 = vmatprep.subr.mxu0 0.0
        %5385 = vmatpush1.msra.mxu0 0.0
        %5386 = vmatprep.subr.mxu0 0.0
        %5387 = vmatpush1.msra.mxu0 0.0
        %5388 = vmatprep.subr.mxu0 0.0
        %5389 = vmatpush1.msra.mxu0 0.0
        %5390 = vmatprep.subr.mxu0 0.0
        %5391 = vmatpush1.msra.mxu0 0.0
        %5392 = vmatprep.subr.mxu0 0.0
        %5393 = vmatpush1.msra.mxu0 0.0
        %5394 = vmatprep.subr.mxu0 0.0
        %5395 = vmatpush1.msra.mxu0 0.0
        %5396 = vmatprep.subr.mxu0 0.0
        %5397 = vmatpush1.msra.mxu0 0.0
        %5398 = vmatprep.subr.mxu0 0.0
        %5399 = vmatpush1.msra.mxu0 0.0
        %5400 = vmatprep.subr.mxu0 0.0
        %5401 = vmatpush1.msra.mxu0 0.0
        %5402 = vmatprep.subr.mxu0 %v5372
        %5403 = vmatpush1.msra.mxu0 %v5370
        %5404 = vmatprep.subr.mxu0 %v5336
        %5405 = vmatpush1.msra.mxu0 %v5342
        %5406 = vmatprep.subr.mxu0 0.0
        %5407 = vmatpush2.msra.mxu0 0.0
        %5408 = vmatprep.subr.mxu0 0.0
        %5409 = vmatpush2.msra.mxu0 0.0
        %5410 = vmatprep.subr.mxu0 0.0
        %5411 = vmatpush2.msra.mxu0 0.0
        %5412 = vmatprep.subr.mxu0 0.0
        %5413 = vmatpush2.msra.mxu0 0.0
        %5414 = vmatprep.subr.mxu0 0.0
        %5415 = vmatpush2.msra.mxu0 0.0
        %5416 = vmatprep.subr.mxu0 0.0
        %5417 = vmatpush2.msra.mxu0 0.0
        %5418 = vmatprep.subr.mxu0 0.0
        %5419 = vmatpush2.msra.mxu0 0.0
        %5420 = vmatprep.subr.mxu0 0.0
        %5421 = vmatpush2.msra.mxu0 0.0
        %5422 = vmatprep.subr.mxu0 0.0
        %5423 = vmatpush2.msra.mxu0 0.0
        %5424 = vmatprep.subr.mxu0 0.0
        %5425 = vmatpush2.msra.mxu0 0.0
        %5426 = vmatprep.subr.mxu0 0.0
        %5427 = vmatpush2.msra.mxu0 0.0
        %5428 = vmatprep.subr.mxu0 0.0
        %5429 = vmatpush2.msra.mxu0 0.0
        %5430 = vmatprep.subr.mxu0 0.0
        %5431 = vmatpush2.msra.mxu0 0.0
        %5432 = vmatprep.subr.mxu0 0.0
        %5433 = vmatpush2.msra.mxu0 0.0
        %5434 = vmatprep.subr.mxu0 0.0
        %5435 = vmatpush2.msra.mxu0 0.0
        %5436 = vmatprep.subr.mxu0 0.0
        %5437 = vmatpush2.msra.mxu0 0.0
        %5438 = vmatprep.mubr.f32.mxu0 0.0
        %5439 = vmatmul.mubr.f32.gmra.mxu0 %v5347
        %v5440 = vpop.f32.mrf.mxu0
        %v5441 = vadd.f32 0.0, %v5440
        %v5442 = vpop.f32.mrf.mxu0
        %v5443 = vadd.f32 0.0, %v5442
        %5444 = vmatprep.mubr.f32.mxu0 0.0
        %5445 = vmatmul.mubr.f32.gmra.mxu0 %v5350
        %v5446 = vpop.f32.mrf.mxu0
        %v5447 = vadd.f32 0.0, %v5446
        %v5448 = vpop.f32.mrf.mxu0
        %v5449 = vadd.f32 0.0, %v5448
        %5450 = vmatprep.mubr.f32.mxu0 0.0
        %5451 = vmatmul.mubr.f32.gmra.mxu0 %v5353
        %v5452 = vpop.f32.mrf.mxu0
        %v5453 = vadd.f32 0.0, %v5452
        %v5454 = vpop.f32.mrf.mxu0
        %v5455 = vadd.f32 0.0, %v5454
        %5456 = vmatprep.mubr.f32.mxu0 0.0
        %5457 = vmatmul.mubr.f32.gmra.mxu0 %v5356
        %v5458 = vpop.f32.mrf.mxu0
        %v5459 = vadd.f32 0.0, %v5458
        %v5460 = vpop.f32.mrf.mxu0
        %v5461 = vadd.f32 0.0, %v5460
        %5462 = vmatprep.mubr.f32.mxu0 0.0
        %5463 = vmatmul.mubr.f32.gmra.mxu0 %v5359
        %v5464 = vpop.f32.mrf.mxu0
        %v5465 = vadd.f32 0.0, %v5464
        %v5466 = vpop.f32.mrf.mxu0
        %v5467 = vadd.f32 0.0, %v5466
        %5468 = vmatprep.mubr.f32.mxu0 0.0
        %5469 = vmatmul.mubr.f32.gmra.mxu0 %v5362
        %v5470 = vpop.f32.mrf.mxu0
        %v5471 = vadd.f32 0.0, %v5470
        %v5472 = vpop.f32.mrf.mxu0
        %v5473 = vadd.f32 0.0, %v5472
        %5474 = vmatprep.mubr.f32.mxu0 0.0
        %5475 = vmatmul.mubr.f32.gmra.mxu0 %v5365
        %v5476 = vpop.f32.mrf.mxu0
        %v5477 = vadd.f32 0.0, %v5476
        %v5478 = vpop.f32.mrf.mxu0
        %v5479 = vadd.f32 0.0, %v5478
        %5480 = vmatprep.mubr.f32.mxu0 0.0
        %5481 = vmatmul.mubr.f32.gmra.mxu0 %v5368
        %v5482 = vpop.f32.mrf.mxu0
        %v5483 = vadd.f32 0.0, %v5482
        %v5484 = vpop.f32.mrf.mxu0
        %v5485 = vadd.f32 0.0, %v5484
        %5486 = vdwg.mxu0
        %v5487 = vadd.f32 %v5308, %v5441
        %v5488 = vadd.f32 %v5309, %v5443
        %v5489 = vadd.f32 %v5310, %v5447
        %v5490 = vadd.f32 %v5311, %v5449
        %v5491 = vadd.f32 %v5312, %v5453
        %v5492 = vadd.f32 %v5313, %v5455
        %v5493 = vadd.f32 %v5314, %v5459
        %v5494 = vadd.f32 %v5315, %v5461
        %v5495 = vadd.f32 %v5316, %v5465
        %v5496 = vadd.f32 %v5317, %v5467
        %v5497 = vadd.f32 %v5318, %v5471
        %v5498 = vadd.f32 %v5319, %v5473
        %v5499 = vadd.f32 %v5320, %v5477
        %v5500 = vadd.f32 %v5321, %v5479
        %v5501 = vadd.f32 %v5322, %v5483
        %v5502 = vadd.f32 %v5323, %v5485
        %s5503 = scalar_lea.vmem %s1, 1920
        %v5504 = vld [vmem:[%s5503] sm:$0xff]
        %v5505 = vld [vmem:[%s5503 + $0x8] sm:$0xff]
        %v5506 = vld [vmem:[%s5503 + $0x10] sm:$0xff]
        %v5507 = vld [vmem:[%s5503 + $0x18] sm:$0xff]
        %v5508 = vld [vmem:[%s5503 + $0x20] sm:$0xff]
        %v5509 = vld [vmem:[%s5503 + $0x28] sm:$0xff]
        %v5510 = vld [vmem:[%s5503 + $0x30] sm:$0xff]
        %v5511 = vld [vmem:[%s5503 + $0x38] sm:$0xff]
        %5512 = vrot.lane.b32.xlu0 %v169, 98
        %v5513 = vpop.permute.xlu0 %5512
        %5514 = vrot.lane.b32.xlu0 %v170, 98
        %v5515 = vpop.permute.xlu0 %5514
        %5516 = vrot.lane.b32.xlu0 %v171, 98
        %v5517 = vpop.permute.xlu0 %5516
        %5518 = vrot.lane.b32.xlu0 %v172, 98
        %v5519 = vpop.permute.xlu0 %5518
        %vm5520 = vcmask 801792
        %v5521 = vsel %vm5520, %v5513, %v5515
        %v5522 = vsel %vm5520, %v5517, %v5519
        %v5526 = vsel %vm207, %v5504, 0
        %v5529 = vsel %vm207, %v5505, 0
        %v5532 = vsel %vm207, %v5506, 0
        %v5535 = vsel %vm207, %v5507, 0
        %v5538 = vsel %vm207, %v5508, 0
        %v5541 = vsel %vm207, %v5509, 0
        %v5544 = vsel %vm207, %v5510, 0
        %v5547 = vsel %vm207, %v5511, 0
        %v5549 = vsel %vm232, %v5522, 0
        %v5551 = vsel %vm232, %v5519, 0
        %5553 = vmatprep.subr.mxu0 0.0
        %5554 = vmatpush1.msra.mxu0 0.0
        %5555 = vmatprep.subr.mxu0 0.0
        %5556 = vmatpush1.msra.mxu0 0.0
        %5557 = vmatprep.subr.mxu0 0.0
        %5558 = vmatpush1.msra.mxu0 0.0
        %5559 = vmatprep.subr.mxu0 0.0
        %5560 = vmatpush1.msra.mxu0 0.0
        %5561 = vmatprep.subr.mxu0 0.0
        %5562 = vmatpush1.msra.mxu0 0.0
        %5563 = vmatprep.subr.mxu0 0.0
        %5564 = vmatpush1.msra.mxu0 0.0
        %5565 = vmatprep.subr.mxu0 0.0
        %5566 = vmatpush1.msra.mxu0 0.0
        %5567 = vmatprep.subr.mxu0 0.0
        %5568 = vmatpush1.msra.mxu0 0.0
        %5569 = vmatprep.subr.mxu0 0.0
        %5570 = vmatpush1.msra.mxu0 0.0
        %5571 = vmatprep.subr.mxu0 0.0
        %5572 = vmatpush1.msra.mxu0 0.0
        %5573 = vmatprep.subr.mxu0 0.0
        %5574 = vmatpush1.msra.mxu0 0.0
        %5575 = vmatprep.subr.mxu0 0.0
        %5576 = vmatpush1.msra.mxu0 0.0
        %5577 = vmatprep.subr.mxu0 0.0
        %5578 = vmatpush1.msra.mxu0 0.0
        %5579 = vmatprep.subr.mxu0 0.0
        %5580 = vmatpush1.msra.mxu0 0.0
        %5581 = vmatprep.subr.mxu0 %v5551
        %5582 = vmatpush1.msra.mxu0 %v5549
        %5583 = vmatprep.subr.mxu0 %v5515
        %5584 = vmatpush1.msra.mxu0 %v5521
        %5585 = vmatprep.subr.mxu0 0.0
        %5586 = vmatpush2.msra.mxu0 0.0
        %5587 = vmatprep.subr.mxu0 0.0
        %5588 = vmatpush2.msra.mxu0 0.0
        %5589 = vmatprep.subr.mxu0 0.0
        %5590 = vmatpush2.msra.mxu0 0.0
        %5591 = vmatprep.subr.mxu0 0.0
        %5592 = vmatpush2.msra.mxu0 0.0
        %5593 = vmatprep.subr.mxu0 0.0
        %5594 = vmatpush2.msra.mxu0 0.0
        %5595 = vmatprep.subr.mxu0 0.0
        %5596 = vmatpush2.msra.mxu0 0.0
        %5597 = vmatprep.subr.mxu0 0.0
        %5598 = vmatpush2.msra.mxu0 0.0
        %5599 = vmatprep.subr.mxu0 0.0
        %5600 = vmatpush2.msra.mxu0 0.0
        %5601 = vmatprep.subr.mxu0 0.0
        %5602 = vmatpush2.msra.mxu0 0.0
        %5603 = vmatprep.subr.mxu0 0.0
        %5604 = vmatpush2.msra.mxu0 0.0
        %5605 = vmatprep.subr.mxu0 0.0
        %5606 = vmatpush2.msra.mxu0 0.0
        %5607 = vmatprep.subr.mxu0 0.0
        %5608 = vmatpush2.msra.mxu0 0.0
        %5609 = vmatprep.subr.mxu0 0.0
        %5610 = vmatpush2.msra.mxu0 0.0
        %5611 = vmatprep.subr.mxu0 0.0
        %5612 = vmatpush2.msra.mxu0 0.0
        %5613 = vmatprep.subr.mxu0 0.0
        %5614 = vmatpush2.msra.mxu0 0.0
        %5615 = vmatprep.subr.mxu0 0.0
        %5616 = vmatpush2.msra.mxu0 0.0
        %5617 = vmatprep.mubr.f32.mxu0 0.0
        %5618 = vmatmul.mubr.f32.gmra.mxu0 %v5526
        %v5619 = vpop.f32.mrf.mxu0
        %v5620 = vadd.f32 0.0, %v5619
        %v5621 = vpop.f32.mrf.mxu0
        %v5622 = vadd.f32 0.0, %v5621
        %5623 = vmatprep.mubr.f32.mxu0 0.0
        %5624 = vmatmul.mubr.f32.gmra.mxu0 %v5529
        %v5625 = vpop.f32.mrf.mxu0
        %v5626 = vadd.f32 0.0, %v5625
        %v5627 = vpop.f32.mrf.mxu0
        %v5628 = vadd.f32 0.0, %v5627
        %5629 = vmatprep.mubr.f32.mxu0 0.0
        %5630 = vmatmul.mubr.f32.gmra.mxu0 %v5532
        %v5631 = vpop.f32.mrf.mxu0
        %v5632 = vadd.f32 0.0, %v5631
        %v5633 = vpop.f32.mrf.mxu0
        %v5634 = vadd.f32 0.0, %v5633
        %5635 = vmatprep.mubr.f32.mxu0 0.0
        %5636 = vmatmul.mubr.f32.gmra.mxu0 %v5535
        %v5637 = vpop.f32.mrf.mxu0
        %v5638 = vadd.f32 0.0, %v5637
        %v5639 = vpop.f32.mrf.mxu0
        %v5640 = vadd.f32 0.0, %v5639
        %5641 = vmatprep.mubr.f32.mxu0 0.0
        %5642 = vmatmul.mubr.f32.gmra.mxu0 %v5538
        %v5643 = vpop.f32.mrf.mxu0
        %v5644 = vadd.f32 0.0, %v5643
        %v5645 = vpop.f32.mrf.mxu0
        %v5646 = vadd.f32 0.0, %v5645
        %5647 = vmatprep.mubr.f32.mxu0 0.0
        %5648 = vmatmul.mubr.f32.gmra.mxu0 %v5541
        %v5649 = vpop.f32.mrf.mxu0
        %v5650 = vadd.f32 0.0, %v5649
        %v5651 = vpop.f32.mrf.mxu0
        %v5652 = vadd.f32 0.0, %v5651
        %5653 = vmatprep.mubr.f32.mxu0 0.0
        %5654 = vmatmul.mubr.f32.gmra.mxu0 %v5544
        %v5655 = vpop.f32.mrf.mxu0
        %v5656 = vadd.f32 0.0, %v5655
        %v5657 = vpop.f32.mrf.mxu0
        %v5658 = vadd.f32 0.0, %v5657
        %5659 = vmatprep.mubr.f32.mxu0 0.0
        %5660 = vmatmul.mubr.f32.gmra.mxu0 %v5547
        %v5661 = vpop.f32.mrf.mxu0
        %v5662 = vadd.f32 0.0, %v5661
        %v5663 = vpop.f32.mrf.mxu0
        %v5664 = vadd.f32 0.0, %v5663
        %5665 = vdwg.mxu0
        %v5666 = vadd.f32 %v5487, %v5620
        %v5667 = vadd.f32 %v5488, %v5622
        %v5668 = vadd.f32 %v5489, %v5626
        %v5669 = vadd.f32 %v5490, %v5628
        %v5670 = vadd.f32 %v5491, %v5632
        %v5671 = vadd.f32 %v5492, %v5634
        %v5672 = vadd.f32 %v5493, %v5638
        %v5673 = vadd.f32 %v5494, %v5640
        %v5674 = vadd.f32 %v5495, %v5644
        %v5675 = vadd.f32 %v5496, %v5646
        %v5676 = vadd.f32 %v5497, %v5650
        %v5677 = vadd.f32 %v5498, %v5652
        %v5678 = vadd.f32 %v5499, %v5656
        %v5679 = vadd.f32 %v5500, %v5658
        %v5680 = vadd.f32 %v5501, %v5662
        %v5681 = vadd.f32 %v5502, %v5664
        %s5682 = scalar_lea.vmem %s1, 1984
        %v5683 = vld [vmem:[%s5682] sm:$0xff]
        %v5684 = vld [vmem:[%s5682 + $0x8] sm:$0xff]
        %v5685 = vld [vmem:[%s5682 + $0x10] sm:$0xff]
        %v5686 = vld [vmem:[%s5682 + $0x18] sm:$0xff]
        %v5687 = vld [vmem:[%s5682 + $0x20] sm:$0xff]
        %v5688 = vld [vmem:[%s5682 + $0x28] sm:$0xff]
        %v5689 = vld [vmem:[%s5682 + $0x30] sm:$0xff]
        %v5690 = vld [vmem:[%s5682 + $0x38] sm:$0xff]
        %5691 = vrot.lane.b32.xlu0 %v169, 97
        %v5692 = vpop.permute.xlu0 %5691
        %5693 = vrot.lane.b32.xlu0 %v170, 97
        %v5694 = vpop.permute.xlu0 %5693
        %5695 = vrot.lane.b32.xlu0 %v171, 97
        %v5696 = vpop.permute.xlu0 %5695
        %5697 = vrot.lane.b32.xlu0 %v172, 97
        %v5698 = vpop.permute.xlu0 %5697
        %vm5699 = vcmask 793600
        %v5700 = vsel %vm5699, %v5692, %v5694
        %v5701 = vsel %vm5699, %v5696, %v5698
        %v5705 = vsel %vm207, %v5683, 0
        %v5708 = vsel %vm207, %v5684, 0
        %v5711 = vsel %vm207, %v5685, 0
        %v5714 = vsel %vm207, %v5686, 0
        %v5717 = vsel %vm207, %v5687, 0
        %v5720 = vsel %vm207, %v5688, 0
        %v5723 = vsel %vm207, %v5689, 0
        %v5726 = vsel %vm207, %v5690, 0
        %v5728 = vsel %vm232, %v5701, 0
        %v5730 = vsel %vm232, %v5698, 0
        %5732 = vmatprep.subr.mxu0 0.0
        %5733 = vmatpush1.msra.mxu0 0.0
        %5734 = vmatprep.subr.mxu0 0.0
        %5735 = vmatpush1.msra.mxu0 0.0
        %5736 = vmatprep.subr.mxu0 0.0
        %5737 = vmatpush1.msra.mxu0 0.0
        %5738 = vmatprep.subr.mxu0 0.0
        %5739 = vmatpush1.msra.mxu0 0.0
        %5740 = vmatprep.subr.mxu0 0.0
        %5741 = vmatpush1.msra.mxu0 0.0
        %5742 = vmatprep.subr.mxu0 0.0
        %5743 = vmatpush1.msra.mxu0 0.0
        %5744 = vmatprep.subr.mxu0 0.0
        %5745 = vmatpush1.msra.mxu0 0.0
        %5746 = vmatprep.subr.mxu0 0.0
        %5747 = vmatpush1.msra.mxu0 0.0
        %5748 = vmatprep.subr.mxu0 0.0
        %5749 = vmatpush1.msra.mxu0 0.0
        %5750 = vmatprep.subr.mxu0 0.0
        %5751 = vmatpush1.msra.mxu0 0.0
        %5752 = vmatprep.subr.mxu0 0.0
        %5753 = vmatpush1.msra.mxu0 0.0
        %5754 = vmatprep.subr.mxu0 0.0
        %5755 = vmatpush1.msra.mxu0 0.0
        %5756 = vmatprep.subr.mxu0 0.0
        %5757 = vmatpush1.msra.mxu0 0.0
        %5758 = vmatprep.subr.mxu0 0.0
        %5759 = vmatpush1.msra.mxu0 0.0
        %5760 = vmatprep.subr.mxu0 %v5730
        %5761 = vmatpush1.msra.mxu0 %v5728
        %5762 = vmatprep.subr.mxu0 %v5694
        %5763 = vmatpush1.msra.mxu0 %v5700
        %5764 = vmatprep.subr.mxu0 0.0
        %5765 = vmatpush2.msra.mxu0 0.0
        %5766 = vmatprep.subr.mxu0 0.0
        %5767 = vmatpush2.msra.mxu0 0.0
        %5768 = vmatprep.subr.mxu0 0.0
        %5769 = vmatpush2.msra.mxu0 0.0
        %5770 = vmatprep.subr.mxu0 0.0
        %5771 = vmatpush2.msra.mxu0 0.0
        %5772 = vmatprep.subr.mxu0 0.0
        %5773 = vmatpush2.msra.mxu0 0.0
        %5774 = vmatprep.subr.mxu0 0.0
        %5775 = vmatpush2.msra.mxu0 0.0
        %5776 = vmatprep.subr.mxu0 0.0
        %5777 = vmatpush2.msra.mxu0 0.0
        %5778 = vmatprep.subr.mxu0 0.0
        %5779 = vmatpush2.msra.mxu0 0.0
        %5780 = vmatprep.subr.mxu0 0.0
        %5781 = vmatpush2.msra.mxu0 0.0
        %5782 = vmatprep.subr.mxu0 0.0
        %5783 = vmatpush2.msra.mxu0 0.0
        %5784 = vmatprep.subr.mxu0 0.0
        %5785 = vmatpush2.msra.mxu0 0.0
        %5786 = vmatprep.subr.mxu0 0.0
        %5787 = vmatpush2.msra.mxu0 0.0
        %5788 = vmatprep.subr.mxu0 0.0
        %5789 = vmatpush2.msra.mxu0 0.0
        %5790 = vmatprep.subr.mxu0 0.0
        %5791 = vmatpush2.msra.mxu0 0.0
        %5792 = vmatprep.subr.mxu0 0.0
        %5793 = vmatpush2.msra.mxu0 0.0
        %5794 = vmatprep.subr.mxu0 0.0
        %5795 = vmatpush2.msra.mxu0 0.0
        %5796 = vmatprep.mubr.f32.mxu0 0.0
        %5797 = vmatmul.mubr.f32.gmra.mxu0 %v5705
        %v5798 = vpop.f32.mrf.mxu0
        %v5799 = vadd.f32 0.0, %v5798
        %v5800 = vpop.f32.mrf.mxu0
        %v5801 = vadd.f32 0.0, %v5800
        %5802 = vmatprep.mubr.f32.mxu0 0.0
        %5803 = vmatmul.mubr.f32.gmra.mxu0 %v5708
        %v5804 = vpop.f32.mrf.mxu0
        %v5805 = vadd.f32 0.0, %v5804
        %v5806 = vpop.f32.mrf.mxu0
        %v5807 = vadd.f32 0.0, %v5806
        %5808 = vmatprep.mubr.f32.mxu0 0.0
        %5809 = vmatmul.mubr.f32.gmra.mxu0 %v5711
        %v5810 = vpop.f32.mrf.mxu0
        %v5811 = vadd.f32 0.0, %v5810
        %v5812 = vpop.f32.mrf.mxu0
        %v5813 = vadd.f32 0.0, %v5812
        %5814 = vmatprep.mubr.f32.mxu0 0.0
        %5815 = vmatmul.mubr.f32.gmra.mxu0 %v5714
        %v5816 = vpop.f32.mrf.mxu0
        %v5817 = vadd.f32 0.0, %v5816
        %v5818 = vpop.f32.mrf.mxu0
        %v5819 = vadd.f32 0.0, %v5818
        %5820 = vmatprep.mubr.f32.mxu0 0.0
        %5821 = vmatmul.mubr.f32.gmra.mxu0 %v5717
        %v5822 = vpop.f32.mrf.mxu0
        %v5823 = vadd.f32 0.0, %v5822
        %v5824 = vpop.f32.mrf.mxu0
        %v5825 = vadd.f32 0.0, %v5824
        %5826 = vmatprep.mubr.f32.mxu0 0.0
        %5827 = vmatmul.mubr.f32.gmra.mxu0 %v5720
        %v5828 = vpop.f32.mrf.mxu0
        %v5829 = vadd.f32 0.0, %v5828
        %v5830 = vpop.f32.mrf.mxu0
        %v5831 = vadd.f32 0.0, %v5830
        %5832 = vmatprep.mubr.f32.mxu0 0.0
        %5833 = vmatmul.mubr.f32.gmra.mxu0 %v5723
        %v5834 = vpop.f32.mrf.mxu0
        %v5835 = vadd.f32 0.0, %v5834
        %v5836 = vpop.f32.mrf.mxu0
        %v5837 = vadd.f32 0.0, %v5836
        %5838 = vmatprep.mubr.f32.mxu0 0.0
        %5839 = vmatmul.mubr.f32.gmra.mxu0 %v5726
        %v5840 = vpop.f32.mrf.mxu0
        %v5841 = vadd.f32 0.0, %v5840
        %v5842 = vpop.f32.mrf.mxu0
        %v5843 = vadd.f32 0.0, %v5842
        %5844 = vdwg.mxu0
        %v5845 = vadd.f32 %v5666, %v5799
        %v5846 = vadd.f32 %v5667, %v5801
        %v5847 = vadd.f32 %v5668, %v5805
        %v5848 = vadd.f32 %v5669, %v5807
        %v5849 = vadd.f32 %v5670, %v5811
        %v5850 = vadd.f32 %v5671, %v5813
        %v5851 = vadd.f32 %v5672, %v5817
        %v5852 = vadd.f32 %v5673, %v5819
        %v5853 = vadd.f32 %v5674, %v5823
        %v5854 = vadd.f32 %v5675, %v5825
        %v5855 = vadd.f32 %v5676, %v5829
        %v5856 = vadd.f32 %v5677, %v5831
        %v5857 = vadd.f32 %v5678, %v5835
        %v5858 = vadd.f32 %v5679, %v5837
        %v5859 = vadd.f32 %v5680, %v5841
        %v5860 = vadd.f32 %v5681, %v5843
        %s5861 = scalar_lea.vmem %s1, 2048
        %v5862 = vld [vmem:[%s5861] sm:$0xff]
        %v5863 = vld [vmem:[%s5861 + $0x8] sm:$0xff]
        %v5864 = vld [vmem:[%s5861 + $0x10] sm:$0xff]
        %v5865 = vld [vmem:[%s5861 + $0x18] sm:$0xff]
        %v5866 = vld [vmem:[%s5861 + $0x20] sm:$0xff]
        %v5867 = vld [vmem:[%s5861 + $0x28] sm:$0xff]
        %v5868 = vld [vmem:[%s5861 + $0x30] sm:$0xff]
        %v5869 = vld [vmem:[%s5861 + $0x38] sm:$0xff]
        %5870 = vrot.lane.b32.xlu0 %v169, 96
        %v5871 = vpop.permute.xlu0 %5870
        %5872 = vrot.lane.b32.xlu0 %v170, 96
        %v5873 = vpop.permute.xlu0 %5872
        %5874 = vrot.lane.b32.xlu0 %v171, 96
        %v5875 = vpop.permute.xlu0 %5874
        %5876 = vrot.lane.b32.xlu0 %v172, 96
        %v5877 = vpop.permute.xlu0 %5876
        %vm5878 = vcmask 785408
        %v5879 = vsel %vm5878, %v5871, %v5873
        %v5880 = vsel %vm5878, %v5875, %v5877
        %v5884 = vsel %vm207, %v5862, 0
        %v5887 = vsel %vm207, %v5863, 0
        %v5890 = vsel %vm207, %v5864, 0
        %v5893 = vsel %vm207, %v5865, 0
        %v5896 = vsel %vm207, %v5866, 0
        %v5899 = vsel %vm207, %v5867, 0
        %v5902 = vsel %vm207, %v5868, 0
        %v5905 = vsel %vm207, %v5869, 0
        %v5907 = vsel %vm232, %v5880, 0
        %v5909 = vsel %vm232, %v5877, 0
        %5911 = vmatprep.subr.mxu0 0.0
        %5912 = vmatpush1.msra.mxu0 0.0
        %5913 = vmatprep.subr.mxu0 0.0
        %5914 = vmatpush1.msra.mxu0 0.0
        %5915 = vmatprep.subr.mxu0 0.0
        %5916 = vmatpush1.msra.mxu0 0.0
        %5917 = vmatprep.subr.mxu0 0.0
        %5918 = vmatpush1.msra.mxu0 0.0
        %5919 = vmatprep.subr.mxu0 0.0
        %5920 = vmatpush1.msra.mxu0 0.0
        %5921 = vmatprep.subr.mxu0 0.0
        %5922 = vmatpush1.msra.mxu0 0.0
        %5923 = vmatprep.subr.mxu0 0.0
        %5924 = vmatpush1.msra.mxu0 0.0
        %5925 = vmatprep.subr.mxu0 0.0
        %5926 = vmatpush1.msra.mxu0 0.0
        %5927 = vmatprep.subr.mxu0 0.0
        %5928 = vmatpush1.msra.mxu0 0.0
        %5929 = vmatprep.subr.mxu0 0.0
        %5930 = vmatpush1.msra.mxu0 0.0
        %5931 = vmatprep.subr.mxu0 0.0
        %5932 = vmatpush1.msra.mxu0 0.0
        %5933 = vmatprep.subr.mxu0 0.0
        %5934 = vmatpush1.msra.mxu0 0.0
        %5935 = vmatprep.subr.mxu0 0.0
        %5936 = vmatpush1.msra.mxu0 0.0
        %5937 = vmatprep.subr.mxu0 0.0
        %5938 = vmatpush1.msra.mxu0 0.0
        %5939 = vmatprep.subr.mxu0 %v5909
        %5940 = vmatpush1.msra.mxu0 %v5907
        %5941 = vmatprep.subr.mxu0 %v5873
        %5942 = vmatpush1.msra.mxu0 %v5879
        %5943 = vmatprep.subr.mxu0 0.0
        %5944 = vmatpush2.msra.mxu0 0.0
        %5945 = vmatprep.subr.mxu0 0.0
        %5946 = vmatpush2.msra.mxu0 0.0
        %5947 = vmatprep.subr.mxu0 0.0
        %5948 = vmatpush2.msra.mxu0 0.0
        %5949 = vmatprep.subr.mxu0 0.0
        %5950 = vmatpush2.msra.mxu0 0.0
        %5951 = vmatprep.subr.mxu0 0.0
        %5952 = vmatpush2.msra.mxu0 0.0
        %5953 = vmatprep.subr.mxu0 0.0
        %5954 = vmatpush2.msra.mxu0 0.0
        %5955 = vmatprep.subr.mxu0 0.0
        %5956 = vmatpush2.msra.mxu0 0.0
        %5957 = vmatprep.subr.mxu0 0.0
        %5958 = vmatpush2.msra.mxu0 0.0
        %5959 = vmatprep.subr.mxu0 0.0
        %5960 = vmatpush2.msra.mxu0 0.0
        %5961 = vmatprep.subr.mxu0 0.0
        %5962 = vmatpush2.msra.mxu0 0.0
        %5963 = vmatprep.subr.mxu0 0.0
        %5964 = vmatpush2.msra.mxu0 0.0
        %5965 = vmatprep.subr.mxu0 0.0
        %5966 = vmatpush2.msra.mxu0 0.0
        %5967 = vmatprep.subr.mxu0 0.0
        %5968 = vmatpush2.msra.mxu0 0.0
        %5969 = vmatprep.subr.mxu0 0.0
        %5970 = vmatpush2.msra.mxu0 0.0
        %5971 = vmatprep.subr.mxu0 0.0
        %5972 = vmatpush2.msra.mxu0 0.0
        %5973 = vmatprep.subr.mxu0 0.0
        %5974 = vmatpush2.msra.mxu0 0.0
        %5975 = vmatprep.mubr.f32.mxu0 0.0
        %5976 = vmatmul.mubr.f32.gmra.mxu0 %v5884
        %v5977 = vpop.f32.mrf.mxu0
        %v5978 = vadd.f32 0.0, %v5977
        %v5979 = vpop.f32.mrf.mxu0
        %v5980 = vadd.f32 0.0, %v5979
        %5981 = vmatprep.mubr.f32.mxu0 0.0
        %5982 = vmatmul.mubr.f32.gmra.mxu0 %v5887
        %v5983 = vpop.f32.mrf.mxu0
        %v5984 = vadd.f32 0.0, %v5983
        %v5985 = vpop.f32.mrf.mxu0
        %v5986 = vadd.f32 0.0, %v5985
        %5987 = vmatprep.mubr.f32.mxu0 0.0
        %5988 = vmatmul.mubr.f32.gmra.mxu0 %v5890
        %v5989 = vpop.f32.mrf.mxu0
        %v5990 = vadd.f32 0.0, %v5989
        %v5991 = vpop.f32.mrf.mxu0
        %v5992 = vadd.f32 0.0, %v5991
        %5993 = vmatprep.mubr.f32.mxu0 0.0
        %5994 = vmatmul.mubr.f32.gmra.mxu0 %v5893
        %v5995 = vpop.f32.mrf.mxu0
        %v5996 = vadd.f32 0.0, %v5995
        %v5997 = vpop.f32.mrf.mxu0
        %v5998 = vadd.f32 0.0, %v5997
        %5999 = vmatprep.mubr.f32.mxu0 0.0
        %6000 = vmatmul.mubr.f32.gmra.mxu0 %v5896
        %v6001 = vpop.f32.mrf.mxu0
        %v6002 = vadd.f32 0.0, %v6001
        %v6003 = vpop.f32.mrf.mxu0
        %v6004 = vadd.f32 0.0, %v6003
        %6005 = vmatprep.mubr.f32.mxu0 0.0
        %6006 = vmatmul.mubr.f32.gmra.mxu0 %v5899
        %v6007 = vpop.f32.mrf.mxu0
        %v6008 = vadd.f32 0.0, %v6007
        %v6009 = vpop.f32.mrf.mxu0
        %v6010 = vadd.f32 0.0, %v6009
        %6011 = vmatprep.mubr.f32.mxu0 0.0
        %6012 = vmatmul.mubr.f32.gmra.mxu0 %v5902
        %v6013 = vpop.f32.mrf.mxu0
        %v6014 = vadd.f32 0.0, %v6013
        %v6015 = vpop.f32.mrf.mxu0
        %v6016 = vadd.f32 0.0, %v6015
        %6017 = vmatprep.mubr.f32.mxu0 0.0
        %6018 = vmatmul.mubr.f32.gmra.mxu0 %v5905
        %v6019 = vpop.f32.mrf.mxu0
        %v6020 = vadd.f32 0.0, %v6019
        %v6021 = vpop.f32.mrf.mxu0
        %v6022 = vadd.f32 0.0, %v6021
        %6023 = vdwg.mxu0
        %v6024 = vadd.f32 %v5845, %v5978
        %v6025 = vadd.f32 %v5846, %v5980
        %v6026 = vadd.f32 %v5847, %v5984
        %v6027 = vadd.f32 %v5848, %v5986
        %v6028 = vadd.f32 %v5849, %v5990
        %v6029 = vadd.f32 %v5850, %v5992
        %v6030 = vadd.f32 %v5851, %v5996
        %v6031 = vadd.f32 %v5852, %v5998
        %v6032 = vadd.f32 %v5853, %v6002
        %v6033 = vadd.f32 %v5854, %v6004
        %v6034 = vadd.f32 %v5855, %v6008
        %v6035 = vadd.f32 %v5856, %v6010
        %v6036 = vadd.f32 %v5857, %v6014
        %v6037 = vadd.f32 %v5858, %v6016
        %v6038 = vadd.f32 %v5859, %v6020
        %v6039 = vadd.f32 %v5860, %v6022
        %s6040 = scalar_lea.vmem %s1, 2112
        %v6041 = vld [vmem:[%s6040] sm:$0xff]
        %v6042 = vld [vmem:[%s6040 + $0x8] sm:$0xff]
        %v6043 = vld [vmem:[%s6040 + $0x10] sm:$0xff]
        %v6044 = vld [vmem:[%s6040 + $0x18] sm:$0xff]
        %v6045 = vld [vmem:[%s6040 + $0x20] sm:$0xff]
        %v6046 = vld [vmem:[%s6040 + $0x28] sm:$0xff]
        %v6047 = vld [vmem:[%s6040 + $0x30] sm:$0xff]
        %v6048 = vld [vmem:[%s6040 + $0x38] sm:$0xff]
        %6049 = vrot.lane.b32.xlu0 %v169, 95
        %v6050 = vpop.permute.xlu0 %6049
        %6051 = vrot.lane.b32.xlu0 %v170, 95
        %v6052 = vpop.permute.xlu0 %6051
        %6053 = vrot.lane.b32.xlu0 %v171, 95
        %v6054 = vpop.permute.xlu0 %6053
        %6055 = vrot.lane.b32.xlu0 %v172, 95
        %v6056 = vpop.permute.xlu0 %6055
        %vm6057 = vcmask 777216
        %v6058 = vsel %vm6057, %v6050, %v6052
        %v6059 = vsel %vm6057, %v6054, %v6056
        %v6063 = vsel %vm207, %v6041, 0
        %v6066 = vsel %vm207, %v6042, 0
        %v6069 = vsel %vm207, %v6043, 0
        %v6072 = vsel %vm207, %v6044, 0
        %v6075 = vsel %vm207, %v6045, 0
        %v6078 = vsel %vm207, %v6046, 0
        %v6081 = vsel %vm207, %v6047, 0
        %v6084 = vsel %vm207, %v6048, 0
        %v6086 = vsel %vm232, %v6059, 0
        %v6088 = vsel %vm232, %v6056, 0
        %6090 = vmatprep.subr.mxu0 0.0
        %6091 = vmatpush1.msra.mxu0 0.0
        %6092 = vmatprep.subr.mxu0 0.0
        %6093 = vmatpush1.msra.mxu0 0.0
        %6094 = vmatprep.subr.mxu0 0.0
        %6095 = vmatpush1.msra.mxu0 0.0
        %6096 = vmatprep.subr.mxu0 0.0
        %6097 = vmatpush1.msra.mxu0 0.0
        %6098 = vmatprep.subr.mxu0 0.0
        %6099 = vmatpush1.msra.mxu0 0.0
        %6100 = vmatprep.subr.mxu0 0.0
        %6101 = vmatpush1.msra.mxu0 0.0
        %6102 = vmatprep.subr.mxu0 0.0
        %6103 = vmatpush1.msra.mxu0 0.0
        %6104 = vmatprep.subr.mxu0 0.0
        %6105 = vmatpush1.msra.mxu0 0.0
        %6106 = vmatprep.subr.mxu0 0.0
        %6107 = vmatpush1.msra.mxu0 0.0
        %6108 = vmatprep.subr.mxu0 0.0
        %6109 = vmatpush1.msra.mxu0 0.0
        %6110 = vmatprep.subr.mxu0 0.0
        %6111 = vmatpush1.msra.mxu0 0.0
        %6112 = vmatprep.subr.mxu0 0.0
        %6113 = vmatpush1.msra.mxu0 0.0
        %6114 = vmatprep.subr.mxu0 0.0
        %6115 = vmatpush1.msra.mxu0 0.0
        %6116 = vmatprep.subr.mxu0 0.0
        %6117 = vmatpush1.msra.mxu0 0.0
        %6118 = vmatprep.subr.mxu0 %v6088
        %6119 = vmatpush1.msra.mxu0 %v6086
        %6120 = vmatprep.subr.mxu0 %v6052
        %6121 = vmatpush1.msra.mxu0 %v6058
        %6122 = vmatprep.subr.mxu0 0.0
        %6123 = vmatpush2.msra.mxu0 0.0
        %6124 = vmatprep.subr.mxu0 0.0
        %6125 = vmatpush2.msra.mxu0 0.0
        %6126 = vmatprep.subr.mxu0 0.0
        %6127 = vmatpush2.msra.mxu0 0.0
        %6128 = vmatprep.subr.mxu0 0.0
        %6129 = vmatpush2.msra.mxu0 0.0
        %6130 = vmatprep.subr.mxu0 0.0
        %6131 = vmatpush2.msra.mxu0 0.0
        %6132 = vmatprep.subr.mxu0 0.0
        %6133 = vmatpush2.msra.mxu0 0.0
        %6134 = vmatprep.subr.mxu0 0.0
        %6135 = vmatpush2.msra.mxu0 0.0
        %6136 = vmatprep.subr.mxu0 0.0
        %6137 = vmatpush2.msra.mxu0 0.0
        %6138 = vmatprep.subr.mxu0 0.0
        %6139 = vmatpush2.msra.mxu0 0.0
        %6140 = vmatprep.subr.mxu0 0.0
        %6141 = vmatpush2.msra.mxu0 0.0
        %6142 = vmatprep.subr.mxu0 0.0
        %6143 = vmatpush2.msra.mxu0 0.0
        %6144 = vmatprep.subr.mxu0 0.0
        %6145 = vmatpush2.msra.mxu0 0.0
        %6146 = vmatprep.subr.mxu0 0.0
        %6147 = vmatpush2.msra.mxu0 0.0
        %6148 = vmatprep.subr.mxu0 0.0
        %6149 = vmatpush2.msra.mxu0 0.0
        %6150 = vmatprep.subr.mxu0 0.0
        %6151 = vmatpush2.msra.mxu0 0.0
        %6152 = vmatprep.subr.mxu0 0.0
        %6153 = vmatpush2.msra.mxu0 0.0
        %6154 = vmatprep.mubr.f32.mxu0 0.0
        %6155 = vmatmul.mubr.f32.gmra.mxu0 %v6063
        %v6156 = vpop.f32.mrf.mxu0
        %v6157 = vadd.f32 0.0, %v6156
        %v6158 = vpop.f32.mrf.mxu0
        %v6159 = vadd.f32 0.0, %v6158
        %6160 = vmatprep.mubr.f32.mxu0 0.0
        %6161 = vmatmul.mubr.f32.gmra.mxu0 %v6066
        %v6162 = vpop.f32.mrf.mxu0
        %v6163 = vadd.f32 0.0, %v6162
        %v6164 = vpop.f32.mrf.mxu0
        %v6165 = vadd.f32 0.0, %v6164
        %6166 = vmatprep.mubr.f32.mxu0 0.0
        %6167 = vmatmul.mubr.f32.gmra.mxu0 %v6069
        %v6168 = vpop.f32.mrf.mxu0
        %v6169 = vadd.f32 0.0, %v6168
        %v6170 = vpop.f32.mrf.mxu0
        %v6171 = vadd.f32 0.0, %v6170
        %6172 = vmatprep.mubr.f32.mxu0 0.0
        %6173 = vmatmul.mubr.f32.gmra.mxu0 %v6072
        %v6174 = vpop.f32.mrf.mxu0
        %v6175 = vadd.f32 0.0, %v6174
        %v6176 = vpop.f32.mrf.mxu0
        %v6177 = vadd.f32 0.0, %v6176
        %6178 = vmatprep.mubr.f32.mxu0 0.0
        %6179 = vmatmul.mubr.f32.gmra.mxu0 %v6075
        %v6180 = vpop.f32.mrf.mxu0
        %v6181 = vadd.f32 0.0, %v6180
        %v6182 = vpop.f32.mrf.mxu0
        %v6183 = vadd.f32 0.0, %v6182
        %6184 = vmatprep.mubr.f32.mxu0 0.0
        %6185 = vmatmul.mubr.f32.gmra.mxu0 %v6078
        %v6186 = vpop.f32.mrf.mxu0
        %v6187 = vadd.f32 0.0, %v6186
        %v6188 = vpop.f32.mrf.mxu0
        %v6189 = vadd.f32 0.0, %v6188
        %6190 = vmatprep.mubr.f32.mxu0 0.0
        %6191 = vmatmul.mubr.f32.gmra.mxu0 %v6081
        %v6192 = vpop.f32.mrf.mxu0
        %v6193 = vadd.f32 0.0, %v6192
        %v6194 = vpop.f32.mrf.mxu0
        %v6195 = vadd.f32 0.0, %v6194
        %6196 = vmatprep.mubr.f32.mxu0 0.0
        %6197 = vmatmul.mubr.f32.gmra.mxu0 %v6084
        %v6198 = vpop.f32.mrf.mxu0
        %v6199 = vadd.f32 0.0, %v6198
        %v6200 = vpop.f32.mrf.mxu0
        %v6201 = vadd.f32 0.0, %v6200
        %6202 = vdwg.mxu0
        %v6203 = vadd.f32 %v6024, %v6157
        %v6204 = vadd.f32 %v6025, %v6159
        %v6205 = vadd.f32 %v6026, %v6163
        %v6206 = vadd.f32 %v6027, %v6165
        %v6207 = vadd.f32 %v6028, %v6169
        %v6208 = vadd.f32 %v6029, %v6171
        %v6209 = vadd.f32 %v6030, %v6175
        %v6210 = vadd.f32 %v6031, %v6177
        %v6211 = vadd.f32 %v6032, %v6181
        %v6212 = vadd.f32 %v6033, %v6183
        %v6213 = vadd.f32 %v6034, %v6187
        %v6214 = vadd.f32 %v6035, %v6189
        %v6215 = vadd.f32 %v6036, %v6193
        %v6216 = vadd.f32 %v6037, %v6195
        %v6217 = vadd.f32 %v6038, %v6199
        %v6218 = vadd.f32 %v6039, %v6201
        %s6219 = scalar_lea.vmem %s1, 2176
        %v6220 = vld [vmem:[%s6219] sm:$0xff]
        %v6221 = vld [vmem:[%s6219 + $0x8] sm:$0xff]
        %v6222 = vld [vmem:[%s6219 + $0x10] sm:$0xff]
        %v6223 = vld [vmem:[%s6219 + $0x18] sm:$0xff]
        %v6224 = vld [vmem:[%s6219 + $0x20] sm:$0xff]
        %v6225 = vld [vmem:[%s6219 + $0x28] sm:$0xff]
        %v6226 = vld [vmem:[%s6219 + $0x30] sm:$0xff]
        %v6227 = vld [vmem:[%s6219 + $0x38] sm:$0xff]
        %6228 = vrot.lane.b32.xlu0 %v169, 94
        %v6229 = vpop.permute.xlu0 %6228
        %6230 = vrot.lane.b32.xlu0 %v170, 94
        %v6231 = vpop.permute.xlu0 %6230
        %6232 = vrot.lane.b32.xlu0 %v171, 94
        %v6233 = vpop.permute.xlu0 %6232
        %6234 = vrot.lane.b32.xlu0 %v172, 94
        %v6235 = vpop.permute.xlu0 %6234
        %vm6236 = vcmask 769024
        %v6237 = vsel %vm6236, %v6229, %v6231
        %v6238 = vsel %vm6236, %v6233, %v6235
        %v6242 = vsel %vm207, %v6220, 0
        %v6245 = vsel %vm207, %v6221, 0
        %v6248 = vsel %vm207, %v6222, 0
        %v6251 = vsel %vm207, %v6223, 0
        %v6254 = vsel %vm207, %v6224, 0
        %v6257 = vsel %vm207, %v6225, 0
        %v6260 = vsel %vm207, %v6226, 0
        %v6263 = vsel %vm207, %v6227, 0
        %v6265 = vsel %vm232, %v6238, 0
        %v6267 = vsel %vm232, %v6235, 0
        %6269 = vmatprep.subr.mxu0 0.0
        %6270 = vmatpush1.msra.mxu0 0.0
        %6271 = vmatprep.subr.mxu0 0.0
        %6272 = vmatpush1.msra.mxu0 0.0
        %6273 = vmatprep.subr.mxu0 0.0
        %6274 = vmatpush1.msra.mxu0 0.0
        %6275 = vmatprep.subr.mxu0 0.0
        %6276 = vmatpush1.msra.mxu0 0.0
        %6277 = vmatprep.subr.mxu0 0.0
        %6278 = vmatpush1.msra.mxu0 0.0
        %6279 = vmatprep.subr.mxu0 0.0
        %6280 = vmatpush1.msra.mxu0 0.0
        %6281 = vmatprep.subr.mxu0 0.0
        %6282 = vmatpush1.msra.mxu0 0.0
        %6283 = vmatprep.subr.mxu0 0.0
        %6284 = vmatpush1.msra.mxu0 0.0
        %6285 = vmatprep.subr.mxu0 0.0
        %6286 = vmatpush1.msra.mxu0 0.0
        %6287 = vmatprep.subr.mxu0 0.0
        %6288 = vmatpush1.msra.mxu0 0.0
        %6289 = vmatprep.subr.mxu0 0.0
        %6290 = vmatpush1.msra.mxu0 0.0
        %6291 = vmatprep.subr.mxu0 0.0
        %6292 = vmatpush1.msra.mxu0 0.0
        %6293 = vmatprep.subr.mxu0 0.0
        %6294 = vmatpush1.msra.mxu0 0.0
        %6295 = vmatprep.subr.mxu0 0.0
        %6296 = vmatpush1.msra.mxu0 0.0
        %6297 = vmatprep.subr.mxu0 %v6267
        %6298 = vmatpush1.msra.mxu0 %v6265
        %6299 = vmatprep.subr.mxu0 %v6231
        %6300 = vmatpush1.msra.mxu0 %v6237
        %6301 = vmatprep.subr.mxu0 0.0
        %6302 = vmatpush2.msra.mxu0 0.0
        %6303 = vmatprep.subr.mxu0 0.0
        %6304 = vmatpush2.msra.mxu0 0.0
        %6305 = vmatprep.subr.mxu0 0.0
        %6306 = vmatpush2.msra.mxu0 0.0
        %6307 = vmatprep.subr.mxu0 0.0
        %6308 = vmatpush2.msra.mxu0 0.0
        %6309 = vmatprep.subr.mxu0 0.0
        %6310 = vmatpush2.msra.mxu0 0.0
        %6311 = vmatprep.subr.mxu0 0.0
        %6312 = vmatpush2.msra.mxu0 0.0
        %6313 = vmatprep.subr.mxu0 0.0
        %6314 = vmatpush2.msra.mxu0 0.0
        %6315 = vmatprep.subr.mxu0 0.0
        %6316 = vmatpush2.msra.mxu0 0.0
        %6317 = vmatprep.subr.mxu0 0.0
        %6318 = vmatpush2.msra.mxu0 0.0
        %6319 = vmatprep.subr.mxu0 0.0
        %6320 = vmatpush2.msra.mxu0 0.0
        %6321 = vmatprep.subr.mxu0 0.0
        %6322 = vmatpush2.msra.mxu0 0.0
        %6323 = vmatprep.subr.mxu0 0.0
        %6324 = vmatpush2.msra.mxu0 0.0
        %6325 = vmatprep.subr.mxu0 0.0
        %6326 = vmatpush2.msra.mxu0 0.0
        %6327 = vmatprep.subr.mxu0 0.0
        %6328 = vmatpush2.msra.mxu0 0.0
        %6329 = vmatprep.subr.mxu0 0.0
        %6330 = vmatpush2.msra.mxu0 0.0
        %6331 = vmatprep.subr.mxu0 0.0
        %6332 = vmatpush2.msra.mxu0 0.0
        %6333 = vmatprep.mubr.f32.mxu0 0.0
        %6334 = vmatmul.mubr.f32.gmra.mxu0 %v6242
        %v6335 = vpop.f32.mrf.mxu0
        %v6336 = vadd.f32 0.0, %v6335
        %v6337 = vpop.f32.mrf.mxu0
        %v6338 = vadd.f32 0.0, %v6337
        %6339 = vmatprep.mubr.f32.mxu0 0.0
        %6340 = vmatmul.mubr.f32.gmra.mxu0 %v6245
        %v6341 = vpop.f32.mrf.mxu0
        %v6342 = vadd.f32 0.0, %v6341
        %v6343 = vpop.f32.mrf.mxu0
        %v6344 = vadd.f32 0.0, %v6343
        %6345 = vmatprep.mubr.f32.mxu0 0.0
        %6346 = vmatmul.mubr.f32.gmra.mxu0 %v6248
        %v6347 = vpop.f32.mrf.mxu0
        %v6348 = vadd.f32 0.0, %v6347
        %v6349 = vpop.f32.mrf.mxu0
        %v6350 = vadd.f32 0.0, %v6349
        %6351 = vmatprep.mubr.f32.mxu0 0.0
        %6352 = vmatmul.mubr.f32.gmra.mxu0 %v6251
        %v6353 = vpop.f32.mrf.mxu0
        %v6354 = vadd.f32 0.0, %v6353
        %v6355 = vpop.f32.mrf.mxu0
        %v6356 = vadd.f32 0.0, %v6355
        %6357 = vmatprep.mubr.f32.mxu0 0.0
        %6358 = vmatmul.mubr.f32.gmra.mxu0 %v6254
        %v6359 = vpop.f32.mrf.mxu0
        %v6360 = vadd.f32 0.0, %v6359
        %v6361 = vpop.f32.mrf.mxu0
        %v6362 = vadd.f32 0.0, %v6361
        %6363 = vmatprep.mubr.f32.mxu0 0.0
        %6364 = vmatmul.mubr.f32.gmra.mxu0 %v6257
        %v6365 = vpop.f32.mrf.mxu0
        %v6366 = vadd.f32 0.0, %v6365
        %v6367 = vpop.f32.mrf.mxu0
        %v6368 = vadd.f32 0.0, %v6367
        %6369 = vmatprep.mubr.f32.mxu0 0.0
        %6370 = vmatmul.mubr.f32.gmra.mxu0 %v6260
        %v6371 = vpop.f32.mrf.mxu0
        %v6372 = vadd.f32 0.0, %v6371
        %v6373 = vpop.f32.mrf.mxu0
        %v6374 = vadd.f32 0.0, %v6373
        %6375 = vmatprep.mubr.f32.mxu0 0.0
        %6376 = vmatmul.mubr.f32.gmra.mxu0 %v6263
        %v6377 = vpop.f32.mrf.mxu0
        %v6378 = vadd.f32 0.0, %v6377
        %v6379 = vpop.f32.mrf.mxu0
        %v6380 = vadd.f32 0.0, %v6379
        %6381 = vdwg.mxu0
        %v6382 = vadd.f32 %v6203, %v6336
        %v6383 = vadd.f32 %v6204, %v6338
        %v6384 = vadd.f32 %v6205, %v6342
        %v6385 = vadd.f32 %v6206, %v6344
        %v6386 = vadd.f32 %v6207, %v6348
        %v6387 = vadd.f32 %v6208, %v6350
        %v6388 = vadd.f32 %v6209, %v6354
        %v6389 = vadd.f32 %v6210, %v6356
        %v6390 = vadd.f32 %v6211, %v6360
        %v6391 = vadd.f32 %v6212, %v6362
        %v6392 = vadd.f32 %v6213, %v6366
        %v6393 = vadd.f32 %v6214, %v6368
        %v6394 = vadd.f32 %v6215, %v6372
        %v6395 = vadd.f32 %v6216, %v6374
        %v6396 = vadd.f32 %v6217, %v6378
        %v6397 = vadd.f32 %v6218, %v6380
        %s6398 = scalar_lea.vmem %s1, 2240
        %v6399 = vld [vmem:[%s6398] sm:$0xff]
        %v6400 = vld [vmem:[%s6398 + $0x8] sm:$0xff]
        %v6401 = vld [vmem:[%s6398 + $0x10] sm:$0xff]
        %v6402 = vld [vmem:[%s6398 + $0x18] sm:$0xff]
        %v6403 = vld [vmem:[%s6398 + $0x20] sm:$0xff]
        %v6404 = vld [vmem:[%s6398 + $0x28] sm:$0xff]
        %v6405 = vld [vmem:[%s6398 + $0x30] sm:$0xff]
        %v6406 = vld [vmem:[%s6398 + $0x38] sm:$0xff]
        %6407 = vrot.lane.b32.xlu0 %v169, 93
        %v6408 = vpop.permute.xlu0 %6407
        %6409 = vrot.lane.b32.xlu0 %v170, 93
        %v6410 = vpop.permute.xlu0 %6409
        %6411 = vrot.lane.b32.xlu0 %v171, 93
        %v6412 = vpop.permute.xlu0 %6411
        %6413 = vrot.lane.b32.xlu0 %v172, 93
        %v6414 = vpop.permute.xlu0 %6413
        %vm6415 = vcmask 760832
        %v6416 = vsel %vm6415, %v6408, %v6410
        %v6417 = vsel %vm6415, %v6412, %v6414
        %v6421 = vsel %vm207, %v6399, 0
        %v6424 = vsel %vm207, %v6400, 0
        %v6427 = vsel %vm207, %v6401, 0
        %v6430 = vsel %vm207, %v6402, 0
        %v6433 = vsel %vm207, %v6403, 0
        %v6436 = vsel %vm207, %v6404, 0
        %v6439 = vsel %vm207, %v6405, 0
        %v6442 = vsel %vm207, %v6406, 0
        %v6444 = vsel %vm232, %v6417, 0
        %v6446 = vsel %vm232, %v6414, 0
        %6448 = vmatprep.subr.mxu0 0.0
        %6449 = vmatpush1.msra.mxu0 0.0
        %6450 = vmatprep.subr.mxu0 0.0
        %6451 = vmatpush1.msra.mxu0 0.0
        %6452 = vmatprep.subr.mxu0 0.0
        %6453 = vmatpush1.msra.mxu0 0.0
        %6454 = vmatprep.subr.mxu0 0.0
        %6455 = vmatpush1.msra.mxu0 0.0
        %6456 = vmatprep.subr.mxu0 0.0
        %6457 = vmatpush1.msra.mxu0 0.0
        %6458 = vmatprep.subr.mxu0 0.0
        %6459 = vmatpush1.msra.mxu0 0.0
        %6460 = vmatprep.subr.mxu0 0.0
        %6461 = vmatpush1.msra.mxu0 0.0
        %6462 = vmatprep.subr.mxu0 0.0
        %6463 = vmatpush1.msra.mxu0 0.0
        %6464 = vmatprep.subr.mxu0 0.0
        %6465 = vmatpush1.msra.mxu0 0.0
        %6466 = vmatprep.subr.mxu0 0.0
        %6467 = vmatpush1.msra.mxu0 0.0
        %6468 = vmatprep.subr.mxu0 0.0
        %6469 = vmatpush1.msra.mxu0 0.0
        %6470 = vmatprep.subr.mxu0 0.0
        %6471 = vmatpush1.msra.mxu0 0.0
        %6472 = vmatprep.subr.mxu0 0.0
        %6473 = vmatpush1.msra.mxu0 0.0
        %6474 = vmatprep.subr.mxu0 0.0
        %6475 = vmatpush1.msra.mxu0 0.0
        %6476 = vmatprep.subr.mxu0 %v6446
        %6477 = vmatpush1.msra.mxu0 %v6444
        %6478 = vmatprep.subr.mxu0 %v6410
        %6479 = vmatpush1.msra.mxu0 %v6416
        %6480 = vmatprep.subr.mxu0 0.0
        %6481 = vmatpush2.msra.mxu0 0.0
        %6482 = vmatprep.subr.mxu0 0.0
        %6483 = vmatpush2.msra.mxu0 0.0
        %6484 = vmatprep.subr.mxu0 0.0
        %6485 = vmatpush2.msra.mxu0 0.0
        %6486 = vmatprep.subr.mxu0 0.0
        %6487 = vmatpush2.msra.mxu0 0.0
        %6488 = vmatprep.subr.mxu0 0.0
        %6489 = vmatpush2.msra.mxu0 0.0
        %6490 = vmatprep.subr.mxu0 0.0
        %6491 = vmatpush2.msra.mxu0 0.0
        %6492 = vmatprep.subr.mxu0 0.0
        %6493 = vmatpush2.msra.mxu0 0.0
        %6494 = vmatprep.subr.mxu0 0.0
        %6495 = vmatpush2.msra.mxu0 0.0
        %6496 = vmatprep.subr.mxu0 0.0
        %6497 = vmatpush2.msra.mxu0 0.0
        %6498 = vmatprep.subr.mxu0 0.0
        %6499 = vmatpush2.msra.mxu0 0.0
        %6500 = vmatprep.subr.mxu0 0.0
        %6501 = vmatpush2.msra.mxu0 0.0
        %6502 = vmatprep.subr.mxu0 0.0
        %6503 = vmatpush2.msra.mxu0 0.0
        %6504 = vmatprep.subr.mxu0 0.0
        %6505 = vmatpush2.msra.mxu0 0.0
        %6506 = vmatprep.subr.mxu0 0.0
        %6507 = vmatpush2.msra.mxu0 0.0
        %6508 = vmatprep.subr.mxu0 0.0
        %6509 = vmatpush2.msra.mxu0 0.0
        %6510 = vmatprep.subr.mxu0 0.0
        %6511 = vmatpush2.msra.mxu0 0.0
        %6512 = vmatprep.mubr.f32.mxu0 0.0
        %6513 = vmatmul.mubr.f32.gmra.mxu0 %v6421
        %v6514 = vpop.f32.mrf.mxu0
        %v6515 = vadd.f32 0.0, %v6514
        %v6516 = vpop.f32.mrf.mxu0
        %v6517 = vadd.f32 0.0, %v6516
        %6518 = vmatprep.mubr.f32.mxu0 0.0
        %6519 = vmatmul.mubr.f32.gmra.mxu0 %v6424
        %v6520 = vpop.f32.mrf.mxu0
        %v6521 = vadd.f32 0.0, %v6520
        %v6522 = vpop.f32.mrf.mxu0
        %v6523 = vadd.f32 0.0, %v6522
        %6524 = vmatprep.mubr.f32.mxu0 0.0
        %6525 = vmatmul.mubr.f32.gmra.mxu0 %v6427
        %v6526 = vpop.f32.mrf.mxu0
        %v6527 = vadd.f32 0.0, %v6526
        %v6528 = vpop.f32.mrf.mxu0
        %v6529 = vadd.f32 0.0, %v6528
        %6530 = vmatprep.mubr.f32.mxu0 0.0
        %6531 = vmatmul.mubr.f32.gmra.mxu0 %v6430
        %v6532 = vpop.f32.mrf.mxu0
        %v6533 = vadd.f32 0.0, %v6532
        %v6534 = vpop.f32.mrf.mxu0
        %v6535 = vadd.f32 0.0, %v6534
        %6536 = vmatprep.mubr.f32.mxu0 0.0
        %6537 = vmatmul.mubr.f32.gmra.mxu0 %v6433
        %v6538 = vpop.f32.mrf.mxu0
        %v6539 = vadd.f32 0.0, %v6538
        %v6540 = vpop.f32.mrf.mxu0
        %v6541 = vadd.f32 0.0, %v6540
        %6542 = vmatprep.mubr.f32.mxu0 0.0
        %6543 = vmatmul.mubr.f32.gmra.mxu0 %v6436
        %v6544 = vpop.f32.mrf.mxu0
        %v6545 = vadd.f32 0.0, %v6544
        %v6546 = vpop.f32.mrf.mxu0
        %v6547 = vadd.f32 0.0, %v6546
        %6548 = vmatprep.mubr.f32.mxu0 0.0
        %6549 = vmatmul.mubr.f32.gmra.mxu0 %v6439
        %v6550 = vpop.f32.mrf.mxu0
        %v6551 = vadd.f32 0.0, %v6550
        %v6552 = vpop.f32.mrf.mxu0
        %v6553 = vadd.f32 0.0, %v6552
        %6554 = vmatprep.mubr.f32.mxu0 0.0
        %6555 = vmatmul.mubr.f32.gmra.mxu0 %v6442
        %v6556 = vpop.f32.mrf.mxu0
        %v6557 = vadd.f32 0.0, %v6556
        %v6558 = vpop.f32.mrf.mxu0
        %v6559 = vadd.f32 0.0, %v6558
        %6560 = vdwg.mxu0
        %v6561 = vadd.f32 %v6382, %v6515
        %v6562 = vadd.f32 %v6383, %v6517
        %v6563 = vadd.f32 %v6384, %v6521
        %v6564 = vadd.f32 %v6385, %v6523
        %v6565 = vadd.f32 %v6386, %v6527
        %v6566 = vadd.f32 %v6387, %v6529
        %v6567 = vadd.f32 %v6388, %v6533
        %v6568 = vadd.f32 %v6389, %v6535
        %v6569 = vadd.f32 %v6390, %v6539
        %v6570 = vadd.f32 %v6391, %v6541
        %v6571 = vadd.f32 %v6392, %v6545
        %v6572 = vadd.f32 %v6393, %v6547
        %v6573 = vadd.f32 %v6394, %v6551
        %v6574 = vadd.f32 %v6395, %v6553
        %v6575 = vadd.f32 %v6396, %v6557
        %v6576 = vadd.f32 %v6397, %v6559
        %s6577 = scalar_lea.vmem %s1, 2304
        %v6578 = vld [vmem:[%s6577] sm:$0xff]
        %v6579 = vld [vmem:[%s6577 + $0x8] sm:$0xff]
        %v6580 = vld [vmem:[%s6577 + $0x10] sm:$0xff]
        %v6581 = vld [vmem:[%s6577 + $0x18] sm:$0xff]
        %v6582 = vld [vmem:[%s6577 + $0x20] sm:$0xff]
        %v6583 = vld [vmem:[%s6577 + $0x28] sm:$0xff]
        %v6584 = vld [vmem:[%s6577 + $0x30] sm:$0xff]
        %v6585 = vld [vmem:[%s6577 + $0x38] sm:$0xff]
        %6586 = vrot.lane.b32.xlu0 %v169, 92
        %v6587 = vpop.permute.xlu0 %6586
        %6588 = vrot.lane.b32.xlu0 %v170, 92
        %v6589 = vpop.permute.xlu0 %6588
        %6590 = vrot.lane.b32.xlu0 %v171, 92
        %v6591 = vpop.permute.xlu0 %6590
        %6592 = vrot.lane.b32.xlu0 %v172, 92
        %v6593 = vpop.permute.xlu0 %6592
        %vm6594 = vcmask 752640
        %v6595 = vsel %vm6594, %v6587, %v6589
        %v6596 = vsel %vm6594, %v6591, %v6593
        %v6600 = vsel %vm207, %v6578, 0
        %v6603 = vsel %vm207, %v6579, 0
        %v6606 = vsel %vm207, %v6580, 0
        %v6609 = vsel %vm207, %v6581, 0
        %v6612 = vsel %vm207, %v6582, 0
        %v6615 = vsel %vm207, %v6583, 0
        %v6618 = vsel %vm207, %v6584, 0
        %v6621 = vsel %vm207, %v6585, 0
        %v6623 = vsel %vm232, %v6596, 0
        %v6625 = vsel %vm232, %v6593, 0
        %6627 = vmatprep.subr.mxu0 0.0
        %6628 = vmatpush1.msra.mxu0 0.0
        %6629 = vmatprep.subr.mxu0 0.0
        %6630 = vmatpush1.msra.mxu0 0.0
        %6631 = vmatprep.subr.mxu0 0.0
        %6632 = vmatpush1.msra.mxu0 0.0
        %6633 = vmatprep.subr.mxu0 0.0
        %6634 = vmatpush1.msra.mxu0 0.0
        %6635 = vmatprep.subr.mxu0 0.0
        %6636 = vmatpush1.msra.mxu0 0.0
        %6637 = vmatprep.subr.mxu0 0.0
        %6638 = vmatpush1.msra.mxu0 0.0
        %6639 = vmatprep.subr.mxu0 0.0
        %6640 = vmatpush1.msra.mxu0 0.0
        %6641 = vmatprep.subr.mxu0 0.0
        %6642 = vmatpush1.msra.mxu0 0.0
        %6643 = vmatprep.subr.mxu0 0.0
        %6644 = vmatpush1.msra.mxu0 0.0
        %6645 = vmatprep.subr.mxu0 0.0
        %6646 = vmatpush1.msra.mxu0 0.0
        %6647 = vmatprep.subr.mxu0 0.0
        %6648 = vmatpush1.msra.mxu0 0.0
        %6649 = vmatprep.subr.mxu0 0.0
        %6650 = vmatpush1.msra.mxu0 0.0
        %6651 = vmatprep.subr.mxu0 0.0
        %6652 = vmatpush1.msra.mxu0 0.0
        %6653 = vmatprep.subr.mxu0 0.0
        %6654 = vmatpush1.msra.mxu0 0.0
        %6655 = vmatprep.subr.mxu0 %v6625
        %6656 = vmatpush1.msra.mxu0 %v6623
        %6657 = vmatprep.subr.mxu0 %v6589
        %6658 = vmatpush1.msra.mxu0 %v6595
        %6659 = vmatprep.subr.mxu0 0.0
        %6660 = vmatpush2.msra.mxu0 0.0
        %6661 = vmatprep.subr.mxu0 0.0
        %6662 = vmatpush2.msra.mxu0 0.0
        %6663 = vmatprep.subr.mxu0 0.0
        %6664 = vmatpush2.msra.mxu0 0.0
        %6665 = vmatprep.subr.mxu0 0.0
        %6666 = vmatpush2.msra.mxu0 0.0
        %6667 = vmatprep.subr.mxu0 0.0
        %6668 = vmatpush2.msra.mxu0 0.0
        %6669 = vmatprep.subr.mxu0 0.0
        %6670 = vmatpush2.msra.mxu0 0.0
        %6671 = vmatprep.subr.mxu0 0.0
        %6672 = vmatpush2.msra.mxu0 0.0
        %6673 = vmatprep.subr.mxu0 0.0
        %6674 = vmatpush2.msra.mxu0 0.0
        %6675 = vmatprep.subr.mxu0 0.0
        %6676 = vmatpush2.msra.mxu0 0.0
        %6677 = vmatprep.subr.mxu0 0.0
        %6678 = vmatpush2.msra.mxu0 0.0
        %6679 = vmatprep.subr.mxu0 0.0
        %6680 = vmatpush2.msra.mxu0 0.0
        %6681 = vmatprep.subr.mxu0 0.0
        %6682 = vmatpush2.msra.mxu0 0.0
        %6683 = vmatprep.subr.mxu0 0.0
        %6684 = vmatpush2.msra.mxu0 0.0
        %6685 = vmatprep.subr.mxu0 0.0
        %6686 = vmatpush2.msra.mxu0 0.0
        %6687 = vmatprep.subr.mxu0 0.0
        %6688 = vmatpush2.msra.mxu0 0.0
        %6689 = vmatprep.subr.mxu0 0.0
        %6690 = vmatpush2.msra.mxu0 0.0
        %6691 = vmatprep.mubr.f32.mxu0 0.0
        %6692 = vmatmul.mubr.f32.gmra.mxu0 %v6600
        %v6693 = vpop.f32.mrf.mxu0
        %v6694 = vadd.f32 0.0, %v6693
        %v6695 = vpop.f32.mrf.mxu0
        %v6696 = vadd.f32 0.0, %v6695
        %6697 = vmatprep.mubr.f32.mxu0 0.0
        %6698 = vmatmul.mubr.f32.gmra.mxu0 %v6603
        %v6699 = vpop.f32.mrf.mxu0
        %v6700 = vadd.f32 0.0, %v6699
        %v6701 = vpop.f32.mrf.mxu0
        %v6702 = vadd.f32 0.0, %v6701
        %6703 = vmatprep.mubr.f32.mxu0 0.0
        %6704 = vmatmul.mubr.f32.gmra.mxu0 %v6606
        %v6705 = vpop.f32.mrf.mxu0
        %v6706 = vadd.f32 0.0, %v6705
        %v6707 = vpop.f32.mrf.mxu0
        %v6708 = vadd.f32 0.0, %v6707
        %6709 = vmatprep.mubr.f32.mxu0 0.0
        %6710 = vmatmul.mubr.f32.gmra.mxu0 %v6609
        %v6711 = vpop.f32.mrf.mxu0
        %v6712 = vadd.f32 0.0, %v6711
        %v6713 = vpop.f32.mrf.mxu0
        %v6714 = vadd.f32 0.0, %v6713
        %6715 = vmatprep.mubr.f32.mxu0 0.0
        %6716 = vmatmul.mubr.f32.gmra.mxu0 %v6612
        %v6717 = vpop.f32.mrf.mxu0
        %v6718 = vadd.f32 0.0, %v6717
        %v6719 = vpop.f32.mrf.mxu0
        %v6720 = vadd.f32 0.0, %v6719
        %6721 = vmatprep.mubr.f32.mxu0 0.0
        %6722 = vmatmul.mubr.f32.gmra.mxu0 %v6615
        %v6723 = vpop.f32.mrf.mxu0
        %v6724 = vadd.f32 0.0, %v6723
        %v6725 = vpop.f32.mrf.mxu0
        %v6726 = vadd.f32 0.0, %v6725
        %6727 = vmatprep.mubr.f32.mxu0 0.0
        %6728 = vmatmul.mubr.f32.gmra.mxu0 %v6618
        %v6729 = vpop.f32.mrf.mxu0
        %v6730 = vadd.f32 0.0, %v6729
        %v6731 = vpop.f32.mrf.mxu0
        %v6732 = vadd.f32 0.0, %v6731
        %6733 = vmatprep.mubr.f32.mxu0 0.0
        %6734 = vmatmul.mubr.f32.gmra.mxu0 %v6621
        %v6735 = vpop.f32.mrf.mxu0
        %v6736 = vadd.f32 0.0, %v6735
        %v6737 = vpop.f32.mrf.mxu0
        %v6738 = vadd.f32 0.0, %v6737
        %6739 = vdwg.mxu0
        %v6740 = vadd.f32 %v6561, %v6694
        %v6741 = vadd.f32 %v6562, %v6696
        %v6742 = vadd.f32 %v6563, %v6700
        %v6743 = vadd.f32 %v6564, %v6702
        %v6744 = vadd.f32 %v6565, %v6706
        %v6745 = vadd.f32 %v6566, %v6708
        %v6746 = vadd.f32 %v6567, %v6712
        %v6747 = vadd.f32 %v6568, %v6714
        %v6748 = vadd.f32 %v6569, %v6718
        %v6749 = vadd.f32 %v6570, %v6720
        %v6750 = vadd.f32 %v6571, %v6724
        %v6751 = vadd.f32 %v6572, %v6726
        %v6752 = vadd.f32 %v6573, %v6730
        %v6753 = vadd.f32 %v6574, %v6732
        %v6754 = vadd.f32 %v6575, %v6736
        %v6755 = vadd.f32 %v6576, %v6738
        %s6756 = scalar_lea.vmem %s1, 2368
        %v6757 = vld [vmem:[%s6756] sm:$0xff]
        %v6758 = vld [vmem:[%s6756 + $0x8] sm:$0xff]
        %v6759 = vld [vmem:[%s6756 + $0x10] sm:$0xff]
        %v6760 = vld [vmem:[%s6756 + $0x18] sm:$0xff]
        %v6761 = vld [vmem:[%s6756 + $0x20] sm:$0xff]
        %v6762 = vld [vmem:[%s6756 + $0x28] sm:$0xff]
        %v6763 = vld [vmem:[%s6756 + $0x30] sm:$0xff]
        %v6764 = vld [vmem:[%s6756 + $0x38] sm:$0xff]
        %6765 = vrot.lane.b32.xlu0 %v169, 91
        %v6766 = vpop.permute.xlu0 %6765
        %6767 = vrot.lane.b32.xlu0 %v170, 91
        %v6768 = vpop.permute.xlu0 %6767
        %6769 = vrot.lane.b32.xlu0 %v171, 91
        %v6770 = vpop.permute.xlu0 %6769
        %6771 = vrot.lane.b32.xlu0 %v172, 91
        %v6772 = vpop.permute.xlu0 %6771
        %vm6773 = vcmask 744448
        %v6774 = vsel %vm6773, %v6766, %v6768
        %v6775 = vsel %vm6773, %v6770, %v6772
        %v6779 = vsel %vm207, %v6757, 0
        %v6782 = vsel %vm207, %v6758, 0
        %v6785 = vsel %vm207, %v6759, 0
        %v6788 = vsel %vm207, %v6760, 0
        %v6791 = vsel %vm207, %v6761, 0
        %v6794 = vsel %vm207, %v6762, 0
        %v6797 = vsel %vm207, %v6763, 0
        %v6800 = vsel %vm207, %v6764, 0
        %v6802 = vsel %vm232, %v6775, 0
        %v6804 = vsel %vm232, %v6772, 0
        %6806 = vmatprep.subr.mxu0 0.0
        %6807 = vmatpush1.msra.mxu0 0.0
        %6808 = vmatprep.subr.mxu0 0.0
        %6809 = vmatpush1.msra.mxu0 0.0
        %6810 = vmatprep.subr.mxu0 0.0
        %6811 = vmatpush1.msra.mxu0 0.0
        %6812 = vmatprep.subr.mxu0 0.0
        %6813 = vmatpush1.msra.mxu0 0.0
        %6814 = vmatprep.subr.mxu0 0.0
        %6815 = vmatpush1.msra.mxu0 0.0
        %6816 = vmatprep.subr.mxu0 0.0
        %6817 = vmatpush1.msra.mxu0 0.0
        %6818 = vmatprep.subr.mxu0 0.0
        %6819 = vmatpush1.msra.mxu0 0.0
        %6820 = vmatprep.subr.mxu0 0.0
        %6821 = vmatpush1.msra.mxu0 0.0
        %6822 = vmatprep.subr.mxu0 0.0
        %6823 = vmatpush1.msra.mxu0 0.0
        %6824 = vmatprep.subr.mxu0 0.0
        %6825 = vmatpush1.msra.mxu0 0.0
        %6826 = vmatprep.subr.mxu0 0.0
        %6827 = vmatpush1.msra.mxu0 0.0
        %6828 = vmatprep.subr.mxu0 0.0
        %6829 = vmatpush1.msra.mxu0 0.0
        %6830 = vmatprep.subr.mxu0 0.0
        %6831 = vmatpush1.msra.mxu0 0.0
        %6832 = vmatprep.subr.mxu0 0.0
        %6833 = vmatpush1.msra.mxu0 0.0
        %6834 = vmatprep.subr.mxu0 %v6804
        %6835 = vmatpush1.msra.mxu0 %v6802
        %6836 = vmatprep.subr.mxu0 %v6768
        %6837 = vmatpush1.msra.mxu0 %v6774
        %6838 = vmatprep.subr.mxu0 0.0
        %6839 = vmatpush2.msra.mxu0 0.0
        %6840 = vmatprep.subr.mxu0 0.0
        %6841 = vmatpush2.msra.mxu0 0.0
        %6842 = vmatprep.subr.mxu0 0.0
        %6843 = vmatpush2.msra.mxu0 0.0
        %6844 = vmatprep.subr.mxu0 0.0
        %6845 = vmatpush2.msra.mxu0 0.0
        %6846 = vmatprep.subr.mxu0 0.0
        %6847 = vmatpush2.msra.mxu0 0.0
        %6848 = vmatprep.subr.mxu0 0.0
        %6849 = vmatpush2.msra.mxu0 0.0
        %6850 = vmatprep.subr.mxu0 0.0
        %6851 = vmatpush2.msra.mxu0 0.0
        %6852 = vmatprep.subr.mxu0 0.0
        %6853 = vmatpush2.msra.mxu0 0.0
        %6854 = vmatprep.subr.mxu0 0.0
        %6855 = vmatpush2.msra.mxu0 0.0
        %6856 = vmatprep.subr.mxu0 0.0
        %6857 = vmatpush2.msra.mxu0 0.0
        %6858 = vmatprep.subr.mxu0 0.0
        %6859 = vmatpush2.msra.mxu0 0.0
        %6860 = vmatprep.subr.mxu0 0.0
        %6861 = vmatpush2.msra.mxu0 0.0
        %6862 = vmatprep.subr.mxu0 0.0
        %6863 = vmatpush2.msra.mxu0 0.0
        %6864 = vmatprep.subr.mxu0 0.0
        %6865 = vmatpush2.msra.mxu0 0.0
        %6866 = vmatprep.subr.mxu0 0.0
        %6867 = vmatpush2.msra.mxu0 0.0
        %6868 = vmatprep.subr.mxu0 0.0
        %6869 = vmatpush2.msra.mxu0 0.0
        %6870 = vmatprep.mubr.f32.mxu0 0.0
        %6871 = vmatmul.mubr.f32.gmra.mxu0 %v6779
        %v6872 = vpop.f32.mrf.mxu0
        %v6873 = vadd.f32 0.0, %v6872
        %v6874 = vpop.f32.mrf.mxu0
        %v6875 = vadd.f32 0.0, %v6874
        %6876 = vmatprep.mubr.f32.mxu0 0.0
        %6877 = vmatmul.mubr.f32.gmra.mxu0 %v6782
        %v6878 = vpop.f32.mrf.mxu0
        %v6879 = vadd.f32 0.0, %v6878
        %v6880 = vpop.f32.mrf.mxu0
        %v6881 = vadd.f32 0.0, %v6880
        %6882 = vmatprep.mubr.f32.mxu0 0.0
        %6883 = vmatmul.mubr.f32.gmra.mxu0 %v6785
        %v6884 = vpop.f32.mrf.mxu0
        %v6885 = vadd.f32 0.0, %v6884
        %v6886 = vpop.f32.mrf.mxu0
        %v6887 = vadd.f32 0.0, %v6886
        %6888 = vmatprep.mubr.f32.mxu0 0.0
        %6889 = vmatmul.mubr.f32.gmra.mxu0 %v6788
        %v6890 = vpop.f32.mrf.mxu0
        %v6891 = vadd.f32 0.0, %v6890
        %v6892 = vpop.f32.mrf.mxu0
        %v6893 = vadd.f32 0.0, %v6892
        %6894 = vmatprep.mubr.f32.mxu0 0.0
        %6895 = vmatmul.mubr.f32.gmra.mxu0 %v6791
        %v6896 = vpop.f32.mrf.mxu0
        %v6897 = vadd.f32 0.0, %v6896
        %v6898 = vpop.f32.mrf.mxu0
        %v6899 = vadd.f32 0.0, %v6898
        %6900 = vmatprep.mubr.f32.mxu0 0.0
        %6901 = vmatmul.mubr.f32.gmra.mxu0 %v6794
        %v6902 = vpop.f32.mrf.mxu0
        %v6903 = vadd.f32 0.0, %v6902
        %v6904 = vpop.f32.mrf.mxu0
        %v6905 = vadd.f32 0.0, %v6904
        %6906 = vmatprep.mubr.f32.mxu0 0.0
        %6907 = vmatmul.mubr.f32.gmra.mxu0 %v6797
        %v6908 = vpop.f32.mrf.mxu0
        %v6909 = vadd.f32 0.0, %v6908
        %v6910 = vpop.f32.mrf.mxu0
        %v6911 = vadd.f32 0.0, %v6910
        %6912 = vmatprep.mubr.f32.mxu0 0.0
        %6913 = vmatmul.mubr.f32.gmra.mxu0 %v6800
        %v6914 = vpop.f32.mrf.mxu0
        %v6915 = vadd.f32 0.0, %v6914
        %v6916 = vpop.f32.mrf.mxu0
        %v6917 = vadd.f32 0.0, %v6916
        %6918 = vdwg.mxu0
        %v6919 = vadd.f32 %v6740, %v6873
        %v6920 = vadd.f32 %v6741, %v6875
        %v6921 = vadd.f32 %v6742, %v6879
        %v6922 = vadd.f32 %v6743, %v6881
        %v6923 = vadd.f32 %v6744, %v6885
        %v6924 = vadd.f32 %v6745, %v6887
        %v6925 = vadd.f32 %v6746, %v6891
        %v6926 = vadd.f32 %v6747, %v6893
        %v6927 = vadd.f32 %v6748, %v6897
        %v6928 = vadd.f32 %v6749, %v6899
        %v6929 = vadd.f32 %v6750, %v6903
        %v6930 = vadd.f32 %v6751, %v6905
        %v6931 = vadd.f32 %v6752, %v6909
        %v6932 = vadd.f32 %v6753, %v6911
        %v6933 = vadd.f32 %v6754, %v6915
        %v6934 = vadd.f32 %v6755, %v6917
        %s6935 = scalar_lea.vmem %s1, 2432
        %v6936 = vld [vmem:[%s6935] sm:$0xff]
        %v6937 = vld [vmem:[%s6935 + $0x8] sm:$0xff]
        %v6938 = vld [vmem:[%s6935 + $0x10] sm:$0xff]
        %v6939 = vld [vmem:[%s6935 + $0x18] sm:$0xff]
        %v6940 = vld [vmem:[%s6935 + $0x20] sm:$0xff]
        %v6941 = vld [vmem:[%s6935 + $0x28] sm:$0xff]
        %v6942 = vld [vmem:[%s6935 + $0x30] sm:$0xff]
        %v6943 = vld [vmem:[%s6935 + $0x38] sm:$0xff]
        %6944 = vrot.lane.b32.xlu0 %v169, 90
        %v6945 = vpop.permute.xlu0 %6944
        %6946 = vrot.lane.b32.xlu0 %v170, 90
        %v6947 = vpop.permute.xlu0 %6946
        %6948 = vrot.lane.b32.xlu0 %v171, 90
        %v6949 = vpop.permute.xlu0 %6948
        %6950 = vrot.lane.b32.xlu0 %v172, 90
        %v6951 = vpop.permute.xlu0 %6950
        %vm6952 = vcmask 736256
        %v6953 = vsel %vm6952, %v6945, %v6947
        %v6954 = vsel %vm6952, %v6949, %v6951
        %v6958 = vsel %vm207, %v6936, 0
        %v6961 = vsel %vm207, %v6937, 0
        %v6964 = vsel %vm207, %v6938, 0
        %v6967 = vsel %vm207, %v6939, 0
        %v6970 = vsel %vm207, %v6940, 0
        %v6973 = vsel %vm207, %v6941, 0
        %v6976 = vsel %vm207, %v6942, 0
        %v6979 = vsel %vm207, %v6943, 0
        %v6981 = vsel %vm232, %v6954, 0
        %v6983 = vsel %vm232, %v6951, 0
        %6985 = vmatprep.subr.mxu0 0.0
        %6986 = vmatpush1.msra.mxu0 0.0
        %6987 = vmatprep.subr.mxu0 0.0
        %6988 = vmatpush1.msra.mxu0 0.0
        %6989 = vmatprep.subr.mxu0 0.0
        %6990 = vmatpush1.msra.mxu0 0.0
        %6991 = vmatprep.subr.mxu0 0.0
        %6992 = vmatpush1.msra.mxu0 0.0
        %6993 = vmatprep.subr.mxu0 0.0
        %6994 = vmatpush1.msra.mxu0 0.0
        %6995 = vmatprep.subr.mxu0 0.0
        %6996 = vmatpush1.msra.mxu0 0.0
        %6997 = vmatprep.subr.mxu0 0.0
        %6998 = vmatpush1.msra.mxu0 0.0
        %6999 = vmatprep.subr.mxu0 0.0
        %7000 = vmatpush1.msra.mxu0 0.0
        %7001 = vmatprep.subr.mxu0 0.0
        %7002 = vmatpush1.msra.mxu0 0.0
        %7003 = vmatprep.subr.mxu0 0.0
        %7004 = vmatpush1.msra.mxu0 0.0
        %7005 = vmatprep.subr.mxu0 0.0
        %7006 = vmatpush1.msra.mxu0 0.0
        %7007 = vmatprep.subr.mxu0 0.0
        %7008 = vmatpush1.msra.mxu0 0.0
        %7009 = vmatprep.subr.mxu0 0.0
        %7010 = vmatpush1.msra.mxu0 0.0
        %7011 = vmatprep.subr.mxu0 0.0
        %7012 = vmatpush1.msra.mxu0 0.0
        %7013 = vmatprep.subr.mxu0 %v6983
        %7014 = vmatpush1.msra.mxu0 %v6981
        %7015 = vmatprep.subr.mxu0 %v6947
        %7016 = vmatpush1.msra.mxu0 %v6953
        %7017 = vmatprep.subr.mxu0 0.0
        %7018 = vmatpush2.msra.mxu0 0.0
        %7019 = vmatprep.subr.mxu0 0.0
        %7020 = vmatpush2.msra.mxu0 0.0
        %7021 = vmatprep.subr.mxu0 0.0
        %7022 = vmatpush2.msra.mxu0 0.0
        %7023 = vmatprep.subr.mxu0 0.0
        %7024 = vmatpush2.msra.mxu0 0.0
        %7025 = vmatprep.subr.mxu0 0.0
        %7026 = vmatpush2.msra.mxu0 0.0
        %7027 = vmatprep.subr.mxu0 0.0
        %7028 = vmatpush2.msra.mxu0 0.0
        %7029 = vmatprep.subr.mxu0 0.0
        %7030 = vmatpush2.msra.mxu0 0.0
        %7031 = vmatprep.subr.mxu0 0.0
        %7032 = vmatpush2.msra.mxu0 0.0
        %7033 = vmatprep.subr.mxu0 0.0
        %7034 = vmatpush2.msra.mxu0 0.0
        %7035 = vmatprep.subr.mxu0 0.0
        %7036 = vmatpush2.msra.mxu0 0.0
        %7037 = vmatprep.subr.mxu0 0.0
        %7038 = vmatpush2.msra.mxu0 0.0
        %7039 = vmatprep.subr.mxu0 0.0
        %7040 = vmatpush2.msra.mxu0 0.0
        %7041 = vmatprep.subr.mxu0 0.0
        %7042 = vmatpush2.msra.mxu0 0.0
        %7043 = vmatprep.subr.mxu0 0.0
        %7044 = vmatpush2.msra.mxu0 0.0
        %7045 = vmatprep.subr.mxu0 0.0
        %7046 = vmatpush2.msra.mxu0 0.0
        %7047 = vmatprep.subr.mxu0 0.0
        %7048 = vmatpush2.msra.mxu0 0.0
        %7049 = vmatprep.mubr.f32.mxu0 0.0
        %7050 = vmatmul.mubr.f32.gmra.mxu0 %v6958
        %v7051 = vpop.f32.mrf.mxu0
        %v7052 = vadd.f32 0.0, %v7051
        %v7053 = vpop.f32.mrf.mxu0
        %v7054 = vadd.f32 0.0, %v7053
        %7055 = vmatprep.mubr.f32.mxu0 0.0
        %7056 = vmatmul.mubr.f32.gmra.mxu0 %v6961
        %v7057 = vpop.f32.mrf.mxu0
        %v7058 = vadd.f32 0.0, %v7057
        %v7059 = vpop.f32.mrf.mxu0
        %v7060 = vadd.f32 0.0, %v7059
        %7061 = vmatprep.mubr.f32.mxu0 0.0
        %7062 = vmatmul.mubr.f32.gmra.mxu0 %v6964
        %v7063 = vpop.f32.mrf.mxu0
        %v7064 = vadd.f32 0.0, %v7063
        %v7065 = vpop.f32.mrf.mxu0
        %v7066 = vadd.f32 0.0, %v7065
        %7067 = vmatprep.mubr.f32.mxu0 0.0
        %7068 = vmatmul.mubr.f32.gmra.mxu0 %v6967
        %v7069 = vpop.f32.mrf.mxu0
        %v7070 = vadd.f32 0.0, %v7069
        %v7071 = vpop.f32.mrf.mxu0
        %v7072 = vadd.f32 0.0, %v7071
        %7073 = vmatprep.mubr.f32.mxu0 0.0
        %7074 = vmatmul.mubr.f32.gmra.mxu0 %v6970
        %v7075 = vpop.f32.mrf.mxu0
        %v7076 = vadd.f32 0.0, %v7075
        %v7077 = vpop.f32.mrf.mxu0
        %v7078 = vadd.f32 0.0, %v7077
        %7079 = vmatprep.mubr.f32.mxu0 0.0
        %7080 = vmatmul.mubr.f32.gmra.mxu0 %v6973
        %v7081 = vpop.f32.mrf.mxu0
        %v7082 = vadd.f32 0.0, %v7081
        %v7083 = vpop.f32.mrf.mxu0
        %v7084 = vadd.f32 0.0, %v7083
        %7085 = vmatprep.mubr.f32.mxu0 0.0
        %7086 = vmatmul.mubr.f32.gmra.mxu0 %v6976
        %v7087 = vpop.f32.mrf.mxu0
        %v7088 = vadd.f32 0.0, %v7087
        %v7089 = vpop.f32.mrf.mxu0
        %v7090 = vadd.f32 0.0, %v7089
        %7091 = vmatprep.mubr.f32.mxu0 0.0
        %7092 = vmatmul.mubr.f32.gmra.mxu0 %v6979
        %v7093 = vpop.f32.mrf.mxu0
        %v7094 = vadd.f32 0.0, %v7093
        %v7095 = vpop.f32.mrf.mxu0
        %v7096 = vadd.f32 0.0, %v7095
        %7097 = vdwg.mxu0
        %v7098 = vadd.f32 %v6919, %v7052
        %v7099 = vadd.f32 %v6920, %v7054
        %v7100 = vadd.f32 %v6921, %v7058
        %v7101 = vadd.f32 %v6922, %v7060
        %v7102 = vadd.f32 %v6923, %v7064
        %v7103 = vadd.f32 %v6924, %v7066
        %v7104 = vadd.f32 %v6925, %v7070
        %v7105 = vadd.f32 %v6926, %v7072
        %v7106 = vadd.f32 %v6927, %v7076
        %v7107 = vadd.f32 %v6928, %v7078
        %v7108 = vadd.f32 %v6929, %v7082
        %v7109 = vadd.f32 %v6930, %v7084
        %v7110 = vadd.f32 %v6931, %v7088
        %v7111 = vadd.f32 %v6932, %v7090
        %v7112 = vadd.f32 %v6933, %v7094
        %v7113 = vadd.f32 %v6934, %v7096
        %s7114 = scalar_lea.vmem %s1, 2496
        %v7115 = vld [vmem:[%s7114] sm:$0xff]
        %v7116 = vld [vmem:[%s7114 + $0x8] sm:$0xff]
        %v7117 = vld [vmem:[%s7114 + $0x10] sm:$0xff]
        %v7118 = vld [vmem:[%s7114 + $0x18] sm:$0xff]
        %v7119 = vld [vmem:[%s7114 + $0x20] sm:$0xff]
        %v7120 = vld [vmem:[%s7114 + $0x28] sm:$0xff]
        %v7121 = vld [vmem:[%s7114 + $0x30] sm:$0xff]
        %v7122 = vld [vmem:[%s7114 + $0x38] sm:$0xff]
        %7123 = vrot.lane.b32.xlu0 %v169, 89
        %v7124 = vpop.permute.xlu0 %7123
        %7125 = vrot.lane.b32.xlu0 %v170, 89
        %v7126 = vpop.permute.xlu0 %7125
        %7127 = vrot.lane.b32.xlu0 %v171, 89
        %v7128 = vpop.permute.xlu0 %7127
        %7129 = vrot.lane.b32.xlu0 %v172, 89
        %v7130 = vpop.permute.xlu0 %7129
        %vm7131 = vcmask 728064
        %v7132 = vsel %vm7131, %v7124, %v7126
        %v7133 = vsel %vm7131, %v7128, %v7130
        %v7137 = vsel %vm207, %v7115, 0
        %v7140 = vsel %vm207, %v7116, 0
        %v7143 = vsel %vm207, %v7117, 0
        %v7146 = vsel %vm207, %v7118, 0
        %v7149 = vsel %vm207, %v7119, 0
        %v7152 = vsel %vm207, %v7120, 0
        %v7155 = vsel %vm207, %v7121, 0
        %v7158 = vsel %vm207, %v7122, 0
        %v7160 = vsel %vm232, %v7133, 0
        %v7162 = vsel %vm232, %v7130, 0
        %7164 = vmatprep.subr.mxu0 0.0
        %7165 = vmatpush1.msra.mxu0 0.0
        %7166 = vmatprep.subr.mxu0 0.0
        %7167 = vmatpush1.msra.mxu0 0.0
        %7168 = vmatprep.subr.mxu0 0.0
        %7169 = vmatpush1.msra.mxu0 0.0
        %7170 = vmatprep.subr.mxu0 0.0
        %7171 = vmatpush1.msra.mxu0 0.0
        %7172 = vmatprep.subr.mxu0 0.0
        %7173 = vmatpush1.msra.mxu0 0.0
        %7174 = vmatprep.subr.mxu0 0.0
        %7175 = vmatpush1.msra.mxu0 0.0
        %7176 = vmatprep.subr.mxu0 0.0
        %7177 = vmatpush1.msra.mxu0 0.0
        %7178 = vmatprep.subr.mxu0 0.0
        %7179 = vmatpush1.msra.mxu0 0.0
        %7180 = vmatprep.subr.mxu0 0.0
        %7181 = vmatpush1.msra.mxu0 0.0
        %7182 = vmatprep.subr.mxu0 0.0
        %7183 = vmatpush1.msra.mxu0 0.0
        %7184 = vmatprep.subr.mxu0 0.0
        %7185 = vmatpush1.msra.mxu0 0.0
        %7186 = vmatprep.subr.mxu0 0.0
        %7187 = vmatpush1.msra.mxu0 0.0
        %7188 = vmatprep.subr.mxu0 0.0
        %7189 = vmatpush1.msra.mxu0 0.0
        %7190 = vmatprep.subr.mxu0 0.0
        %7191 = vmatpush1.msra.mxu0 0.0
        %7192 = vmatprep.subr.mxu0 %v7162
        %7193 = vmatpush1.msra.mxu0 %v7160
        %7194 = vmatprep.subr.mxu0 %v7126
        %7195 = vmatpush1.msra.mxu0 %v7132
        %7196 = vmatprep.subr.mxu0 0.0
        %7197 = vmatpush2.msra.mxu0 0.0
        %7198 = vmatprep.subr.mxu0 0.0
        %7199 = vmatpush2.msra.mxu0 0.0
        %7200 = vmatprep.subr.mxu0 0.0
        %7201 = vmatpush2.msra.mxu0 0.0
        %7202 = vmatprep.subr.mxu0 0.0
        %7203 = vmatpush2.msra.mxu0 0.0
        %7204 = vmatprep.subr.mxu0 0.0
        %7205 = vmatpush2.msra.mxu0 0.0
        %7206 = vmatprep.subr.mxu0 0.0
        %7207 = vmatpush2.msra.mxu0 0.0
        %7208 = vmatprep.subr.mxu0 0.0
        %7209 = vmatpush2.msra.mxu0 0.0
        %7210 = vmatprep.subr.mxu0 0.0
        %7211 = vmatpush2.msra.mxu0 0.0
        %7212 = vmatprep.subr.mxu0 0.0
        %7213 = vmatpush2.msra.mxu0 0.0
        %7214 = vmatprep.subr.mxu0 0.0
        %7215 = vmatpush2.msra.mxu0 0.0
        %7216 = vmatprep.subr.mxu0 0.0
        %7217 = vmatpush2.msra.mxu0 0.0
        %7218 = vmatprep.subr.mxu0 0.0
        %7219 = vmatpush2.msra.mxu0 0.0
        %7220 = vmatprep.subr.mxu0 0.0
        %7221 = vmatpush2.msra.mxu0 0.0
        %7222 = vmatprep.subr.mxu0 0.0
        %7223 = vmatpush2.msra.mxu0 0.0
        %7224 = vmatprep.subr.mxu0 0.0
        %7225 = vmatpush2.msra.mxu0 0.0
        %7226 = vmatprep.subr.mxu0 0.0
        %7227 = vmatpush2.msra.mxu0 0.0
        %7228 = vmatprep.mubr.f32.mxu0 0.0
        %7229 = vmatmul.mubr.f32.gmra.mxu0 %v7137
        %v7230 = vpop.f32.mrf.mxu0
        %v7231 = vadd.f32 0.0, %v7230
        %v7232 = vpop.f32.mrf.mxu0
        %v7233 = vadd.f32 0.0, %v7232
        %7234 = vmatprep.mubr.f32.mxu0 0.0
        %7235 = vmatmul.mubr.f32.gmra.mxu0 %v7140
        %v7236 = vpop.f32.mrf.mxu0
        %v7237 = vadd.f32 0.0, %v7236
        %v7238 = vpop.f32.mrf.mxu0
        %v7239 = vadd.f32 0.0, %v7238
        %7240 = vmatprep.mubr.f32.mxu0 0.0
        %7241 = vmatmul.mubr.f32.gmra.mxu0 %v7143
        %v7242 = vpop.f32.mrf.mxu0
        %v7243 = vadd.f32 0.0, %v7242
        %v7244 = vpop.f32.mrf.mxu0
        %v7245 = vadd.f32 0.0, %v7244
        %7246 = vmatprep.mubr.f32.mxu0 0.0
        %7247 = vmatmul.mubr.f32.gmra.mxu0 %v7146
        %v7248 = vpop.f32.mrf.mxu0
        %v7249 = vadd.f32 0.0, %v7248
        %v7250 = vpop.f32.mrf.mxu0
        %v7251 = vadd.f32 0.0, %v7250
        %7252 = vmatprep.mubr.f32.mxu0 0.0
        %7253 = vmatmul.mubr.f32.gmra.mxu0 %v7149
        %v7254 = vpop.f32.mrf.mxu0
        %v7255 = vadd.f32 0.0, %v7254
        %v7256 = vpop.f32.mrf.mxu0
        %v7257 = vadd.f32 0.0, %v7256
        %7258 = vmatprep.mubr.f32.mxu0 0.0
        %7259 = vmatmul.mubr.f32.gmra.mxu0 %v7152
        %v7260 = vpop.f32.mrf.mxu0
        %v7261 = vadd.f32 0.0, %v7260
        %v7262 = vpop.f32.mrf.mxu0
        %v7263 = vadd.f32 0.0, %v7262
        %7264 = vmatprep.mubr.f32.mxu0 0.0
        %7265 = vmatmul.mubr.f32.gmra.mxu0 %v7155
        %v7266 = vpop.f32.mrf.mxu0
        %v7267 = vadd.f32 0.0, %v7266
        %v7268 = vpop.f32.mrf.mxu0
        %v7269 = vadd.f32 0.0, %v7268
        %7270 = vmatprep.mubr.f32.mxu0 0.0
        %7271 = vmatmul.mubr.f32.gmra.mxu0 %v7158
        %v7272 = vpop.f32.mrf.mxu0
        %v7273 = vadd.f32 0.0, %v7272
        %v7274 = vpop.f32.mrf.mxu0
        %v7275 = vadd.f32 0.0, %v7274
        %7276 = vdwg.mxu0
        %v7277 = vadd.f32 %v7098, %v7231
        %v7278 = vadd.f32 %v7099, %v7233
        %v7279 = vadd.f32 %v7100, %v7237
        %v7280 = vadd.f32 %v7101, %v7239
        %v7281 = vadd.f32 %v7102, %v7243
        %v7282 = vadd.f32 %v7103, %v7245
        %v7283 = vadd.f32 %v7104, %v7249
        %v7284 = vadd.f32 %v7105, %v7251
        %v7285 = vadd.f32 %v7106, %v7255
        %v7286 = vadd.f32 %v7107, %v7257
        %v7287 = vadd.f32 %v7108, %v7261
        %v7288 = vadd.f32 %v7109, %v7263
        %v7289 = vadd.f32 %v7110, %v7267
        %v7290 = vadd.f32 %v7111, %v7269
        %v7291 = vadd.f32 %v7112, %v7273
        %v7292 = vadd.f32 %v7113, %v7275
        %s7293 = scalar_lea.vmem %s1, 2560
        %v7294 = vld [vmem:[%s7293] sm:$0xff]
        %v7295 = vld [vmem:[%s7293 + $0x8] sm:$0xff]
        %v7296 = vld [vmem:[%s7293 + $0x10] sm:$0xff]
        %v7297 = vld [vmem:[%s7293 + $0x18] sm:$0xff]
        %v7298 = vld [vmem:[%s7293 + $0x20] sm:$0xff]
        %v7299 = vld [vmem:[%s7293 + $0x28] sm:$0xff]
        %v7300 = vld [vmem:[%s7293 + $0x30] sm:$0xff]
        %v7301 = vld [vmem:[%s7293 + $0x38] sm:$0xff]
        %7302 = vrot.lane.b32.xlu0 %v169, 88
        %v7303 = vpop.permute.xlu0 %7302
        %7304 = vrot.lane.b32.xlu0 %v170, 88
        %v7305 = vpop.permute.xlu0 %7304
        %7306 = vrot.lane.b32.xlu0 %v171, 88
        %v7307 = vpop.permute.xlu0 %7306
        %7308 = vrot.lane.b32.xlu0 %v172, 88
        %v7309 = vpop.permute.xlu0 %7308
        %vm7310 = vcmask 719872
        %v7311 = vsel %vm7310, %v7303, %v7305
        %v7312 = vsel %vm7310, %v7307, %v7309
        %v7316 = vsel %vm207, %v7294, 0
        %v7319 = vsel %vm207, %v7295, 0
        %v7322 = vsel %vm207, %v7296, 0
        %v7325 = vsel %vm207, %v7297, 0
        %v7328 = vsel %vm207, %v7298, 0
        %v7331 = vsel %vm207, %v7299, 0
        %v7334 = vsel %vm207, %v7300, 0
        %v7337 = vsel %vm207, %v7301, 0
        %v7339 = vsel %vm232, %v7312, 0
        %v7341 = vsel %vm232, %v7309, 0
        %7343 = vmatprep.subr.mxu0 0.0
        %7344 = vmatpush1.msra.mxu0 0.0
        %7345 = vmatprep.subr.mxu0 0.0
        %7346 = vmatpush1.msra.mxu0 0.0
        %7347 = vmatprep.subr.mxu0 0.0
        %7348 = vmatpush1.msra.mxu0 0.0
        %7349 = vmatprep.subr.mxu0 0.0
        %7350 = vmatpush1.msra.mxu0 0.0
        %7351 = vmatprep.subr.mxu0 0.0
        %7352 = vmatpush1.msra.mxu0 0.0
        %7353 = vmatprep.subr.mxu0 0.0
        %7354 = vmatpush1.msra.mxu0 0.0
        %7355 = vmatprep.subr.mxu0 0.0
        %7356 = vmatpush1.msra.mxu0 0.0
        %7357 = vmatprep.subr.mxu0 0.0
        %7358 = vmatpush1.msra.mxu0 0.0
        %7359 = vmatprep.subr.mxu0 0.0
        %7360 = vmatpush1.msra.mxu0 0.0
        %7361 = vmatprep.subr.mxu0 0.0
        %7362 = vmatpush1.msra.mxu0 0.0
        %7363 = vmatprep.subr.mxu0 0.0
        %7364 = vmatpush1.msra.mxu0 0.0
        %7365 = vmatprep.subr.mxu0 0.0
        %7366 = vmatpush1.msra.mxu0 0.0
        %7367 = vmatprep.subr.mxu0 0.0
        %7368 = vmatpush1.msra.mxu0 0.0
        %7369 = vmatprep.subr.mxu0 0.0
        %7370 = vmatpush1.msra.mxu0 0.0
        %7371 = vmatprep.subr.mxu0 %v7341
        %7372 = vmatpush1.msra.mxu0 %v7339
        %7373 = vmatprep.subr.mxu0 %v7305
        %7374 = vmatpush1.msra.mxu0 %v7311
        %7375 = vmatprep.subr.mxu0 0.0
        %7376 = vmatpush2.msra.mxu0 0.0
        %7377 = vmatprep.subr.mxu0 0.0
        %7378 = vmatpush2.msra.mxu0 0.0
        %7379 = vmatprep.subr.mxu0 0.0
        %7380 = vmatpush2.msra.mxu0 0.0
        %7381 = vmatprep.subr.mxu0 0.0
        %7382 = vmatpush2.msra.mxu0 0.0
        %7383 = vmatprep.subr.mxu0 0.0
        %7384 = vmatpush2.msra.mxu0 0.0
        %7385 = vmatprep.subr.mxu0 0.0
        %7386 = vmatpush2.msra.mxu0 0.0
        %7387 = vmatprep.subr.mxu0 0.0
        %7388 = vmatpush2.msra.mxu0 0.0
        %7389 = vmatprep.subr.mxu0 0.0
        %7390 = vmatpush2.msra.mxu0 0.0
        %7391 = vmatprep.subr.mxu0 0.0
        %7392 = vmatpush2.msra.mxu0 0.0
        %7393 = vmatprep.subr.mxu0 0.0
        %7394 = vmatpush2.msra.mxu0 0.0
        %7395 = vmatprep.subr.mxu0 0.0
        %7396 = vmatpush2.msra.mxu0 0.0
        %7397 = vmatprep.subr.mxu0 0.0
        %7398 = vmatpush2.msra.mxu0 0.0
        %7399 = vmatprep.subr.mxu0 0.0
        %7400 = vmatpush2.msra.mxu0 0.0
        %7401 = vmatprep.subr.mxu0 0.0
        %7402 = vmatpush2.msra.mxu0 0.0
        %7403 = vmatprep.subr.mxu0 0.0
        %7404 = vmatpush2.msra.mxu0 0.0
        %7405 = vmatprep.subr.mxu0 0.0
        %7406 = vmatpush2.msra.mxu0 0.0
        %7407 = vmatprep.mubr.f32.mxu0 0.0
        %7408 = vmatmul.mubr.f32.gmra.mxu0 %v7316
        %v7409 = vpop.f32.mrf.mxu0
        %v7410 = vadd.f32 0.0, %v7409
        %v7411 = vpop.f32.mrf.mxu0
        %v7412 = vadd.f32 0.0, %v7411
        %7413 = vmatprep.mubr.f32.mxu0 0.0
        %7414 = vmatmul.mubr.f32.gmra.mxu0 %v7319
        %v7415 = vpop.f32.mrf.mxu0
        %v7416 = vadd.f32 0.0, %v7415
        %v7417 = vpop.f32.mrf.mxu0
        %v7418 = vadd.f32 0.0, %v7417
        %7419 = vmatprep.mubr.f32.mxu0 0.0
        %7420 = vmatmul.mubr.f32.gmra.mxu0 %v7322
        %v7421 = vpop.f32.mrf.mxu0
        %v7422 = vadd.f32 0.0, %v7421
        %v7423 = vpop.f32.mrf.mxu0
        %v7424 = vadd.f32 0.0, %v7423
        %7425 = vmatprep.mubr.f32.mxu0 0.0
        %7426 = vmatmul.mubr.f32.gmra.mxu0 %v7325
        %v7427 = vpop.f32.mrf.mxu0
        %v7428 = vadd.f32 0.0, %v7427
        %v7429 = vpop.f32.mrf.mxu0
        %v7430 = vadd.f32 0.0, %v7429
        %7431 = vmatprep.mubr.f32.mxu0 0.0
        %7432 = vmatmul.mubr.f32.gmra.mxu0 %v7328
        %v7433 = vpop.f32.mrf.mxu0
        %v7434 = vadd.f32 0.0, %v7433
        %v7435 = vpop.f32.mrf.mxu0
        %v7436 = vadd.f32 0.0, %v7435
        %7437 = vmatprep.mubr.f32.mxu0 0.0
        %7438 = vmatmul.mubr.f32.gmra.mxu0 %v7331
        %v7439 = vpop.f32.mrf.mxu0
        %v7440 = vadd.f32 0.0, %v7439
        %v7441 = vpop.f32.mrf.mxu0
        %v7442 = vadd.f32 0.0, %v7441
        %7443 = vmatprep.mubr.f32.mxu0 0.0
        %7444 = vmatmul.mubr.f32.gmra.mxu0 %v7334
        %v7445 = vpop.f32.mrf.mxu0
        %v7446 = vadd.f32 0.0, %v7445
        %v7447 = vpop.f32.mrf.mxu0
        %v7448 = vadd.f32 0.0, %v7447
        %7449 = vmatprep.mubr.f32.mxu0 0.0
        %7450 = vmatmul.mubr.f32.gmra.mxu0 %v7337
        %v7451 = vpop.f32.mrf.mxu0
        %v7452 = vadd.f32 0.0, %v7451
        %v7453 = vpop.f32.mrf.mxu0
        %v7454 = vadd.f32 0.0, %v7453
        %7455 = vdwg.mxu0
        %v7456 = vadd.f32 %v7277, %v7410
        %v7457 = vadd.f32 %v7278, %v7412
        %v7458 = vadd.f32 %v7279, %v7416
        %v7459 = vadd.f32 %v7280, %v7418
        %v7460 = vadd.f32 %v7281, %v7422
        %v7461 = vadd.f32 %v7282, %v7424
        %v7462 = vadd.f32 %v7283, %v7428
        %v7463 = vadd.f32 %v7284, %v7430
        %v7464 = vadd.f32 %v7285, %v7434
        %v7465 = vadd.f32 %v7286, %v7436
        %v7466 = vadd.f32 %v7287, %v7440
        %v7467 = vadd.f32 %v7288, %v7442
        %v7468 = vadd.f32 %v7289, %v7446
        %v7469 = vadd.f32 %v7290, %v7448
        %v7470 = vadd.f32 %v7291, %v7452
        %v7471 = vadd.f32 %v7292, %v7454
        %v7472 = vld [vmem:[%s2] sm:$0xff]
        %v7473 = vld [vmem:[%s2 + $0x8] sm:$0xff]
        %v7474 = vld [vmem:[%s2 + $0x10] sm:$0xff]
        %v7475 = vld [vmem:[%s2 + $0x18] sm:$0xff]
        %v7476 = vld [vmem:[%s2 + $0x20] sm:$0xff]
        %v7477 = vld [vmem:[%s2 + $0x28] sm:$0xff]
        %v7478 = vld [vmem:[%s2 + $0x30] sm:$0xff]
        %v7479 = vld [vmem:[%s2 + $0x38] sm:$0xff]
        %7481 = vset.pattern.permute.xlu0 0
        %7482 = vperm.xlu0 %7481, %v7472
        %v7483 = vpop.permute.xlu0 %7482
        %7486 = vset.pattern.permute.xlu0 0
        %7487 = vperm.xlu0 %7486, %v7473
        %v7488 = vpop.permute.xlu0 %7487
        %7491 = vset.pattern.permute.xlu0 0
        %7492 = vperm.xlu0 %7491, %v7474
        %v7493 = vpop.permute.xlu0 %7492
        %7496 = vset.pattern.permute.xlu0 0
        %7497 = vperm.xlu0 %7496, %v7475
        %v7498 = vpop.permute.xlu0 %7497
        %7501 = vset.pattern.permute.xlu0 0
        %7502 = vperm.xlu0 %7501, %v7476
        %v7503 = vpop.permute.xlu0 %7502
        %7506 = vset.pattern.permute.xlu0 0
        %7507 = vperm.xlu0 %7506, %v7477
        %v7508 = vpop.permute.xlu0 %7507
        %7511 = vset.pattern.permute.xlu0 0
        %7512 = vperm.xlu0 %7511, %v7478
        %v7513 = vpop.permute.xlu0 %7512
        %7516 = vset.pattern.permute.xlu0 0
        %7517 = vperm.xlu0 %7516, %v7479
        %v7518 = vpop.permute.xlu0 %7517
        %v7520 = vadd.f32 %v7456, %v7483
        %v7521 = vadd.f32 %v7457, %v7483
        %v7522 = vadd.f32 %v7458, %v7488
        %v7523 = vadd.f32 %v7459, %v7488
        %v7524 = vadd.f32 %v7460, %v7493
        %v7525 = vadd.f32 %v7461, %v7493
        %v7526 = vadd.f32 %v7462, %v7498
        %v7527 = vadd.f32 %v7463, %v7498
        %v7528 = vadd.f32 %v7464, %v7503
        %v7529 = vadd.f32 %v7465, %v7503
        %v7530 = vadd.f32 %v7466, %v7508
        %v7531 = vadd.f32 %v7467, %v7508
        %v7532 = vadd.f32 %v7468, %v7513
        %v7533 = vadd.f32 %v7469, %v7513
        %v7534 = vadd.f32 %v7470, %v7518
        %v7535 = vadd.f32 %v7471, %v7518
        %7536 = vst [vmem:[%s163] sm:$0xff] %v7520
        %vm7537 = vcmask 523264
        %7538 = vst.msk [vmem:[%s163 + $0x8] sm:$0xff] %vm7537, %v7521
        %7539 = vst [vmem:[%s163 + $0x10] sm:$0xff] %v7522
        %7540 = vst.msk [vmem:[%s163 + $0x18] sm:$0xff] %vm7537, %v7523
        %7541 = vst [vmem:[%s163 + $0x20] sm:$0xff] %v7524
        %7542 = vst.msk [vmem:[%s163 + $0x28] sm:$0xff] %vm7537, %v7525
        %7543 = vst [vmem:[%s163 + $0x30] sm:$0xff] %v7526
        %7544 = vst.msk [vmem:[%s163 + $0x38] sm:$0xff] %vm7537, %v7527
        %7545 = vst [vmem:[%s163 + $0x40] sm:$0xff] %v7528
        %7546 = vst.msk [vmem:[%s163 + $0x48] sm:$0xff] %vm7537, %v7529
        %7547 = vst [vmem:[%s163 + $0x50] sm:$0xff] %v7530
        %7548 = vst.msk [vmem:[%s163 + $0x58] sm:$0xff] %vm7537, %v7531
        %7549 = vst [vmem:[%s163 + $0x60] sm:$0xff] %v7532
        %7550 = vst.msk [vmem:[%s163 + $0x68] sm:$0xff] %vm7537, %v7533
        %7551 = vst [vmem:[%s163 + $0x70] sm:$0xff] %v7534
        %7552 = vst.msk [vmem:[%s163 + $0x78] sm:$0xff] %vm7537, %v7535
        %s7553 = sand.u32 %s93, 1
        %s7554 = scalar_lea.sflag [#allocation3], %s7553
        %s7555 = sand.u32 %s93, 1
        %s7556 = smul.addr %s7555, 128
        %s7557 = scalar_lea.vmem [#allocation2], %s7556
        // Predicated region
        $region33: #{sino_reconstructor_forward.1} parent=31 // pred_check
          %p7558 = pneg %p103
        $region34: #{sino_reconstructor_forward.1} parent=31 // pred_check_branch
          %7560 = sbr.rel (%p7558) target = $region36
        $region35: #{sino_reconstructor_forward.1} parent=31 // pred_region
          %s7562 = ssub.s32 2048, 2048
          %7563 = vsyncadd %s7554, %s7562
          %s7564 = smul.addr %s17, 16
          %s7565 = smul.addr %s7564, 128
          %s7566 = scalar_lea.hbm %s3, %s7565
          %s7567 = sshll.u32 %s7557, 4
          %s7568 = int_to_ptr.vmem [resolvable:$true] %s7567
          %7573 = dma.vmem_to_hbm [thread:$0]  %s7568, 2048, %s7566, %s7554, 256, 256, 16
        $region36: #{sino_reconstructor_forward.1} parent=31 // pred_fallthru
          _
      $region32: #{sino_reconstructor_forward.1} parent=5 // pred_fallthru
        _
      %p7574 = scmp.le.s32.totalorder 2, %s12
      // Predicated region
      $region37: #{sino_reconstructor_forward.1} parent=5 // pred_check
        %p7575 = pneg %p7574
      $region38: #{sino_reconstructor_forward.1} parent=5 // pred_check_branch
        %7577 = sbr.rel (%p7575) target = $region40
      $region39: #{sino_reconstructor_forward.1} parent=5 // pred_region
        %s7578 = ssub.s32 %s12, 2
        // Predicated region
        $region41: #{sino_reconstructor_forward.1} parent=39 // pred_check
          %p7579 = pneg %p109
        $region42: #{sino_reconstructor_forward.1} parent=39 // pred_check_branch
          %7581 = sbr.rel (%p7579) target = $region44
        $region43: #{sino_reconstructor_forward.1} parent=39 // pred_region
          %s7582 = sand.u32 %s94, 1
          %s7583 = scalar_lea.sflag [#allocation3], %s7582
          %s7584 = sand.u32 %s94, 1
          %s7585 = smul.addr %s7584, 128
          %s7586 = scalar_lea.vmem [#allocation2], %s7585
          %7587 = dma.done %s7583, 2048
        $region44: #{sino_reconstructor_forward.1} parent=39 // pred_fallthru
          _
      $region40: #{sino_reconstructor_forward.1} parent=5 // pred_fallthru
        _
    $region6: #{sino_reconstructor_forward.1} parent=1 // loop_footer
      %s16 = sadd.s32 1, %s12
    $region7: #{sino_reconstructor_forward.1} parent=1 // loop_footer_branch
      %11 = sbr.rel target = $region3
    $region8: #{sino_reconstructor_forward.1} parent=1 // loop_exit
      _
    %7588 = vsyncpa [#allocation3], 1
    %s7589 = scalar_lea.sflag [#allocation3], 1
    %7590 = vsyncpa %s7589, 1

</llo_original>
